<compile_context>
chip_gen: v6e
topology: v6e:2x2x1
jax: 0.10.0
libtpu: 0.0.40
codegen_flags: <defaults>
</compile_context>

<pallas_src>
import functools

import numpy as np

import jax
import jax.numpy as jnp
from jax.experimental import pallas as pl
from jax.experimental.pallas import tpu as pltpu

EPS = 1e-5
KSIZE = 5
STRIDE = 2


def _round_up(v, m):
    return (v + m - 1) // m * m


# ----------------------------------------------------------------------------
# Fused kernel: one batch sample per grid step.
# ----------------------------------------------------------------------------
def _fused_dqn_kernel(p1_ref, w1_ref, s1_ref, g2_ref, w2_ref, s2_ref,
                      g3_ref, w3_ref, s3_ref, wf1_ref, b1_ref, wf2_ref, b2_ref,
                      o_ref, *, taps, m2p, m3p, n_pos):
    f32 = jnp.float32
    bf16 = jnp.bfloat16

    # --- conv1 + bn1 + relu (patches pre-im2col'd from the raw input) -------
    a1 = jnp.dot(p1_ref[0], w1_ref[...], preferred_element_type=f32)
    a1 = jnp.maximum(a1 + s1_ref[...], 0.0).astype(bf16)            # [P1, 16]

    # --- conv2 + bn2 + relu: one-hot gather (im2col in VMEM) + tap dots -----
    p2 = jnp.dot(g2_ref[...], a1, preferred_element_type=f32).astype(bf16)  # [taps*m2p, 16]
    acc2 = jnp.zeros((m2p, w2_ref.shape[2]), f32)
    for t in range(taps):
        acc2 = acc2 + jnp.dot(p2[t * m2p:(t + 1) * m2p, :], w2_ref[t],
                              preferred_element_type=f32)
    a2 = jnp.maximum(acc2 + s2_ref[...], 0.0).astype(bf16)          # [m2p, 32]

    # --- conv3 + bn3 + relu --------------------------------------------------
    p3 = jnp.dot(g3_ref[...], a2, preferred_element_type=f32).astype(bf16)  # [taps*m3p, 32]
    acc3 = jnp.zeros((m3p, w3_ref.shape[2]), f32)
    for t in range(taps):
        acc3 = acc3 + jnp.dot(p3[t * m3p:(t + 1) * m3p, :], w3_ref[t],
                              preferred_element_type=f32)
    a3 = jnp.maximum(acc3 + s3_ref[...], 0.0).astype(bf16)          # [m3p, 32]

    # --- fc1 + relu: NCHW flatten folded into per-position weight slabs -----
    h1 = b1_ref[...]                                                # [1, hidden]
    for p in range(n_pos):
        h1 = h1 + jnp.dot(a3[p:p + 1, :], wf1_ref[p],
                          preferred_element_type=f32)
    h1 = jnp.maximum(h1, 0.0).astype(bf16)

    # --- fc2 -----------------------------------------------------------------
    q = jnp.dot(h1, wf2_ref[...], preferred_element_type=f32) + b2_ref[...]
    o_ref[0] = q.astype(o_ref.dtype)


# ----------------------------------------------------------------------------
# Host-side prep (pure layout transforms / constants, no hot-path compute)
# ----------------------------------------------------------------------------
def _fold_bn(w, b, gamma, beta, mean, var):
    """Eval-mode BN folded into conv weight (scale) + per-channel shift."""
    scale = gamma / jnp.sqrt(var + EPS)
    return w * scale[:, None, None, None], beta + (b - mean) * scale


def _conv_tap_weights(w_folded):
    """[OC, IC, K, K] -> [K*K, IC, OC], tap index t = kh*K + kw."""
    oc, ic, k, _ = w_folded.shape
    return jnp.transpose(w_folded, (2, 3, 1, 0)).reshape(k * k, ic, oc)


def _im2col_nhwc(x_nhwc, k, s):
    """[N, H, W, C] -> [N, OH*OW, K*K*C]  (column order: tap-major, channel)."""
    n, h, w, c = x_nhwc.shape
    oh = (h - k) // s + 1
    ow = (w - k) // s + 1
    taps = [x_nhwc[:, i:i + s * (oh - 1) + 1:s, j:j + s * (ow - 1) + 1:s, :]
            for i in range(k) for j in range(k)]
    p = jnp.stack(taps, axis=3)                      # [N, OH, OW, K*K, C]
    return p.reshape(n, oh * ow, k * k * c), oh, ow


def _gather_onehot(ih, iw, oh, ow, k, s, m_pad, src_dim):
    """Exact one-hot row-gather matrix [K*K*m_pad, src_dim].

    Row (t*m_pad + m) selects the input position (s*oy+kh, s*ox+kw) for output
    position m = oy*ow + ox and tap t = kh*k + kw; padded rows stay all-zero.
    """
    t = np.arange(k * k)
    kh, kw = t // k, t % k
    m = np.arange(oh * ow)
    oy, ox = m // ow, m % ow
    src = (s * oy[None, :] + kh[:, None]) * iw + (s * ox[None, :] + kw[:, None])
    assert src.max() < src_dim
    g = np.zeros((k * k, m_pad, src_dim), np.float32)
    g[np.repeat(t, oh * ow), np.tile(m, k * k), src.reshape(-1)] = 1.0
    return jnp.asarray(g.reshape(k * k * m_pad, src_dim), dtype=jnp.bfloat16)


# ----------------------------------------------------------------------------
# Forward pass (matches Object_DQN.forward, eval-mode BN)
# ----------------------------------------------------------------------------
def object_dqn_forward(x, params):
    n, in_c, h, w = x.shape
    k, s = KSIZE, STRIDE
    oh1, ow1 = (h - k) // s + 1, (w - k) // s + 1
    oh2, ow2 = (oh1 - k) // s + 1, (ow1 - k) // s + 1
    oh3, ow3 = (oh2 - k) // s + 1, (ow2 - k) // s + 1
    p1_rows = oh1 * ow1
    m2p = _round_up(oh2 * ow2, 16)      # bf16-sublane friendly padding
    m3p = _round_up(oh3 * ow3, 16)
    n_pos = oh3 * ow3

    # conv1 im2col on the raw input only (XLA prep; nothing comes back to HBM
    # between layers after this point).
    x_nhwc = jnp.transpose(x, (0, 2, 3, 1))
    p1, _, _ = _im2col_nhwc(x_nhwc, k, s)
    p1 = p1.astype(jnp.bfloat16)                                   # [N, 289, 75]

    # Fold BN (eval mode) into conv weights; reshape to per-tap matrices.
    w1f, sh1 = _fold_bn(params["conv1_w"], params["conv1_b"], params["bn1_gamma"],
                        params["bn1_beta"], params["bn1_mean"], params["bn1_var"])
    w2f, sh2 = _fold_bn(params["conv2_w"], params["conv2_b"], params["bn2_gamma"],
                        params["bn2_beta"], params["bn2_mean"], params["bn2_var"])
    w3f, sh3 = _fold_bn(params["conv3_w"], params["conv3_b"], params["bn3_gamma"],
                        params["bn3_beta"], params["bn3_mean"], params["bn3_var"])
    c1 = w1f.shape[0]
    c2 = w2f.shape[0]
    c3 = w3f.shape[0]
    w1m = _conv_tap_weights(w1f).reshape(k * k * in_c, c1).astype(jnp.bfloat16)
    w2t = _conv_tap_weights(w2f).astype(jnp.bfloat16)              # [25, 16, 32]
    w3t = _conv_tap_weights(w3f).astype(jnp.bfloat16)              # [25, 32, 32]
    s1r = sh1.reshape(1, c1).astype(jnp.float32)
    s2r = sh2.reshape(1, c2).astype(jnp.float32)
    s3r = sh3.reshape(1, c3).astype(jnp.float32)

    # One-hot gather matrices that perform the in-kernel im2col for conv2/3.
    g2 = _gather_onehot(oh1, ow1, oh2, ow2, k, s, m2p, p1_rows)    # [25*m2p, 289]
    g3 = _gather_onehot(oh2, ow2, oh3, ow3, k, s, m3p, m2p)        # [25*m3p, m2p]

    # fc1: PyTorch flatten order is (c, h, w); kernel produces (h, w, c) rows,
    # so reorder the fc1 weight into per-spatial-position [IC, hidden] slabs.
    hidden = params["fc1_w"].shape[0]
    action = params["fc2_w"].shape[0]
    wf1 = params["fc1_w"].reshape(hidden, c3, oh3, ow3)
    wf1 = jnp.transpose(wf1, (2, 3, 1, 0)).reshape(n_pos, c3, hidden)
    wf1 = wf1.astype(jnp.bfloat16)                                 # [4, 32, hidden]
    b1 = params["fc1_b"].reshape(1, hidden).astype(jnp.float32)
    wf2 = params["fc2_w"].T.astype(jnp.bfloat16)                   # [hidden, action]
    b2 = params["fc2_b"].reshape(1, action).astype(jnp.float32)

    kern = functools.partial(_fused_dqn_kernel, taps=k * k,
                             m2p=m2p, m3p=m3p, n_pos=n_pos)

    out = pl.pallas_call(
        kern,
        out_shape=jax.ShapeDtypeStruct((n, 1, action), jnp.float32),
        grid=(n,),
        in_specs=[
            # per-sample patches stream with the grid; everything else stays
            # VMEM-resident (constant block index across steps).
            pl.BlockSpec((1, p1_rows, p1.shape[2]), lambda b: (b, 0, 0)),
            pl.BlockSpec(w1m.shape, lambda b: (0, 0)),
            pl.BlockSpec(s1r.shape, lambda b: (0, 0)),
            pl.BlockSpec(g2.shape, lambda b: (0, 0)),
            pl.BlockSpec(w2t.shape, lambda b: (0, 0, 0)),
            pl.BlockSpec(s2r.shape, lambda b: (0, 0)),
            pl.BlockSpec(g3.shape, lambda b: (0, 0)),
            pl.BlockSpec(w3t.shape, lambda b: (0, 0, 0)),
            pl.BlockSpec(s3r.shape, lambda b: (0, 0)),
            pl.BlockSpec(wf1.shape, lambda b: (0, 0, 0)),
            pl.BlockSpec(b1.shape, lambda b: (0, 0)),
            pl.BlockSpec(wf2.shape, lambda b: (0, 0)),
            pl.BlockSpec(b2.shape, lambda b: (0, 0)),
        ],
        out_specs=pl.BlockSpec((1, 1, action), lambda b: (b, 0, 0)),
        compiler_params=pltpu.CompilerParams(
            dimension_semantics=("parallel",)),
    )(p1, w1m, s1r, g2, w2t, s2r, g3, w3t, s3r, wf1, b1, wf2, b2)
    return out.reshape(n, action)


# ----------------------------------------------------------------------------
# Parameter construction (deterministic, synthetic)
# ----------------------------------------------------------------------------
def make_params(key, hidden_size, action_space, conv_output_size):
    specs = {
        "conv1_w": (16, 3, 5, 5), "conv1_b": (16,),
        "conv2_w": (32, 16, 5, 5), "conv2_b": (32,),
        "conv3_w": (32, 32, 5, 5), "conv3_b": (32,),
        "fc1_w": (hidden_size, conv_output_size), "fc1_b": (hidden_size,),
        "fc2_w": (action_space, hidden_size), "fc2_b": (action_space,),
    }
    params = {}
    keys = jax.random.split(key, len(specs) + 12)
    for i, (name, shape) in enumerate(specs.items()):
        params[name] = 0.1 * jax.random.normal(keys[i], shape, dtype=jnp.float32)
    k_extra = keys[len(specs):]
    for li, ch in zip((1, 2, 3), (16, 32, 32)):
        kg, kb, km, kv = jax.random.split(k_extra[li], 4)
        params[f"bn{li}_gamma"] = 1.0 + 0.1 * jax.random.normal(kg, (ch,), dtype=jnp.float32)
        params[f"bn{li}_beta"] = 0.1 * jax.random.normal(kb, (ch,), dtype=jnp.float32)
        params[f"bn{li}_mean"] = 0.05 * jax.random.normal(km, (ch,), dtype=jnp.float32)
        params[f"bn{li}_var"] = 0.5 + jax.random.uniform(kv, (ch,), dtype=jnp.float32)
    return params


# ----------------------------------------------------------------------------
# Reference: canonical NCHW path (lax.conv + PyTorch flatten + plain matmuls),
# with operands rounded to bf16 to match the kernel's MXU precision.
# ----------------------------------------------------------------------------
def reference_forward(x, params):
    def q(v):  # mirror the kernel's bf16 operand rounding (accumulation f32)
        return v.astype(jnp.bfloat16).astype(jnp.float32)

    h = x
    for li in (1, 2, 3):
        wf, shift = _fold_bn(params[f"conv{li}_w"], params[f"conv{li}_b"],
                             params[f"bn{li}_gamma"], params[f"bn{li}_beta"],
                             params[f"bn{li}_mean"], params[f"bn{li}_var"])
        y = jax.lax.conv_general_dilated(
            q(h), q(wf), window_strides=(2, 2), padding="VALID",
            dimension_numbers=("NCHW", "OIHW", "NCHW"))
        h = jnp.maximum(y + shift[None, :, None, None], 0.0)
    flat = h.reshape(h.shape[0], -1)                  # PyTorch NCHW .view
    h1 = jnp.maximum(q(flat) @ q(params["fc1_w"]).T + params["fc1_b"], 0.0)
    return q(h1) @ q(params["fc2_w"]).T + params["fc2_b"]


# ----------------------------------------------------------------------------
if __name__ == "__main__":
    # 3-channel NCHW input, w = h = 37 so the three 5x5/stride-2 convs give
    # 37 -> 17 -> 7 -> 2, i.e. conv_output_size = 2*2*32 = 128.
    batch = 2
    in_ch = 3
    w = h = 37
    hidden_size = 32
    action_space = 4

    def conv_size_out(v, k=5, s=2):
        return (v - k) // s + 1

    convw = conv_size_out(conv_size_out(conv_size_out(w)))
    convh = conv_size_out(conv_size_out(conv_size_out(h)))
    conv_output_size = convw * convh * 32  # = 128

    key = jax.random.PRNGKey(0)
    kx, kp = jax.random.split(key)
    x = jax.random.normal(kx, (batch, in_ch, h, w), dtype=jnp.float32)
    params = make_params(kp, hidden_size, action_space, conv_output_size)

    fwd = jax.jit(object_dqn_forward)
    out = jax.block_until_ready(fwd(x, params))
    assert out.shape == (batch, action_space), out.shape

    ref = jax.block_until_ready(jax.jit(reference_forward)(x, params))
    max_err = float(jnp.max(jnp.abs(out - ref)))
    assert jnp.allclose(out, ref, atol=2e-2, rtol=2e-2), max_err

    print("KERNEL_OK")
</pallas_src>

<mosaic_0001>
module attributes {stable_mosaic.version = 11 : i64} {
  func.func @_fused_dqn_kernel(%arg0: i32, %arg1: memref<1x289x75xbf16, #tpu.memory_space<vmem>>, %arg2: memref<75x16xbf16, #tpu.memory_space<vmem>>, %arg3: memref<1x16xf32, #tpu.memory_space<vmem>>, %arg4: memref<1600x289xbf16, #tpu.memory_space<vmem>>, %arg5: memref<25x16x32xbf16, #tpu.memory_space<vmem>>, %arg6: memref<1x32xf32, #tpu.memory_space<vmem>>, %arg7: memref<400x64xbf16, #tpu.memory_space<vmem>>, %arg8: memref<25x32x32xbf16, #tpu.memory_space<vmem>>, %arg9: memref<1x32xf32, #tpu.memory_space<vmem>>, %arg10: memref<4x32x32xbf16, #tpu.memory_space<vmem>>, %arg11: memref<1x32xf32, #tpu.memory_space<vmem>>, %arg12: memref<32x4xbf16, #tpu.memory_space<vmem>>, %arg13: memref<1x4xf32, #tpu.memory_space<vmem>>, %arg14: memref<1x1x4xf32, #tpu.memory_space<vmem>>) attributes {dimension_semantics = [#tpu.dimension_semantics<parallel>], iteration_bounds = array<i64: 2>, scalar_prefetch = 0 : i64, scratch_operands = 0 : i64, tpu.core_type = #tpu.core_type<tc>, window_params = [{transform_indices = @transform_0, window_bounds = array<i64: 1, 289, 75>}, {pipeline_mode = #tpu.pipeline_mode<synchronous>, transform_indices = @transform_1, window_bounds = array<i64: 75, 16>}, {pipeline_mode = #tpu.pipeline_mode<synchronous>, transform_indices = @transform_2, window_bounds = array<i64: 1, 16>}, {pipeline_mode = #tpu.pipeline_mode<synchronous>, transform_indices = @transform_3, window_bounds = array<i64: 1600, 289>}, {pipeline_mode = #tpu.pipeline_mode<synchronous>, transform_indices = @transform_4, window_bounds = array<i64: 25, 16, 32>}, {pipeline_mode = #tpu.pipeline_mode<synchronous>, transform_indices = @transform_5, window_bounds = array<i64: 1, 32>}, {pipeline_mode = #tpu.pipeline_mode<synchronous>, transform_indices = @transform_6, window_bounds = array<i64: 400, 64>}, {pipeline_mode = #tpu.pipeline_mode<synchronous>, transform_indices = @transform_7, window_bounds = array<i64: 25, 32, 32>}, {pipeline_mode = #tpu.pipeline_mode<synchronous>, transform_indices = @transform_8, window_bounds = array<i64: 1, 32>}, {pipeline_mode = #tpu.pipeline_mode<synchronous>, transform_indices = @transform_9, window_bounds = array<i64: 4, 32, 32>}, {pipeline_mode = #tpu.pipeline_mode<synchronous>, transform_indices = @transform_10, window_bounds = array<i64: 1, 32>}, {pipeline_mode = #tpu.pipeline_mode<synchronous>, transform_indices = @transform_11, window_bounds = array<i64: 32, 4>}, {pipeline_mode = #tpu.pipeline_mode<synchronous>, transform_indices = @transform_12, window_bounds = array<i64: 1, 4>}, {transform_indices = @transform_13, window_bounds = array<i64: 1, 1, 4>}]} {
    %c0 = arith.constant 0 : index
    %c0_0 = arith.constant 0 : index
    %c0_1 = arith.constant 0 : index
    %0 = vector.load %arg1[%c0, %c0_0, %c0_1] : memref<1x289x75xbf16, #tpu.memory_space<vmem>>, vector<1x289x75xbf16>
    %1 = vector.shape_cast %0 : vector<1x289x75xbf16> to vector<289x75xbf16>
    %c0_2 = arith.constant 0 : index
    %c0_3 = arith.constant 0 : index
    %2 = vector.load %arg2[%c0_2, %c0_3] : memref<75x16xbf16, #tpu.memory_space<vmem>>, vector<75x16xbf16>
    %cst = arith.constant dense<0.000000e+00> : vector<289x16xf32>
    %3 = tpu.matmul %1, %2, %cst {dimension_numbers = #tpu.dot_dimension_numbers<[1], [0], [0], [1], [0, 0, 1, 1], [], []>} : vector<289x75xbf16>, vector<75x16xbf16>, vector<289x16xf32> -> vector<289x16xf32>
    %c0_4 = arith.constant 0 : index
    %c0_5 = arith.constant 0 : index
    %4 = vector.load %arg3[%c0_4, %c0_5] : memref<1x16xf32, #tpu.memory_space<vmem>>, vector<1x16xf32>
    %5 = vector.broadcast %4 : vector<1x16xf32> to vector<289x16xf32>
    %6 = arith.addf %3, %5 : vector<289x16xf32>
    %cst_6 = arith.constant 0.000000e+00 : f32
    %7 = vector.broadcast %cst_6 : f32 to vector<289x16xf32>
    %8 = arith.maximumf %6, %7 : vector<289x16xf32>
    %9 = arith.truncf %8 : vector<289x16xf32> to vector<289x16xbf16>
    %c0_7 = arith.constant 0 : index
    %c0_8 = arith.constant 0 : index
    %10 = vector.load %arg4[%c0_7, %c0_8] : memref<1600x289xbf16, #tpu.memory_space<vmem>>, vector<1600x289xbf16>
    %cst_9 = arith.constant dense<0.000000e+00> : vector<1600x16xf32>
    %11 = tpu.matmul %10, %9, %cst_9 {dimension_numbers = #tpu.dot_dimension_numbers<[1], [0], [0], [1], [0, 0, 1, 1], [], []>} : vector<1600x289xbf16>, vector<289x16xbf16>, vector<1600x16xf32> -> vector<1600x16xf32>
    %12 = arith.truncf %11 : vector<1600x16xf32> to vector<1600x16xbf16>
    %cst_10 = arith.constant 0.000000e+00 : f32
    %13 = vector.broadcast %cst_10 : f32 to vector<64x32xf32>
    %14 = vector.extract_strided_slice %12 {offsets = [0, 0], sizes = [64, 16], strides = [1, 1]} : vector<1600x16xbf16> to vector<64x16xbf16>
    %c0_11 = arith.constant 0 : index
    %c0_12 = arith.constant 0 : index
    %c0_13 = arith.constant 0 : index
    %15 = vector.load %arg5[%c0_11, %c0_12, %c0_13] : memref<25x16x32xbf16, #tpu.memory_space<vmem>>, vector<1x16x32xbf16>
    %16 = vector.shape_cast %15 : vector<1x16x32xbf16> to vector<16x32xbf16>
    %cst_14 = arith.constant dense<0.000000e+00> : vector<64x32xf32>
    %17 = tpu.matmul %14, %16, %cst_14 {dimension_numbers = #tpu.dot_dimension_numbers<[1], [0], [0], [1], [0, 0, 1, 1], [], []>} : vector<64x16xbf16>, vector<16x32xbf16>, vector<64x32xf32> -> vector<64x32xf32>
    %18 = arith.addf %13, %17 : vector<64x32xf32>
    %19 = vector.extract_strided_slice %12 {offsets = [64, 0], sizes = [64, 16], strides = [1, 1]} : vector<1600x16xbf16> to vector<64x16xbf16>
    %c1 = arith.constant 1 : index
    %c0_15 = arith.constant 0 : index
    %c0_16 = arith.constant 0 : index
    %20 = vector.load %arg5[%c1, %c0_15, %c0_16] : memref<25x16x32xbf16, #tpu.memory_space<vmem>>, vector<1x16x32xbf16>
    %21 = vector.shape_cast %20 : vector<1x16x32xbf16> to vector<16x32xbf16>
    %cst_17 = arith.constant dense<0.000000e+00> : vector<64x32xf32>
    %22 = tpu.matmul %19, %21, %cst_17 {dimension_numbers = #tpu.dot_dimension_numbers<[1], [0], [0], [1], [0, 0, 1, 1], [], []>} : vector<64x16xbf16>, vector<16x32xbf16>, vector<64x32xf32> -> vector<64x32xf32>
    %23 = arith.addf %18, %22 : vector<64x32xf32>
    %24 = vector.extract_strided_slice %12 {offsets = [128, 0], sizes = [64, 16], strides = [1, 1]} : vector<1600x16xbf16> to vector<64x16xbf16>
    %c2 = arith.constant 2 : index
    %c0_18 = arith.constant 0 : index
    %c0_19 = arith.constant 0 : index
    %25 = vector.load %arg5[%c2, %c0_18, %c0_19] : memref<25x16x32xbf16, #tpu.memory_space<vmem>>, vector<1x16x32xbf16>
    %26 = vector.shape_cast %25 : vector<1x16x32xbf16> to vector<16x32xbf16>
    %cst_20 = arith.constant dense<0.000000e+00> : vector<64x32xf32>
    %27 = tpu.matmul %24, %26, %cst_20 {dimension_numbers = #tpu.dot_dimension_numbers<[1], [0], [0], [1], [0, 0, 1, 1], [], []>} : vector<64x16xbf16>, vector<16x32xbf16>, vector<64x32xf32> -> vector<64x32xf32>
    %28 = arith.addf %23, %27 : vector<64x32xf32>
    %29 = vector.extract_strided_slice %12 {offsets = [192, 0], sizes = [64, 16], strides = [1, 1]} : vector<1600x16xbf16> to vector<64x16xbf16>
    %c3 = arith.constant 3 : index
    %c0_21 = arith.constant 0 : index
    %c0_22 = arith.constant 0 : index
    %30 = vector.load %arg5[%c3, %c0_21, %c0_22] : memref<25x16x32xbf16, #tpu.memory_space<vmem>>, vector<1x16x32xbf16>
    %31 = vector.shape_cast %30 : vector<1x16x32xbf16> to vector<16x32xbf16>
    %cst_23 = arith.constant dense<0.000000e+00> : vector<64x32xf32>
    %32 = tpu.matmul %29, %31, %cst_23 {dimension_numbers = #tpu.dot_dimension_numbers<[1], [0], [0], [1], [0, 0, 1, 1], [], []>} : vector<64x16xbf16>, vector<16x32xbf16>, vector<64x32xf32> -> vector<64x32xf32>
    %33 = arith.addf %28, %32 : vector<64x32xf32>
    %34 = vector.extract_strided_slice %12 {offsets = [256, 0], sizes = [64, 16], strides = [1, 1]} : vector<1600x16xbf16> to vector<64x16xbf16>
    %c4 = arith.constant 4 : index
    %c0_24 = arith.constant 0 : index
    %c0_25 = arith.constant 0 : index
    %35 = vector.load %arg5[%c4, %c0_24, %c0_25] : memref<25x16x32xbf16, #tpu.memory_space<vmem>>, vector<1x16x32xbf16>
    %36 = vector.shape_cast %35 : vector<1x16x32xbf16> to vector<16x32xbf16>
    %cst_26 = arith.constant dense<0.000000e+00> : vector<64x32xf32>
    %37 = tpu.matmul %34, %36, %cst_26 {dimension_numbers = #tpu.dot_dimension_numbers<[1], [0], [0], [1], [0, 0, 1, 1], [], []>} : vector<64x16xbf16>, vector<16x32xbf16>, vector<64x32xf32> -> vector<64x32xf32>
    %38 = arith.addf %33, %37 : vector<64x32xf32>
    %39 = vector.extract_strided_slice %12 {offsets = [320, 0], sizes = [64, 16], strides = [1, 1]} : vector<1600x16xbf16> to vector<64x16xbf16>
    %c5 = arith.constant 5 : index
    %c0_27 = arith.constant 0 : index
    %c0_28 = arith.constant 0 : index
    %40 = vector.load %arg5[%c5, %c0_27, %c0_28] : memref<25x16x32xbf16, #tpu.memory_space<vmem>>, vector<1x16x32xbf16>
    %41 = vector.shape_cast %40 : vector<1x16x32xbf16> to vector<16x32xbf16>
    %cst_29 = arith.constant dense<0.000000e+00> : vector<64x32xf32>
    %42 = tpu.matmul %39, %41, %cst_29 {dimension_numbers = #tpu.dot_dimension_numbers<[1], [0], [0], [1], [0, 0, 1, 1], [], []>} : vector<64x16xbf16>, vector<16x32xbf16>, vector<64x32xf32> -> vector<64x32xf32>
    %43 = arith.addf %38, %42 : vector<64x32xf32>
    %44 = vector.extract_strided_slice %12 {offsets = [384, 0], sizes = [64, 16], strides = [1, 1]} : vector<1600x16xbf16> to vector<64x16xbf16>
    %c6 = arith.constant 6 : index
    %c0_30 = arith.constant 0 : index
    %c0_31 = arith.constant 0 : index
    %45 = vector.load %arg5[%c6, %c0_30, %c0_31] : memref<25x16x32xbf16, #tpu.memory_space<vmem>>, vector<1x16x32xbf16>
    %46 = vector.shape_cast %45 : vector<1x16x32xbf16> to vector<16x32xbf16>
    %cst_32 = arith.constant dense<0.000000e+00> : vector<64x32xf32>
    %47 = tpu.matmul %44, %46, %cst_32 {dimension_numbers = #tpu.dot_dimension_numbers<[1], [0], [0], [1], [0, 0, 1, 1], [], []>} : vector<64x16xbf16>, vector<16x32xbf16>, vector<64x32xf32> -> vector<64x32xf32>
    %48 = arith.addf %43, %47 : vector<64x32xf32>
    %49 = vector.extract_strided_slice %12 {offsets = [448, 0], sizes = [64, 16], strides = [1, 1]} : vector<1600x16xbf16> to vector<64x16xbf16>
    %c7 = arith.constant 7 : index
    %c0_33 = arith.constant 0 : index
    %c0_34 = arith.constant 0 : index
    %50 = vector.load %arg5[%c7, %c0_33, %c0_34] : memref<25x16x32xbf16, #tpu.memory_space<vmem>>, vector<1x16x32xbf16>
    %51 = vector.shape_cast %50 : vector<1x16x32xbf16> to vector<16x32xbf16>
    %cst_35 = arith.constant dense<0.000000e+00> : vector<64x32xf32>
    %52 = tpu.matmul %49, %51, %cst_35 {dimension_numbers = #tpu.dot_dimension_numbers<[1], [0], [0], [1], [0, 0, 1, 1], [], []>} : vector<64x16xbf16>, vector<16x32xbf16>, vector<64x32xf32> -> vector<64x32xf32>
    %53 = arith.addf %48, %52 : vector<64x32xf32>
    %54 = vector.extract_strided_slice %12 {offsets = [512, 0], sizes = [64, 16], strides = [1, 1]} : vector<1600x16xbf16> to vector<64x16xbf16>
    %c8 = arith.constant 8 : index
    %c0_36 = arith.constant 0 : index
    %c0_37 = arith.constant 0 : index
    %55 = vector.load %arg5[%c8, %c0_36, %c0_37] : memref<25x16x32xbf16, #tpu.memory_space<vmem>>, vector<1x16x32xbf16>
    %56 = vector.shape_cast %55 : vector<1x16x32xbf16> to vector<16x32xbf16>
    %cst_38 = arith.constant dense<0.000000e+00> : vector<64x32xf32>
    %57 = tpu.matmul %54, %56, %cst_38 {dimension_numbers = #tpu.dot_dimension_numbers<[1], [0], [0], [1], [0, 0, 1, 1], [], []>} : vector<64x16xbf16>, vector<16x32xbf16>, vector<64x32xf32> -> vector<64x32xf32>
    %58 = arith.addf %53, %57 : vector<64x32xf32>
    %59 = vector.extract_strided_slice %12 {offsets = [576, 0], sizes = [64, 16], strides = [1, 1]} : vector<1600x16xbf16> to vector<64x16xbf16>
    %c9 = arith.constant 9 : index
    %c0_39 = arith.constant 0 : index
    %c0_40 = arith.constant 0 : index
    %60 = vector.load %arg5[%c9, %c0_39, %c0_40] : memref<25x16x32xbf16, #tpu.memory_space<vmem>>, vector<1x16x32xbf16>
    %61 = vector.shape_cast %60 : vector<1x16x32xbf16> to vector<16x32xbf16>
    %cst_41 = arith.constant dense<0.000000e+00> : vector<64x32xf32>
    %62 = tpu.matmul %59, %61, %cst_41 {dimension_numbers = #tpu.dot_dimension_numbers<[1], [0], [0], [1], [0, 0, 1, 1], [], []>} : vector<64x16xbf16>, vector<16x32xbf16>, vector<64x32xf32> -> vector<64x32xf32>
    %63 = arith.addf %58, %62 : vector<64x32xf32>
    %64 = vector.extract_strided_slice %12 {offsets = [640, 0], sizes = [64, 16], strides = [1, 1]} : vector<1600x16xbf16> to vector<64x16xbf16>
    %c10 = arith.constant 10 : index
    %c0_42 = arith.constant 0 : index
    %c0_43 = arith.constant 0 : index
    %65 = vector.load %arg5[%c10, %c0_42, %c0_43] : memref<25x16x32xbf16, #tpu.memory_space<vmem>>, vector<1x16x32xbf16>
    %66 = vector.shape_cast %65 : vector<1x16x32xbf16> to vector<16x32xbf16>
    %cst_44 = arith.constant dense<0.000000e+00> : vector<64x32xf32>
    %67 = tpu.matmul %64, %66, %cst_44 {dimension_numbers = #tpu.dot_dimension_numbers<[1], [0], [0], [1], [0, 0, 1, 1], [], []>} : vector<64x16xbf16>, vector<16x32xbf16>, vector<64x32xf32> -> vector<64x32xf32>
    %68 = arith.addf %63, %67 : vector<64x32xf32>
    %69 = vector.extract_strided_slice %12 {offsets = [704, 0], sizes = [64, 16], strides = [1, 1]} : vector<1600x16xbf16> to vector<64x16xbf16>
    %c11 = arith.constant 11 : index
    %c0_45 = arith.constant 0 : index
    %c0_46 = arith.constant 0 : index
    %70 = vector.load %arg5[%c11, %c0_45, %c0_46] : memref<25x16x32xbf16, #tpu.memory_space<vmem>>, vector<1x16x32xbf16>
    %71 = vector.shape_cast %70 : vector<1x16x32xbf16> to vector<16x32xbf16>
    %cst_47 = arith.constant dense<0.000000e+00> : vector<64x32xf32>
    %72 = tpu.matmul %69, %71, %cst_47 {dimension_numbers = #tpu.dot_dimension_numbers<[1], [0], [0], [1], [0, 0, 1, 1], [], []>} : vector<64x16xbf16>, vector<16x32xbf16>, vector<64x32xf32> -> vector<64x32xf32>
    %73 = arith.addf %68, %72 : vector<64x32xf32>
    %74 = vector.extract_strided_slice %12 {offsets = [768, 0], sizes = [64, 16], strides = [1, 1]} : vector<1600x16xbf16> to vector<64x16xbf16>
    %c12 = arith.constant 12 : index
    %c0_48 = arith.constant 0 : index
    %c0_49 = arith.constant 0 : index
    %75 = vector.load %arg5[%c12, %c0_48, %c0_49] : memref<25x16x32xbf16, #tpu.memory_space<vmem>>, vector<1x16x32xbf16>
    %76 = vector.shape_cast %75 : vector<1x16x32xbf16> to vector<16x32xbf16>
    %cst_50 = arith.constant dense<0.000000e+00> : vector<64x32xf32>
    %77 = tpu.matmul %74, %76, %cst_50 {dimension_numbers = #tpu.dot_dimension_numbers<[1], [0], [0], [1], [0, 0, 1, 1], [], []>} : vector<64x16xbf16>, vector<16x32xbf16>, vector<64x32xf32> -> vector<64x32xf32>
    %78 = arith.addf %73, %77 : vector<64x32xf32>
    %79 = vector.extract_strided_slice %12 {offsets = [832, 0], sizes = [64, 16], strides = [1, 1]} : vector<1600x16xbf16> to vector<64x16xbf16>
    %c13 = arith.constant 13 : index
    %c0_51 = arith.constant 0 : index
    %c0_52 = arith.constant 0 : index
    %80 = vector.load %arg5[%c13, %c0_51, %c0_52] : memref<25x16x32xbf16, #tpu.memory_space<vmem>>, vector<1x16x32xbf16>
    %81 = vector.shape_cast %80 : vector<1x16x32xbf16> to vector<16x32xbf16>
    %cst_53 = arith.constant dense<0.000000e+00> : vector<64x32xf32>
    %82 = tpu.matmul %79, %81, %cst_53 {dimension_numbers = #tpu.dot_dimension_numbers<[1], [0], [0], [1], [0, 0, 1, 1], [], []>} : vector<64x16xbf16>, vector<16x32xbf16>, vector<64x32xf32> -> vector<64x32xf32>
    %83 = arith.addf %78, %82 : vector<64x32xf32>
    %84 = vector.extract_strided_slice %12 {offsets = [896, 0], sizes = [64, 16], strides = [1, 1]} : vector<1600x16xbf16> to vector<64x16xbf16>
    %c14 = arith.constant 14 : index
    %c0_54 = arith.constant 0 : index
    %c0_55 = arith.constant 0 : index
    %85 = vector.load %arg5[%c14, %c0_54, %c0_55] : memref<25x16x32xbf16, #tpu.memory_space<vmem>>, vector<1x16x32xbf16>
    %86 = vector.shape_cast %85 : vector<1x16x32xbf16> to vector<16x32xbf16>
    %cst_56 = arith.constant dense<0.000000e+00> : vector<64x32xf32>
    %87 = tpu.matmul %84, %86, %cst_56 {dimension_numbers = #tpu.dot_dimension_numbers<[1], [0], [0], [1], [0, 0, 1, 1], [], []>} : vector<64x16xbf16>, vector<16x32xbf16>, vector<64x32xf32> -> vector<64x32xf32>
    %88 = arith.addf %83, %87 : vector<64x32xf32>
    %89 = vector.extract_strided_slice %12 {offsets = [960, 0], sizes = [64, 16], strides = [1, 1]} : vector<1600x16xbf16> to vector<64x16xbf16>
    %c15 = arith.constant 15 : index
    %c0_57 = arith.constant 0 : index
    %c0_58 = arith.constant 0 : index
    %90 = vector.load %arg5[%c15, %c0_57, %c0_58] : memref<25x16x32xbf16, #tpu.memory_space<vmem>>, vector<1x16x32xbf16>
    %91 = vector.shape_cast %90 : vector<1x16x32xbf16> to vector<16x32xbf16>
    %cst_59 = arith.constant dense<0.000000e+00> : vector<64x32xf32>
    %92 = tpu.matmul %89, %91, %cst_59 {dimension_numbers = #tpu.dot_dimension_numbers<[1], [0], [0], [1], [0, 0, 1, 1], [], []>} : vector<64x16xbf16>, vector<16x32xbf16>, vector<64x32xf32> -> vector<64x32xf32>
    %93 = arith.addf %88, %92 : vector<64x32xf32>
    %94 = vector.extract_strided_slice %12 {offsets = [1024, 0], sizes = [64, 16], strides = [1, 1]} : vector<1600x16xbf16> to vector<64x16xbf16>
    %c16 = arith.constant 16 : index
    %c0_60 = arith.constant 0 : index
    %c0_61 = arith.constant 0 : index
    %95 = vector.load %arg5[%c16, %c0_60, %c0_61] : memref<25x16x32xbf16, #tpu.memory_space<vmem>>, vector<1x16x32xbf16>
    %96 = vector.shape_cast %95 : vector<1x16x32xbf16> to vector<16x32xbf16>
    %cst_62 = arith.constant dense<0.000000e+00> : vector<64x32xf32>
    %97 = tpu.matmul %94, %96, %cst_62 {dimension_numbers = #tpu.dot_dimension_numbers<[1], [0], [0], [1], [0, 0, 1, 1], [], []>} : vector<64x16xbf16>, vector<16x32xbf16>, vector<64x32xf32> -> vector<64x32xf32>
    %98 = arith.addf %93, %97 : vector<64x32xf32>
    %99 = vector.extract_strided_slice %12 {offsets = [1088, 0], sizes = [64, 16], strides = [1, 1]} : vector<1600x16xbf16> to vector<64x16xbf16>
    %c17 = arith.constant 17 : index
    %c0_63 = arith.constant 0 : index
    %c0_64 = arith.constant 0 : index
    %100 = vector.load %arg5[%c17, %c0_63, %c0_64] : memref<25x16x32xbf16, #tpu.memory_space<vmem>>, vector<1x16x32xbf16>
    %101 = vector.shape_cast %100 : vector<1x16x32xbf16> to vector<16x32xbf16>
    %cst_65 = arith.constant dense<0.000000e+00> : vector<64x32xf32>
    %102 = tpu.matmul %99, %101, %cst_65 {dimension_numbers = #tpu.dot_dimension_numbers<[1], [0], [0], [1], [0, 0, 1, 1], [], []>} : vector<64x16xbf16>, vector<16x32xbf16>, vector<64x32xf32> -> vector<64x32xf32>
    %103 = arith.addf %98, %102 : vector<64x32xf32>
    %104 = vector.extract_strided_slice %12 {offsets = [1152, 0], sizes = [64, 16], strides = [1, 1]} : vector<1600x16xbf16> to vector<64x16xbf16>
    %c18 = arith.constant 18 : index
    %c0_66 = arith.constant 0 : index
    %c0_67 = arith.constant 0 : index
    %105 = vector.load %arg5[%c18, %c0_66, %c0_67] : memref<25x16x32xbf16, #tpu.memory_space<vmem>>, vector<1x16x32xbf16>
    %106 = vector.shape_cast %105 : vector<1x16x32xbf16> to vector<16x32xbf16>
    %cst_68 = arith.constant dense<0.000000e+00> : vector<64x32xf32>
    %107 = tpu.matmul %104, %106, %cst_68 {dimension_numbers = #tpu.dot_dimension_numbers<[1], [0], [0], [1], [0, 0, 1, 1], [], []>} : vector<64x16xbf16>, vector<16x32xbf16>, vector<64x32xf32> -> vector<64x32xf32>
    %108 = arith.addf %103, %107 : vector<64x32xf32>
    %109 = vector.extract_strided_slice %12 {offsets = [1216, 0], sizes = [64, 16], strides = [1, 1]} : vector<1600x16xbf16> to vector<64x16xbf16>
    %c19 = arith.constant 19 : index
    %c0_69 = arith.constant 0 : index
    %c0_70 = arith.constant 0 : index
    %110 = vector.load %arg5[%c19, %c0_69, %c0_70] : memref<25x16x32xbf16, #tpu.memory_space<vmem>>, vector<1x16x32xbf16>
    %111 = vector.shape_cast %110 : vector<1x16x32xbf16> to vector<16x32xbf16>
    %cst_71 = arith.constant dense<0.000000e+00> : vector<64x32xf32>
    %112 = tpu.matmul %109, %111, %cst_71 {dimension_numbers = #tpu.dot_dimension_numbers<[1], [0], [0], [1], [0, 0, 1, 1], [], []>} : vector<64x16xbf16>, vector<16x32xbf16>, vector<64x32xf32> -> vector<64x32xf32>
    %113 = arith.addf %108, %112 : vector<64x32xf32>
    %114 = vector.extract_strided_slice %12 {offsets = [1280, 0], sizes = [64, 16], strides = [1, 1]} : vector<1600x16xbf16> to vector<64x16xbf16>
    %c20 = arith.constant 20 : index
    %c0_72 = arith.constant 0 : index
    %c0_73 = arith.constant 0 : index
    %115 = vector.load %arg5[%c20, %c0_72, %c0_73] : memref<25x16x32xbf16, #tpu.memory_space<vmem>>, vector<1x16x32xbf16>
    %116 = vector.shape_cast %115 : vector<1x16x32xbf16> to vector<16x32xbf16>
    %cst_74 = arith.constant dense<0.000000e+00> : vector<64x32xf32>
    %117 = tpu.matmul %114, %116, %cst_74 {dimension_numbers = #tpu.dot_dimension_numbers<[1], [0], [0], [1], [0, 0, 1, 1], [], []>} : vector<64x16xbf16>, vector<16x32xbf16>, vector<64x32xf32> -> vector<64x32xf32>
    %118 = arith.addf %113, %117 : vector<64x32xf32>
    %119 = vector.extract_strided_slice %12 {offsets = [1344, 0], sizes = [64, 16], strides = [1, 1]} : vector<1600x16xbf16> to vector<64x16xbf16>
    %c21 = arith.constant 21 : index
    %c0_75 = arith.constant 0 : index
    %c0_76 = arith.constant 0 : index
    %120 = vector.load %arg5[%c21, %c0_75, %c0_76] : memref<25x16x32xbf16, #tpu.memory_space<vmem>>, vector<1x16x32xbf16>
    %121 = vector.shape_cast %120 : vector<1x16x32xbf16> to vector<16x32xbf16>
    %cst_77 = arith.constant dense<0.000000e+00> : vector<64x32xf32>
    %122 = tpu.matmul %119, %121, %cst_77 {dimension_numbers = #tpu.dot_dimension_numbers<[1], [0], [0], [1], [0, 0, 1, 1], [], []>} : vector<64x16xbf16>, vector<16x32xbf16>, vector<64x32xf32> -> vector<64x32xf32>
    %123 = arith.addf %118, %122 : vector<64x32xf32>
    %124 = vector.extract_strided_slice %12 {offsets = [1408, 0], sizes = [64, 16], strides = [1, 1]} : vector<1600x16xbf16> to vector<64x16xbf16>
    %c22 = arith.constant 22 : index
    %c0_78 = arith.constant 0 : index
    %c0_79 = arith.constant 0 : index
    %125 = vector.load %arg5[%c22, %c0_78, %c0_79] : memref<25x16x32xbf16, #tpu.memory_space<vmem>>, vector<1x16x32xbf16>
    %126 = vector.shape_cast %125 : vector<1x16x32xbf16> to vector<16x32xbf16>
    %cst_80 = arith.constant dense<0.000000e+00> : vector<64x32xf32>
    %127 = tpu.matmul %124, %126, %cst_80 {dimension_numbers = #tpu.dot_dimension_numbers<[1], [0], [0], [1], [0, 0, 1, 1], [], []>} : vector<64x16xbf16>, vector<16x32xbf16>, vector<64x32xf32> -> vector<64x32xf32>
    %128 = arith.addf %123, %127 : vector<64x32xf32>
    %129 = vector.extract_strided_slice %12 {offsets = [1472, 0], sizes = [64, 16], strides = [1, 1]} : vector<1600x16xbf16> to vector<64x16xbf16>
    %c23 = arith.constant 23 : index
    %c0_81 = arith.constant 0 : index
    %c0_82 = arith.constant 0 : index
    %130 = vector.load %arg5[%c23, %c0_81, %c0_82] : memref<25x16x32xbf16, #tpu.memory_space<vmem>>, vector<1x16x32xbf16>
    %131 = vector.shape_cast %130 : vector<1x16x32xbf16> to vector<16x32xbf16>
    %cst_83 = arith.constant dense<0.000000e+00> : vector<64x32xf32>
    %132 = tpu.matmul %129, %131, %cst_83 {dimension_numbers = #tpu.dot_dimension_numbers<[1], [0], [0], [1], [0, 0, 1, 1], [], []>} : vector<64x16xbf16>, vector<16x32xbf16>, vector<64x32xf32> -> vector<64x32xf32>
    %133 = arith.addf %128, %132 : vector<64x32xf32>
    %134 = vector.extract_strided_slice %12 {offsets = [1536, 0], sizes = [64, 16], strides = [1, 1]} : vector<1600x16xbf16> to vector<64x16xbf16>
    %c24 = arith.constant 24 : index
    %c0_84 = arith.constant 0 : index
    %c0_85 = arith.constant 0 : index
    %135 = vector.load %arg5[%c24, %c0_84, %c0_85] : memref<25x16x32xbf16, #tpu.memory_space<vmem>>, vector<1x16x32xbf16>
    %136 = vector.shape_cast %135 : vector<1x16x32xbf16> to vector<16x32xbf16>
    %cst_86 = arith.constant dense<0.000000e+00> : vector<64x32xf32>
    %137 = tpu.matmul %134, %136, %cst_86 {dimension_numbers = #tpu.dot_dimension_numbers<[1], [0], [0], [1], [0, 0, 1, 1], [], []>} : vector<64x16xbf16>, vector<16x32xbf16>, vector<64x32xf32> -> vector<64x32xf32>
    %138 = arith.addf %133, %137 : vector<64x32xf32>
    %c0_87 = arith.constant 0 : index
    %c0_88 = arith.constant 0 : index
    %139 = vector.load %arg6[%c0_87, %c0_88] : memref<1x32xf32, #tpu.memory_space<vmem>>, vector<1x32xf32>
    %140 = vector.broadcast %139 : vector<1x32xf32> to vector<64x32xf32>
    %141 = arith.addf %138, %140 : vector<64x32xf32>
    %cst_89 = arith.constant 0.000000e+00 : f32
    %142 = vector.broadcast %cst_89 : f32 to vector<64x32xf32>
    %143 = arith.maximumf %141, %142 : vector<64x32xf32>
    %144 = arith.truncf %143 : vector<64x32xf32> to vector<64x32xbf16>
    %c0_90 = arith.constant 0 : index
    %c0_91 = arith.constant 0 : index
    %145 = vector.load %arg7[%c0_90, %c0_91] : memref<400x64xbf16, #tpu.memory_space<vmem>>, vector<400x64xbf16>
    %cst_92 = arith.constant dense<0.000000e+00> : vector<400x32xf32>
    %146 = tpu.matmul %145, %144, %cst_92 {dimension_numbers = #tpu.dot_dimension_numbers<[1], [0], [0], [1], [0, 0, 1, 1], [], []>} : vector<400x64xbf16>, vector<64x32xbf16>, vector<400x32xf32> -> vector<400x32xf32>
    %147 = arith.truncf %146 : vector<400x32xf32> to vector<400x32xbf16>
    %cst_93 = arith.constant 0.000000e+00 : f32
    %148 = vector.broadcast %cst_93 : f32 to vector<16x32xf32>
    %149 = vector.extract_strided_slice %147 {offsets = [0, 0], sizes = [16, 32], strides = [1, 1]} : vector<400x32xbf16> to vector<16x32xbf16>
    %c0_94 = arith.constant 0 : index
    %c0_95 = arith.constant 0 : index
    %c0_96 = arith.constant 0 : index
    %150 = vector.load %arg8[%c0_94, %c0_95, %c0_96] : memref<25x32x32xbf16, #tpu.memory_space<vmem>>, vector<1x32x32xbf16>
    %151 = vector.shape_cast %150 : vector<1x32x32xbf16> to vector<32x32xbf16>
    %cst_97 = arith.constant dense<0.000000e+00> : vector<16x32xf32>
    %152 = tpu.matmul %149, %151, %cst_97 {dimension_numbers = #tpu.dot_dimension_numbers<[1], [0], [0], [1], [0, 0, 1, 1], [], []>} : vector<16x32xbf16>, vector<32x32xbf16>, vector<16x32xf32> -> vector<16x32xf32>
    %153 = arith.addf %148, %152 : vector<16x32xf32>
    %154 = vector.extract_strided_slice %147 {offsets = [16, 0], sizes = [16, 32], strides = [1, 1]} : vector<400x32xbf16> to vector<16x32xbf16>
    %c1_98 = arith.constant 1 : index
    %c0_99 = arith.constant 0 : index
    %c0_100 = arith.constant 0 : index
    %155 = vector.load %arg8[%c1_98, %c0_99, %c0_100] : memref<25x32x32xbf16, #tpu.memory_space<vmem>>, vector<1x32x32xbf16>
    %156 = vector.shape_cast %155 : vector<1x32x32xbf16> to vector<32x32xbf16>
    %cst_101 = arith.constant dense<0.000000e+00> : vector<16x32xf32>
    %157 = tpu.matmul %154, %156, %cst_101 {dimension_numbers = #tpu.dot_dimension_numbers<[1], [0], [0], [1], [0, 0, 1, 1], [], []>} : vector<16x32xbf16>, vector<32x32xbf16>, vector<16x32xf32> -> vector<16x32xf32>
    %158 = arith.addf %153, %157 : vector<16x32xf32>
    %159 = vector.extract_strided_slice %147 {offsets = [32, 0], sizes = [16, 32], strides = [1, 1]} : vector<400x32xbf16> to vector<16x32xbf16>
    %c2_102 = arith.constant 2 : index
    %c0_103 = arith.constant 0 : index
    %c0_104 = arith.constant 0 : index
    %160 = vector.load %arg8[%c2_102, %c0_103, %c0_104] : memref<25x32x32xbf16, #tpu.memory_space<vmem>>, vector<1x32x32xbf16>
    %161 = vector.shape_cast %160 : vector<1x32x32xbf16> to vector<32x32xbf16>
    %cst_105 = arith.constant dense<0.000000e+00> : vector<16x32xf32>
    %162 = tpu.matmul %159, %161, %cst_105 {dimension_numbers = #tpu.dot_dimension_numbers<[1], [0], [0], [1], [0, 0, 1, 1], [], []>} : vector<16x32xbf16>, vector<32x32xbf16>, vector<16x32xf32> -> vector<16x32xf32>
    %163 = arith.addf %158, %162 : vector<16x32xf32>
    %164 = vector.extract_strided_slice %147 {offsets = [48, 0], sizes = [16, 32], strides = [1, 1]} : vector<400x32xbf16> to vector<16x32xbf16>
    %c3_106 = arith.constant 3 : index
    %c0_107 = arith.constant 0 : index
    %c0_108 = arith.constant 0 : index
    %165 = vector.load %arg8[%c3_106, %c0_107, %c0_108] : memref<25x32x32xbf16, #tpu.memory_space<vmem>>, vector<1x32x32xbf16>
    %166 = vector.shape_cast %165 : vector<1x32x32xbf16> to vector<32x32xbf16>
    %cst_109 = arith.constant dense<0.000000e+00> : vector<16x32xf32>
    %167 = tpu.matmul %164, %166, %cst_109 {dimension_numbers = #tpu.dot_dimension_numbers<[1], [0], [0], [1], [0, 0, 1, 1], [], []>} : vector<16x32xbf16>, vector<32x32xbf16>, vector<16x32xf32> -> vector<16x32xf32>
    %168 = arith.addf %163, %167 : vector<16x32xf32>
    %169 = vector.extract_strided_slice %147 {offsets = [64, 0], sizes = [16, 32], strides = [1, 1]} : vector<400x32xbf16> to vector<16x32xbf16>
    %c4_110 = arith.constant 4 : index
    %c0_111 = arith.constant 0 : index
    %c0_112 = arith.constant 0 : index
    %170 = vector.load %arg8[%c4_110, %c0_111, %c0_112] : memref<25x32x32xbf16, #tpu.memory_space<vmem>>, vector<1x32x32xbf16>
    %171 = vector.shape_cast %170 : vector<1x32x32xbf16> to vector<32x32xbf16>
    %cst_113 = arith.constant dense<0.000000e+00> : vector<16x32xf32>
    %172 = tpu.matmul %169, %171, %cst_113 {dimension_numbers = #tpu.dot_dimension_numbers<[1], [0], [0], [1], [0, 0, 1, 1], [], []>} : vector<16x32xbf16>, vector<32x32xbf16>, vector<16x32xf32> -> vector<16x32xf32>
    %173 = arith.addf %168, %172 : vector<16x32xf32>
    %174 = vector.extract_strided_slice %147 {offsets = [80, 0], sizes = [16, 32], strides = [1, 1]} : vector<400x32xbf16> to vector<16x32xbf16>
    %c5_114 = arith.constant 5 : index
    %c0_115 = arith.constant 0 : index
    %c0_116 = arith.constant 0 : index
    %175 = vector.load %arg8[%c5_114, %c0_115, %c0_116] : memref<25x32x32xbf16, #tpu.memory_space<vmem>>, vector<1x32x32xbf16>
    %176 = vector.shape_cast %175 : vector<1x32x32xbf16> to vector<32x32xbf16>
    %cst_117 = arith.constant dense<0.000000e+00> : vector<16x32xf32>
    %177 = tpu.matmul %174, %176, %cst_117 {dimension_numbers = #tpu.dot_dimension_numbers<[1], [0], [0], [1], [0, 0, 1, 1], [], []>} : vector<16x32xbf16>, vector<32x32xbf16>, vector<16x32xf32> -> vector<16x32xf32>
    %178 = arith.addf %173, %177 : vector<16x32xf32>
    %179 = vector.extract_strided_slice %147 {offsets = [96, 0], sizes = [16, 32], strides = [1, 1]} : vector<400x32xbf16> to vector<16x32xbf16>
    %c6_118 = arith.constant 6 : index
    %c0_119 = arith.constant 0 : index
    %c0_120 = arith.constant 0 : index
    %180 = vector.load %arg8[%c6_118, %c0_119, %c0_120] : memref<25x32x32xbf16, #tpu.memory_space<vmem>>, vector<1x32x32xbf16>
    %181 = vector.shape_cast %180 : vector<1x32x32xbf16> to vector<32x32xbf16>
    %cst_121 = arith.constant dense<0.000000e+00> : vector<16x32xf32>
    %182 = tpu.matmul %179, %181, %cst_121 {dimension_numbers = #tpu.dot_dimension_numbers<[1], [0], [0], [1], [0, 0, 1, 1], [], []>} : vector<16x32xbf16>, vector<32x32xbf16>, vector<16x32xf32> -> vector<16x32xf32>
    %183 = arith.addf %178, %182 : vector<16x32xf32>
    %184 = vector.extract_strided_slice %147 {offsets = [112, 0], sizes = [16, 32], strides = [1, 1]} : vector<400x32xbf16> to vector<16x32xbf16>
    %c7_122 = arith.constant 7 : index
    %c0_123 = arith.constant 0 : index
    %c0_124 = arith.constant 0 : index
    %185 = vector.load %arg8[%c7_122, %c0_123, %c0_124] : memref<25x32x32xbf16, #tpu.memory_space<vmem>>, vector<1x32x32xbf16>
    %186 = vector.shape_cast %185 : vector<1x32x32xbf16> to vector<32x32xbf16>
    %cst_125 = arith.constant dense<0.000000e+00> : vector<16x32xf32>
    %187 = tpu.matmul %184, %186, %cst_125 {dimension_numbers = #tpu.dot_dimension_numbers<[1], [0], [0], [1], [0, 0, 1, 1], [], []>} : vector<16x32xbf16>, vector<32x32xbf16>, vector<16x32xf32> -> vector<16x32xf32>
    %188 = arith.addf %183, %187 : vector<16x32xf32>
    %189 = vector.extract_strided_slice %147 {offsets = [128, 0], sizes = [16, 32], strides = [1, 1]} : vector<400x32xbf16> to vector<16x32xbf16>
    %c8_126 = arith.constant 8 : index
    %c0_127 = arith.constant 0 : index
    %c0_128 = arith.constant 0 : index
    %190 = vector.load %arg8[%c8_126, %c0_127, %c0_128] : memref<25x32x32xbf16, #tpu.memory_space<vmem>>, vector<1x32x32xbf16>
    %191 = vector.shape_cast %190 : vector<1x32x32xbf16> to vector<32x32xbf16>
    %cst_129 = arith.constant dense<0.000000e+00> : vector<16x32xf32>
    %192 = tpu.matmul %189, %191, %cst_129 {dimension_numbers = #tpu.dot_dimension_numbers<[1], [0], [0], [1], [0, 0, 1, 1], [], []>} : vector<16x32xbf16>, vector<32x32xbf16>, vector<16x32xf32> -> vector<16x32xf32>
    %193 = arith.addf %188, %192 : vector<16x32xf32>
    %194 = vector.extract_strided_slice %147 {offsets = [144, 0], sizes = [16, 32], strides = [1, 1]} : vector<400x32xbf16> to vector<16x32xbf16>
    %c9_130 = arith.constant 9 : index
    %c0_131 = arith.constant 0 : index
    %c0_132 = arith.constant 0 : index
    %195 = vector.load %arg8[%c9_130, %c0_131, %c0_132] : memref<25x32x32xbf16, #tpu.memory_space<vmem>>, vector<1x32x32xbf16>
    %196 = vector.shape_cast %195 : vector<1x32x32xbf16> to vector<32x32xbf16>
    %cst_133 = arith.constant dense<0.000000e+00> : vector<16x32xf32>
    %197 = tpu.matmul %194, %196, %cst_133 {dimension_numbers = #tpu.dot_dimension_numbers<[1], [0], [0], [1], [0, 0, 1, 1], [], []>} : vector<16x32xbf16>, vector<32x32xbf16>, vector<16x32xf32> -> vector<16x32xf32>
    %198 = arith.addf %193, %197 : vector<16x32xf32>
    %199 = vector.extract_strided_slice %147 {offsets = [160, 0], sizes = [16, 32], strides = [1, 1]} : vector<400x32xbf16> to vector<16x32xbf16>
    %c10_134 = arith.constant 10 : index
    %c0_135 = arith.constant 0 : index
    %c0_136 = arith.constant 0 : index
    %200 = vector.load %arg8[%c10_134, %c0_135, %c0_136] : memref<25x32x32xbf16, #tpu.memory_space<vmem>>, vector<1x32x32xbf16>
    %201 = vector.shape_cast %200 : vector<1x32x32xbf16> to vector<32x32xbf16>
    %cst_137 = arith.constant dense<0.000000e+00> : vector<16x32xf32>
    %202 = tpu.matmul %199, %201, %cst_137 {dimension_numbers = #tpu.dot_dimension_numbers<[1], [0], [0], [1], [0, 0, 1, 1], [], []>} : vector<16x32xbf16>, vector<32x32xbf16>, vector<16x32xf32> -> vector<16x32xf32>
    %203 = arith.addf %198, %202 : vector<16x32xf32>
    %204 = vector.extract_strided_slice %147 {offsets = [176, 0], sizes = [16, 32], strides = [1, 1]} : vector<400x32xbf16> to vector<16x32xbf16>
    %c11_138 = arith.constant 11 : index
    %c0_139 = arith.constant 0 : index
    %c0_140 = arith.constant 0 : index
    %205 = vector.load %arg8[%c11_138, %c0_139, %c0_140] : memref<25x32x32xbf16, #tpu.memory_space<vmem>>, vector<1x32x32xbf16>
    %206 = vector.shape_cast %205 : vector<1x32x32xbf16> to vector<32x32xbf16>
    %cst_141 = arith.constant dense<0.000000e+00> : vector<16x32xf32>
    %207 = tpu.matmul %204, %206, %cst_141 {dimension_numbers = #tpu.dot_dimension_numbers<[1], [0], [0], [1], [0, 0, 1, 1], [], []>} : vector<16x32xbf16>, vector<32x32xbf16>, vector<16x32xf32> -> vector<16x32xf32>
    %208 = arith.addf %203, %207 : vector<16x32xf32>
    %209 = vector.extract_strided_slice %147 {offsets = [192, 0], sizes = [16, 32], strides = [1, 1]} : vector<400x32xbf16> to vector<16x32xbf16>
    %c12_142 = arith.constant 12 : index
    %c0_143 = arith.constant 0 : index
    %c0_144 = arith.constant 0 : index
    %210 = vector.load %arg8[%c12_142, %c0_143, %c0_144] : memref<25x32x32xbf16, #tpu.memory_space<vmem>>, vector<1x32x32xbf16>
    %211 = vector.shape_cast %210 : vector<1x32x32xbf16> to vector<32x32xbf16>
    %cst_145 = arith.constant dense<0.000000e+00> : vector<16x32xf32>
    %212 = tpu.matmul %209, %211, %cst_145 {dimension_numbers = #tpu.dot_dimension_numbers<[1], [0], [0], [1], [0, 0, 1, 1], [], []>} : vector<16x32xbf16>, vector<32x32xbf16>, vector<16x32xf32> -> vector<16x32xf32>
    %213 = arith.addf %208, %212 : vector<16x32xf32>
    %214 = vector.extract_strided_slice %147 {offsets = [208, 0], sizes = [16, 32], strides = [1, 1]} : vector<400x32xbf16> to vector<16x32xbf16>
    %c13_146 = arith.constant 13 : index
    %c0_147 = arith.constant 0 : index
    %c0_148 = arith.constant 0 : index
    %215 = vector.load %arg8[%c13_146, %c0_147, %c0_148] : memref<25x32x32xbf16, #tpu.memory_space<vmem>>, vector<1x32x32xbf16>
    %216 = vector.shape_cast %215 : vector<1x32x32xbf16> to vector<32x32xbf16>
    %cst_149 = arith.constant dense<0.000000e+00> : vector<16x32xf32>
    %217 = tpu.matmul %214, %216, %cst_149 {dimension_numbers = #tpu.dot_dimension_numbers<[1], [0], [0], [1], [0, 0, 1, 1], [], []>} : vector<16x32xbf16>, vector<32x32xbf16>, vector<16x32xf32> -> vector<16x32xf32>
    %218 = arith.addf %213, %217 : vector<16x32xf32>
    %219 = vector.extract_strided_slice %147 {offsets = [224, 0], sizes = [16, 32], strides = [1, 1]} : vector<400x32xbf16> to vector<16x32xbf16>
    %c14_150 = arith.constant 14 : index
    %c0_151 = arith.constant 0 : index
    %c0_152 = arith.constant 0 : index
    %220 = vector.load %arg8[%c14_150, %c0_151, %c0_152] : memref<25x32x32xbf16, #tpu.memory_space<vmem>>, vector<1x32x32xbf16>
    %221 = vector.shape_cast %220 : vector<1x32x32xbf16> to vector<32x32xbf16>
    %cst_153 = arith.constant dense<0.000000e+00> : vector<16x32xf32>
    %222 = tpu.matmul %219, %221, %cst_153 {dimension_numbers = #tpu.dot_dimension_numbers<[1], [0], [0], [1], [0, 0, 1, 1], [], []>} : vector<16x32xbf16>, vector<32x32xbf16>, vector<16x32xf32> -> vector<16x32xf32>
    %223 = arith.addf %218, %222 : vector<16x32xf32>
    %224 = vector.extract_strided_slice %147 {offsets = [240, 0], sizes = [16, 32], strides = [1, 1]} : vector<400x32xbf16> to vector<16x32xbf16>
    %c15_154 = arith.constant 15 : index
    %c0_155 = arith.constant 0 : index
    %c0_156 = arith.constant 0 : index
    %225 = vector.load %arg8[%c15_154, %c0_155, %c0_156] : memref<25x32x32xbf16, #tpu.memory_space<vmem>>, vector<1x32x32xbf16>
    %226 = vector.shape_cast %225 : vector<1x32x32xbf16> to vector<32x32xbf16>
    %cst_157 = arith.constant dense<0.000000e+00> : vector<16x32xf32>
    %227 = tpu.matmul %224, %226, %cst_157 {dimension_numbers = #tpu.dot_dimension_numbers<[1], [0], [0], [1], [0, 0, 1, 1], [], []>} : vector<16x32xbf16>, vector<32x32xbf16>, vector<16x32xf32> -> vector<16x32xf32>
    %228 = arith.addf %223, %227 : vector<16x32xf32>
    %229 = vector.extract_strided_slice %147 {offsets = [256, 0], sizes = [16, 32], strides = [1, 1]} : vector<400x32xbf16> to vector<16x32xbf16>
    %c16_158 = arith.constant 16 : index
    %c0_159 = arith.constant 0 : index
    %c0_160 = arith.constant 0 : index
    %230 = vector.load %arg8[%c16_158, %c0_159, %c0_160] : memref<25x32x32xbf16, #tpu.memory_space<vmem>>, vector<1x32x32xbf16>
    %231 = vector.shape_cast %230 : vector<1x32x32xbf16> to vector<32x32xbf16>
    %cst_161 = arith.constant dense<0.000000e+00> : vector<16x32xf32>
    %232 = tpu.matmul %229, %231, %cst_161 {dimension_numbers = #tpu.dot_dimension_numbers<[1], [0], [0], [1], [0, 0, 1, 1], [], []>} : vector<16x32xbf16>, vector<32x32xbf16>, vector<16x32xf32> -> vector<16x32xf32>
    %233 = arith.addf %228, %232 : vector<16x32xf32>
    %234 = vector.extract_strided_slice %147 {offsets = [272, 0], sizes = [16, 32], strides = [1, 1]} : vector<400x32xbf16> to vector<16x32xbf16>
    %c17_162 = arith.constant 17 : index
    %c0_163 = arith.constant 0 : index
    %c0_164 = arith.constant 0 : index
    %235 = vector.load %arg8[%c17_162, %c0_163, %c0_164] : memref<25x32x32xbf16, #tpu.memory_space<vmem>>, vector<1x32x32xbf16>
    %236 = vector.shape_cast %235 : vector<1x32x32xbf16> to vector<32x32xbf16>
    %cst_165 = arith.constant dense<0.000000e+00> : vector<16x32xf32>
    %237 = tpu.matmul %234, %236, %cst_165 {dimension_numbers = #tpu.dot_dimension_numbers<[1], [0], [0], [1], [0, 0, 1, 1], [], []>} : vector<16x32xbf16>, vector<32x32xbf16>, vector<16x32xf32> -> vector<16x32xf32>
    %238 = arith.addf %233, %237 : vector<16x32xf32>
    %239 = vector.extract_strided_slice %147 {offsets = [288, 0], sizes = [16, 32], strides = [1, 1]} : vector<400x32xbf16> to vector<16x32xbf16>
    %c18_166 = arith.constant 18 : index
    %c0_167 = arith.constant 0 : index
    %c0_168 = arith.constant 0 : index
    %240 = vector.load %arg8[%c18_166, %c0_167, %c0_168] : memref<25x32x32xbf16, #tpu.memory_space<vmem>>, vector<1x32x32xbf16>
    %241 = vector.shape_cast %240 : vector<1x32x32xbf16> to vector<32x32xbf16>
    %cst_169 = arith.constant dense<0.000000e+00> : vector<16x32xf32>
    %242 = tpu.matmul %239, %241, %cst_169 {dimension_numbers = #tpu.dot_dimension_numbers<[1], [0], [0], [1], [0, 0, 1, 1], [], []>} : vector<16x32xbf16>, vector<32x32xbf16>, vector<16x32xf32> -> vector<16x32xf32>
    %243 = arith.addf %238, %242 : vector<16x32xf32>
    %244 = vector.extract_strided_slice %147 {offsets = [304, 0], sizes = [16, 32], strides = [1, 1]} : vector<400x32xbf16> to vector<16x32xbf16>
    %c19_170 = arith.constant 19 : index
    %c0_171 = arith.constant 0 : index
    %c0_172 = arith.constant 0 : index
    %245 = vector.load %arg8[%c19_170, %c0_171, %c0_172] : memref<25x32x32xbf16, #tpu.memory_space<vmem>>, vector<1x32x32xbf16>
    %246 = vector.shape_cast %245 : vector<1x32x32xbf16> to vector<32x32xbf16>
    %cst_173 = arith.constant dense<0.000000e+00> : vector<16x32xf32>
    %247 = tpu.matmul %244, %246, %cst_173 {dimension_numbers = #tpu.dot_dimension_numbers<[1], [0], [0], [1], [0, 0, 1, 1], [], []>} : vector<16x32xbf16>, vector<32x32xbf16>, vector<16x32xf32> -> vector<16x32xf32>
    %248 = arith.addf %243, %247 : vector<16x32xf32>
    %249 = vector.extract_strided_slice %147 {offsets = [320, 0], sizes = [16, 32], strides = [1, 1]} : vector<400x32xbf16> to vector<16x32xbf16>
    %c20_174 = arith.constant 20 : index
    %c0_175 = arith.constant 0 : index
    %c0_176 = arith.constant 0 : index
    %250 = vector.load %arg8[%c20_174, %c0_175, %c0_176] : memref<25x32x32xbf16, #tpu.memory_space<vmem>>, vector<1x32x32xbf16>
    %251 = vector.shape_cast %250 : vector<1x32x32xbf16> to vector<32x32xbf16>
    %cst_177 = arith.constant dense<0.000000e+00> : vector<16x32xf32>
    %252 = tpu.matmul %249, %251, %cst_177 {dimension_numbers = #tpu.dot_dimension_numbers<[1], [0], [0], [1], [0, 0, 1, 1], [], []>} : vector<16x32xbf16>, vector<32x32xbf16>, vector<16x32xf32> -> vector<16x32xf32>
    %253 = arith.addf %248, %252 : vector<16x32xf32>
    %254 = vector.extract_strided_slice %147 {offsets = [336, 0], sizes = [16, 32], strides = [1, 1]} : vector<400x32xbf16> to vector<16x32xbf16>
    %c21_178 = arith.constant 21 : index
    %c0_179 = arith.constant 0 : index
    %c0_180 = arith.constant 0 : index
    %255 = vector.load %arg8[%c21_178, %c0_179, %c0_180] : memref<25x32x32xbf16, #tpu.memory_space<vmem>>, vector<1x32x32xbf16>
    %256 = vector.shape_cast %255 : vector<1x32x32xbf16> to vector<32x32xbf16>
    %cst_181 = arith.constant dense<0.000000e+00> : vector<16x32xf32>
    %257 = tpu.matmul %254, %256, %cst_181 {dimension_numbers = #tpu.dot_dimension_numbers<[1], [0], [0], [1], [0, 0, 1, 1], [], []>} : vector<16x32xbf16>, vector<32x32xbf16>, vector<16x32xf32> -> vector<16x32xf32>
    %258 = arith.addf %253, %257 : vector<16x32xf32>
    %259 = vector.extract_strided_slice %147 {offsets = [352, 0], sizes = [16, 32], strides = [1, 1]} : vector<400x32xbf16> to vector<16x32xbf16>
    %c22_182 = arith.constant 22 : index
    %c0_183 = arith.constant 0 : index
    %c0_184 = arith.constant 0 : index
    %260 = vector.load %arg8[%c22_182, %c0_183, %c0_184] : memref<25x32x32xbf16, #tpu.memory_space<vmem>>, vector<1x32x32xbf16>
    %261 = vector.shape_cast %260 : vector<1x32x32xbf16> to vector<32x32xbf16>
    %cst_185 = arith.constant dense<0.000000e+00> : vector<16x32xf32>
    %262 = tpu.matmul %259, %261, %cst_185 {dimension_numbers = #tpu.dot_dimension_numbers<[1], [0], [0], [1], [0, 0, 1, 1], [], []>} : vector<16x32xbf16>, vector<32x32xbf16>, vector<16x32xf32> -> vector<16x32xf32>
    %263 = arith.addf %258, %262 : vector<16x32xf32>
    %264 = vector.extract_strided_slice %147 {offsets = [368, 0], sizes = [16, 32], strides = [1, 1]} : vector<400x32xbf16> to vector<16x32xbf16>
    %c23_186 = arith.constant 23 : index
    %c0_187 = arith.constant 0 : index
    %c0_188 = arith.constant 0 : index
    %265 = vector.load %arg8[%c23_186, %c0_187, %c0_188] : memref<25x32x32xbf16, #tpu.memory_space<vmem>>, vector<1x32x32xbf16>
    %266 = vector.shape_cast %265 : vector<1x32x32xbf16> to vector<32x32xbf16>
    %cst_189 = arith.constant dense<0.000000e+00> : vector<16x32xf32>
    %267 = tpu.matmul %264, %266, %cst_189 {dimension_numbers = #tpu.dot_dimension_numbers<[1], [0], [0], [1], [0, 0, 1, 1], [], []>} : vector<16x32xbf16>, vector<32x32xbf16>, vector<16x32xf32> -> vector<16x32xf32>
    %268 = arith.addf %263, %267 : vector<16x32xf32>
    %269 = vector.extract_strided_slice %147 {offsets = [384, 0], sizes = [16, 32], strides = [1, 1]} : vector<400x32xbf16> to vector<16x32xbf16>
    %c24_190 = arith.constant 24 : index
    %c0_191 = arith.constant 0 : index
    %c0_192 = arith.constant 0 : index
    %270 = vector.load %arg8[%c24_190, %c0_191, %c0_192] : memref<25x32x32xbf16, #tpu.memory_space<vmem>>, vector<1x32x32xbf16>
    %271 = vector.shape_cast %270 : vector<1x32x32xbf16> to vector<32x32xbf16>
    %cst_193 = arith.constant dense<0.000000e+00> : vector<16x32xf32>
    %272 = tpu.matmul %269, %271, %cst_193 {dimension_numbers = #tpu.dot_dimension_numbers<[1], [0], [0], [1], [0, 0, 1, 1], [], []>} : vector<16x32xbf16>, vector<32x32xbf16>, vector<16x32xf32> -> vector<16x32xf32>
    %273 = arith.addf %268, %272 : vector<16x32xf32>
    %c0_194 = arith.constant 0 : index
    %c0_195 = arith.constant 0 : index
    %274 = vector.load %arg9[%c0_194, %c0_195] : memref<1x32xf32, #tpu.memory_space<vmem>>, vector<1x32xf32>
    %275 = vector.broadcast %274 : vector<1x32xf32> to vector<16x32xf32>
    %276 = arith.addf %273, %275 : vector<16x32xf32>
    %cst_196 = arith.constant 0.000000e+00 : f32
    %277 = vector.broadcast %cst_196 : f32 to vector<16x32xf32>
    %278 = arith.maximumf %276, %277 : vector<16x32xf32>
    %279 = arith.truncf %278 : vector<16x32xf32> to vector<16x32xbf16>
    %c0_197 = arith.constant 0 : index
    %c0_198 = arith.constant 0 : index
    %280 = vector.load %arg11[%c0_197, %c0_198] : memref<1x32xf32, #tpu.memory_space<vmem>>, vector<1x32xf32>
    %281 = vector.extract_strided_slice %279 {offsets = [0, 0], sizes = [1, 32], strides = [1, 1]} : vector<16x32xbf16> to vector<1x32xbf16>
    %c0_199 = arith.constant 0 : index
    %c0_200 = arith.constant 0 : index
    %c0_201 = arith.constant 0 : index
    %282 = vector.load %arg10[%c0_199, %c0_200, %c0_201] : memref<4x32x32xbf16, #tpu.memory_space<vmem>>, vector<1x32x32xbf16>
    %283 = vector.shape_cast %282 : vector<1x32x32xbf16> to vector<32x32xbf16>
    %cst_202 = arith.constant dense<0.000000e+00> : vector<1x32xf32>
    %284 = tpu.matmul %281, %283, %cst_202 {dimension_numbers = #tpu.dot_dimension_numbers<[1], [0], [0], [1], [0, 0, 1, 1], [], []>} : vector<1x32xbf16>, vector<32x32xbf16>, vector<1x32xf32> -> vector<1x32xf32>
    %285 = arith.addf %280, %284 : vector<1x32xf32>
    %286 = vector.extract_strided_slice %279 {offsets = [1, 0], sizes = [1, 32], strides = [1, 1]} : vector<16x32xbf16> to vector<1x32xbf16>
    %c1_203 = arith.constant 1 : index
    %c0_204 = arith.constant 0 : index
    %c0_205 = arith.constant 0 : index
    %287 = vector.load %arg10[%c1_203, %c0_204, %c0_205] : memref<4x32x32xbf16, #tpu.memory_space<vmem>>, vector<1x32x32xbf16>
    %288 = vector.shape_cast %287 : vector<1x32x32xbf16> to vector<32x32xbf16>
    %cst_206 = arith.constant dense<0.000000e+00> : vector<1x32xf32>
    %289 = tpu.matmul %286, %288, %cst_206 {dimension_numbers = #tpu.dot_dimension_numbers<[1], [0], [0], [1], [0, 0, 1, 1], [], []>} : vector<1x32xbf16>, vector<32x32xbf16>, vector<1x32xf32> -> vector<1x32xf32>
    %290 = arith.addf %285, %289 : vector<1x32xf32>
    %291 = vector.extract_strided_slice %279 {offsets = [2, 0], sizes = [1, 32], strides = [1, 1]} : vector<16x32xbf16> to vector<1x32xbf16>
    %c2_207 = arith.constant 2 : index
    %c0_208 = arith.constant 0 : index
    %c0_209 = arith.constant 0 : index
    %292 = vector.load %arg10[%c2_207, %c0_208, %c0_209] : memref<4x32x32xbf16, #tpu.memory_space<vmem>>, vector<1x32x32xbf16>
    %293 = vector.shape_cast %292 : vector<1x32x32xbf16> to vector<32x32xbf16>
    %cst_210 = arith.constant dense<0.000000e+00> : vector<1x32xf32>
    %294 = tpu.matmul %291, %293, %cst_210 {dimension_numbers = #tpu.dot_dimension_numbers<[1], [0], [0], [1], [0, 0, 1, 1], [], []>} : vector<1x32xbf16>, vector<32x32xbf16>, vector<1x32xf32> -> vector<1x32xf32>
    %295 = arith.addf %290, %294 : vector<1x32xf32>
    %296 = vector.extract_strided_slice %279 {offsets = [3, 0], sizes = [1, 32], strides = [1, 1]} : vector<16x32xbf16> to vector<1x32xbf16>
    %c3_211 = arith.constant 3 : index
    %c0_212 = arith.constant 0 : index
    %c0_213 = arith.constant 0 : index
    %297 = vector.load %arg10[%c3_211, %c0_212, %c0_213] : memref<4x32x32xbf16, #tpu.memory_space<vmem>>, vector<1x32x32xbf16>
    %298 = vector.shape_cast %297 : vector<1x32x32xbf16> to vector<32x32xbf16>
    %cst_214 = arith.constant dense<0.000000e+00> : vector<1x32xf32>
    %299 = tpu.matmul %296, %298, %cst_214 {dimension_numbers = #tpu.dot_dimension_numbers<[1], [0], [0], [1], [0, 0, 1, 1], [], []>} : vector<1x32xbf16>, vector<32x32xbf16>, vector<1x32xf32> -> vector<1x32xf32>
    %300 = arith.addf %295, %299 : vector<1x32xf32>
    %cst_215 = arith.constant 0.000000e+00 : f32
    %301 = vector.broadcast %cst_215 : f32 to vector<1x32xf32>
    %302 = arith.maximumf %300, %301 : vector<1x32xf32>
    %303 = arith.truncf %302 : vector<1x32xf32> to vector<1x32xbf16>
    %c0_216 = arith.constant 0 : index
    %c0_217 = arith.constant 0 : index
    %304 = vector.load %arg12[%c0_216, %c0_217] : memref<32x4xbf16, #tpu.memory_space<vmem>>, vector<32x4xbf16>
    %cst_218 = arith.constant dense<0.000000e+00> : vector<1x4xf32>
    %305 = tpu.matmul %303, %304, %cst_218 {dimension_numbers = #tpu.dot_dimension_numbers<[1], [0], [0], [1], [0, 0, 1, 1], [], []>} : vector<1x32xbf16>, vector<32x4xbf16>, vector<1x4xf32> -> vector<1x4xf32>
    %c0_219 = arith.constant 0 : index
    %c0_220 = arith.constant 0 : index
    %306 = vector.load %arg13[%c0_219, %c0_220] : memref<1x4xf32, #tpu.memory_space<vmem>>, vector<1x4xf32>
    %307 = arith.addf %305, %306 : vector<1x4xf32>
    %c0_221 = arith.constant 0 : index
    %c0_222 = arith.constant 0 : index
    %c0_223 = arith.constant 0 : index
    %308 = vector.load %arg14[%c0_221, %c0_222, %c0_223] : memref<1x1x4xf32, #tpu.memory_space<vmem>>, vector<1x1x4xf32>
    %309 = vector.shape_cast %308 : vector<1x1x4xf32> to vector<1x4xf32>
    %310 = vector.shape_cast %307 : vector<1x4xf32> to vector<1x1x4xf32>
    tpu.vector_store %arg14[%c0_221, %c0_222, %c0_223], %310 {strides = array<i32>} : memref<1x1x4xf32, #tpu.memory_space<vmem>>, vector<1x1x4xf32>,
    return
  }
  func.func @transform_0(%arg0: i32) -> (i32, i32, i32) {
    %c0_i32 = arith.constant 0 : i32
    %c0_i32_0 = arith.constant 0 : i32
    %c0_i32_1 = arith.constant 0 : i32
    return %arg0, %c0_i32, %c0_i32_0 : i32, i32, i32
  }
  func.func @transform_1(%arg0: i32) -> (i32, i32) {
    %c0_i32 = arith.constant 0 : i32
    %c0_i32_0 = arith.constant 0 : i32
    %c0_i32_1 = arith.constant 0 : i32
    return %c0_i32, %c0_i32_0 : i32, i32
  }
  func.func @transform_2(%arg0: i32) -> (i32, i32) {
    %c0_i32 = arith.constant 0 : i32
    %c0_i32_0 = arith.constant 0 : i32
    %c0_i32_1 = arith.constant 0 : i32
    return %c0_i32, %c0_i32_0 : i32, i32
  }
  func.func @transform_3(%arg0: i32) -> (i32, i32) {
    %c0_i32 = arith.constant 0 : i32
    %c0_i32_0 = arith.constant 0 : i32
    %c0_i32_1 = arith.constant 0 : i32
    return %c0_i32, %c0_i32_0 : i32, i32
  }
  func.func @transform_4(%arg0: i32) -> (i32, i32, i32) {
    %c0_i32 = arith.constant 0 : i32
    %c0_i32_0 = arith.constant 0 : i32
    %c0_i32_1 = arith.constant 0 : i32
    %c0_i32_2 = arith.constant 0 : i32
    return %c0_i32, %c0_i32_0, %c0_i32_1 : i32, i32, i32
  }
  func.func @transform_5(%arg0: i32) -> (i32, i32) {
    %c0_i32 = arith.constant 0 : i32
    %c0_i32_0 = arith.constant 0 : i32
    %c0_i32_1 = arith.constant 0 : i32
    return %c0_i32, %c0_i32_0 : i32, i32
  }
  func.func @transform_6(%arg0: i32) -> (i32, i32) {
    %c0_i32 = arith.constant 0 : i32
    %c0_i32_0 = arith.constant 0 : i32
    %c0_i32_1 = arith.constant 0 : i32
    return %c0_i32, %c0_i32_0 : i32, i32
  }
  func.func @transform_7(%arg0: i32) -> (i32, i32, i32) {
    %c0_i32 = arith.constant 0 : i32
    %c0_i32_0 = arith.constant 0 : i32
    %c0_i32_1 = arith.constant 0 : i32
    %c0_i32_2 = arith.constant 0 : i32
    return %c0_i32, %c0_i32_0, %c0_i32_1 : i32, i32, i32
  }
  func.func @transform_8(%arg0: i32) -> (i32, i32) {
    %c0_i32 = arith.constant 0 : i32
    %c0_i32_0 = arith.constant 0 : i32
    %c0_i32_1 = arith.constant 0 : i32
    return %c0_i32, %c0_i32_0 : i32, i32
  }
  func.func @transform_9(%arg0: i32) -> (i32, i32, i32) {
    %c0_i32 = arith.constant 0 : i32
    %c0_i32_0 = arith.constant 0 : i32
    %c0_i32_1 = arith.constant 0 : i32
    %c0_i32_2 = arith.constant 0 : i32
    return %c0_i32, %c0_i32_0, %c0_i32_1 : i32, i32, i32
  }
  func.func @transform_10(%arg0: i32) -> (i32, i32) {
    %c0_i32 = arith.constant 0 : i32
    %c0_i32_0 = arith.constant 0 : i32
    %c0_i32_1 = arith.constant 0 : i32
    return %c0_i32, %c0_i32_0 : i32, i32
  }
  func.func @transform_11(%arg0: i32) -> (i32, i32) {
    %c0_i32 = arith.constant 0 : i32
    %c0_i32_0 = arith.constant 0 : i32
    %c0_i32_1 = arith.constant 0 : i32
    return %c0_i32, %c0_i32_0 : i32, i32
  }
  func.func @transform_12(%arg0: i32) -> (i32, i32) {
    %c0_i32 = arith.constant 0 : i32
    %c0_i32_0 = arith.constant 0 : i32
    %c0_i32_1 = arith.constant 0 : i32
    return %c0_i32, %c0_i32_0 : i32, i32
  }
  func.func @transform_13(%arg0: i32) -> (i32, i32, i32) {
    %c0_i32 = arith.constant 0 : i32
    %c0_i32_0 = arith.constant 0 : i32
    %c0_i32_1 = arith.constant 0 : i32
    return %arg0, %c0_i32, %c0_i32_0 : i32, i32, i32
  }
}

</mosaic_0001>

<llo_original>
// kernel: object_dqn_forward.1
$region0: #{object_dqn_forward.1}
  #allocation0 [shape = 'u32[]', space=smem, size = 0x4, offset = 0x4, fixed_abs, tag = 'smem constant byte address 0x4 - core index']
  #allocation1 [shape = 'u32[144,128]{1,0:T(1,128)}', space=vmem, size = 0x12000, scoped, tag = 'internal scratch']
  %s0 = inlined_call_operand.vmem [shape: bf16[2,289,75], index: 0, kind: input, shape index: {}]
  %s1 = inlined_call_operand.vmem [shape: bf16[75,16], index: 1, kind: input, shape index: {}]
  %s2 = inlined_call_operand.vmem [shape: f32[1,16], index: 2, kind: input, shape index: {}]
  %s3 = inlined_call_operand.vmem [shape: bf16[1600,289], index: 3, kind: input, shape index: {}]
  %s4 = inlined_call_operand.vmem [shape: bf16[25,16,32], index: 4, kind: input, shape index: {}]
  %s5 = inlined_call_operand.vmem [shape: f32[1,32], index: 5, kind: input, shape index: {}]
  %s6 = inlined_call_operand.vmem [shape: bf16[400,64], index: 6, kind: input, shape index: {}]
  %s7 = inlined_call_operand.vmem [shape: bf16[25,32,32], index: 7, kind: input, shape index: {}]
  %s8 = inlined_call_operand.vmem [shape: f32[1,32], index: 8, kind: input, shape index: {}]
  %s9 = inlined_call_operand.vmem [shape: bf16[4,32,32], index: 9, kind: input, shape index: {}]
  %s10 = inlined_call_operand.vmem [shape: f32[1,32], index: 10, kind: input, shape index: {}]
  %s11 = inlined_call_operand.vmem [shape: bf16[32,4], index: 11, kind: input, shape index: {}]
  %s12 = inlined_call_operand.vmem [shape: f32[1,4], index: 12, kind: input, shape index: {}]
  %s13 = inlined_call_operand.hbm [shape: f32[2,1,4], index: 13, kind: output, shape index: {}]
  %s14 = sld [smem:[#allocation0]]
  $region85: #{object_dqn_forward.1} parent=0
    _
  %s16 = ssub.s32 1, %s14
  %s17 = scalar_select 0, %s16, %s14
  $region1: #{object_dqn_forward.1} parent=0
    #allocation2 [shape = 'u8[1024]{0}', space=vmem, size = 0x400, scoped, tag = 'output window, operand 0']
    #allocation3 [shape = 's32[2]{0}', space=sflag, size = 0x8, scoped, tag = 'scoped memory for object_dqn_forward.1']
    %18 = vsyncpa [#allocation3], 0
    %s19 = scalar_lea.sflag [#allocation3], 1
    %20 = vsyncpa %s19, 0
    loop: start=0, step=1, limit=4
    $region2: #{object_dqn_forward.1} parent=1 // loop_pre_header
      _
    $region3: #{object_dqn_forward.1} parent=1 // loop_header
      %s22 = sphi 0, %s26
      %p23 = scmp.ge.s32.totalorder %s22, 4
      %s32 = sphi 0, %s34
      %s35 = sphi 0, %s32
      %s36 = sphi 0, %s35
      %s52 = sphi 0, %s36
      %s56 = sphi 0, %s56
      %s58 = sphi 0, %s56
      %s59 = sphi 0, %s58
      %s73 = sphi 0, %s59
      %s77 = sphi 0, %s77
      %s79 = sphi 0, %s77
      %s80 = sphi 0, %s79
      %s94 = sphi 0, %s80
      %s98 = sphi 0, %s98
      %s100 = sphi 0, %s98
      %s101 = sphi 0, %s100
      %s115 = sphi 0, %s101
      %s119 = sphi 0, %s119
      %s121 = sphi 0, %s119
      %s122 = sphi 0, %s121
      %s136 = sphi 0, %s122
      %s140 = sphi 0, %s140
      %s142 = sphi 0, %s140
      %s143 = sphi 0, %s142
      %s157 = sphi 0, %s143
      %s161 = sphi 0, %s161
      %s163 = sphi 0, %s161
      %s164 = sphi 0, %s163
      %s178 = sphi 0, %s164
      %s182 = sphi 0, %s182
      %s184 = sphi 0, %s182
      %s185 = sphi 0, %s184
      %s199 = sphi 0, %s185
      %s203 = sphi 0, %s203
      %s205 = sphi 0, %s203
      %s206 = sphi 0, %s205
      %s220 = sphi 0, %s206
      %s224 = sphi 0, %s224
      %s226 = sphi 0, %s224
      %s227 = sphi 0, %s226
      %s241 = sphi 0, %s227
      %s245 = sphi 0, %s245
      %s247 = sphi 0, %s245
      %s248 = sphi 0, %s247
      %s262 = sphi 0, %s248
      %s266 = sphi 0, %s266
      %s268 = sphi 0, %s266
      %s269 = sphi 0, %s268
      %s283 = sphi 0, %s269
      %s287 = sphi 0, %s287
      %s289 = sphi 0, %s287
      %s290 = sphi 0, %s289
      %s304 = sphi 0, %s290
      %s310 = sphi 0, %s312
      %s313 = sphi 0, %s310
      %s314 = sphi 0, %s313
      %s330 = sphi 0, %s314
    $region4: #{object_dqn_forward.1} parent=1 // loop_header_branch
      %25 = sbr.rel (%p23) target = $region8
    $region5: #{object_dqn_forward.1} parent=1 // loop_body
      %s27 = ssub.s32 %s22, 1
      %s28 = ssub.s32 %s22, 2
      %s29 = sadd.s32 %s22, 1
      %s30 = ssub.s32 %s22, %s29
      %p31 = scmp.eq.s32.totalorder %s30, 0
      %s33 = sadd.s32 %s32, 1
      %s34 = scalar_select %p31, %s32, %s33
      %p37 = pneg %p31
      %p38 = scmp.eq.s32.totalorder %s22, 1
      %p39 = por %p37, %p38
      %p40 = scmp.ne.s32.totalorder %s32, %s35
      %p41 = scmp.eq.s32.totalorder %s22, 0
      %p42 = por %p40, %p41
      %p43 = scmp.ne.s32.totalorder %s32, %s35
      %p44 = scmp.eq.s32.totalorder %s27, 1
      %p45 = por %p43, %p44
      %p46 = scmp.ne.s32.totalorder %s35, %s36
      %p47 = scmp.eq.s32.totalorder %s27, 0
      %p48 = por %p46, %p47
      %p49 = scmp.ne.s32.totalorder %s35, %s36
      %p50 = scmp.eq.s32.totalorder %s28, 1
      %p51 = por %p49, %p50
      %p53 = scmp.ne.s32.totalorder %s36, %s52
      %p54 = scmp.eq.s32.totalorder %s28, 0
      %p55 = por %p53, %p54
      %s57 = sadd.s32 %s56, 1
      %p60 = scmp.eq.s32.totalorder %s22, 1
      %p61 = scmp.ne.s32.totalorder %s56, %s58
      %p62 = scmp.eq.s32.totalorder %s22, 0
      %p63 = por %p61, %p62
      %p64 = scmp.ne.s32.totalorder %s56, %s58
      %p65 = scmp.eq.s32.totalorder %s27, 1
      %p66 = por %p64, %p65
      %p67 = scmp.ne.s32.totalorder %s58, %s59
      %p68 = scmp.eq.s32.totalorder %s27, 0
      %p69 = por %p67, %p68
      %p70 = scmp.ne.s32.totalorder %s58, %s59
      %p71 = scmp.eq.s32.totalorder %s28, 1
      %p72 = por %p70, %p71
      %p74 = scmp.ne.s32.totalorder %s59, %s73
      %p75 = scmp.eq.s32.totalorder %s28, 0
      %p76 = por %p74, %p75
      %s78 = sadd.s32 %s77, 1
      %p81 = scmp.eq.s32.totalorder %s22, 1
      %p82 = scmp.ne.s32.totalorder %s77, %s79
      %p83 = scmp.eq.s32.totalorder %s22, 0
      %p84 = por %p82, %p83
      %p85 = scmp.ne.s32.totalorder %s77, %s79
      %p86 = scmp.eq.s32.totalorder %s27, 1
      %p87 = por %p85, %p86
      %p88 = scmp.ne.s32.totalorder %s79, %s80
      %p89 = scmp.eq.s32.totalorder %s27, 0
      %p90 = por %p88, %p89
      %p91 = scmp.ne.s32.totalorder %s79, %s80
      %p92 = scmp.eq.s32.totalorder %s28, 1
      %p93 = por %p91, %p92
      %p95 = scmp.ne.s32.totalorder %s80, %s94
      %p96 = scmp.eq.s32.totalorder %s28, 0
      %p97 = por %p95, %p96
      %s99 = sadd.s32 %s98, 1
      %p102 = scmp.eq.s32.totalorder %s22, 1
      %p103 = scmp.ne.s32.totalorder %s98, %s100
      %p104 = scmp.eq.s32.totalorder %s22, 0
      %p105 = por %p103, %p104
      %p106 = scmp.ne.s32.totalorder %s98, %s100
      %p107 = scmp.eq.s32.totalorder %s27, 1
      %p108 = por %p106, %p107
      %p109 = scmp.ne.s32.totalorder %s100, %s101
      %p110 = scmp.eq.s32.totalorder %s27, 0
      %p111 = por %p109, %p110
      %p112 = scmp.ne.s32.totalorder %s100, %s101
      %p113 = scmp.eq.s32.totalorder %s28, 1
      %p114 = por %p112, %p113
      %p116 = scmp.ne.s32.totalorder %s101, %s115
      %p117 = scmp.eq.s32.totalorder %s28, 0
      %p118 = por %p116, %p117
      %s120 = sadd.s32 %s119, 1
      %p123 = scmp.eq.s32.totalorder %s22, 1
      %p124 = scmp.ne.s32.totalorder %s119, %s121
      %p125 = scmp.eq.s32.totalorder %s22, 0
      %p126 = por %p124, %p125
      %p127 = scmp.ne.s32.totalorder %s119, %s121
      %p128 = scmp.eq.s32.totalorder %s27, 1
      %p129 = por %p127, %p128
      %p130 = scmp.ne.s32.totalorder %s121, %s122
      %p131 = scmp.eq.s32.totalorder %s27, 0
      %p132 = por %p130, %p131
      %p133 = scmp.ne.s32.totalorder %s121, %s122
      %p134 = scmp.eq.s32.totalorder %s28, 1
      %p135 = por %p133, %p134
      %p137 = scmp.ne.s32.totalorder %s122, %s136
      %p138 = scmp.eq.s32.totalorder %s28, 0
      %p139 = por %p137, %p138
      %s141 = sadd.s32 %s140, 1
      %p144 = scmp.eq.s32.totalorder %s22, 1
      %p145 = scmp.ne.s32.totalorder %s140, %s142
      %p146 = scmp.eq.s32.totalorder %s22, 0
      %p147 = por %p145, %p146
      %p148 = scmp.ne.s32.totalorder %s140, %s142
      %p149 = scmp.eq.s32.totalorder %s27, 1
      %p150 = por %p148, %p149
      %p151 = scmp.ne.s32.totalorder %s142, %s143
      %p152 = scmp.eq.s32.totalorder %s27, 0
      %p153 = por %p151, %p152
      %p154 = scmp.ne.s32.totalorder %s142, %s143
      %p155 = scmp.eq.s32.totalorder %s28, 1
      %p156 = por %p154, %p155
      %p158 = scmp.ne.s32.totalorder %s143, %s157
      %p159 = scmp.eq.s32.totalorder %s28, 0
      %p160 = por %p158, %p159
      %s162 = sadd.s32 %s161, 1
      %p165 = scmp.eq.s32.totalorder %s22, 1
      %p166 = scmp.ne.s32.totalorder %s161, %s163
      %p167 = scmp.eq.s32.totalorder %s22, 0
      %p168 = por %p166, %p167
      %p169 = scmp.ne.s32.totalorder %s161, %s163
      %p170 = scmp.eq.s32.totalorder %s27, 1
      %p171 = por %p169, %p170
      %p172 = scmp.ne.s32.totalorder %s163, %s164
      %p173 = scmp.eq.s32.totalorder %s27, 0
      %p174 = por %p172, %p173
      %p175 = scmp.ne.s32.totalorder %s163, %s164
      %p176 = scmp.eq.s32.totalorder %s28, 1
      %p177 = por %p175, %p176
      %p179 = scmp.ne.s32.totalorder %s164, %s178
      %p180 = scmp.eq.s32.totalorder %s28, 0
      %p181 = por %p179, %p180
      %s183 = sadd.s32 %s182, 1
      %p186 = scmp.eq.s32.totalorder %s22, 1
      %p187 = scmp.ne.s32.totalorder %s182, %s184
      %p188 = scmp.eq.s32.totalorder %s22, 0
      %p189 = por %p187, %p188
      %p190 = scmp.ne.s32.totalorder %s182, %s184
      %p191 = scmp.eq.s32.totalorder %s27, 1
      %p192 = por %p190, %p191
      %p193 = scmp.ne.s32.totalorder %s184, %s185
      %p194 = scmp.eq.s32.totalorder %s27, 0
      %p195 = por %p193, %p194
      %p196 = scmp.ne.s32.totalorder %s184, %s185
      %p197 = scmp.eq.s32.totalorder %s28, 1
      %p198 = por %p196, %p197
      %p200 = scmp.ne.s32.totalorder %s185, %s199
      %p201 = scmp.eq.s32.totalorder %s28, 0
      %p202 = por %p200, %p201
      %s204 = sadd.s32 %s203, 1
      %p207 = scmp.eq.s32.totalorder %s22, 1
      %p208 = scmp.ne.s32.totalorder %s203, %s205
      %p209 = scmp.eq.s32.totalorder %s22, 0
      %p210 = por %p208, %p209
      %p211 = scmp.ne.s32.totalorder %s203, %s205
      %p212 = scmp.eq.s32.totalorder %s27, 1
      %p213 = por %p211, %p212
      %p214 = scmp.ne.s32.totalorder %s205, %s206
      %p215 = scmp.eq.s32.totalorder %s27, 0
      %p216 = por %p214, %p215
      %p217 = scmp.ne.s32.totalorder %s205, %s206
      %p218 = scmp.eq.s32.totalorder %s28, 1
      %p219 = por %p217, %p218
      %p221 = scmp.ne.s32.totalorder %s206, %s220
      %p222 = scmp.eq.s32.totalorder %s28, 0
      %p223 = por %p221, %p222
      %s225 = sadd.s32 %s224, 1
      %p228 = scmp.eq.s32.totalorder %s22, 1
      %p229 = scmp.ne.s32.totalorder %s224, %s226
      %p230 = scmp.eq.s32.totalorder %s22, 0
      %p231 = por %p229, %p230
      %p232 = scmp.ne.s32.totalorder %s224, %s226
      %p233 = scmp.eq.s32.totalorder %s27, 1
      %p234 = por %p232, %p233
      %p235 = scmp.ne.s32.totalorder %s226, %s227
      %p236 = scmp.eq.s32.totalorder %s27, 0
      %p237 = por %p235, %p236
      %p238 = scmp.ne.s32.totalorder %s226, %s227
      %p239 = scmp.eq.s32.totalorder %s28, 1
      %p240 = por %p238, %p239
      %p242 = scmp.ne.s32.totalorder %s227, %s241
      %p243 = scmp.eq.s32.totalorder %s28, 0
      %p244 = por %p242, %p243
      %s246 = sadd.s32 %s245, 1
      %p249 = scmp.eq.s32.totalorder %s22, 1
      %p250 = scmp.ne.s32.totalorder %s245, %s247
      %p251 = scmp.eq.s32.totalorder %s22, 0
      %p252 = por %p250, %p251
      %p253 = scmp.ne.s32.totalorder %s245, %s247
      %p254 = scmp.eq.s32.totalorder %s27, 1
      %p255 = por %p253, %p254
      %p256 = scmp.ne.s32.totalorder %s247, %s248
      %p257 = scmp.eq.s32.totalorder %s27, 0
      %p258 = por %p256, %p257
      %p259 = scmp.ne.s32.totalorder %s247, %s248
      %p260 = scmp.eq.s32.totalorder %s28, 1
      %p261 = por %p259, %p260
      %p263 = scmp.ne.s32.totalorder %s248, %s262
      %p264 = scmp.eq.s32.totalorder %s28, 0
      %p265 = por %p263, %p264
      %s267 = sadd.s32 %s266, 1
      %p270 = scmp.eq.s32.totalorder %s22, 1
      %p271 = scmp.ne.s32.totalorder %s266, %s268
      %p272 = scmp.eq.s32.totalorder %s22, 0
      %p273 = por %p271, %p272
      %p274 = scmp.ne.s32.totalorder %s266, %s268
      %p275 = scmp.eq.s32.totalorder %s27, 1
      %p276 = por %p274, %p275
      %p277 = scmp.ne.s32.totalorder %s268, %s269
      %p278 = scmp.eq.s32.totalorder %s27, 0
      %p279 = por %p277, %p278
      %p280 = scmp.ne.s32.totalorder %s268, %s269
      %p281 = scmp.eq.s32.totalorder %s28, 1
      %p282 = por %p280, %p281
      %p284 = scmp.ne.s32.totalorder %s269, %s283
      %p285 = scmp.eq.s32.totalorder %s28, 0
      %p286 = por %p284, %p285
      %s288 = sadd.s32 %s287, 1
      %p291 = scmp.eq.s32.totalorder %s22, 1
      %p292 = scmp.ne.s32.totalorder %s287, %s289
      %p293 = scmp.eq.s32.totalorder %s22, 0
      %p294 = por %p292, %p293
      %p295 = scmp.ne.s32.totalorder %s287, %s289
      %p296 = scmp.eq.s32.totalorder %s27, 1
      %p297 = por %p295, %p296
      %p298 = scmp.ne.s32.totalorder %s289, %s290
      %p299 = scmp.eq.s32.totalorder %s27, 0
      %p300 = por %p298, %p299
      %p301 = scmp.ne.s32.totalorder %s289, %s290
      %p302 = scmp.eq.s32.totalorder %s28, 1
      %p303 = por %p301, %p302
      %p305 = scmp.ne.s32.totalorder %s290, %s304
      %p306 = scmp.eq.s32.totalorder %s28, 0
      %p307 = por %p305, %p306
      %s308 = ssub.s32 %s22, %s29
      %p309 = scmp.eq.s32.totalorder %s308, 0
      %s311 = sadd.s32 %s310, 1
      %s312 = scalar_select %p309, %s310, %s311
      %p315 = pneg %p309
      %p316 = scmp.eq.s32.totalorder %s22, 1
      %p317 = por %p315, %p316
      %p318 = scmp.ne.s32.totalorder %s310, %s313
      %p319 = scmp.eq.s32.totalorder %s22, 0
      %p320 = por %p318, %p319
      %p321 = scmp.ne.s32.totalorder %s310, %s313
      %p322 = scmp.eq.s32.totalorder %s27, 1
      %p323 = por %p321, %p322
      %p324 = scmp.ne.s32.totalorder %s313, %s314
      %p325 = scmp.eq.s32.totalorder %s27, 0
      %p326 = por %p324, %p325
      %p327 = scmp.ne.s32.totalorder %s313, %s314
      %p328 = scmp.eq.s32.totalorder %s28, 1
      %p329 = por %p327, %p328
      %p331 = scmp.ne.s32.totalorder %s314, %s330
      %p332 = scmp.eq.s32.totalorder %s28, 0
      %p333 = por %p331, %p332
      %p334 = scmp.le.s32.totalorder 1, %s22
      %p335 = scmp.lt.s32.totalorder %s22, 3
      %p336 = pnand %p334, %p335
      %p337 = pneg %p336
      // Predicated region
      $region9: #{object_dqn_forward.1} parent=5 // pred_check
        _
      $region10: #{object_dqn_forward.1} parent=5 // pred_check_branch
        %339 = sbr.rel (%p336) target = $region12
      $region11: #{object_dqn_forward.1} parent=5 // pred_region
        %s340 = ssub.s32 %s22, 1
        // Predicated region
        $region13: #{object_dqn_forward.1} parent=11 // pred_check
          %p341 = pneg %p69
        $region14: #{object_dqn_forward.1} parent=11 // pred_check_branch
          %343 = sbr.rel (%p341) target = $region16
        $region15: #{object_dqn_forward.1} parent=11 // pred_region
          _
        $region16: #{object_dqn_forward.1} parent=11 // pred_fallthru
          _
        // Predicated region
        $region17: #{object_dqn_forward.1} parent=11 // pred_check
          %p344 = pneg %p90
        $region18: #{object_dqn_forward.1} parent=11 // pred_check_branch
          %346 = sbr.rel (%p344) target = $region20
        $region19: #{object_dqn_forward.1} parent=11 // pred_region
          _
        $region20: #{object_dqn_forward.1} parent=11 // pred_fallthru
          _
        // Predicated region
        $region21: #{object_dqn_forward.1} parent=11 // pred_check
          %p347 = pneg %p111
        $region22: #{object_dqn_forward.1} parent=11 // pred_check_branch
          %349 = sbr.rel (%p347) target = $region24
        $region23: #{object_dqn_forward.1} parent=11 // pred_region
          _
        $region24: #{object_dqn_forward.1} parent=11 // pred_fallthru
          _
        // Predicated region
        $region25: #{object_dqn_forward.1} parent=11 // pred_check
          %p350 = pneg %p132
        $region26: #{object_dqn_forward.1} parent=11 // pred_check_branch
          %352 = sbr.rel (%p350) target = $region28
        $region27: #{object_dqn_forward.1} parent=11 // pred_region
          _
        $region28: #{object_dqn_forward.1} parent=11 // pred_fallthru
          _
        // Predicated region
        $region29: #{object_dqn_forward.1} parent=11 // pred_check
          %p353 = pneg %p153
        $region30: #{object_dqn_forward.1} parent=11 // pred_check_branch
          %355 = sbr.rel (%p353) target = $region32
        $region31: #{object_dqn_forward.1} parent=11 // pred_region
          _
        $region32: #{object_dqn_forward.1} parent=11 // pred_fallthru
          _
        // Predicated region
        $region33: #{object_dqn_forward.1} parent=11 // pred_check
          %p356 = pneg %p174
        $region34: #{object_dqn_forward.1} parent=11 // pred_check_branch
          %358 = sbr.rel (%p356) target = $region36
        $region35: #{object_dqn_forward.1} parent=11 // pred_region
          _
        $region36: #{object_dqn_forward.1} parent=11 // pred_fallthru
          _
        // Predicated region
        $region37: #{object_dqn_forward.1} parent=11 // pred_check
          %p359 = pneg %p195
        $region38: #{object_dqn_forward.1} parent=11 // pred_check_branch
          %361 = sbr.rel (%p359) target = $region40
        $region39: #{object_dqn_forward.1} parent=11 // pred_region
          _
        $region40: #{object_dqn_forward.1} parent=11 // pred_fallthru
          _
        // Predicated region
        $region41: #{object_dqn_forward.1} parent=11 // pred_check
          %p362 = pneg %p216
        $region42: #{object_dqn_forward.1} parent=11 // pred_check_branch
          %364 = sbr.rel (%p362) target = $region44
        $region43: #{object_dqn_forward.1} parent=11 // pred_region
          _
        $region44: #{object_dqn_forward.1} parent=11 // pred_fallthru
          _
        // Predicated region
        $region45: #{object_dqn_forward.1} parent=11 // pred_check
          %p365 = pneg %p237
        $region46: #{object_dqn_forward.1} parent=11 // pred_check_branch
          %367 = sbr.rel (%p365) target = $region48
        $region47: #{object_dqn_forward.1} parent=11 // pred_region
          _
        $region48: #{object_dqn_forward.1} parent=11 // pred_fallthru
          _
        // Predicated region
        $region49: #{object_dqn_forward.1} parent=11 // pred_check
          %p368 = pneg %p258
        $region50: #{object_dqn_forward.1} parent=11 // pred_check_branch
          %370 = sbr.rel (%p368) target = $region52
        $region51: #{object_dqn_forward.1} parent=11 // pred_region
          _
        $region52: #{object_dqn_forward.1} parent=11 // pred_fallthru
          _
        // Predicated region
        $region53: #{object_dqn_forward.1} parent=11 // pred_check
          %p371 = pneg %p279
        $region54: #{object_dqn_forward.1} parent=11 // pred_check_branch
          %373 = sbr.rel (%p371) target = $region56
        $region55: #{object_dqn_forward.1} parent=11 // pred_region
          _
        $region56: #{object_dqn_forward.1} parent=11 // pred_fallthru
          _
        // Predicated region
        $region57: #{object_dqn_forward.1} parent=11 // pred_check
          %p374 = pneg %p300
        $region58: #{object_dqn_forward.1} parent=11 // pred_check_branch
          %376 = sbr.rel (%p374) target = $region60
        $region59: #{object_dqn_forward.1} parent=11 // pred_region
          _
        $region60: #{object_dqn_forward.1} parent=11 // pred_fallthru
          _
      $region12: #{object_dqn_forward.1} parent=5 // pred_fallthru
        _
      %p377 = scmp.lt.s32.totalorder %s22, 2
      // Predicated region
      $region61: #{object_dqn_forward.1} parent=5 // pred_check
        %p378 = pneg %p377
      $region62: #{object_dqn_forward.1} parent=5 // pred_check_branch
        %380 = sbr.rel (%p378) target = $region64
      $region63: #{object_dqn_forward.1} parent=5 // pred_region
        // Predicated region
        $region65: #{object_dqn_forward.1} parent=63 // pred_check
          %p381 = pneg %p42
        $region66: #{object_dqn_forward.1} parent=63 // pred_check_branch
          %383 = sbr.rel (%p381) target = $region68
        $region67: #{object_dqn_forward.1} parent=63 // pred_region
          %p384 = scmp.lt.s32.totalorder %s22, 1
          %s385 = scalar_select %p384, %s22, 1
          %s386 = smul.addr %s385, 37
          %s387 = smul.addr %s386, 4
          %s388 = scalar_lea.vmem %s0, %s387
        $region68: #{object_dqn_forward.1} parent=63 // pred_fallthru
          _
      $region64: #{object_dqn_forward.1} parent=5 // pred_fallthru
        _
      %p389 = scmp.le.s32.totalorder 1, %s22
      %p390 = scmp.lt.s32.totalorder %s22, 3
      %p391 = pnand %p389, %p390
      %p392 = pneg %p391
      // Predicated region
      $region69: #{object_dqn_forward.1} parent=5 // pred_check
        _
      $region70: #{object_dqn_forward.1} parent=5 // pred_check_branch
        %394 = sbr.rel (%p391) target = $region72
      $region71: #{object_dqn_forward.1} parent=5 // pred_region
        %s395 = ssub.s32 %s22, 1
        %p396 = scmp.lt.s32.totalorder %s27, 1
        %s397 = scalar_select %p396, %s27, 1
        %s398 = smul.addr %s397, 37
        %s399 = smul.addr %s398, 4
        %s400 = scalar_lea.vmem %s0, %s399
        %p401 = pneg %p48
        %p402 = pneg %p45
        %p403 = pneg %p69
        %p404 = pneg %p66
        %p405 = pneg %p90
        %p406 = pneg %p87
        %p407 = pneg %p111
        %p408 = pneg %p108
        %p409 = pneg %p132
        %p410 = pneg %p129
        %p411 = pneg %p153
        %p412 = pneg %p150
        %p413 = pneg %p174
        %p414 = pneg %p171
        %p415 = pneg %p195
        %p416 = pneg %p192
        %p417 = pneg %p216
        %p418 = pneg %p213
        %p419 = pneg %p237
        %p420 = pneg %p234
        %p421 = pneg %p258
        %p422 = pneg %p255
        %p423 = pneg %p279
        %p424 = pneg %p276
        %p425 = pneg %p300
        %p426 = pneg %p297
        %p427 = pneg %p326
        %p428 = pneg %p323
        %s429 = sand.u32 %s313, 1
        %s430 = scalar_lea.sflag [#allocation3], %s429
        %s431 = sand.u32 %s313, 1
        %s432 = scalar_lea.vmem [#allocation2], %s431
        %p433 = scmp.lt.s32.totalorder %s27, 1
        %s434 = scalar_select %p433, %s27, 1
        %s435 = smul.addr %s434, 37
        %s436 = smul.addr %s435, 4
        %s437 = scalar_lea.vmem %s0, %s436
        %v439 = vld [vmem:[%s437] sm:$0xf]
        %v440 = vld [vmem:[%s437 + $0x4] sm:$0xf]
        %v441 = vld [vmem:[%s437 + $0x8] sm:$0xf]
        %v442 = vld [vmem:[%s437 + $0xc] sm:$0xf]
        %v443 = vld [vmem:[%s437 + $0x10] sm:$0xf]
        %v444 = vld [vmem:[%s437 + $0x14] sm:$0xf]
        %v445 = vld [vmem:[%s437 + $0x18] sm:$0xf]
        %v446 = vld [vmem:[%s437 + $0x1c] sm:$0xf]
        %v447 = vld [vmem:[%s437 + $0x20] sm:$0xf]
        %v448 = vld [vmem:[%s437 + $0x24] sm:$0xf]
        %v449 = vld [vmem:[%s437 + $0x28] sm:$0xf]
        %v450 = vld [vmem:[%s437 + $0x2c] sm:$0xf]
        %v451 = vld [vmem:[%s437 + $0x30] sm:$0xf]
        %v452 = vld [vmem:[%s437 + $0x34] sm:$0xf]
        %v453 = vld [vmem:[%s437 + $0x38] sm:$0xf]
        %v454 = vld [vmem:[%s437 + $0x3c] sm:$0xf]
        %v455 = vld [vmem:[%s437 + $0x40] sm:$0xf]
        %v456 = vld [vmem:[%s437 + $0x44] sm:$0xf]
        %v457 = vld [vmem:[%s437 + $0x48] sm:$0xf]
        %v458 = vld [vmem:[%s437 + $0x4c] sm:$0xf]
        %v459 = vld [vmem:[%s437 + $0x50] sm:$0xf]
        %v460 = vld [vmem:[%s437 + $0x54] sm:$0xf]
        %v461 = vld [vmem:[%s437 + $0x58] sm:$0xf]
        %v462 = vld [vmem:[%s437 + $0x5c] sm:$0xf]
        %v463 = vld [vmem:[%s437 + $0x60] sm:$0xf]
        %v464 = vld [vmem:[%s437 + $0x64] sm:$0xf]
        %v465 = vld [vmem:[%s437 + $0x68] sm:$0xf]
        %v466 = vld [vmem:[%s437 + $0x6c] sm:$0xf]
        %v467 = vld [vmem:[%s437 + $0x70] sm:$0xf]
        %v468 = vld [vmem:[%s437 + $0x74] sm:$0xf]
        %v469 = vld [vmem:[%s437 + $0x78] sm:$0xf]
        %v470 = vld [vmem:[%s437 + $0x7c] sm:$0xf]
        %v471 = vld [vmem:[%s437 + $0x80] sm:$0xf]
        %v472 = vld [vmem:[%s437 + $0x84] sm:$0xf]
        %v473 = vld [vmem:[%s437 + $0x88] sm:$0xf]
        %v474 = vld [vmem:[%s437 + $0x8c] sm:$0xf]
        %v475 = vld [vmem:[%s437 + $0x90] sm:$0x1]
        %v476 = vld [vmem:[%s1] sm:$0xf]
        %v477 = vld [vmem:[%s1 + $0x4] sm:$0xf]
        %v478 = vld [vmem:[%s1 + $0x8] sm:$0xf]
        %v479 = vld [vmem:[%s1 + $0xc] sm:$0xf]
        %v480 = vld [vmem:[%s1 + $0x10] sm:$0xf]
        %v481 = vld [vmem:[%s1 + $0x14] sm:$0xf]
        %v482 = vld [vmem:[%s1 + $0x18] sm:$0xf]
        %v483 = vld [vmem:[%s1 + $0x1c] sm:$0xf]
        %v484 = vld [vmem:[%s1 + $0x20] sm:$0xf]
        %v485 = vld [vmem:[%s1 + $0x24] sm:$0x3]
        %v486 = vld [vmem:[%s2] sm:$0x1]
        %v488 = vlaneseq
        %v489 = vshrl.u32 %v488, 7
        %v490 = vsub.s32 0, %v489
        %v491 = vrot.slane %v486, %v490
        %v530 = vunpack.c.l.b16 %v439
        %v531 = vunpack.c.l.b16 %v440
        %v532 = vunpack.c.l.b16 %v441
        %v533 = vunpack.c.l.b16 %v442
        %v534 = vunpack.c.l.b16 %v443
        %v535 = vunpack.c.l.b16 %v444
        %v536 = vunpack.c.l.b16 %v445
        %v537 = vunpack.c.l.b16 %v446
        %v538 = vunpack.c.l.b16 %v447
        %v539 = vunpack.c.l.b16 %v448
        %v540 = vunpack.c.l.b16 %v449
        %v541 = vunpack.c.l.b16 %v450
        %v542 = vunpack.c.l.b16 %v451
        %v543 = vunpack.c.l.b16 %v452
        %v544 = vunpack.c.l.b16 %v453
        %v545 = vunpack.c.l.b16 %v454
        %v546 = vunpack.c.l.b16 %v455
        %v547 = vunpack.c.l.b16 %v456
        %v548 = vunpack.c.l.b16 %v457
        %v549 = vunpack.c.l.b16 %v458
        %v550 = vunpack.c.l.b16 %v459
        %v551 = vunpack.c.l.b16 %v460
        %v552 = vunpack.c.l.b16 %v461
        %v553 = vunpack.c.l.b16 %v462
        %v554 = vunpack.c.l.b16 %v463
        %v555 = vunpack.c.l.b16 %v464
        %v556 = vunpack.c.l.b16 %v465
        %v557 = vunpack.c.l.b16 %v466
        %v558 = vunpack.c.l.b16 %v467
        %v559 = vunpack.c.l.b16 %v468
        %v560 = vunpack.c.l.b16 %v469
        %v561 = vunpack.c.l.b16 %v470
        %v562 = vunpack.c.l.b16 %v471
        %v563 = vunpack.c.l.b16 %v472
        %v564 = vunpack.c.l.b16 %v473
        %v565 = vunpack.c.l.b16 %v474
        %v566 = vunpack.c.l.b16 %v475
        %v567 = vpack.c.b16 %v531, %v530
        %v568 = vpack.c.b16 %v533, %v532
        %v569 = vpack.c.b16 %v535, %v534
        %v570 = vpack.c.b16 %v537, %v536
        %v571 = vpack.c.b16 %v539, %v538
        %v572 = vpack.c.b16 %v541, %v540
        %v573 = vpack.c.b16 %v543, %v542
        %v574 = vpack.c.b16 %v545, %v544
        %v575 = vpack.c.b16 %v547, %v546
        %v576 = vpack.c.b16 %v549, %v548
        %v577 = vpack.c.b16 %v551, %v550
        %v578 = vpack.c.b16 %v553, %v552
        %v579 = vpack.c.b16 %v555, %v554
        %v580 = vpack.c.b16 %v557, %v556
        %v581 = vpack.c.b16 %v559, %v558
        %v582 = vpack.c.b16 %v561, %v560
        %v583 = vpack.c.b16 %v563, %v562
        %v584 = vpack.c.b16 %v565, %v564
        %v585 = vpack.c.b16 %v566, %v566
        %v596 = vunpack.c.l.b16 %v476
        %v597 = vunpack.c.l.b16 %v477
        %v598 = vunpack.c.l.b16 %v478
        %v599 = vunpack.c.l.b16 %v479
        %v600 = vunpack.c.l.b16 %v480
        %v601 = vunpack.c.l.b16 %v481
        %v602 = vunpack.c.l.b16 %v482
        %v603 = vunpack.c.l.b16 %v483
        %v604 = vunpack.c.l.b16 %v484
        %v605 = vunpack.c.l.b16 %v485
        %v606 = vpack.c.b16 %v597, %v596
        %v607 = vpack.c.b16 %v599, %v598
        %v608 = vpack.c.b16 %v601, %v600
        %v609 = vpack.c.b16 %v603, %v602
        %v610 = vpack.c.b16 %v605, %v604
        %vm615 = vcmask 613376
        %v617 = vsel %vm615, %v567, 0
        %v620 = vsel %vm615, %v568, 0
        %v623 = vsel %vm615, %v569, 0
        %v626 = vsel %vm615, %v570, 0
        %v629 = vsel %vm615, %v571, 0
        %v632 = vsel %vm615, %v572, 0
        %v635 = vsel %vm615, %v573, 0
        %v638 = vsel %vm615, %v574, 0
        %v641 = vsel %vm615, %v575, 0
        %v644 = vsel %vm615, %v576, 0
        %v647 = vsel %vm615, %v577, 0
        %v650 = vsel %vm615, %v578, 0
        %v653 = vsel %vm615, %v579, 0
        %v656 = vsel %vm615, %v580, 0
        %v659 = vsel %vm615, %v581, 0
        %v662 = vsel %vm615, %v582, 0
        %v665 = vsel %vm615, %v583, 0
        %v668 = vsel %vm615, %v584, 0
        %v671 = vsel %vm615, %v585, 0
        %vm673 = vcmask 1044480
        %vm674 = vcmask 1045504
        %v675 = vsel %vm673, 4294967295, 65535
        %v676 = vsel %vm674, %v675, 0
        %v678 = vand.u32 %v610, %v676
        %680 = vmatprep.subr.bf16.mxu0 0
        %681 = vmatpush1.bf16.msra.mxu0 0
        %682 = vmatprep.subr.bf16.mxu0 0
        %683 = vmatpush1.bf16.msra.mxu0 0
        %684 = vmatprep.subr.bf16.mxu0 0
        %685 = vmatpush1.bf16.msra.mxu0 0
        %686 = vmatprep.subr.bf16.mxu0 0
        %687 = vmatpush1.bf16.msra.mxu0 %v678
        %688 = vmatprep.subr.bf16.mxu0 0
        %689 = vmatpush1.bf16.msra.mxu0 %v609
        %690 = vmatprep.subr.bf16.mxu0 0
        %691 = vmatpush1.bf16.msra.mxu0 %v608
        %692 = vmatprep.subr.bf16.mxu0 0
        %693 = vmatpush1.bf16.msra.mxu0 %v607
        %694 = vmatprep.subr.bf16.mxu0 0
        %695 = vmatpush1.bf16.msra.mxu0 %v606
        %696 = vmatprep.subr.bf16.mxu0 0
        %697 = vmatpush2.bf16.msra.mxu0 0
        %698 = vmatprep.subr.bf16.mxu0 0
        %699 = vmatpush2.bf16.msra.mxu0 0
        %700 = vmatprep.subr.bf16.mxu0 0
        %701 = vmatpush2.bf16.msra.mxu0 0
        %702 = vmatprep.subr.bf16.mxu0 0
        %703 = vmatpush2.bf16.msra.mxu0 0
        %704 = vmatprep.subr.bf16.mxu0 0
        %705 = vmatpush2.bf16.msra.mxu0 0
        %706 = vmatprep.subr.bf16.mxu0 0
        %707 = vmatpush2.bf16.msra.mxu0 0
        %708 = vmatprep.subr.bf16.mxu0 0
        %709 = vmatpush2.bf16.msra.mxu0 0
        %710 = vmatprep.subr.bf16.mxu0 0
        %711 = vmatpush2.bf16.msra.mxu0 0
        %712 = vmatprep.mubr.bf16.mxu0 0
        %713 = vmatmul.mubr.bf16.gmra.mxu0 %v617
        %v714 = vpop.f32.mrf.mxu0
        %v715 = vadd.f32 %v491, %v714
        %v716 = vpop.f32.mrf.mxu0
        %v717 = vpop.f32.mrf.mxu0
        %v718 = vadd.f32 %v491, %v717
        %v719 = vpop.f32.mrf.mxu0
        %720 = vmatprep.mubr.bf16.mxu0 0
        %721 = vmatmul.mubr.bf16.gmra.mxu0 %v620
        %v722 = vpop.f32.mrf.mxu0
        %v723 = vadd.f32 %v491, %v722
        %v724 = vpop.f32.mrf.mxu0
        %v725 = vpop.f32.mrf.mxu0
        %v726 = vadd.f32 %v491, %v725
        %v727 = vpop.f32.mrf.mxu0
        %728 = vmatprep.mubr.bf16.mxu0 0
        %729 = vmatmul.mubr.bf16.gmra.mxu0 %v623
        %v730 = vpop.f32.mrf.mxu0
        %v731 = vadd.f32 %v491, %v730
        %v732 = vpop.f32.mrf.mxu0
        %v733 = vpop.f32.mrf.mxu0
        %v734 = vadd.f32 %v491, %v733
        %v735 = vpop.f32.mrf.mxu0
        %736 = vmatprep.mubr.bf16.mxu0 0
        %737 = vmatmul.mubr.bf16.gmra.mxu0 %v626
        %v738 = vpop.f32.mrf.mxu0
        %v739 = vadd.f32 %v491, %v738
        %v740 = vpop.f32.mrf.mxu0
        %v741 = vpop.f32.mrf.mxu0
        %v742 = vadd.f32 %v491, %v741
        %v743 = vpop.f32.mrf.mxu0
        %744 = vmatprep.mubr.bf16.mxu0 0
        %745 = vmatmul.mubr.bf16.gmra.mxu0 %v629
        %v746 = vpop.f32.mrf.mxu0
        %v747 = vadd.f32 %v491, %v746
        %v748 = vpop.f32.mrf.mxu0
        %v749 = vpop.f32.mrf.mxu0
        %v750 = vadd.f32 %v491, %v749
        %v751 = vpop.f32.mrf.mxu0
        %752 = vmatprep.mubr.bf16.mxu0 0
        %753 = vmatmul.mubr.bf16.gmra.mxu0 %v632
        %v754 = vpop.f32.mrf.mxu0
        %v755 = vadd.f32 %v491, %v754
        %v756 = vpop.f32.mrf.mxu0
        %v757 = vpop.f32.mrf.mxu0
        %v758 = vadd.f32 %v491, %v757
        %v759 = vpop.f32.mrf.mxu0
        %760 = vmatprep.mubr.bf16.mxu0 0
        %761 = vmatmul.mubr.bf16.gmra.mxu0 %v635
        %v762 = vpop.f32.mrf.mxu0
        %v763 = vadd.f32 %v491, %v762
        %v764 = vpop.f32.mrf.mxu0
        %v765 = vpop.f32.mrf.mxu0
        %v766 = vadd.f32 %v491, %v765
        %v767 = vpop.f32.mrf.mxu0
        %768 = vmatprep.mubr.bf16.mxu0 0
        %769 = vmatmul.mubr.bf16.gmra.mxu0 %v638
        %v770 = vpop.f32.mrf.mxu0
        %v771 = vadd.f32 %v491, %v770
        %v772 = vpop.f32.mrf.mxu0
        %v773 = vpop.f32.mrf.mxu0
        %v774 = vadd.f32 %v491, %v773
        %v775 = vpop.f32.mrf.mxu0
        %776 = vmatprep.mubr.bf16.mxu0 0
        %777 = vmatmul.mubr.bf16.gmra.mxu0 %v641
        %v778 = vpop.f32.mrf.mxu0
        %v779 = vadd.f32 %v491, %v778
        %v780 = vpop.f32.mrf.mxu0
        %v781 = vpop.f32.mrf.mxu0
        %v782 = vadd.f32 %v491, %v781
        %v783 = vpop.f32.mrf.mxu0
        %784 = vmatprep.mubr.bf16.mxu0 0
        %785 = vmatmul.mubr.bf16.gmra.mxu0 %v644
        %v786 = vpop.f32.mrf.mxu0
        %v787 = vadd.f32 %v491, %v786
        %v788 = vpop.f32.mrf.mxu0
        %v789 = vpop.f32.mrf.mxu0
        %v790 = vadd.f32 %v491, %v789
        %v791 = vpop.f32.mrf.mxu0
        %792 = vmatprep.mubr.bf16.mxu0 0
        %793 = vmatmul.mubr.bf16.gmra.mxu0 %v647
        %v794 = vpop.f32.mrf.mxu0
        %v795 = vadd.f32 %v491, %v794
        %v796 = vpop.f32.mrf.mxu0
        %v797 = vpop.f32.mrf.mxu0
        %v798 = vadd.f32 %v491, %v797
        %v799 = vpop.f32.mrf.mxu0
        %800 = vmatprep.mubr.bf16.mxu0 0
        %801 = vmatmul.mubr.bf16.gmra.mxu0 %v650
        %v802 = vpop.f32.mrf.mxu0
        %v803 = vadd.f32 %v491, %v802
        %v804 = vpop.f32.mrf.mxu0
        %v805 = vpop.f32.mrf.mxu0
        %v806 = vadd.f32 %v491, %v805
        %v807 = vpop.f32.mrf.mxu0
        %808 = vmatprep.mubr.bf16.mxu0 0
        %809 = vmatmul.mubr.bf16.gmra.mxu0 %v653
        %v810 = vpop.f32.mrf.mxu0
        %v811 = vadd.f32 %v491, %v810
        %v812 = vpop.f32.mrf.mxu0
        %v813 = vpop.f32.mrf.mxu0
        %v814 = vadd.f32 %v491, %v813
        %v815 = vpop.f32.mrf.mxu0
        %816 = vmatprep.mubr.bf16.mxu0 0
        %817 = vmatmul.mubr.bf16.gmra.mxu0 %v656
        %v818 = vpop.f32.mrf.mxu0
        %v819 = vadd.f32 %v491, %v818
        %v820 = vpop.f32.mrf.mxu0
        %v821 = vpop.f32.mrf.mxu0
        %v822 = vadd.f32 %v491, %v821
        %v823 = vpop.f32.mrf.mxu0
        %824 = vmatprep.mubr.bf16.mxu0 0
        %825 = vmatmul.mubr.bf16.gmra.mxu0 %v659
        %v826 = vpop.f32.mrf.mxu0
        %v827 = vadd.f32 %v491, %v826
        %v828 = vpop.f32.mrf.mxu0
        %v829 = vpop.f32.mrf.mxu0
        %v830 = vadd.f32 %v491, %v829
        %v831 = vpop.f32.mrf.mxu0
        %832 = vmatprep.mubr.bf16.mxu0 0
        %833 = vmatmul.mubr.bf16.gmra.mxu0 %v662
        %v834 = vpop.f32.mrf.mxu0
        %v835 = vadd.f32 %v491, %v834
        %v836 = vpop.f32.mrf.mxu0
        %v837 = vpop.f32.mrf.mxu0
        %v838 = vadd.f32 %v491, %v837
        %v839 = vpop.f32.mrf.mxu0
        %840 = vmatprep.mubr.bf16.mxu0 0
        %841 = vmatmul.mubr.bf16.gmra.mxu0 %v665
        %v842 = vpop.f32.mrf.mxu0
        %v843 = vadd.f32 %v491, %v842
        %v844 = vpop.f32.mrf.mxu0
        %v845 = vpop.f32.mrf.mxu0
        %v846 = vadd.f32 %v491, %v845
        %v847 = vpop.f32.mrf.mxu0
        %848 = vmatprep.mubr.bf16.mxu0 0
        %849 = vmatmul.mubr.bf16.gmra.mxu0 %v668
        %v850 = vpop.f32.mrf.mxu0
        %v851 = vadd.f32 %v491, %v850
        %v852 = vpop.f32.mrf.mxu0
        %v853 = vpop.f32.mrf.mxu0
        %v854 = vadd.f32 %v491, %v853
        %v855 = vpop.f32.mrf.mxu0
        %856 = vmatprep.mubr.bf16.mxu0 0
        %857 = vmatmul.mubr.bf16.gmra.mxu0 %v671
        %v858 = vpop.f32.mrf.mxu0
        %v859 = vadd.f32 %v491, %v858
        %v860 = vpop.f32.mrf.mxu0
        %v861 = vpop.f32.mrf.mxu0
        %v862 = vpop.f32.mrf.mxu0
        %863 = vdwg.mxu0
        %v864 = vmax.f32 %v715, 0.0
        %v865 = vmax.f32 %v718, 0.0
        %v866 = vmax.f32 %v723, 0.0
        %v867 = vmax.f32 %v726, 0.0
        %v868 = vmax.f32 %v731, 0.0
        %v869 = vmax.f32 %v734, 0.0
        %v870 = vmax.f32 %v739, 0.0
        %v871 = vmax.f32 %v742, 0.0
        %v872 = vmax.f32 %v747, 0.0
        %v873 = vmax.f32 %v750, 0.0
        %v874 = vmax.f32 %v755, 0.0
        %v875 = vmax.f32 %v758, 0.0
        %v876 = vmax.f32 %v763, 0.0
        %v877 = vmax.f32 %v766, 0.0
        %v878 = vmax.f32 %v771, 0.0
        %v879 = vmax.f32 %v774, 0.0
        %v880 = vmax.f32 %v779, 0.0
        %v881 = vmax.f32 %v782, 0.0
        %v882 = vmax.f32 %v787, 0.0
        %v883 = vmax.f32 %v790, 0.0
        %v884 = vmax.f32 %v795, 0.0
        %v885 = vmax.f32 %v798, 0.0
        %v886 = vmax.f32 %v803, 0.0
        %v887 = vmax.f32 %v806, 0.0
        %v888 = vmax.f32 %v811, 0.0
        %v889 = vmax.f32 %v814, 0.0
        %v890 = vmax.f32 %v819, 0.0
        %v891 = vmax.f32 %v822, 0.0
        %v892 = vmax.f32 %v827, 0.0
        %v893 = vmax.f32 %v830, 0.0
        %v894 = vmax.f32 %v835, 0.0
        %v895 = vmax.f32 %v838, 0.0
        %v896 = vmax.f32 %v843, 0.0
        %v897 = vmax.f32 %v846, 0.0
        %v898 = vmax.f32 %v851, 0.0
        %v899 = vmax.f32 %v854, 0.0
        %v900 = vmax.f32 %v859, 0.0
        %v901 = vpack.c.bf16 %v865, %v864
        %v902 = vpack.c.bf16 %v867, %v866
        %v903 = vpack.c.bf16 %v869, %v868
        %v904 = vpack.c.bf16 %v871, %v870
        %v905 = vpack.c.bf16 %v873, %v872
        %v906 = vpack.c.bf16 %v875, %v874
        %v907 = vpack.c.bf16 %v877, %v876
        %v908 = vpack.c.bf16 %v879, %v878
        %v909 = vpack.c.bf16 %v881, %v880
        %v910 = vpack.c.bf16 %v883, %v882
        %v911 = vpack.c.bf16 %v885, %v884
        %v912 = vpack.c.bf16 %v887, %v886
        %v913 = vpack.c.bf16 %v889, %v888
        %v914 = vpack.c.bf16 %v891, %v890
        %v915 = vpack.c.bf16 %v893, %v892
        %v916 = vpack.c.bf16 %v895, %v894
        %v917 = vpack.c.bf16 %v897, %v896
        %v918 = vpack.c.bf16 %v899, %v898
        %v919 = vpack.c.bf16 %v900, %v900
        %v920 = vld [vmem:[%s3] sm:$0xff]
        %v921 = vld [vmem:[%s3 + $0x8] sm:$0xf]
        %v922 = vld [vmem:[%s3 + $0xc] sm:$0xff]
        %v923 = vld [vmem:[%s3 + $0x14] sm:$0xf]
        %v924 = vld [vmem:[%s3 + $0x18] sm:$0xff]
        %v925 = vld [vmem:[%s3 + $0x20] sm:$0xf]
        %v926 = vld [vmem:[%s3 + $0x24] sm:$0xff]
        %v927 = vld [vmem:[%s3 + $0x2c] sm:$0xf]
        %v928 = vld [vmem:[%s3 + $0x30] sm:$0xff]
        %v929 = vld [vmem:[%s3 + $0x38] sm:$0xf]
        %v930 = vld [vmem:[%s3 + $0x3c] sm:$0xff]
        %v931 = vld [vmem:[%s3 + $0x44] sm:$0xf]
        %v932 = vld [vmem:[%s3 + $0x48] sm:$0xff]
        %v933 = vld [vmem:[%s3 + $0x50] sm:$0xf]
        %v934 = vld [vmem:[%s3 + $0x54] sm:$0xff]
        %v935 = vld [vmem:[%s3 + $0x5c] sm:$0xf]
        %v936 = vld [vmem:[%s3 + $0x60] sm:$0xff]
        %v937 = vld [vmem:[%s3 + $0x68] sm:$0xf]
        %v938 = vld [vmem:[%s3 + $0x6c] sm:$0xff]
        %v939 = vld [vmem:[%s3 + $0x74] sm:$0xf]
        %v940 = vld [vmem:[%s3 + $0x78] sm:$0xff]
        %v941 = vld [vmem:[%s3 + $0x80] sm:$0xf]
        %v942 = vld [vmem:[%s3 + $0x84] sm:$0xff]
        %v943 = vld [vmem:[%s3 + $0x8c] sm:$0xf]
        %v944 = vld [vmem:[%s3 + $0x90] sm:$0xff]
        %v945 = vld [vmem:[%s3 + $0x98] sm:$0xf]
        %v946 = vld [vmem:[%s3 + $0x9c] sm:$0xff]
        %v947 = vld [vmem:[%s3 + $0xa4] sm:$0xf]
        %v948 = vld [vmem:[%s3 + $0xa8] sm:$0xff]
        %v949 = vld [vmem:[%s3 + $0xb0] sm:$0xf]
        %v950 = vld [vmem:[%s3 + $0xb4] sm:$0xff]
        %v951 = vld [vmem:[%s3 + $0xbc] sm:$0xf]
        %v952 = vld [vmem:[%s3 + $0xc0] sm:$0xff]
        %v953 = vld [vmem:[%s3 + $0xc8] sm:$0xf]
        %v954 = vld [vmem:[%s3 + $0xcc] sm:$0xff]
        %v955 = vld [vmem:[%s3 + $0xd4] sm:$0xf]
        %v956 = vld [vmem:[%s3 + $0xd8] sm:$0xff]
        %v957 = vld [vmem:[%s3 + $0xe0] sm:$0xf]
        %v958 = vld [vmem:[%s3 + $0xe4] sm:$0xff]
        %v959 = vld [vmem:[%s3 + $0xec] sm:$0xf]
        %v960 = vld [vmem:[%s3 + $0xf0] sm:$0xff]
        %v961 = vld [vmem:[%s3 + $0xf8] sm:$0xf]
        %v962 = vld [vmem:[%s3 + $0xfc] sm:$0xff]
        %v963 = vld [vmem:[%s3 + $0x104] sm:$0xf]
        %v964 = vld [vmem:[%s3 + $0x108] sm:$0xff]
        %v965 = vld [vmem:[%s3 + $0x110] sm:$0xf]
        %v966 = vld [vmem:[%s3 + $0x114] sm:$0xff]
        %v967 = vld [vmem:[%s3 + $0x11c] sm:$0xf]
        %v968 = vld [vmem:[%s3 + $0x120] sm:$0xff]
        %v969 = vld [vmem:[%s3 + $0x128] sm:$0xf]
        %v970 = vld [vmem:[%s3 + $0x12c] sm:$0xff]
        %v971 = vld [vmem:[%s3 + $0x134] sm:$0xf]
        %v972 = vld [vmem:[%s3 + $0x138] sm:$0xff]
        %v973 = vld [vmem:[%s3 + $0x140] sm:$0xf]
        %v974 = vld [vmem:[%s3 + $0x144] sm:$0xff]
        %v975 = vld [vmem:[%s3 + $0x14c] sm:$0xf]
        %v976 = vld [vmem:[%s3 + $0x150] sm:$0xff]
        %v977 = vld [vmem:[%s3 + $0x158] sm:$0xf]
        %v978 = vld [vmem:[%s3 + $0x15c] sm:$0xff]
        %v979 = vld [vmem:[%s3 + $0x164] sm:$0xf]
        %v980 = vld [vmem:[%s3 + $0x168] sm:$0xff]
        %v981 = vld [vmem:[%s3 + $0x170] sm:$0xf]
        %v982 = vld [vmem:[%s3 + $0x174] sm:$0xff]
        %v983 = vld [vmem:[%s3 + $0x17c] sm:$0xf]
        %v984 = vld [vmem:[%s3 + $0x180] sm:$0xff]
        %v985 = vld [vmem:[%s3 + $0x188] sm:$0xf]
        %v986 = vld [vmem:[%s3 + $0x18c] sm:$0xff]
        %v987 = vld [vmem:[%s3 + $0x194] sm:$0xf]
        %v988 = vld [vmem:[%s3 + $0x198] sm:$0xff]
        %v989 = vld [vmem:[%s3 + $0x1a0] sm:$0xf]
        %v990 = vld [vmem:[%s3 + $0x1a4] sm:$0xff]
        %v991 = vld [vmem:[%s3 + $0x1ac] sm:$0xf]
        %v992 = vld [vmem:[%s3 + $0x1b0] sm:$0xff]
        %v993 = vld [vmem:[%s3 + $0x1b8] sm:$0xf]
        %v994 = vld [vmem:[%s3 + $0x1bc] sm:$0xff]
        %v995 = vld [vmem:[%s3 + $0x1c4] sm:$0xf]
        %v996 = vld [vmem:[%s3 + $0x1c8] sm:$0xff]
        %v997 = vld [vmem:[%s3 + $0x1d0] sm:$0xf]
        %v998 = vld [vmem:[%s3 + $0x1d4] sm:$0xff]
        %v999 = vld [vmem:[%s3 + $0x1dc] sm:$0xf]
        %v1000 = vld [vmem:[%s3 + $0x1e0] sm:$0xff]
        %v1001 = vld [vmem:[%s3 + $0x1e8] sm:$0xf]
        %v1002 = vld [vmem:[%s3 + $0x1ec] sm:$0xff]
        %v1003 = vld [vmem:[%s3 + $0x1f4] sm:$0xf]
        %v1004 = vld [vmem:[%s3 + $0x1f8] sm:$0xff]
        %v1005 = vld [vmem:[%s3 + $0x200] sm:$0xf]
        %v1006 = vld [vmem:[%s3 + $0x204] sm:$0xff]
        %v1007 = vld [vmem:[%s3 + $0x20c] sm:$0xf]
        %v1008 = vld [vmem:[%s3 + $0x210] sm:$0xff]
        %v1009 = vld [vmem:[%s3 + $0x218] sm:$0xf]
        %v1010 = vld [vmem:[%s3 + $0x21c] sm:$0xff]
        %v1011 = vld [vmem:[%s3 + $0x224] sm:$0xf]
        %v1012 = vld [vmem:[%s3 + $0x228] sm:$0xff]
        %v1013 = vld [vmem:[%s3 + $0x230] sm:$0xf]
        %v1014 = vld [vmem:[%s3 + $0x234] sm:$0xff]
        %v1015 = vld [vmem:[%s3 + $0x23c] sm:$0xf]
        %v1016 = vld [vmem:[%s3 + $0x240] sm:$0xff]
        %v1017 = vld [vmem:[%s3 + $0x248] sm:$0xf]
        %v1018 = vld [vmem:[%s3 + $0x24c] sm:$0xff]
        %v1019 = vld [vmem:[%s3 + $0x254] sm:$0xf]
        %v1020 = vld [vmem:[%s3 + $0x258] sm:$0xff]
        %v1021 = vld [vmem:[%s3 + $0x260] sm:$0xf]
        %v1022 = vld [vmem:[%s3 + $0x264] sm:$0xff]
        %v1023 = vld [vmem:[%s3 + $0x26c] sm:$0xf]
        %v1024 = vld [vmem:[%s3 + $0x270] sm:$0xff]
        %v1025 = vld [vmem:[%s3 + $0x278] sm:$0xf]
        %v1026 = vld [vmem:[%s3 + $0x27c] sm:$0xff]
        %v1027 = vld [vmem:[%s3 + $0x284] sm:$0xf]
        %v1028 = vld [vmem:[%s3 + $0x288] sm:$0xff]
        %v1029 = vld [vmem:[%s3 + $0x290] sm:$0xf]
        %v1030 = vld [vmem:[%s3 + $0x294] sm:$0xff]
        %v1031 = vld [vmem:[%s3 + $0x29c] sm:$0xf]
        %v1032 = vld [vmem:[%s3 + $0x2a0] sm:$0xff]
        %v1033 = vld [vmem:[%s3 + $0x2a8] sm:$0xf]
        %v1034 = vld [vmem:[%s3 + $0x2ac] sm:$0xff]
        %v1035 = vld [vmem:[%s3 + $0x2b4] sm:$0xf]
        %v1036 = vld [vmem:[%s3 + $0x2b8] sm:$0xff]
        %v1037 = vld [vmem:[%s3 + $0x2c0] sm:$0xf]
        %v1038 = vld [vmem:[%s3 + $0x2c4] sm:$0xff]
        %v1039 = vld [vmem:[%s3 + $0x2cc] sm:$0xf]
        %v1040 = vld [vmem:[%s3 + $0x2d0] sm:$0xff]
        %v1041 = vld [vmem:[%s3 + $0x2d8] sm:$0xf]
        %v1042 = vld [vmem:[%s3 + $0x2dc] sm:$0xff]
        %v1043 = vld [vmem:[%s3 + $0x2e4] sm:$0xf]
        %v1044 = vld [vmem:[%s3 + $0x2e8] sm:$0xff]
        %v1045 = vld [vmem:[%s3 + $0x2f0] sm:$0xf]
        %v1046 = vld [vmem:[%s3 + $0x2f4] sm:$0xff]
        %v1047 = vld [vmem:[%s3 + $0x2fc] sm:$0xf]
        %v1048 = vld [vmem:[%s3 + $0x300] sm:$0xff]
        %v1049 = vld [vmem:[%s3 + $0x308] sm:$0xf]
        %v1050 = vld [vmem:[%s3 + $0x30c] sm:$0xff]
        %v1051 = vld [vmem:[%s3 + $0x314] sm:$0xf]
        %v1052 = vld [vmem:[%s3 + $0x318] sm:$0xff]
        %v1053 = vld [vmem:[%s3 + $0x320] sm:$0xf]
        %v1054 = vld [vmem:[%s3 + $0x324] sm:$0xff]
        %v1055 = vld [vmem:[%s3 + $0x32c] sm:$0xf]
        %v1056 = vld [vmem:[%s3 + $0x330] sm:$0xff]
        %v1057 = vld [vmem:[%s3 + $0x338] sm:$0xf]
        %v1058 = vld [vmem:[%s3 + $0x33c] sm:$0xff]
        %v1059 = vld [vmem:[%s3 + $0x344] sm:$0xf]
        %v1060 = vld [vmem:[%s3 + $0x348] sm:$0xff]
        %v1061 = vld [vmem:[%s3 + $0x350] sm:$0xf]
        %v1062 = vld [vmem:[%s3 + $0x354] sm:$0xff]
        %v1063 = vld [vmem:[%s3 + $0x35c] sm:$0xf]
        %v1064 = vld [vmem:[%s3 + $0x360] sm:$0xff]
        %v1065 = vld [vmem:[%s3 + $0x368] sm:$0xf]
        %v1066 = vld [vmem:[%s3 + $0x36c] sm:$0xff]
        %v1067 = vld [vmem:[%s3 + $0x374] sm:$0xf]
        %v1068 = vld [vmem:[%s3 + $0x378] sm:$0xff]
        %v1069 = vld [vmem:[%s3 + $0x380] sm:$0xf]
        %v1070 = vld [vmem:[%s3 + $0x384] sm:$0xff]
        %v1071 = vld [vmem:[%s3 + $0x38c] sm:$0xf]
        %v1072 = vld [vmem:[%s3 + $0x390] sm:$0xff]
        %v1073 = vld [vmem:[%s3 + $0x398] sm:$0xf]
        %v1074 = vld [vmem:[%s3 + $0x39c] sm:$0xff]
        %v1075 = vld [vmem:[%s3 + $0x3a4] sm:$0xf]
        %v1076 = vld [vmem:[%s3 + $0x3a8] sm:$0xff]
        %v1077 = vld [vmem:[%s3 + $0x3b0] sm:$0xf]
        %v1078 = vld [vmem:[%s3 + $0x3b4] sm:$0xff]
        %v1079 = vld [vmem:[%s3 + $0x3bc] sm:$0xf]
        %v1080 = vld [vmem:[%s3 + $0x3c0] sm:$0xff]
        %v1081 = vld [vmem:[%s3 + $0x3c8] sm:$0xf]
        %v1082 = vld [vmem:[%s3 + $0x3cc] sm:$0xff]
        %v1083 = vld [vmem:[%s3 + $0x3d4] sm:$0xf]
        %v1084 = vld [vmem:[%s3 + $0x3d8] sm:$0xff]
        %v1085 = vld [vmem:[%s3 + $0x3e0] sm:$0xf]
        %v1086 = vld [vmem:[%s3 + $0x3e4] sm:$0xff]
        %v1087 = vld [vmem:[%s3 + $0x3ec] sm:$0xf]
        %v1088 = vld [vmem:[%s3 + $0x3f0] sm:$0xff]
        %v1089 = vld [vmem:[%s3 + $0x3f8] sm:$0xf]
        %v1090 = vld [vmem:[%s3 + $0x3fc] sm:$0xff]
        %v1091 = vld [vmem:[%s3 + $0x404] sm:$0xf]
        %v1092 = vld [vmem:[%s3 + $0x408] sm:$0xff]
        %v1093 = vld [vmem:[%s3 + $0x410] sm:$0xf]
        %v1094 = vld [vmem:[%s3 + $0x414] sm:$0xff]
        %v1095 = vld [vmem:[%s3 + $0x41c] sm:$0xf]
        %v1096 = vld [vmem:[%s3 + $0x420] sm:$0xff]
        %v1097 = vld [vmem:[%s3 + $0x428] sm:$0xf]
        %v1098 = vld [vmem:[%s3 + $0x42c] sm:$0xff]
        %v1099 = vld [vmem:[%s3 + $0x434] sm:$0xf]
        %v1100 = vld [vmem:[%s3 + $0x438] sm:$0xff]
        %v1101 = vld [vmem:[%s3 + $0x440] sm:$0xf]
        %v1102 = vld [vmem:[%s3 + $0x444] sm:$0xff]
        %v1103 = vld [vmem:[%s3 + $0x44c] sm:$0xf]
        %v1104 = vld [vmem:[%s3 + $0x450] sm:$0xff]
        %v1105 = vld [vmem:[%s3 + $0x458] sm:$0xf]
        %v1106 = vld [vmem:[%s3 + $0x45c] sm:$0xff]
        %v1107 = vld [vmem:[%s3 + $0x464] sm:$0xf]
        %v1108 = vld [vmem:[%s3 + $0x468] sm:$0xff]
        %v1109 = vld [vmem:[%s3 + $0x470] sm:$0xf]
        %v1110 = vld [vmem:[%s3 + $0x474] sm:$0xff]
        %v1111 = vld [vmem:[%s3 + $0x47c] sm:$0xf]
        %v1112 = vld [vmem:[%s3 + $0x480] sm:$0xff]
        %v1113 = vld [vmem:[%s3 + $0x488] sm:$0xf]
        %v1114 = vld [vmem:[%s3 + $0x48c] sm:$0xff]
        %v1115 = vld [vmem:[%s3 + $0x494] sm:$0xf]
        %v1116 = vld [vmem:[%s3 + $0x498] sm:$0xff]
        %v1117 = vld [vmem:[%s3 + $0x4a0] sm:$0xf]
        %v1118 = vld [vmem:[%s3 + $0x4a4] sm:$0xff]
        %v1119 = vld [vmem:[%s3 + $0x4ac] sm:$0xf]
        %v1120 = vld [vmem:[%s3 + $0x4b0] sm:$0xff]
        %v1121 = vld [vmem:[%s3 + $0x4b8] sm:$0xf]
        %v1122 = vld [vmem:[%s3 + $0x4bc] sm:$0xff]
        %v1123 = vld [vmem:[%s3 + $0x4c4] sm:$0xf]
        %v1124 = vld [vmem:[%s3 + $0x4c8] sm:$0xff]
        %v1125 = vld [vmem:[%s3 + $0x4d0] sm:$0xf]
        %v1126 = vld [vmem:[%s3 + $0x4d4] sm:$0xff]
        %v1127 = vld [vmem:[%s3 + $0x4dc] sm:$0xf]
        %v1128 = vld [vmem:[%s3 + $0x4e0] sm:$0xff]
        %v1129 = vld [vmem:[%s3 + $0x4e8] sm:$0xf]
        %v1130 = vld [vmem:[%s3 + $0x4ec] sm:$0xff]
        %v1131 = vld [vmem:[%s3 + $0x4f4] sm:$0xf]
        %v1132 = vld [vmem:[%s3 + $0x4f8] sm:$0xff]
        %v1133 = vld [vmem:[%s3 + $0x500] sm:$0xf]
        %v1134 = vld [vmem:[%s3 + $0x504] sm:$0xff]
        %v1135 = vld [vmem:[%s3 + $0x50c] sm:$0xf]
        %v1136 = vld [vmem:[%s3 + $0x510] sm:$0xff]
        %v1137 = vld [vmem:[%s3 + $0x518] sm:$0xf]
        %v1138 = vld [vmem:[%s3 + $0x51c] sm:$0xff]
        %v1139 = vld [vmem:[%s3 + $0x524] sm:$0xf]
        %v1140 = vld [vmem:[%s3 + $0x528] sm:$0xff]
        %v1141 = vld [vmem:[%s3 + $0x530] sm:$0xf]
        %v1142 = vld [vmem:[%s3 + $0x534] sm:$0xff]
        %v1143 = vld [vmem:[%s3 + $0x53c] sm:$0xf]
        %v1144 = vld [vmem:[%s3 + $0x540] sm:$0xff]
        %v1145 = vld [vmem:[%s3 + $0x548] sm:$0xf]
        %v1146 = vld [vmem:[%s3 + $0x54c] sm:$0xff]
        %v1147 = vld [vmem:[%s3 + $0x554] sm:$0xf]
        %v1148 = vld [vmem:[%s3 + $0x558] sm:$0xff]
        %v1149 = vld [vmem:[%s3 + $0x560] sm:$0xf]
        %v1150 = vld [vmem:[%s3 + $0x564] sm:$0xff]
        %v1151 = vld [vmem:[%s3 + $0x56c] sm:$0xf]
        %v1152 = vld [vmem:[%s3 + $0x570] sm:$0xff]
        %v1153 = vld [vmem:[%s3 + $0x578] sm:$0xf]
        %v1154 = vld [vmem:[%s3 + $0x57c] sm:$0xff]
        %v1155 = vld [vmem:[%s3 + $0x584] sm:$0xf]
        %v1156 = vld [vmem:[%s3 + $0x588] sm:$0xff]
        %v1157 = vld [vmem:[%s3 + $0x590] sm:$0xf]
        %v1158 = vld [vmem:[%s3 + $0x594] sm:$0xff]
        %v1159 = vld [vmem:[%s3 + $0x59c] sm:$0xf]
        %v1160 = vld [vmem:[%s3 + $0x5a0] sm:$0xff]
        %v1161 = vld [vmem:[%s3 + $0x5a8] sm:$0xf]
        %v1162 = vld [vmem:[%s3 + $0x5ac] sm:$0xff]
        %v1163 = vld [vmem:[%s3 + $0x5b4] sm:$0xf]
        %v1164 = vld [vmem:[%s3 + $0x5b8] sm:$0xff]
        %v1165 = vld [vmem:[%s3 + $0x5c0] sm:$0xf]
        %v1166 = vld [vmem:[%s3 + $0x5c4] sm:$0xff]
        %v1167 = vld [vmem:[%s3 + $0x5cc] sm:$0xf]
        %v1168 = vld [vmem:[%s3 + $0x5d0] sm:$0xff]
        %v1169 = vld [vmem:[%s3 + $0x5d8] sm:$0xf]
        %v1170 = vld [vmem:[%s3 + $0x5dc] sm:$0xff]
        %v1171 = vld [vmem:[%s3 + $0x5e4] sm:$0xf]
        %v1172 = vld [vmem:[%s3 + $0x5e8] sm:$0xff]
        %v1173 = vld [vmem:[%s3 + $0x5f0] sm:$0xf]
        %v1174 = vld [vmem:[%s3 + $0x5f4] sm:$0xff]
        %v1175 = vld [vmem:[%s3 + $0x5fc] sm:$0xf]
        %v1176 = vld [vmem:[%s3 + $0x600] sm:$0xff]
        %v1177 = vld [vmem:[%s3 + $0x608] sm:$0xf]
        %v1178 = vld [vmem:[%s3 + $0x60c] sm:$0xff]
        %v1179 = vld [vmem:[%s3 + $0x614] sm:$0xf]
        %v1180 = vld [vmem:[%s3 + $0x618] sm:$0xff]
        %v1181 = vld [vmem:[%s3 + $0x620] sm:$0xf]
        %v1182 = vld [vmem:[%s3 + $0x624] sm:$0xff]
        %v1183 = vld [vmem:[%s3 + $0x62c] sm:$0xf]
        %v1184 = vld [vmem:[%s3 + $0x630] sm:$0xff]
        %v1185 = vld [vmem:[%s3 + $0x638] sm:$0xf]
        %v1186 = vld [vmem:[%s3 + $0x63c] sm:$0xff]
        %v1187 = vld [vmem:[%s3 + $0x644] sm:$0xf]
        %v1188 = vld [vmem:[%s3 + $0x648] sm:$0xff]
        %v1189 = vld [vmem:[%s3 + $0x650] sm:$0xf]
        %v1190 = vld [vmem:[%s3 + $0x654] sm:$0xff]
        %v1191 = vld [vmem:[%s3 + $0x65c] sm:$0xf]
        %v1192 = vld [vmem:[%s3 + $0x660] sm:$0xff]
        %v1193 = vld [vmem:[%s3 + $0x668] sm:$0xf]
        %v1194 = vld [vmem:[%s3 + $0x66c] sm:$0xff]
        %v1195 = vld [vmem:[%s3 + $0x674] sm:$0xf]
        %v1196 = vld [vmem:[%s3 + $0x678] sm:$0xff]
        %v1197 = vld [vmem:[%s3 + $0x680] sm:$0xf]
        %v1198 = vld [vmem:[%s3 + $0x684] sm:$0xff]
        %v1199 = vld [vmem:[%s3 + $0x68c] sm:$0xf]
        %v1200 = vld [vmem:[%s3 + $0x690] sm:$0xff]
        %v1201 = vld [vmem:[%s3 + $0x698] sm:$0xf]
        %v1202 = vld [vmem:[%s3 + $0x69c] sm:$0xff]
        %v1203 = vld [vmem:[%s3 + $0x6a4] sm:$0xf]
        %v1204 = vld [vmem:[%s3 + $0x6a8] sm:$0xff]
        %v1205 = vld [vmem:[%s3 + $0x6b0] sm:$0xf]
        %v1206 = vld [vmem:[%s3 + $0x6b4] sm:$0xff]
        %v1207 = vld [vmem:[%s3 + $0x6bc] sm:$0xf]
        %v1208 = vld [vmem:[%s3 + $0x6c0] sm:$0xff]
        %v1209 = vld [vmem:[%s3 + $0x6c8] sm:$0xf]
        %v1210 = vld [vmem:[%s3 + $0x6cc] sm:$0xff]
        %v1211 = vld [vmem:[%s3 + $0x6d4] sm:$0xf]
        %v1212 = vld [vmem:[%s3 + $0x6d8] sm:$0xff]
        %v1213 = vld [vmem:[%s3 + $0x6e0] sm:$0xf]
        %v1214 = vld [vmem:[%s3 + $0x6e4] sm:$0xff]
        %v1215 = vld [vmem:[%s3 + $0x6ec] sm:$0xf]
        %v1216 = vld [vmem:[%s3 + $0x6f0] sm:$0xff]
        %v1217 = vld [vmem:[%s3 + $0x6f8] sm:$0xf]
        %v1218 = vld [vmem:[%s3 + $0x6fc] sm:$0xff]
        %v1219 = vld [vmem:[%s3 + $0x704] sm:$0xf]
        %v1220 = vld [vmem:[%s3 + $0x708] sm:$0xff]
        %v1221 = vld [vmem:[%s3 + $0x710] sm:$0xf]
        %v1222 = vld [vmem:[%s3 + $0x714] sm:$0xff]
        %v1223 = vld [vmem:[%s3 + $0x71c] sm:$0xf]
        %v1224 = vld [vmem:[%s3 + $0x720] sm:$0xff]
        %v1225 = vld [vmem:[%s3 + $0x728] sm:$0xf]
        %v1226 = vld [vmem:[%s3 + $0x72c] sm:$0xff]
        %v1227 = vld [vmem:[%s3 + $0x734] sm:$0xf]
        %v1228 = vld [vmem:[%s3 + $0x738] sm:$0xff]
        %v1229 = vld [vmem:[%s3 + $0x740] sm:$0xf]
        %v1230 = vld [vmem:[%s3 + $0x744] sm:$0xff]
        %v1231 = vld [vmem:[%s3 + $0x74c] sm:$0xf]
        %v1232 = vld [vmem:[%s3 + $0x750] sm:$0xff]
        %v1233 = vld [vmem:[%s3 + $0x758] sm:$0xf]
        %v1234 = vld [vmem:[%s3 + $0x75c] sm:$0xff]
        %v1235 = vld [vmem:[%s3 + $0x764] sm:$0xf]
        %v1236 = vld [vmem:[%s3 + $0x768] sm:$0xff]
        %v1237 = vld [vmem:[%s3 + $0x770] sm:$0xf]
        %v1238 = vld [vmem:[%s3 + $0x774] sm:$0xff]
        %v1239 = vld [vmem:[%s3 + $0x77c] sm:$0xf]
        %v1240 = vld [vmem:[%s3 + $0x780] sm:$0xff]
        %v1241 = vld [vmem:[%s3 + $0x788] sm:$0xf]
        %v1242 = vld [vmem:[%s3 + $0x78c] sm:$0xff]
        %v1243 = vld [vmem:[%s3 + $0x794] sm:$0xf]
        %v1244 = vld [vmem:[%s3 + $0x798] sm:$0xff]
        %v1245 = vld [vmem:[%s3 + $0x7a0] sm:$0xf]
        %v1246 = vld [vmem:[%s3 + $0x7a4] sm:$0xff]
        %v1247 = vld [vmem:[%s3 + $0x7ac] sm:$0xf]
        %v1248 = vld [vmem:[%s3 + $0x7b0] sm:$0xff]
        %v1249 = vld [vmem:[%s3 + $0x7b8] sm:$0xf]
        %v1250 = vld [vmem:[%s3 + $0x7bc] sm:$0xff]
        %v1251 = vld [vmem:[%s3 + $0x7c4] sm:$0xf]
        %v1252 = vld [vmem:[%s3 + $0x7c8] sm:$0xff]
        %v1253 = vld [vmem:[%s3 + $0x7d0] sm:$0xf]
        %v1254 = vld [vmem:[%s3 + $0x7d4] sm:$0xff]
        %v1255 = vld [vmem:[%s3 + $0x7dc] sm:$0xf]
        %v1256 = vld [vmem:[%s3 + $0x7e0] sm:$0xff]
        %v1257 = vld [vmem:[%s3 + $0x7e8] sm:$0xf]
        %v1258 = vld [vmem:[%s3 + $0x7ec] sm:$0xff]
        %v1259 = vld [vmem:[%s3 + $0x7f4] sm:$0xf]
        %v1260 = vld [vmem:[%s3 + $0x7f8] sm:$0xff]
        %v1261 = vld [vmem:[%s3 + $0x800] sm:$0xf]
        %v1262 = vld [vmem:[%s3 + $0x804] sm:$0xff]
        %v1263 = vld [vmem:[%s3 + $0x80c] sm:$0xf]
        %v1264 = vld [vmem:[%s3 + $0x810] sm:$0xff]
        %v1265 = vld [vmem:[%s3 + $0x818] sm:$0xf]
        %v1266 = vld [vmem:[%s3 + $0x81c] sm:$0xff]
        %v1267 = vld [vmem:[%s3 + $0x824] sm:$0xf]
        %v1268 = vld [vmem:[%s3 + $0x828] sm:$0xff]
        %v1269 = vld [vmem:[%s3 + $0x830] sm:$0xf]
        %v1270 = vld [vmem:[%s3 + $0x834] sm:$0xff]
        %v1271 = vld [vmem:[%s3 + $0x83c] sm:$0xf]
        %v1272 = vld [vmem:[%s3 + $0x840] sm:$0xff]
        %v1273 = vld [vmem:[%s3 + $0x848] sm:$0xf]
        %v1274 = vld [vmem:[%s3 + $0x84c] sm:$0xff]
        %v1275 = vld [vmem:[%s3 + $0x854] sm:$0xf]
        %v1276 = vld [vmem:[%s3 + $0x858] sm:$0xff]
        %v1277 = vld [vmem:[%s3 + $0x860] sm:$0xf]
        %v1278 = vld [vmem:[%s3 + $0x864] sm:$0xff]
        %v1279 = vld [vmem:[%s3 + $0x86c] sm:$0xf]
        %v1280 = vld [vmem:[%s3 + $0x870] sm:$0xff]
        %v1281 = vld [vmem:[%s3 + $0x878] sm:$0xf]
        %v1282 = vld [vmem:[%s3 + $0x87c] sm:$0xff]
        %v1283 = vld [vmem:[%s3 + $0x884] sm:$0xf]
        %v1284 = vld [vmem:[%s3 + $0x888] sm:$0xff]
        %v1285 = vld [vmem:[%s3 + $0x890] sm:$0xf]
        %v1286 = vld [vmem:[%s3 + $0x894] sm:$0xff]
        %v1287 = vld [vmem:[%s3 + $0x89c] sm:$0xf]
        %v1288 = vld [vmem:[%s3 + $0x8a0] sm:$0xff]
        %v1289 = vld [vmem:[%s3 + $0x8a8] sm:$0xf]
        %v1290 = vld [vmem:[%s3 + $0x8ac] sm:$0xff]
        %v1291 = vld [vmem:[%s3 + $0x8b4] sm:$0xf]
        %v1292 = vld [vmem:[%s3 + $0x8b8] sm:$0xff]
        %v1293 = vld [vmem:[%s3 + $0x8c0] sm:$0xf]
        %v1294 = vld [vmem:[%s3 + $0x8c4] sm:$0xff]
        %v1295 = vld [vmem:[%s3 + $0x8cc] sm:$0xf]
        %v1296 = vld [vmem:[%s3 + $0x8d0] sm:$0xff]
        %v1297 = vld [vmem:[%s3 + $0x8d8] sm:$0xf]
        %v1298 = vld [vmem:[%s3 + $0x8dc] sm:$0xff]
        %v1299 = vld [vmem:[%s3 + $0x8e4] sm:$0xf]
        %v1300 = vld [vmem:[%s3 + $0x8e8] sm:$0xff]
        %v1301 = vld [vmem:[%s3 + $0x8f0] sm:$0xf]
        %v1302 = vld [vmem:[%s3 + $0x8f4] sm:$0xff]
        %v1303 = vld [vmem:[%s3 + $0x8fc] sm:$0xf]
        %v1304 = vld [vmem:[%s3 + $0x900] sm:$0xff]
        %v1305 = vld [vmem:[%s3 + $0x908] sm:$0xf]
        %v1306 = vld [vmem:[%s3 + $0x90c] sm:$0xff]
        %v1307 = vld [vmem:[%s3 + $0x914] sm:$0xf]
        %v1308 = vld [vmem:[%s3 + $0x918] sm:$0xff]
        %v1309 = vld [vmem:[%s3 + $0x920] sm:$0xf]
        %v1310 = vld [vmem:[%s3 + $0x924] sm:$0xff]
        %v1311 = vld [vmem:[%s3 + $0x92c] sm:$0xf]
        %v1312 = vld [vmem:[%s3 + $0x930] sm:$0xff]
        %v1313 = vld [vmem:[%s3 + $0x938] sm:$0xf]
        %v1314 = vld [vmem:[%s3 + $0x93c] sm:$0xff]
        %v1315 = vld [vmem:[%s3 + $0x944] sm:$0xf]
        %v1316 = vld [vmem:[%s3 + $0x948] sm:$0xff]
        %v1317 = vld [vmem:[%s3 + $0x950] sm:$0xf]
        %v1318 = vld [vmem:[%s3 + $0x954] sm:$0xff]
        %v1319 = vld [vmem:[%s3 + $0x95c] sm:$0xf]
        %v1720 = vunpack.c.l.b16 %v920
        %v1721 = vunpack.c.h.b16 %v920
        %v1722 = vunpack.c.l.b16 %v921
        %v1723 = vunpack.c.l.b16 %v922
        %v1724 = vunpack.c.h.b16 %v922
        %v1725 = vunpack.c.l.b16 %v923
        %v1726 = vunpack.c.l.b16 %v924
        %v1727 = vunpack.c.h.b16 %v924
        %v1728 = vunpack.c.l.b16 %v925
        %v1729 = vunpack.c.l.b16 %v926
        %v1730 = vunpack.c.h.b16 %v926
        %v1731 = vunpack.c.l.b16 %v927
        %v1732 = vunpack.c.l.b16 %v928
        %v1733 = vunpack.c.h.b16 %v928
        %v1734 = vunpack.c.l.b16 %v929
        %v1735 = vunpack.c.l.b16 %v930
        %v1736 = vunpack.c.h.b16 %v930
        %v1737 = vunpack.c.l.b16 %v931
        %v1738 = vunpack.c.l.b16 %v932
        %v1739 = vunpack.c.h.b16 %v932
        %v1740 = vunpack.c.l.b16 %v933
        %v1741 = vunpack.c.l.b16 %v934
        %v1742 = vunpack.c.h.b16 %v934
        %v1743 = vunpack.c.l.b16 %v935
        %v1744 = vunpack.c.l.b16 %v936
        %v1745 = vunpack.c.h.b16 %v936
        %v1746 = vunpack.c.l.b16 %v937
        %v1747 = vunpack.c.l.b16 %v938
        %v1748 = vunpack.c.h.b16 %v938
        %v1749 = vunpack.c.l.b16 %v939
        %v1750 = vunpack.c.l.b16 %v940
        %v1751 = vunpack.c.h.b16 %v940
        %v1752 = vunpack.c.l.b16 %v941
        %v1753 = vunpack.c.l.b16 %v942
        %v1754 = vunpack.c.h.b16 %v942
        %v1755 = vunpack.c.l.b16 %v943
        %v1756 = vunpack.c.l.b16 %v944
        %v1757 = vunpack.c.h.b16 %v944
        %v1758 = vunpack.c.l.b16 %v945
        %v1759 = vunpack.c.l.b16 %v946
        %v1760 = vunpack.c.h.b16 %v946
        %v1761 = vunpack.c.l.b16 %v947
        %v1762 = vunpack.c.l.b16 %v948
        %v1763 = vunpack.c.h.b16 %v948
        %v1764 = vunpack.c.l.b16 %v949
        %v1765 = vunpack.c.l.b16 %v950
        %v1766 = vunpack.c.h.b16 %v950
        %v1767 = vunpack.c.l.b16 %v951
        %v1768 = vunpack.c.l.b16 %v952
        %v1769 = vunpack.c.h.b16 %v952
        %v1770 = vunpack.c.l.b16 %v953
        %v1771 = vunpack.c.l.b16 %v954
        %v1772 = vunpack.c.h.b16 %v954
        %v1773 = vunpack.c.l.b16 %v955
        %v1774 = vunpack.c.l.b16 %v956
        %v1775 = vunpack.c.h.b16 %v956
        %v1776 = vunpack.c.l.b16 %v957
        %v1777 = vunpack.c.l.b16 %v958
        %v1778 = vunpack.c.h.b16 %v958
        %v1779 = vunpack.c.l.b16 %v959
        %v1780 = vunpack.c.l.b16 %v960
        %v1781 = vunpack.c.h.b16 %v960
        %v1782 = vunpack.c.l.b16 %v961
        %v1783 = vunpack.c.l.b16 %v962
        %v1784 = vunpack.c.h.b16 %v962
        %v1785 = vunpack.c.l.b16 %v963
        %v1786 = vunpack.c.l.b16 %v964
        %v1787 = vunpack.c.h.b16 %v964
        %v1788 = vunpack.c.l.b16 %v965
        %v1789 = vunpack.c.l.b16 %v966
        %v1790 = vunpack.c.h.b16 %v966
        %v1791 = vunpack.c.l.b16 %v967
        %v1792 = vunpack.c.l.b16 %v968
        %v1793 = vunpack.c.h.b16 %v968
        %v1794 = vunpack.c.l.b16 %v969
        %v1795 = vunpack.c.l.b16 %v970
        %v1796 = vunpack.c.h.b16 %v970
        %v1797 = vunpack.c.l.b16 %v971
        %v1798 = vunpack.c.l.b16 %v972
        %v1799 = vunpack.c.h.b16 %v972
        %v1800 = vunpack.c.l.b16 %v973
        %v1801 = vunpack.c.l.b16 %v974
        %v1802 = vunpack.c.h.b16 %v974
        %v1803 = vunpack.c.l.b16 %v975
        %v1804 = vunpack.c.l.b16 %v976
        %v1805 = vunpack.c.h.b16 %v976
        %v1806 = vunpack.c.l.b16 %v977
        %v1807 = vunpack.c.l.b16 %v978
        %v1808 = vunpack.c.h.b16 %v978
        %v1809 = vunpack.c.l.b16 %v979
        %v1810 = vunpack.c.l.b16 %v980
        %v1811 = vunpack.c.h.b16 %v980
        %v1812 = vunpack.c.l.b16 %v981
        %v1813 = vunpack.c.l.b16 %v982
        %v1814 = vunpack.c.h.b16 %v982
        %v1815 = vunpack.c.l.b16 %v983
        %v1816 = vunpack.c.l.b16 %v984
        %v1817 = vunpack.c.h.b16 %v984
        %v1818 = vunpack.c.l.b16 %v985
        %v1819 = vunpack.c.l.b16 %v986
        %v1820 = vunpack.c.h.b16 %v986
        %v1821 = vunpack.c.l.b16 %v987
        %v1822 = vunpack.c.l.b16 %v988
        %v1823 = vunpack.c.h.b16 %v988
        %v1824 = vunpack.c.l.b16 %v989
        %v1825 = vunpack.c.l.b16 %v990
        %v1826 = vunpack.c.h.b16 %v990
        %v1827 = vunpack.c.l.b16 %v991
        %v1828 = vunpack.c.l.b16 %v992
        %v1829 = vunpack.c.h.b16 %v992
        %v1830 = vunpack.c.l.b16 %v993
        %v1831 = vunpack.c.l.b16 %v994
        %v1832 = vunpack.c.h.b16 %v994
        %v1833 = vunpack.c.l.b16 %v995
        %v1834 = vunpack.c.l.b16 %v996
        %v1835 = vunpack.c.h.b16 %v996
        %v1836 = vunpack.c.l.b16 %v997
        %v1837 = vunpack.c.l.b16 %v998
        %v1838 = vunpack.c.h.b16 %v998
        %v1839 = vunpack.c.l.b16 %v999
        %v1840 = vunpack.c.l.b16 %v1000
        %v1841 = vunpack.c.h.b16 %v1000
        %v1842 = vunpack.c.l.b16 %v1001
        %v1843 = vunpack.c.l.b16 %v1002
        %v1844 = vunpack.c.h.b16 %v1002
        %v1845 = vunpack.c.l.b16 %v1003
        %v1846 = vunpack.c.l.b16 %v1004
        %v1847 = vunpack.c.h.b16 %v1004
        %v1848 = vunpack.c.l.b16 %v1005
        %v1849 = vunpack.c.l.b16 %v1006
        %v1850 = vunpack.c.h.b16 %v1006
        %v1851 = vunpack.c.l.b16 %v1007
        %v1852 = vunpack.c.l.b16 %v1008
        %v1853 = vunpack.c.h.b16 %v1008
        %v1854 = vunpack.c.l.b16 %v1009
        %v1855 = vunpack.c.l.b16 %v1010
        %v1856 = vunpack.c.h.b16 %v1010
        %v1857 = vunpack.c.l.b16 %v1011
        %v1858 = vunpack.c.l.b16 %v1012
        %v1859 = vunpack.c.h.b16 %v1012
        %v1860 = vunpack.c.l.b16 %v1013
        %v1861 = vunpack.c.l.b16 %v1014
        %v1862 = vunpack.c.h.b16 %v1014
        %v1863 = vunpack.c.l.b16 %v1015
        %v1864 = vunpack.c.l.b16 %v1016
        %v1865 = vunpack.c.h.b16 %v1016
        %v1866 = vunpack.c.l.b16 %v1017
        %v1867 = vunpack.c.l.b16 %v1018
        %v1868 = vunpack.c.h.b16 %v1018
        %v1869 = vunpack.c.l.b16 %v1019
        %v1870 = vunpack.c.l.b16 %v1020
        %v1871 = vunpack.c.h.b16 %v1020
        %v1872 = vunpack.c.l.b16 %v1021
        %v1873 = vunpack.c.l.b16 %v1022
        %v1874 = vunpack.c.h.b16 %v1022
        %v1875 = vunpack.c.l.b16 %v1023
        %v1876 = vunpack.c.l.b16 %v1024
        %v1877 = vunpack.c.h.b16 %v1024
        %v1878 = vunpack.c.l.b16 %v1025
        %v1879 = vunpack.c.l.b16 %v1026
        %v1880 = vunpack.c.h.b16 %v1026
        %v1881 = vunpack.c.l.b16 %v1027
        %v1882 = vunpack.c.l.b16 %v1028
        %v1883 = vunpack.c.h.b16 %v1028
        %v1884 = vunpack.c.l.b16 %v1029
        %v1885 = vunpack.c.l.b16 %v1030
        %v1886 = vunpack.c.h.b16 %v1030
        %v1887 = vunpack.c.l.b16 %v1031
        %v1888 = vunpack.c.l.b16 %v1032
        %v1889 = vunpack.c.h.b16 %v1032
        %v1890 = vunpack.c.l.b16 %v1033
        %v1891 = vunpack.c.l.b16 %v1034
        %v1892 = vunpack.c.h.b16 %v1034
        %v1893 = vunpack.c.l.b16 %v1035
        %v1894 = vunpack.c.l.b16 %v1036
        %v1895 = vunpack.c.h.b16 %v1036
        %v1896 = vunpack.c.l.b16 %v1037
        %v1897 = vunpack.c.l.b16 %v1038
        %v1898 = vunpack.c.h.b16 %v1038
        %v1899 = vunpack.c.l.b16 %v1039
        %v1900 = vunpack.c.l.b16 %v1040
        %v1901 = vunpack.c.h.b16 %v1040
        %v1902 = vunpack.c.l.b16 %v1041
        %v1903 = vunpack.c.l.b16 %v1042
        %v1904 = vunpack.c.h.b16 %v1042
        %v1905 = vunpack.c.l.b16 %v1043
        %v1906 = vunpack.c.l.b16 %v1044
        %v1907 = vunpack.c.h.b16 %v1044
        %v1908 = vunpack.c.l.b16 %v1045
        %v1909 = vunpack.c.l.b16 %v1046
        %v1910 = vunpack.c.h.b16 %v1046
        %v1911 = vunpack.c.l.b16 %v1047
        %v1912 = vunpack.c.l.b16 %v1048
        %v1913 = vunpack.c.h.b16 %v1048
        %v1914 = vunpack.c.l.b16 %v1049
        %v1915 = vunpack.c.l.b16 %v1050
        %v1916 = vunpack.c.h.b16 %v1050
        %v1917 = vunpack.c.l.b16 %v1051
        %v1918 = vunpack.c.l.b16 %v1052
        %v1919 = vunpack.c.h.b16 %v1052
        %v1920 = vunpack.c.l.b16 %v1053
        %v1921 = vunpack.c.l.b16 %v1054
        %v1922 = vunpack.c.h.b16 %v1054
        %v1923 = vunpack.c.l.b16 %v1055
        %v1924 = vunpack.c.l.b16 %v1056
        %v1925 = vunpack.c.h.b16 %v1056
        %v1926 = vunpack.c.l.b16 %v1057
        %v1927 = vunpack.c.l.b16 %v1058
        %v1928 = vunpack.c.h.b16 %v1058
        %v1929 = vunpack.c.l.b16 %v1059
        %v1930 = vunpack.c.l.b16 %v1060
        %v1931 = vunpack.c.h.b16 %v1060
        %v1932 = vunpack.c.l.b16 %v1061
        %v1933 = vunpack.c.l.b16 %v1062
        %v1934 = vunpack.c.h.b16 %v1062
        %v1935 = vunpack.c.l.b16 %v1063
        %v1936 = vunpack.c.l.b16 %v1064
        %v1937 = vunpack.c.h.b16 %v1064
        %v1938 = vunpack.c.l.b16 %v1065
        %v1939 = vunpack.c.l.b16 %v1066
        %v1940 = vunpack.c.h.b16 %v1066
        %v1941 = vunpack.c.l.b16 %v1067
        %v1942 = vunpack.c.l.b16 %v1068
        %v1943 = vunpack.c.h.b16 %v1068
        %v1944 = vunpack.c.l.b16 %v1069
        %v1945 = vunpack.c.l.b16 %v1070
        %v1946 = vunpack.c.h.b16 %v1070
        %v1947 = vunpack.c.l.b16 %v1071
        %v1948 = vunpack.c.l.b16 %v1072
        %v1949 = vunpack.c.h.b16 %v1072
        %v1950 = vunpack.c.l.b16 %v1073
        %v1951 = vunpack.c.l.b16 %v1074
        %v1952 = vunpack.c.h.b16 %v1074
        %v1953 = vunpack.c.l.b16 %v1075
        %v1954 = vunpack.c.l.b16 %v1076
        %v1955 = vunpack.c.h.b16 %v1076
        %v1956 = vunpack.c.l.b16 %v1077
        %v1957 = vunpack.c.l.b16 %v1078
        %v1958 = vunpack.c.h.b16 %v1078
        %v1959 = vunpack.c.l.b16 %v1079
        %v1960 = vunpack.c.l.b16 %v1080
        %v1961 = vunpack.c.h.b16 %v1080
        %v1962 = vunpack.c.l.b16 %v1081
        %v1963 = vunpack.c.l.b16 %v1082
        %v1964 = vunpack.c.h.b16 %v1082
        %v1965 = vunpack.c.l.b16 %v1083
        %v1966 = vunpack.c.l.b16 %v1084
        %v1967 = vunpack.c.h.b16 %v1084
        %v1968 = vunpack.c.l.b16 %v1085
        %v1969 = vunpack.c.l.b16 %v1086
        %v1970 = vunpack.c.h.b16 %v1086
        %v1971 = vunpack.c.l.b16 %v1087
        %v1972 = vunpack.c.l.b16 %v1088
        %v1973 = vunpack.c.h.b16 %v1088
        %v1974 = vunpack.c.l.b16 %v1089
        %v1975 = vunpack.c.l.b16 %v1090
        %v1976 = vunpack.c.h.b16 %v1090
        %v1977 = vunpack.c.l.b16 %v1091
        %v1978 = vunpack.c.l.b16 %v1092
        %v1979 = vunpack.c.h.b16 %v1092
        %v1980 = vunpack.c.l.b16 %v1093
        %v1981 = vunpack.c.l.b16 %v1094
        %v1982 = vunpack.c.h.b16 %v1094
        %v1983 = vunpack.c.l.b16 %v1095
        %v1984 = vunpack.c.l.b16 %v1096
        %v1985 = vunpack.c.h.b16 %v1096
        %v1986 = vunpack.c.l.b16 %v1097
        %v1987 = vunpack.c.l.b16 %v1098
        %v1988 = vunpack.c.h.b16 %v1098
        %v1989 = vunpack.c.l.b16 %v1099
        %v1990 = vunpack.c.l.b16 %v1100
        %v1991 = vunpack.c.h.b16 %v1100
        %v1992 = vunpack.c.l.b16 %v1101
        %v1993 = vunpack.c.l.b16 %v1102
        %v1994 = vunpack.c.h.b16 %v1102
        %v1995 = vunpack.c.l.b16 %v1103
        %v1996 = vunpack.c.l.b16 %v1104
        %v1997 = vunpack.c.h.b16 %v1104
        %v1998 = vunpack.c.l.b16 %v1105
        %v1999 = vunpack.c.l.b16 %v1106
        %v2000 = vunpack.c.h.b16 %v1106
        %v2001 = vunpack.c.l.b16 %v1107
        %v2002 = vunpack.c.l.b16 %v1108
        %v2003 = vunpack.c.h.b16 %v1108
        %v2004 = vunpack.c.l.b16 %v1109
        %v2005 = vunpack.c.l.b16 %v1110
        %v2006 = vunpack.c.h.b16 %v1110
        %v2007 = vunpack.c.l.b16 %v1111
        %v2008 = vunpack.c.l.b16 %v1112
        %v2009 = vunpack.c.h.b16 %v1112
        %v2010 = vunpack.c.l.b16 %v1113
        %v2011 = vunpack.c.l.b16 %v1114
        %v2012 = vunpack.c.h.b16 %v1114
        %v2013 = vunpack.c.l.b16 %v1115
        %v2014 = vunpack.c.l.b16 %v1116
        %v2015 = vunpack.c.h.b16 %v1116
        %v2016 = vunpack.c.l.b16 %v1117
        %v2017 = vunpack.c.l.b16 %v1118
        %v2018 = vunpack.c.h.b16 %v1118
        %v2019 = vunpack.c.l.b16 %v1119
        %v2020 = vunpack.c.l.b16 %v1120
        %v2021 = vunpack.c.h.b16 %v1120
        %v2022 = vunpack.c.l.b16 %v1121
        %v2023 = vunpack.c.l.b16 %v1122
        %v2024 = vunpack.c.h.b16 %v1122
        %v2025 = vunpack.c.l.b16 %v1123
        %v2026 = vunpack.c.l.b16 %v1124
        %v2027 = vunpack.c.h.b16 %v1124
        %v2028 = vunpack.c.l.b16 %v1125
        %v2029 = vunpack.c.l.b16 %v1126
        %v2030 = vunpack.c.h.b16 %v1126
        %v2031 = vunpack.c.l.b16 %v1127
        %v2032 = vunpack.c.l.b16 %v1128
        %v2033 = vunpack.c.h.b16 %v1128
        %v2034 = vunpack.c.l.b16 %v1129
        %v2035 = vunpack.c.l.b16 %v1130
        %v2036 = vunpack.c.h.b16 %v1130
        %v2037 = vunpack.c.l.b16 %v1131
        %v2038 = vunpack.c.l.b16 %v1132
        %v2039 = vunpack.c.h.b16 %v1132
        %v2040 = vunpack.c.l.b16 %v1133
        %v2041 = vunpack.c.l.b16 %v1134
        %v2042 = vunpack.c.h.b16 %v1134
        %v2043 = vunpack.c.l.b16 %v1135
        %v2044 = vunpack.c.l.b16 %v1136
        %v2045 = vunpack.c.h.b16 %v1136
        %v2046 = vunpack.c.l.b16 %v1137
        %v2047 = vunpack.c.l.b16 %v1138
        %v2048 = vunpack.c.h.b16 %v1138
        %v2049 = vunpack.c.l.b16 %v1139
        %v2050 = vunpack.c.l.b16 %v1140
        %v2051 = vunpack.c.h.b16 %v1140
        %v2052 = vunpack.c.l.b16 %v1141
        %v2053 = vunpack.c.l.b16 %v1142
        %v2054 = vunpack.c.h.b16 %v1142
        %v2055 = vunpack.c.l.b16 %v1143
        %v2056 = vunpack.c.l.b16 %v1144
        %v2057 = vunpack.c.h.b16 %v1144
        %v2058 = vunpack.c.l.b16 %v1145
        %v2059 = vunpack.c.l.b16 %v1146
        %v2060 = vunpack.c.h.b16 %v1146
        %v2061 = vunpack.c.l.b16 %v1147
        %v2062 = vunpack.c.l.b16 %v1148
        %v2063 = vunpack.c.h.b16 %v1148
        %v2064 = vunpack.c.l.b16 %v1149
        %v2065 = vunpack.c.l.b16 %v1150
        %v2066 = vunpack.c.h.b16 %v1150
        %v2067 = vunpack.c.l.b16 %v1151
        %v2068 = vunpack.c.l.b16 %v1152
        %v2069 = vunpack.c.h.b16 %v1152
        %v2070 = vunpack.c.l.b16 %v1153
        %v2071 = vunpack.c.l.b16 %v1154
        %v2072 = vunpack.c.h.b16 %v1154
        %v2073 = vunpack.c.l.b16 %v1155
        %v2074 = vunpack.c.l.b16 %v1156
        %v2075 = vunpack.c.h.b16 %v1156
        %v2076 = vunpack.c.l.b16 %v1157
        %v2077 = vunpack.c.l.b16 %v1158
        %v2078 = vunpack.c.h.b16 %v1158
        %v2079 = vunpack.c.l.b16 %v1159
        %v2080 = vunpack.c.l.b16 %v1160
        %v2081 = vunpack.c.h.b16 %v1160
        %v2082 = vunpack.c.l.b16 %v1161
        %v2083 = vunpack.c.l.b16 %v1162
        %v2084 = vunpack.c.h.b16 %v1162
        %v2085 = vunpack.c.l.b16 %v1163
        %v2086 = vunpack.c.l.b16 %v1164
        %v2087 = vunpack.c.h.b16 %v1164
        %v2088 = vunpack.c.l.b16 %v1165
        %v2089 = vunpack.c.l.b16 %v1166
        %v2090 = vunpack.c.h.b16 %v1166
        %v2091 = vunpack.c.l.b16 %v1167
        %v2092 = vunpack.c.l.b16 %v1168
        %v2093 = vunpack.c.h.b16 %v1168
        %v2094 = vunpack.c.l.b16 %v1169
        %v2095 = vunpack.c.l.b16 %v1170
        %v2096 = vunpack.c.h.b16 %v1170
        %v2097 = vunpack.c.l.b16 %v1171
        %v2098 = vunpack.c.l.b16 %v1172
        %v2099 = vunpack.c.h.b16 %v1172
        %v2100 = vunpack.c.l.b16 %v1173
        %v2101 = vunpack.c.l.b16 %v1174
        %v2102 = vunpack.c.h.b16 %v1174
        %v2103 = vunpack.c.l.b16 %v1175
        %v2104 = vunpack.c.l.b16 %v1176
        %v2105 = vunpack.c.h.b16 %v1176
        %v2106 = vunpack.c.l.b16 %v1177
        %v2107 = vunpack.c.l.b16 %v1178
        %v2108 = vunpack.c.h.b16 %v1178
        %v2109 = vunpack.c.l.b16 %v1179
        %v2110 = vunpack.c.l.b16 %v1180
        %v2111 = vunpack.c.h.b16 %v1180
        %v2112 = vunpack.c.l.b16 %v1181
        %v2113 = vunpack.c.l.b16 %v1182
        %v2114 = vunpack.c.h.b16 %v1182
        %v2115 = vunpack.c.l.b16 %v1183
        %v2116 = vunpack.c.l.b16 %v1184
        %v2117 = vunpack.c.h.b16 %v1184
        %v2118 = vunpack.c.l.b16 %v1185
        %v2119 = vunpack.c.l.b16 %v1186
        %v2120 = vunpack.c.h.b16 %v1186
        %v2121 = vunpack.c.l.b16 %v1187
        %v2122 = vunpack.c.l.b16 %v1188
        %v2123 = vunpack.c.h.b16 %v1188
        %v2124 = vunpack.c.l.b16 %v1189
        %v2125 = vunpack.c.l.b16 %v1190
        %v2126 = vunpack.c.h.b16 %v1190
        %v2127 = vunpack.c.l.b16 %v1191
        %v2128 = vunpack.c.l.b16 %v1192
        %v2129 = vunpack.c.h.b16 %v1192
        %v2130 = vunpack.c.l.b16 %v1193
        %v2131 = vunpack.c.l.b16 %v1194
        %v2132 = vunpack.c.h.b16 %v1194
        %v2133 = vunpack.c.l.b16 %v1195
        %v2134 = vunpack.c.l.b16 %v1196
        %v2135 = vunpack.c.h.b16 %v1196
        %v2136 = vunpack.c.l.b16 %v1197
        %v2137 = vunpack.c.l.b16 %v1198
        %v2138 = vunpack.c.h.b16 %v1198
        %v2139 = vunpack.c.l.b16 %v1199
        %v2140 = vunpack.c.l.b16 %v1200
        %v2141 = vunpack.c.h.b16 %v1200
        %v2142 = vunpack.c.l.b16 %v1201
        %v2143 = vunpack.c.l.b16 %v1202
        %v2144 = vunpack.c.h.b16 %v1202
        %v2145 = vunpack.c.l.b16 %v1203
        %v2146 = vunpack.c.l.b16 %v1204
        %v2147 = vunpack.c.h.b16 %v1204
        %v2148 = vunpack.c.l.b16 %v1205
        %v2149 = vunpack.c.l.b16 %v1206
        %v2150 = vunpack.c.h.b16 %v1206
        %v2151 = vunpack.c.l.b16 %v1207
        %v2152 = vunpack.c.l.b16 %v1208
        %v2153 = vunpack.c.h.b16 %v1208
        %v2154 = vunpack.c.l.b16 %v1209
        %v2155 = vunpack.c.l.b16 %v1210
        %v2156 = vunpack.c.h.b16 %v1210
        %v2157 = vunpack.c.l.b16 %v1211
        %v2158 = vunpack.c.l.b16 %v1212
        %v2159 = vunpack.c.h.b16 %v1212
        %v2160 = vunpack.c.l.b16 %v1213
        %v2161 = vunpack.c.l.b16 %v1214
        %v2162 = vunpack.c.h.b16 %v1214
        %v2163 = vunpack.c.l.b16 %v1215
        %v2164 = vunpack.c.l.b16 %v1216
        %v2165 = vunpack.c.h.b16 %v1216
        %v2166 = vunpack.c.l.b16 %v1217
        %v2167 = vunpack.c.l.b16 %v1218
        %v2168 = vunpack.c.h.b16 %v1218
        %v2169 = vunpack.c.l.b16 %v1219
        %v2170 = vunpack.c.l.b16 %v1220
        %v2171 = vunpack.c.h.b16 %v1220
        %v2172 = vunpack.c.l.b16 %v1221
        %v2173 = vunpack.c.l.b16 %v1222
        %v2174 = vunpack.c.h.b16 %v1222
        %v2175 = vunpack.c.l.b16 %v1223
        %v2176 = vunpack.c.l.b16 %v1224
        %v2177 = vunpack.c.h.b16 %v1224
        %v2178 = vunpack.c.l.b16 %v1225
        %v2179 = vunpack.c.l.b16 %v1226
        %v2180 = vunpack.c.h.b16 %v1226
        %v2181 = vunpack.c.l.b16 %v1227
        %v2182 = vunpack.c.l.b16 %v1228
        %v2183 = vunpack.c.h.b16 %v1228
        %v2184 = vunpack.c.l.b16 %v1229
        %v2185 = vunpack.c.l.b16 %v1230
        %v2186 = vunpack.c.h.b16 %v1230
        %v2187 = vunpack.c.l.b16 %v1231
        %v2188 = vunpack.c.l.b16 %v1232
        %v2189 = vunpack.c.h.b16 %v1232
        %v2190 = vunpack.c.l.b16 %v1233
        %v2191 = vunpack.c.l.b16 %v1234
        %v2192 = vunpack.c.h.b16 %v1234
        %v2193 = vunpack.c.l.b16 %v1235
        %v2194 = vunpack.c.l.b16 %v1236
        %v2195 = vunpack.c.h.b16 %v1236
        %v2196 = vunpack.c.l.b16 %v1237
        %v2197 = vunpack.c.l.b16 %v1238
        %v2198 = vunpack.c.h.b16 %v1238
        %v2199 = vunpack.c.l.b16 %v1239
        %v2200 = vunpack.c.l.b16 %v1240
        %v2201 = vunpack.c.h.b16 %v1240
        %v2202 = vunpack.c.l.b16 %v1241
        %v2203 = vunpack.c.l.b16 %v1242
        %v2204 = vunpack.c.h.b16 %v1242
        %v2205 = vunpack.c.l.b16 %v1243
        %v2206 = vunpack.c.l.b16 %v1244
        %v2207 = vunpack.c.h.b16 %v1244
        %v2208 = vunpack.c.l.b16 %v1245
        %v2209 = vunpack.c.l.b16 %v1246
        %v2210 = vunpack.c.h.b16 %v1246
        %v2211 = vunpack.c.l.b16 %v1247
        %v2212 = vunpack.c.l.b16 %v1248
        %v2213 = vunpack.c.h.b16 %v1248
        %v2214 = vunpack.c.l.b16 %v1249
        %v2215 = vunpack.c.l.b16 %v1250
        %v2216 = vunpack.c.h.b16 %v1250
        %v2217 = vunpack.c.l.b16 %v1251
        %v2218 = vunpack.c.l.b16 %v1252
        %v2219 = vunpack.c.h.b16 %v1252
        %v2220 = vunpack.c.l.b16 %v1253
        %v2221 = vunpack.c.l.b16 %v1254
        %v2222 = vunpack.c.h.b16 %v1254
        %v2223 = vunpack.c.l.b16 %v1255
        %v2224 = vunpack.c.l.b16 %v1256
        %v2225 = vunpack.c.h.b16 %v1256
        %v2226 = vunpack.c.l.b16 %v1257
        %v2227 = vunpack.c.l.b16 %v1258
        %v2228 = vunpack.c.h.b16 %v1258
        %v2229 = vunpack.c.l.b16 %v1259
        %v2230 = vunpack.c.l.b16 %v1260
        %v2231 = vunpack.c.h.b16 %v1260
        %v2232 = vunpack.c.l.b16 %v1261
        %v2233 = vunpack.c.l.b16 %v1262
        %v2234 = vunpack.c.h.b16 %v1262
        %v2235 = vunpack.c.l.b16 %v1263
        %v2236 = vunpack.c.l.b16 %v1264
        %v2237 = vunpack.c.h.b16 %v1264
        %v2238 = vunpack.c.l.b16 %v1265
        %v2239 = vunpack.c.l.b16 %v1266
        %v2240 = vunpack.c.h.b16 %v1266
        %v2241 = vunpack.c.l.b16 %v1267
        %v2242 = vunpack.c.l.b16 %v1268
        %v2243 = vunpack.c.h.b16 %v1268
        %v2244 = vunpack.c.l.b16 %v1269
        %v2245 = vunpack.c.l.b16 %v1270
        %v2246 = vunpack.c.h.b16 %v1270
        %v2247 = vunpack.c.l.b16 %v1271
        %v2248 = vunpack.c.l.b16 %v1272
        %v2249 = vunpack.c.h.b16 %v1272
        %v2250 = vunpack.c.l.b16 %v1273
        %v2251 = vunpack.c.l.b16 %v1274
        %v2252 = vunpack.c.h.b16 %v1274
        %v2253 = vunpack.c.l.b16 %v1275
        %v2254 = vunpack.c.l.b16 %v1276
        %v2255 = vunpack.c.h.b16 %v1276
        %v2256 = vunpack.c.l.b16 %v1277
        %v2257 = vunpack.c.l.b16 %v1278
        %v2258 = vunpack.c.h.b16 %v1278
        %v2259 = vunpack.c.l.b16 %v1279
        %v2260 = vunpack.c.l.b16 %v1280
        %v2261 = vunpack.c.h.b16 %v1280
        %v2262 = vunpack.c.l.b16 %v1281
        %v2263 = vunpack.c.l.b16 %v1282
        %v2264 = vunpack.c.h.b16 %v1282
        %v2265 = vunpack.c.l.b16 %v1283
        %v2266 = vunpack.c.l.b16 %v1284
        %v2267 = vunpack.c.h.b16 %v1284
        %v2268 = vunpack.c.l.b16 %v1285
        %v2269 = vunpack.c.l.b16 %v1286
        %v2270 = vunpack.c.h.b16 %v1286
        %v2271 = vunpack.c.l.b16 %v1287
        %v2272 = vunpack.c.l.b16 %v1288
        %v2273 = vunpack.c.h.b16 %v1288
        %v2274 = vunpack.c.l.b16 %v1289
        %v2275 = vunpack.c.l.b16 %v1290
        %v2276 = vunpack.c.h.b16 %v1290
        %v2277 = vunpack.c.l.b16 %v1291
        %v2278 = vunpack.c.l.b16 %v1292
        %v2279 = vunpack.c.h.b16 %v1292
        %v2280 = vunpack.c.l.b16 %v1293
        %v2281 = vunpack.c.l.b16 %v1294
        %v2282 = vunpack.c.h.b16 %v1294
        %v2283 = vunpack.c.l.b16 %v1295
        %v2284 = vunpack.c.l.b16 %v1296
        %v2285 = vunpack.c.h.b16 %v1296
        %v2286 = vunpack.c.l.b16 %v1297
        %v2287 = vunpack.c.l.b16 %v1298
        %v2288 = vunpack.c.h.b16 %v1298
        %v2289 = vunpack.c.l.b16 %v1299
        %v2290 = vunpack.c.l.b16 %v1300
        %v2291 = vunpack.c.h.b16 %v1300
        %v2292 = vunpack.c.l.b16 %v1301
        %v2293 = vunpack.c.l.b16 %v1302
        %v2294 = vunpack.c.h.b16 %v1302
        %v2295 = vunpack.c.l.b16 %v1303
        %v2296 = vunpack.c.l.b16 %v1304
        %v2297 = vunpack.c.h.b16 %v1304
        %v2298 = vunpack.c.l.b16 %v1305
        %v2299 = vunpack.c.l.b16 %v1306
        %v2300 = vunpack.c.h.b16 %v1306
        %v2301 = vunpack.c.l.b16 %v1307
        %v2302 = vunpack.c.l.b16 %v1308
        %v2303 = vunpack.c.h.b16 %v1308
        %v2304 = vunpack.c.l.b16 %v1309
        %v2305 = vunpack.c.l.b16 %v1310
        %v2306 = vunpack.c.h.b16 %v1310
        %v2307 = vunpack.c.l.b16 %v1311
        %v2308 = vunpack.c.l.b16 %v1312
        %v2309 = vunpack.c.h.b16 %v1312
        %v2310 = vunpack.c.l.b16 %v1313
        %v2311 = vunpack.c.l.b16 %v1314
        %v2312 = vunpack.c.h.b16 %v1314
        %v2313 = vunpack.c.l.b16 %v1315
        %v2314 = vunpack.c.l.b16 %v1316
        %v2315 = vunpack.c.h.b16 %v1316
        %v2316 = vunpack.c.l.b16 %v1317
        %v2317 = vunpack.c.l.b16 %v1318
        %v2318 = vunpack.c.h.b16 %v1318
        %v2319 = vunpack.c.l.b16 %v1319
        %v2320 = vpack.c.b16 %v1723, %v1720
        %v2321 = vpack.c.b16 %v1724, %v1721
        %v2322 = vpack.c.b16 %v1725, %v1722
        %v2323 = vpack.c.b16 %v1729, %v1726
        %v2324 = vpack.c.b16 %v1730, %v1727
        %v2325 = vpack.c.b16 %v1731, %v1728
        %v2326 = vpack.c.b16 %v1735, %v1732
        %v2327 = vpack.c.b16 %v1736, %v1733
        %v2328 = vpack.c.b16 %v1737, %v1734
        %v2329 = vpack.c.b16 %v1741, %v1738
        %v2330 = vpack.c.b16 %v1742, %v1739
        %v2331 = vpack.c.b16 %v1743, %v1740
        %v2332 = vpack.c.b16 %v1747, %v1744
        %v2333 = vpack.c.b16 %v1748, %v1745
        %v2334 = vpack.c.b16 %v1749, %v1746
        %v2335 = vpack.c.b16 %v1753, %v1750
        %v2336 = vpack.c.b16 %v1754, %v1751
        %v2337 = vpack.c.b16 %v1755, %v1752
        %v2338 = vpack.c.b16 %v1759, %v1756
        %v2339 = vpack.c.b16 %v1760, %v1757
        %v2340 = vpack.c.b16 %v1761, %v1758
        %v2341 = vpack.c.b16 %v1765, %v1762
        %v2342 = vpack.c.b16 %v1766, %v1763
        %v2343 = vpack.c.b16 %v1767, %v1764
        %v2344 = vpack.c.b16 %v1771, %v1768
        %v2345 = vpack.c.b16 %v1772, %v1769
        %v2346 = vpack.c.b16 %v1773, %v1770
        %v2347 = vpack.c.b16 %v1777, %v1774
        %v2348 = vpack.c.b16 %v1778, %v1775
        %v2349 = vpack.c.b16 %v1779, %v1776
        %v2350 = vpack.c.b16 %v1783, %v1780
        %v2351 = vpack.c.b16 %v1784, %v1781
        %v2352 = vpack.c.b16 %v1785, %v1782
        %v2353 = vpack.c.b16 %v1789, %v1786
        %v2354 = vpack.c.b16 %v1790, %v1787
        %v2355 = vpack.c.b16 %v1791, %v1788
        %v2356 = vpack.c.b16 %v1795, %v1792
        %v2357 = vpack.c.b16 %v1796, %v1793
        %v2358 = vpack.c.b16 %v1797, %v1794
        %v2359 = vpack.c.b16 %v1801, %v1798
        %v2360 = vpack.c.b16 %v1802, %v1799
        %v2361 = vpack.c.b16 %v1803, %v1800
        %v2362 = vpack.c.b16 %v1807, %v1804
        %v2363 = vpack.c.b16 %v1808, %v1805
        %v2364 = vpack.c.b16 %v1809, %v1806
        %v2365 = vpack.c.b16 %v1813, %v1810
        %v2366 = vpack.c.b16 %v1814, %v1811
        %v2367 = vpack.c.b16 %v1815, %v1812
        %v2368 = vpack.c.b16 %v1819, %v1816
        %v2369 = vpack.c.b16 %v1820, %v1817
        %v2370 = vpack.c.b16 %v1821, %v1818
        %v2371 = vpack.c.b16 %v1825, %v1822
        %v2372 = vpack.c.b16 %v1826, %v1823
        %v2373 = vpack.c.b16 %v1827, %v1824
        %v2374 = vpack.c.b16 %v1831, %v1828
        %v2375 = vpack.c.b16 %v1832, %v1829
        %v2376 = vpack.c.b16 %v1833, %v1830
        %v2377 = vpack.c.b16 %v1837, %v1834
        %v2378 = vpack.c.b16 %v1838, %v1835
        %v2379 = vpack.c.b16 %v1839, %v1836
        %v2380 = vpack.c.b16 %v1843, %v1840
        %v2381 = vpack.c.b16 %v1844, %v1841
        %v2382 = vpack.c.b16 %v1845, %v1842
        %v2383 = vpack.c.b16 %v1849, %v1846
        %v2384 = vpack.c.b16 %v1850, %v1847
        %v2385 = vpack.c.b16 %v1851, %v1848
        %v2386 = vpack.c.b16 %v1855, %v1852
        %v2387 = vpack.c.b16 %v1856, %v1853
        %v2388 = vpack.c.b16 %v1857, %v1854
        %v2389 = vpack.c.b16 %v1861, %v1858
        %v2390 = vpack.c.b16 %v1862, %v1859
        %v2391 = vpack.c.b16 %v1863, %v1860
        %v2392 = vpack.c.b16 %v1867, %v1864
        %v2393 = vpack.c.b16 %v1868, %v1865
        %v2394 = vpack.c.b16 %v1869, %v1866
        %v2395 = vpack.c.b16 %v1873, %v1870
        %v2396 = vpack.c.b16 %v1874, %v1871
        %v2397 = vpack.c.b16 %v1875, %v1872
        %v2398 = vpack.c.b16 %v1879, %v1876
        %v2399 = vpack.c.b16 %v1880, %v1877
        %v2400 = vpack.c.b16 %v1881, %v1878
        %v2401 = vpack.c.b16 %v1885, %v1882
        %v2402 = vpack.c.b16 %v1886, %v1883
        %v2403 = vpack.c.b16 %v1887, %v1884
        %v2404 = vpack.c.b16 %v1891, %v1888
        %v2405 = vpack.c.b16 %v1892, %v1889
        %v2406 = vpack.c.b16 %v1893, %v1890
        %v2407 = vpack.c.b16 %v1897, %v1894
        %v2408 = vpack.c.b16 %v1898, %v1895
        %v2409 = vpack.c.b16 %v1899, %v1896
        %v2410 = vpack.c.b16 %v1903, %v1900
        %v2411 = vpack.c.b16 %v1904, %v1901
        %v2412 = vpack.c.b16 %v1905, %v1902
        %v2413 = vpack.c.b16 %v1909, %v1906
        %v2414 = vpack.c.b16 %v1910, %v1907
        %v2415 = vpack.c.b16 %v1911, %v1908
        %v2416 = vpack.c.b16 %v1915, %v1912
        %v2417 = vpack.c.b16 %v1916, %v1913
        %v2418 = vpack.c.b16 %v1917, %v1914
        %v2419 = vpack.c.b16 %v1921, %v1918
        %v2420 = vpack.c.b16 %v1922, %v1919
        %v2421 = vpack.c.b16 %v1923, %v1920
        %v2422 = vpack.c.b16 %v1927, %v1924
        %v2423 = vpack.c.b16 %v1928, %v1925
        %v2424 = vpack.c.b16 %v1929, %v1926
        %v2425 = vpack.c.b16 %v1933, %v1930
        %v2426 = vpack.c.b16 %v1934, %v1931
        %v2427 = vpack.c.b16 %v1935, %v1932
        %v2428 = vpack.c.b16 %v1939, %v1936
        %v2429 = vpack.c.b16 %v1940, %v1937
        %v2430 = vpack.c.b16 %v1941, %v1938
        %v2431 = vpack.c.b16 %v1945, %v1942
        %v2432 = vpack.c.b16 %v1946, %v1943
        %v2433 = vpack.c.b16 %v1947, %v1944
        %v2434 = vpack.c.b16 %v1951, %v1948
        %v2435 = vpack.c.b16 %v1952, %v1949
        %v2436 = vpack.c.b16 %v1953, %v1950
        %v2437 = vpack.c.b16 %v1957, %v1954
        %v2438 = vpack.c.b16 %v1958, %v1955
        %v2439 = vpack.c.b16 %v1959, %v1956
        %v2440 = vpack.c.b16 %v1963, %v1960
        %v2441 = vpack.c.b16 %v1964, %v1961
        %v2442 = vpack.c.b16 %v1965, %v1962
        %v2443 = vpack.c.b16 %v1969, %v1966
        %v2444 = vpack.c.b16 %v1970, %v1967
        %v2445 = vpack.c.b16 %v1971, %v1968
        %v2446 = vpack.c.b16 %v1975, %v1972
        %v2447 = vpack.c.b16 %v1976, %v1973
        %v2448 = vpack.c.b16 %v1977, %v1974
        %v2449 = vpack.c.b16 %v1981, %v1978
        %v2450 = vpack.c.b16 %v1982, %v1979
        %v2451 = vpack.c.b16 %v1983, %v1980
        %v2452 = vpack.c.b16 %v1987, %v1984
        %v2453 = vpack.c.b16 %v1988, %v1985
        %v2454 = vpack.c.b16 %v1989, %v1986
        %v2455 = vpack.c.b16 %v1993, %v1990
        %v2456 = vpack.c.b16 %v1994, %v1991
        %v2457 = vpack.c.b16 %v1995, %v1992
        %v2458 = vpack.c.b16 %v1999, %v1996
        %v2459 = vpack.c.b16 %v2000, %v1997
        %v2460 = vpack.c.b16 %v2001, %v1998
        %v2461 = vpack.c.b16 %v2005, %v2002
        %v2462 = vpack.c.b16 %v2006, %v2003
        %v2463 = vpack.c.b16 %v2007, %v2004
        %v2464 = vpack.c.b16 %v2011, %v2008
        %v2465 = vpack.c.b16 %v2012, %v2009
        %v2466 = vpack.c.b16 %v2013, %v2010
        %v2467 = vpack.c.b16 %v2017, %v2014
        %v2468 = vpack.c.b16 %v2018, %v2015
        %v2469 = vpack.c.b16 %v2019, %v2016
        %v2470 = vpack.c.b16 %v2023, %v2020
        %v2471 = vpack.c.b16 %v2024, %v2021
        %v2472 = vpack.c.b16 %v2025, %v2022
        %v2473 = vpack.c.b16 %v2029, %v2026
        %v2474 = vpack.c.b16 %v2030, %v2027
        %v2475 = vpack.c.b16 %v2031, %v2028
        %v2476 = vpack.c.b16 %v2035, %v2032
        %v2477 = vpack.c.b16 %v2036, %v2033
        %v2478 = vpack.c.b16 %v2037, %v2034
        %v2479 = vpack.c.b16 %v2041, %v2038
        %v2480 = vpack.c.b16 %v2042, %v2039
        %v2481 = vpack.c.b16 %v2043, %v2040
        %v2482 = vpack.c.b16 %v2047, %v2044
        %v2483 = vpack.c.b16 %v2048, %v2045
        %v2484 = vpack.c.b16 %v2049, %v2046
        %v2485 = vpack.c.b16 %v2053, %v2050
        %v2486 = vpack.c.b16 %v2054, %v2051
        %v2487 = vpack.c.b16 %v2055, %v2052
        %v2488 = vpack.c.b16 %v2059, %v2056
        %v2489 = vpack.c.b16 %v2060, %v2057
        %v2490 = vpack.c.b16 %v2061, %v2058
        %v2491 = vpack.c.b16 %v2065, %v2062
        %v2492 = vpack.c.b16 %v2066, %v2063
        %v2493 = vpack.c.b16 %v2067, %v2064
        %v2494 = vpack.c.b16 %v2071, %v2068
        %v2495 = vpack.c.b16 %v2072, %v2069
        %v2496 = vpack.c.b16 %v2073, %v2070
        %v2497 = vpack.c.b16 %v2077, %v2074
        %v2498 = vpack.c.b16 %v2078, %v2075
        %v2499 = vpack.c.b16 %v2079, %v2076
        %v2500 = vpack.c.b16 %v2083, %v2080
        %v2501 = vpack.c.b16 %v2084, %v2081
        %v2502 = vpack.c.b16 %v2085, %v2082
        %v2503 = vpack.c.b16 %v2089, %v2086
        %v2504 = vpack.c.b16 %v2090, %v2087
        %v2505 = vpack.c.b16 %v2091, %v2088
        %v2506 = vpack.c.b16 %v2095, %v2092
        %v2507 = vpack.c.b16 %v2096, %v2093
        %v2508 = vpack.c.b16 %v2097, %v2094
        %v2509 = vpack.c.b16 %v2101, %v2098
        %v2510 = vpack.c.b16 %v2102, %v2099
        %v2511 = vpack.c.b16 %v2103, %v2100
        %v2512 = vpack.c.b16 %v2107, %v2104
        %v2513 = vpack.c.b16 %v2108, %v2105
        %v2514 = vpack.c.b16 %v2109, %v2106
        %v2515 = vpack.c.b16 %v2113, %v2110
        %v2516 = vpack.c.b16 %v2114, %v2111
        %v2517 = vpack.c.b16 %v2115, %v2112
        %v2518 = vpack.c.b16 %v2119, %v2116
        %v2519 = vpack.c.b16 %v2120, %v2117
        %v2520 = vpack.c.b16 %v2121, %v2118
        %v2521 = vpack.c.b16 %v2125, %v2122
        %v2522 = vpack.c.b16 %v2126, %v2123
        %v2523 = vpack.c.b16 %v2127, %v2124
        %v2524 = vpack.c.b16 %v2131, %v2128
        %v2525 = vpack.c.b16 %v2132, %v2129
        %v2526 = vpack.c.b16 %v2133, %v2130
        %v2527 = vpack.c.b16 %v2137, %v2134
        %v2528 = vpack.c.b16 %v2138, %v2135
        %v2529 = vpack.c.b16 %v2139, %v2136
        %v2530 = vpack.c.b16 %v2143, %v2140
        %v2531 = vpack.c.b16 %v2144, %v2141
        %v2532 = vpack.c.b16 %v2145, %v2142
        %v2533 = vpack.c.b16 %v2149, %v2146
        %v2534 = vpack.c.b16 %v2150, %v2147
        %v2535 = vpack.c.b16 %v2151, %v2148
        %v2536 = vpack.c.b16 %v2155, %v2152
        %v2537 = vpack.c.b16 %v2156, %v2153
        %v2538 = vpack.c.b16 %v2157, %v2154
        %v2539 = vpack.c.b16 %v2161, %v2158
        %v2540 = vpack.c.b16 %v2162, %v2159
        %v2541 = vpack.c.b16 %v2163, %v2160
        %v2542 = vpack.c.b16 %v2167, %v2164
        %v2543 = vpack.c.b16 %v2168, %v2165
        %v2544 = vpack.c.b16 %v2169, %v2166
        %v2545 = vpack.c.b16 %v2173, %v2170
        %v2546 = vpack.c.b16 %v2174, %v2171
        %v2547 = vpack.c.b16 %v2175, %v2172
        %v2548 = vpack.c.b16 %v2179, %v2176
        %v2549 = vpack.c.b16 %v2180, %v2177
        %v2550 = vpack.c.b16 %v2181, %v2178
        %v2551 = vpack.c.b16 %v2185, %v2182
        %v2552 = vpack.c.b16 %v2186, %v2183
        %v2553 = vpack.c.b16 %v2187, %v2184
        %v2554 = vpack.c.b16 %v2191, %v2188
        %v2555 = vpack.c.b16 %v2192, %v2189
        %v2556 = vpack.c.b16 %v2193, %v2190
        %v2557 = vpack.c.b16 %v2197, %v2194
        %v2558 = vpack.c.b16 %v2198, %v2195
        %v2559 = vpack.c.b16 %v2199, %v2196
        %v2560 = vpack.c.b16 %v2203, %v2200
        %v2561 = vpack.c.b16 %v2204, %v2201
        %v2562 = vpack.c.b16 %v2205, %v2202
        %v2563 = vpack.c.b16 %v2209, %v2206
        %v2564 = vpack.c.b16 %v2210, %v2207
        %v2565 = vpack.c.b16 %v2211, %v2208
        %v2566 = vpack.c.b16 %v2215, %v2212
        %v2567 = vpack.c.b16 %v2216, %v2213
        %v2568 = vpack.c.b16 %v2217, %v2214
        %v2569 = vpack.c.b16 %v2221, %v2218
        %v2570 = vpack.c.b16 %v2222, %v2219
        %v2571 = vpack.c.b16 %v2223, %v2220
        %v2572 = vpack.c.b16 %v2227, %v2224
        %v2573 = vpack.c.b16 %v2228, %v2225
        %v2574 = vpack.c.b16 %v2229, %v2226
        %v2575 = vpack.c.b16 %v2233, %v2230
        %v2576 = vpack.c.b16 %v2234, %v2231
        %v2577 = vpack.c.b16 %v2235, %v2232
        %v2578 = vpack.c.b16 %v2239, %v2236
        %v2579 = vpack.c.b16 %v2240, %v2237
        %v2580 = vpack.c.b16 %v2241, %v2238
        %v2581 = vpack.c.b16 %v2245, %v2242
        %v2582 = vpack.c.b16 %v2246, %v2243
        %v2583 = vpack.c.b16 %v2247, %v2244
        %v2584 = vpack.c.b16 %v2251, %v2248
        %v2585 = vpack.c.b16 %v2252, %v2249
        %v2586 = vpack.c.b16 %v2253, %v2250
        %v2587 = vpack.c.b16 %v2257, %v2254
        %v2588 = vpack.c.b16 %v2258, %v2255
        %v2589 = vpack.c.b16 %v2259, %v2256
        %v2590 = vpack.c.b16 %v2263, %v2260
        %v2591 = vpack.c.b16 %v2264, %v2261
        %v2592 = vpack.c.b16 %v2265, %v2262
        %v2593 = vpack.c.b16 %v2269, %v2266
        %v2594 = vpack.c.b16 %v2270, %v2267
        %v2595 = vpack.c.b16 %v2271, %v2268
        %v2596 = vpack.c.b16 %v2275, %v2272
        %v2597 = vpack.c.b16 %v2276, %v2273
        %v2598 = vpack.c.b16 %v2277, %v2274
        %v2599 = vpack.c.b16 %v2281, %v2278
        %v2600 = vpack.c.b16 %v2282, %v2279
        %v2601 = vpack.c.b16 %v2283, %v2280
        %v2602 = vpack.c.b16 %v2287, %v2284
        %v2603 = vpack.c.b16 %v2288, %v2285
        %v2604 = vpack.c.b16 %v2289, %v2286
        %v2605 = vpack.c.b16 %v2293, %v2290
        %v2606 = vpack.c.b16 %v2294, %v2291
        %v2607 = vpack.c.b16 %v2295, %v2292
        %v2608 = vpack.c.b16 %v2299, %v2296
        %v2609 = vpack.c.b16 %v2300, %v2297
        %v2610 = vpack.c.b16 %v2301, %v2298
        %v2611 = vpack.c.b16 %v2305, %v2302
        %v2612 = vpack.c.b16 %v2306, %v2303
        %v2613 = vpack.c.b16 %v2307, %v2304
        %v2614 = vpack.c.b16 %v2311, %v2308
        %v2615 = vpack.c.b16 %v2312, %v2309
        %v2616 = vpack.c.b16 %v2313, %v2310
        %v2617 = vpack.c.b16 %v2317, %v2314
        %v2618 = vpack.c.b16 %v2318, %v2315
        %v2619 = vpack.c.b16 %v2319, %v2316
        %vm2820 = vcmask 269312
        %v2822 = vsel %vm2820, %v2322, 0
        %v2825 = vsel %vm2820, %v2325, 0
        %v2828 = vsel %vm2820, %v2328, 0
        %v2831 = vsel %vm2820, %v2331, 0
        %v2834 = vsel %vm2820, %v2334, 0
        %v2837 = vsel %vm2820, %v2337, 0
        %v2840 = vsel %vm2820, %v2340, 0
        %v2843 = vsel %vm2820, %v2343, 0
        %v2846 = vsel %vm2820, %v2346, 0
        %v2849 = vsel %vm2820, %v2349, 0
        %v2852 = vsel %vm2820, %v2352, 0
        %v2855 = vsel %vm2820, %v2355, 0
        %v2858 = vsel %vm2820, %v2358, 0
        %v2861 = vsel %vm2820, %v2361, 0
        %v2864 = vsel %vm2820, %v2364, 0
        %v2867 = vsel %vm2820, %v2367, 0
        %v2870 = vsel %vm2820, %v2370, 0
        %v2873 = vsel %vm2820, %v2373, 0
        %v2876 = vsel %vm2820, %v2376, 0
        %v2879 = vsel %vm2820, %v2379, 0
        %v2882 = vsel %vm2820, %v2382, 0
        %v2885 = vsel %vm2820, %v2385, 0
        %v2888 = vsel %vm2820, %v2388, 0
        %v2891 = vsel %vm2820, %v2391, 0
        %v2894 = vsel %vm2820, %v2394, 0
        %v2897 = vsel %vm2820, %v2397, 0
        %v2900 = vsel %vm2820, %v2400, 0
        %v2903 = vsel %vm2820, %v2403, 0
        %v2906 = vsel %vm2820, %v2406, 0
        %v2909 = vsel %vm2820, %v2409, 0
        %v2912 = vsel %vm2820, %v2412, 0
        %v2915 = vsel %vm2820, %v2415, 0
        %v2918 = vsel %vm2820, %v2418, 0
        %v2921 = vsel %vm2820, %v2421, 0
        %v2924 = vsel %vm2820, %v2424, 0
        %v2927 = vsel %vm2820, %v2427, 0
        %v2930 = vsel %vm2820, %v2430, 0
        %v2933 = vsel %vm2820, %v2433, 0
        %v2936 = vsel %vm2820, %v2436, 0
        %v2939 = vsel %vm2820, %v2439, 0
        %v2942 = vsel %vm2820, %v2442, 0
        %v2945 = vsel %vm2820, %v2445, 0
        %v2948 = vsel %vm2820, %v2448, 0
        %v2951 = vsel %vm2820, %v2451, 0
        %v2954 = vsel %vm2820, %v2454, 0
        %v2957 = vsel %vm2820, %v2457, 0
        %v2960 = vsel %vm2820, %v2460, 0
        %v2963 = vsel %vm2820, %v2463, 0
        %v2966 = vsel %vm2820, %v2466, 0
        %v2969 = vsel %vm2820, %v2469, 0
        %v2972 = vsel %vm2820, %v2472, 0
        %v2975 = vsel %vm2820, %v2475, 0
        %v2978 = vsel %vm2820, %v2478, 0
        %v2981 = vsel %vm2820, %v2481, 0
        %v2984 = vsel %vm2820, %v2484, 0
        %v2987 = vsel %vm2820, %v2487, 0
        %v2990 = vsel %vm2820, %v2490, 0
        %v2993 = vsel %vm2820, %v2493, 0
        %v2996 = vsel %vm2820, %v2496, 0
        %v2999 = vsel %vm2820, %v2499, 0
        %v3002 = vsel %vm2820, %v2502, 0
        %v3005 = vsel %vm2820, %v2505, 0
        %v3008 = vsel %vm2820, %v2508, 0
        %v3011 = vsel %vm2820, %v2511, 0
        %v3014 = vsel %vm2820, %v2514, 0
        %v3017 = vsel %vm2820, %v2517, 0
        %v3020 = vsel %vm2820, %v2520, 0
        %v3023 = vsel %vm2820, %v2523, 0
        %v3026 = vsel %vm2820, %v2526, 0
        %v3029 = vsel %vm2820, %v2529, 0
        %v3032 = vsel %vm2820, %v2532, 0
        %v3035 = vsel %vm2820, %v2535, 0
        %v3038 = vsel %vm2820, %v2538, 0
        %v3041 = vsel %vm2820, %v2541, 0
        %v3044 = vsel %vm2820, %v2544, 0
        %v3047 = vsel %vm2820, %v2547, 0
        %v3050 = vsel %vm2820, %v2550, 0
        %v3053 = vsel %vm2820, %v2553, 0
        %v3056 = vsel %vm2820, %v2556, 0
        %v3059 = vsel %vm2820, %v2559, 0
        %v3062 = vsel %vm2820, %v2562, 0
        %v3065 = vsel %vm2820, %v2565, 0
        %v3068 = vsel %vm2820, %v2568, 0
        %v3071 = vsel %vm2820, %v2571, 0
        %v3074 = vsel %vm2820, %v2574, 0
        %v3077 = vsel %vm2820, %v2577, 0
        %v3080 = vsel %vm2820, %v2580, 0
        %v3083 = vsel %vm2820, %v2583, 0
        %v3086 = vsel %vm2820, %v2586, 0
        %v3089 = vsel %vm2820, %v2589, 0
        %v3092 = vsel %vm2820, %v2592, 0
        %v3095 = vsel %vm2820, %v2595, 0
        %v3098 = vsel %vm2820, %v2598, 0
        %v3101 = vsel %vm2820, %v2601, 0
        %v3104 = vsel %vm2820, %v2604, 0
        %v3107 = vsel %vm2820, %v2607, 0
        %v3110 = vsel %vm2820, %v2610, 0
        %v3113 = vsel %vm2820, %v2613, 0
        %v3116 = vsel %vm2820, %v2616, 0
        %v3119 = vsel %vm2820, %v2619, 0
        %vm3121 = vcmask 1040384
        %v3122 = vsel 0, 4294967295, 65535
        %v3123 = vsel %vm3121, %v3122, 0
        %v3125 = vand.u32 %v919, %v3123
        %3127 = vmatprep.subr.bf16.mxu0 0
        %3128 = vmatpush1.bf16.msra.mxu0 %v908
        %3129 = vmatprep.subr.bf16.mxu0 0
        %3130 = vmatpush1.bf16.msra.mxu0 %v907
        %3131 = vmatprep.subr.bf16.mxu0 0
        %3132 = vmatpush1.bf16.msra.mxu0 %v906
        %3133 = vmatprep.subr.bf16.mxu0 0
        %3134 = vmatpush1.bf16.msra.mxu0 %v905
        %3135 = vmatprep.subr.bf16.mxu0 0
        %3136 = vmatpush1.bf16.msra.mxu0 %v904
        %3137 = vmatprep.subr.bf16.mxu0 0
        %3138 = vmatpush1.bf16.msra.mxu0 %v903
        %3139 = vmatprep.subr.bf16.mxu0 0
        %3140 = vmatpush1.bf16.msra.mxu0 %v902
        %3141 = vmatprep.subr.bf16.mxu0 0
        %3142 = vmatpush1.bf16.msra.mxu0 %v901
        %3143 = vmatprep.subr.bf16.mxu0 0
        %3144 = vmatpush2.bf16.msra.mxu0 %v916
        %3145 = vmatprep.subr.bf16.mxu0 0
        %3146 = vmatpush2.bf16.msra.mxu0 %v915
        %3147 = vmatprep.subr.bf16.mxu0 0
        %3148 = vmatpush2.bf16.msra.mxu0 %v914
        %3149 = vmatprep.subr.bf16.mxu0 0
        %3150 = vmatpush2.bf16.msra.mxu0 %v913
        %3151 = vmatprep.subr.bf16.mxu0 0
        %3152 = vmatpush2.bf16.msra.mxu0 %v912
        %3153 = vmatprep.subr.bf16.mxu0 0
        %3154 = vmatpush2.bf16.msra.mxu0 %v911
        %3155 = vmatprep.subr.bf16.mxu0 0
        %3156 = vmatpush2.bf16.msra.mxu0 %v910
        %3157 = vmatprep.subr.bf16.mxu0 0
        %3158 = vmatpush2.bf16.msra.mxu0 %v909
        %3159 = vmatprep.mubr.bf16.mxu0 %v2321
        %3160 = vmatmul.mubr.bf16.gmra.mxu0 %v2320
        %v3161 = vpop.f32.mrf.mxu0
        %v3162 = vadd.f32 0.0, %v3161
        %v3163 = vpop.f32.mrf.mxu0
        %v3164 = vpop.f32.mrf.mxu0
        %v3165 = vadd.f32 0.0, %v3164
        %v3166 = vpop.f32.mrf.mxu0
        %3167 = vmatprep.mubr.bf16.mxu0 %v2324
        %3168 = vmatmul.mubr.bf16.gmra.mxu0 %v2323
        %v3169 = vpop.f32.mrf.mxu0
        %v3170 = vadd.f32 0.0, %v3169
        %v3171 = vpop.f32.mrf.mxu0
        %v3172 = vpop.f32.mrf.mxu0
        %v3173 = vadd.f32 0.0, %v3172
        %v3174 = vpop.f32.mrf.mxu0
        %3175 = vmatprep.mubr.bf16.mxu0 %v2327
        %3176 = vmatmul.mubr.bf16.gmra.mxu0 %v2326
        %v3177 = vpop.f32.mrf.mxu0
        %v3178 = vadd.f32 0.0, %v3177
        %v3179 = vpop.f32.mrf.mxu0
        %v3180 = vpop.f32.mrf.mxu0
        %v3181 = vadd.f32 0.0, %v3180
        %v3182 = vpop.f32.mrf.mxu0
        %3183 = vmatprep.mubr.bf16.mxu0 %v2330
        %3184 = vmatmul.mubr.bf16.gmra.mxu0 %v2329
        %v3185 = vpop.f32.mrf.mxu0
        %v3186 = vadd.f32 0.0, %v3185
        %v3187 = vpop.f32.mrf.mxu0
        %v3188 = vpop.f32.mrf.mxu0
        %v3189 = vadd.f32 0.0, %v3188
        %v3190 = vpop.f32.mrf.mxu0
        %3191 = vmatprep.mubr.bf16.mxu0 %v2333
        %3192 = vmatmul.mubr.bf16.gmra.mxu0 %v2332
        %v3193 = vpop.f32.mrf.mxu0
        %v3194 = vadd.f32 0.0, %v3193
        %v3195 = vpop.f32.mrf.mxu0
        %v3196 = vpop.f32.mrf.mxu0
        %v3197 = vadd.f32 0.0, %v3196
        %v3198 = vpop.f32.mrf.mxu0
        %3199 = vmatprep.mubr.bf16.mxu0 %v2336
        %3200 = vmatmul.mubr.bf16.gmra.mxu0 %v2335
        %v3201 = vpop.f32.mrf.mxu0
        %v3202 = vadd.f32 0.0, %v3201
        %v3203 = vpop.f32.mrf.mxu0
        %v3204 = vpop.f32.mrf.mxu0
        %v3205 = vadd.f32 0.0, %v3204
        %v3206 = vpop.f32.mrf.mxu0
        %3207 = vmatprep.mubr.bf16.mxu0 %v2339
        %3208 = vmatmul.mubr.bf16.gmra.mxu0 %v2338
        %v3209 = vpop.f32.mrf.mxu0
        %v3210 = vadd.f32 0.0, %v3209
        %v3211 = vpop.f32.mrf.mxu0
        %v3212 = vpop.f32.mrf.mxu0
        %v3213 = vadd.f32 0.0, %v3212
        %v3214 = vpop.f32.mrf.mxu0
        %3215 = vmatprep.mubr.bf16.mxu0 %v2342
        %3216 = vmatmul.mubr.bf16.gmra.mxu0 %v2341
        %v3217 = vpop.f32.mrf.mxu0
        %v3218 = vadd.f32 0.0, %v3217
        %v3219 = vpop.f32.mrf.mxu0
        %v3220 = vpop.f32.mrf.mxu0
        %v3221 = vadd.f32 0.0, %v3220
        %v3222 = vpop.f32.mrf.mxu0
        %3223 = vmatprep.mubr.bf16.mxu0 %v2345
        %3224 = vmatmul.mubr.bf16.gmra.mxu0 %v2344
        %v3225 = vpop.f32.mrf.mxu0
        %v3226 = vadd.f32 0.0, %v3225
        %v3227 = vpop.f32.mrf.mxu0
        %v3228 = vpop.f32.mrf.mxu0
        %v3229 = vadd.f32 0.0, %v3228
        %v3230 = vpop.f32.mrf.mxu0
        %3231 = vmatprep.mubr.bf16.mxu0 %v2348
        %3232 = vmatmul.mubr.bf16.gmra.mxu0 %v2347
        %v3233 = vpop.f32.mrf.mxu0
        %v3234 = vadd.f32 0.0, %v3233
        %v3235 = vpop.f32.mrf.mxu0
        %v3236 = vpop.f32.mrf.mxu0
        %v3237 = vadd.f32 0.0, %v3236
        %v3238 = vpop.f32.mrf.mxu0
        %3239 = vmatprep.mubr.bf16.mxu0 %v2351
        %3240 = vmatmul.mubr.bf16.gmra.mxu0 %v2350
        %v3241 = vpop.f32.mrf.mxu0
        %v3242 = vadd.f32 0.0, %v3241
        %v3243 = vpop.f32.mrf.mxu0
        %v3244 = vpop.f32.mrf.mxu0
        %v3245 = vadd.f32 0.0, %v3244
        %v3246 = vpop.f32.mrf.mxu0
        %3247 = vmatprep.mubr.bf16.mxu0 %v2354
        %3248 = vmatmul.mubr.bf16.gmra.mxu0 %v2353
        %v3249 = vpop.f32.mrf.mxu0
        %v3250 = vadd.f32 0.0, %v3249
        %v3251 = vpop.f32.mrf.mxu0
        %v3252 = vpop.f32.mrf.mxu0
        %v3253 = vadd.f32 0.0, %v3252
        %v3254 = vpop.f32.mrf.mxu0
        %3255 = vmatprep.mubr.bf16.mxu0 %v2357
        %3256 = vmatmul.mubr.bf16.gmra.mxu0 %v2356
        %v3257 = vpop.f32.mrf.mxu0
        %v3258 = vadd.f32 0.0, %v3257
        %v3259 = vpop.f32.mrf.mxu0
        %v3260 = vpop.f32.mrf.mxu0
        %v3261 = vadd.f32 0.0, %v3260
        %v3262 = vpop.f32.mrf.mxu0
        %3263 = vmatprep.mubr.bf16.mxu0 %v2360
        %3264 = vmatmul.mubr.bf16.gmra.mxu0 %v2359
        %v3265 = vpop.f32.mrf.mxu0
        %v3266 = vadd.f32 0.0, %v3265
        %v3267 = vpop.f32.mrf.mxu0
        %v3268 = vpop.f32.mrf.mxu0
        %v3269 = vadd.f32 0.0, %v3268
        %v3270 = vpop.f32.mrf.mxu0
        %3271 = vmatprep.mubr.bf16.mxu0 %v2363
        %3272 = vmatmul.mubr.bf16.gmra.mxu0 %v2362
        %v3273 = vpop.f32.mrf.mxu0
        %v3274 = vadd.f32 0.0, %v3273
        %v3275 = vpop.f32.mrf.mxu0
        %v3276 = vpop.f32.mrf.mxu0
        %v3277 = vadd.f32 0.0, %v3276
        %v3278 = vpop.f32.mrf.mxu0
        %3279 = vmatprep.mubr.bf16.mxu0 %v2366
        %3280 = vmatmul.mubr.bf16.gmra.mxu0 %v2365
        %v3281 = vpop.f32.mrf.mxu0
        %v3282 = vadd.f32 0.0, %v3281
        %v3283 = vpop.f32.mrf.mxu0
        %v3284 = vpop.f32.mrf.mxu0
        %v3285 = vadd.f32 0.0, %v3284
        %v3286 = vpop.f32.mrf.mxu0
        %3287 = vmatprep.mubr.bf16.mxu0 %v2369
        %3288 = vmatmul.mubr.bf16.gmra.mxu0 %v2368
        %v3289 = vpop.f32.mrf.mxu0
        %v3290 = vadd.f32 0.0, %v3289
        %v3291 = vpop.f32.mrf.mxu0
        %v3292 = vpop.f32.mrf.mxu0
        %v3293 = vadd.f32 0.0, %v3292
        %v3294 = vpop.f32.mrf.mxu0
        %3295 = vmatprep.mubr.bf16.mxu0 %v2372
        %3296 = vmatmul.mubr.bf16.gmra.mxu0 %v2371
        %v3297 = vpop.f32.mrf.mxu0
        %v3298 = vadd.f32 0.0, %v3297
        %v3299 = vpop.f32.mrf.mxu0
        %v3300 = vpop.f32.mrf.mxu0
        %v3301 = vadd.f32 0.0, %v3300
        %v3302 = vpop.f32.mrf.mxu0
        %3303 = vmatprep.mubr.bf16.mxu0 %v2375
        %3304 = vmatmul.mubr.bf16.gmra.mxu0 %v2374
        %v3305 = vpop.f32.mrf.mxu0
        %v3306 = vadd.f32 0.0, %v3305
        %v3307 = vpop.f32.mrf.mxu0
        %v3308 = vpop.f32.mrf.mxu0
        %v3309 = vadd.f32 0.0, %v3308
        %v3310 = vpop.f32.mrf.mxu0
        %3311 = vmatprep.mubr.bf16.mxu0 %v2378
        %3312 = vmatmul.mubr.bf16.gmra.mxu0 %v2377
        %v3313 = vpop.f32.mrf.mxu0
        %v3314 = vadd.f32 0.0, %v3313
        %v3315 = vpop.f32.mrf.mxu0
        %v3316 = vpop.f32.mrf.mxu0
        %v3317 = vadd.f32 0.0, %v3316
        %v3318 = vpop.f32.mrf.mxu0
        %3319 = vmatprep.mubr.bf16.mxu0 %v2381
        %3320 = vmatmul.mubr.bf16.gmra.mxu0 %v2380
        %v3321 = vpop.f32.mrf.mxu0
        %v3322 = vadd.f32 0.0, %v3321
        %v3323 = vpop.f32.mrf.mxu0
        %v3324 = vpop.f32.mrf.mxu0
        %v3325 = vadd.f32 0.0, %v3324
        %v3326 = vpop.f32.mrf.mxu0
        %3327 = vmatprep.mubr.bf16.mxu0 %v2384
        %3328 = vmatmul.mubr.bf16.gmra.mxu0 %v2383
        %v3329 = vpop.f32.mrf.mxu0
        %v3330 = vadd.f32 0.0, %v3329
        %v3331 = vpop.f32.mrf.mxu0
        %v3332 = vpop.f32.mrf.mxu0
        %v3333 = vadd.f32 0.0, %v3332
        %v3334 = vpop.f32.mrf.mxu0
        %3335 = vmatprep.mubr.bf16.mxu0 %v2387
        %3336 = vmatmul.mubr.bf16.gmra.mxu0 %v2386
        %v3337 = vpop.f32.mrf.mxu0
        %v3338 = vadd.f32 0.0, %v3337
        %v3339 = vpop.f32.mrf.mxu0
        %v3340 = vpop.f32.mrf.mxu0
        %v3341 = vadd.f32 0.0, %v3340
        %v3342 = vpop.f32.mrf.mxu0
        %3343 = vmatprep.mubr.bf16.mxu0 %v2390
        %3344 = vmatmul.mubr.bf16.gmra.mxu0 %v2389
        %v3345 = vpop.f32.mrf.mxu0
        %v3346 = vadd.f32 0.0, %v3345
        %v3347 = vpop.f32.mrf.mxu0
        %v3348 = vpop.f32.mrf.mxu0
        %v3349 = vadd.f32 0.0, %v3348
        %v3350 = vpop.f32.mrf.mxu0
        %3351 = vmatprep.mubr.bf16.mxu0 %v2393
        %3352 = vmatmul.mubr.bf16.gmra.mxu0 %v2392
        %v3353 = vpop.f32.mrf.mxu0
        %v3354 = vadd.f32 0.0, %v3353
        %v3355 = vpop.f32.mrf.mxu0
        %v3356 = vpop.f32.mrf.mxu0
        %v3357 = vadd.f32 0.0, %v3356
        %v3358 = vpop.f32.mrf.mxu0
        %3359 = vmatprep.mubr.bf16.mxu0 %v2396
        %3360 = vmatmul.mubr.bf16.gmra.mxu0 %v2395
        %v3361 = vpop.f32.mrf.mxu0
        %v3362 = vadd.f32 0.0, %v3361
        %v3363 = vpop.f32.mrf.mxu0
        %v3364 = vpop.f32.mrf.mxu0
        %v3365 = vadd.f32 0.0, %v3364
        %v3366 = vpop.f32.mrf.mxu0
        %3367 = vmatprep.mubr.bf16.mxu0 %v2399
        %3368 = vmatmul.mubr.bf16.gmra.mxu0 %v2398
        %v3369 = vpop.f32.mrf.mxu0
        %v3370 = vadd.f32 0.0, %v3369
        %v3371 = vpop.f32.mrf.mxu0
        %v3372 = vpop.f32.mrf.mxu0
        %v3373 = vadd.f32 0.0, %v3372
        %v3374 = vpop.f32.mrf.mxu0
        %3375 = vmatprep.mubr.bf16.mxu0 %v2402
        %3376 = vmatmul.mubr.bf16.gmra.mxu0 %v2401
        %v3377 = vpop.f32.mrf.mxu0
        %v3378 = vadd.f32 0.0, %v3377
        %v3379 = vpop.f32.mrf.mxu0
        %v3380 = vpop.f32.mrf.mxu0
        %v3381 = vadd.f32 0.0, %v3380
        %v3382 = vpop.f32.mrf.mxu0
        %3383 = vmatprep.mubr.bf16.mxu0 %v2405
        %3384 = vmatmul.mubr.bf16.gmra.mxu0 %v2404
        %v3385 = vpop.f32.mrf.mxu0
        %v3386 = vadd.f32 0.0, %v3385
        %v3387 = vpop.f32.mrf.mxu0
        %v3388 = vpop.f32.mrf.mxu0
        %v3389 = vadd.f32 0.0, %v3388
        %v3390 = vpop.f32.mrf.mxu0
        %3391 = vmatprep.mubr.bf16.mxu0 %v2408
        %3392 = vmatmul.mubr.bf16.gmra.mxu0 %v2407
        %v3393 = vpop.f32.mrf.mxu0
        %v3394 = vadd.f32 0.0, %v3393
        %v3395 = vpop.f32.mrf.mxu0
        %v3396 = vpop.f32.mrf.mxu0
        %v3397 = vadd.f32 0.0, %v3396
        %v3398 = vpop.f32.mrf.mxu0
        %3399 = vmatprep.mubr.bf16.mxu0 %v2411
        %3400 = vmatmul.mubr.bf16.gmra.mxu0 %v2410
        %v3401 = vpop.f32.mrf.mxu0
        %v3402 = vadd.f32 0.0, %v3401
        %v3403 = vpop.f32.mrf.mxu0
        %v3404 = vpop.f32.mrf.mxu0
        %v3405 = vadd.f32 0.0, %v3404
        %v3406 = vpop.f32.mrf.mxu0
        %3407 = vmatprep.mubr.bf16.mxu0 %v2414
        %3408 = vmatmul.mubr.bf16.gmra.mxu0 %v2413
        %v3409 = vpop.f32.mrf.mxu0
        %v3410 = vadd.f32 0.0, %v3409
        %v3411 = vpop.f32.mrf.mxu0
        %v3412 = vpop.f32.mrf.mxu0
        %v3413 = vadd.f32 0.0, %v3412
        %v3414 = vpop.f32.mrf.mxu0
        %3415 = vmatprep.mubr.bf16.mxu0 %v2417
        %3416 = vmatmul.mubr.bf16.gmra.mxu0 %v2416
        %v3417 = vpop.f32.mrf.mxu0
        %v3418 = vadd.f32 0.0, %v3417
        %v3419 = vpop.f32.mrf.mxu0
        %v3420 = vpop.f32.mrf.mxu0
        %v3421 = vadd.f32 0.0, %v3420
        %v3422 = vpop.f32.mrf.mxu0
        %3423 = vmatprep.mubr.bf16.mxu0 %v2420
        %3424 = vmatmul.mubr.bf16.gmra.mxu0 %v2419
        %v3425 = vpop.f32.mrf.mxu0
        %v3426 = vadd.f32 0.0, %v3425
        %v3427 = vpop.f32.mrf.mxu0
        %v3428 = vpop.f32.mrf.mxu0
        %v3429 = vadd.f32 0.0, %v3428
        %v3430 = vpop.f32.mrf.mxu0
        %3431 = vmatprep.mubr.bf16.mxu0 %v2423
        %3432 = vmatmul.mubr.bf16.gmra.mxu0 %v2422
        %v3433 = vpop.f32.mrf.mxu0
        %v3434 = vadd.f32 0.0, %v3433
        %v3435 = vpop.f32.mrf.mxu0
        %v3436 = vpop.f32.mrf.mxu0
        %v3437 = vadd.f32 0.0, %v3436
        %v3438 = vpop.f32.mrf.mxu0
        %3439 = vmatprep.mubr.bf16.mxu0 %v2426
        %3440 = vmatmul.mubr.bf16.gmra.mxu0 %v2425
        %v3441 = vpop.f32.mrf.mxu0
        %v3442 = vadd.f32 0.0, %v3441
        %v3443 = vpop.f32.mrf.mxu0
        %v3444 = vpop.f32.mrf.mxu0
        %v3445 = vadd.f32 0.0, %v3444
        %v3446 = vpop.f32.mrf.mxu0
        %3447 = vmatprep.mubr.bf16.mxu0 %v2429
        %3448 = vmatmul.mubr.bf16.gmra.mxu0 %v2428
        %v3449 = vpop.f32.mrf.mxu0
        %v3450 = vadd.f32 0.0, %v3449
        %v3451 = vpop.f32.mrf.mxu0
        %v3452 = vpop.f32.mrf.mxu0
        %v3453 = vadd.f32 0.0, %v3452
        %v3454 = vpop.f32.mrf.mxu0
        %3455 = vmatprep.mubr.bf16.mxu0 %v2432
        %3456 = vmatmul.mubr.bf16.gmra.mxu0 %v2431
        %v3457 = vpop.f32.mrf.mxu0
        %v3458 = vadd.f32 0.0, %v3457
        %v3459 = vpop.f32.mrf.mxu0
        %v3460 = vpop.f32.mrf.mxu0
        %v3461 = vadd.f32 0.0, %v3460
        %v3462 = vpop.f32.mrf.mxu0
        %3463 = vmatprep.mubr.bf16.mxu0 %v2435
        %3464 = vmatmul.mubr.bf16.gmra.mxu0 %v2434
        %v3465 = vpop.f32.mrf.mxu0
        %v3466 = vadd.f32 0.0, %v3465
        %v3467 = vpop.f32.mrf.mxu0
        %v3468 = vpop.f32.mrf.mxu0
        %v3469 = vadd.f32 0.0, %v3468
        %v3470 = vpop.f32.mrf.mxu0
        %3471 = vmatprep.mubr.bf16.mxu0 %v2438
        %3472 = vmatmul.mubr.bf16.gmra.mxu0 %v2437
        %v3473 = vpop.f32.mrf.mxu0
        %v3474 = vadd.f32 0.0, %v3473
        %v3475 = vpop.f32.mrf.mxu0
        %v3476 = vpop.f32.mrf.mxu0
        %v3477 = vadd.f32 0.0, %v3476
        %v3478 = vpop.f32.mrf.mxu0
        %3479 = vmatprep.mubr.bf16.mxu0 %v2441
        %3480 = vmatmul.mubr.bf16.gmra.mxu0 %v2440
        %v3481 = vpop.f32.mrf.mxu0
        %v3482 = vadd.f32 0.0, %v3481
        %v3483 = vpop.f32.mrf.mxu0
        %v3484 = vpop.f32.mrf.mxu0
        %v3485 = vadd.f32 0.0, %v3484
        %v3486 = vpop.f32.mrf.mxu0
        %3487 = vmatprep.mubr.bf16.mxu0 %v2444
        %3488 = vmatmul.mubr.bf16.gmra.mxu0 %v2443
        %v3489 = vpop.f32.mrf.mxu0
        %v3490 = vadd.f32 0.0, %v3489
        %v3491 = vpop.f32.mrf.mxu0
        %v3492 = vpop.f32.mrf.mxu0
        %v3493 = vadd.f32 0.0, %v3492
        %v3494 = vpop.f32.mrf.mxu0
        %3495 = vmatprep.mubr.bf16.mxu0 %v2447
        %3496 = vmatmul.mubr.bf16.gmra.mxu0 %v2446
        %v3497 = vpop.f32.mrf.mxu0
        %v3498 = vadd.f32 0.0, %v3497
        %v3499 = vpop.f32.mrf.mxu0
        %v3500 = vpop.f32.mrf.mxu0
        %v3501 = vadd.f32 0.0, %v3500
        %v3502 = vpop.f32.mrf.mxu0
        %3503 = vmatprep.mubr.bf16.mxu0 %v2450
        %3504 = vmatmul.mubr.bf16.gmra.mxu0 %v2449
        %v3505 = vpop.f32.mrf.mxu0
        %v3506 = vadd.f32 0.0, %v3505
        %v3507 = vpop.f32.mrf.mxu0
        %v3508 = vpop.f32.mrf.mxu0
        %v3509 = vadd.f32 0.0, %v3508
        %v3510 = vpop.f32.mrf.mxu0
        %3511 = vmatprep.mubr.bf16.mxu0 %v2453
        %3512 = vmatmul.mubr.bf16.gmra.mxu0 %v2452
        %v3513 = vpop.f32.mrf.mxu0
        %v3514 = vadd.f32 0.0, %v3513
        %v3515 = vpop.f32.mrf.mxu0
        %v3516 = vpop.f32.mrf.mxu0
        %v3517 = vadd.f32 0.0, %v3516
        %v3518 = vpop.f32.mrf.mxu0
        %3519 = vmatprep.mubr.bf16.mxu0 %v2456
        %3520 = vmatmul.mubr.bf16.gmra.mxu0 %v2455
        %v3521 = vpop.f32.mrf.mxu0
        %v3522 = vadd.f32 0.0, %v3521
        %v3523 = vpop.f32.mrf.mxu0
        %v3524 = vpop.f32.mrf.mxu0
        %v3525 = vadd.f32 0.0, %v3524
        %v3526 = vpop.f32.mrf.mxu0
        %3527 = vmatprep.mubr.bf16.mxu0 %v2459
        %3528 = vmatmul.mubr.bf16.gmra.mxu0 %v2458
        %v3529 = vpop.f32.mrf.mxu0
        %v3530 = vadd.f32 0.0, %v3529
        %v3531 = vpop.f32.mrf.mxu0
        %v3532 = vpop.f32.mrf.mxu0
        %v3533 = vadd.f32 0.0, %v3532
        %v3534 = vpop.f32.mrf.mxu0
        %3535 = vmatprep.mubr.bf16.mxu0 %v2462
        %3536 = vmatmul.mubr.bf16.gmra.mxu0 %v2461
        %v3537 = vpop.f32.mrf.mxu0
        %v3538 = vadd.f32 0.0, %v3537
        %v3539 = vpop.f32.mrf.mxu0
        %v3540 = vpop.f32.mrf.mxu0
        %v3541 = vadd.f32 0.0, %v3540
        %v3542 = vpop.f32.mrf.mxu0
        %3543 = vmatprep.mubr.bf16.mxu0 %v2465
        %3544 = vmatmul.mubr.bf16.gmra.mxu0 %v2464
        %v3545 = vpop.f32.mrf.mxu0
        %v3546 = vadd.f32 0.0, %v3545
        %v3547 = vpop.f32.mrf.mxu0
        %v3548 = vpop.f32.mrf.mxu0
        %v3549 = vadd.f32 0.0, %v3548
        %v3550 = vpop.f32.mrf.mxu0
        %3551 = vmatprep.mubr.bf16.mxu0 %v2468
        %3552 = vmatmul.mubr.bf16.gmra.mxu0 %v2467
        %v3553 = vpop.f32.mrf.mxu0
        %v3554 = vadd.f32 0.0, %v3553
        %v3555 = vpop.f32.mrf.mxu0
        %v3556 = vpop.f32.mrf.mxu0
        %v3557 = vadd.f32 0.0, %v3556
        %v3558 = vpop.f32.mrf.mxu0
        %3559 = vmatprep.mubr.bf16.mxu0 %v2471
        %3560 = vmatmul.mubr.bf16.gmra.mxu0 %v2470
        %v3561 = vpop.f32.mrf.mxu0
        %v3562 = vadd.f32 0.0, %v3561
        %v3563 = vpop.f32.mrf.mxu0
        %v3564 = vpop.f32.mrf.mxu0
        %v3565 = vadd.f32 0.0, %v3564
        %v3566 = vpop.f32.mrf.mxu0
        %3567 = vmatprep.mubr.bf16.mxu0 %v2474
        %3568 = vmatmul.mubr.bf16.gmra.mxu0 %v2473
        %v3569 = vpop.f32.mrf.mxu0
        %v3570 = vadd.f32 0.0, %v3569
        %v3571 = vpop.f32.mrf.mxu0
        %v3572 = vpop.f32.mrf.mxu0
        %v3573 = vadd.f32 0.0, %v3572
        %v3574 = vpop.f32.mrf.mxu0
        %3575 = vmatprep.mubr.bf16.mxu0 %v2477
        %3576 = vmatmul.mubr.bf16.gmra.mxu0 %v2476
        %v3577 = vpop.f32.mrf.mxu0
        %v3578 = vadd.f32 0.0, %v3577
        %v3579 = vpop.f32.mrf.mxu0
        %v3580 = vpop.f32.mrf.mxu0
        %v3581 = vadd.f32 0.0, %v3580
        %v3582 = vpop.f32.mrf.mxu0
        %3583 = vmatprep.mubr.bf16.mxu0 %v2480
        %3584 = vmatmul.mubr.bf16.gmra.mxu0 %v2479
        %v3585 = vpop.f32.mrf.mxu0
        %v3586 = vadd.f32 0.0, %v3585
        %v3587 = vpop.f32.mrf.mxu0
        %v3588 = vpop.f32.mrf.mxu0
        %v3589 = vadd.f32 0.0, %v3588
        %v3590 = vpop.f32.mrf.mxu0
        %3591 = vmatprep.mubr.bf16.mxu0 %v2483
        %3592 = vmatmul.mubr.bf16.gmra.mxu0 %v2482
        %v3593 = vpop.f32.mrf.mxu0
        %v3594 = vadd.f32 0.0, %v3593
        %v3595 = vpop.f32.mrf.mxu0
        %v3596 = vpop.f32.mrf.mxu0
        %v3597 = vadd.f32 0.0, %v3596
        %v3598 = vpop.f32.mrf.mxu0
        %3599 = vmatprep.mubr.bf16.mxu0 %v2486
        %3600 = vmatmul.mubr.bf16.gmra.mxu0 %v2485
        %v3601 = vpop.f32.mrf.mxu0
        %v3602 = vadd.f32 0.0, %v3601
        %v3603 = vpop.f32.mrf.mxu0
        %v3604 = vpop.f32.mrf.mxu0
        %v3605 = vadd.f32 0.0, %v3604
        %v3606 = vpop.f32.mrf.mxu0
        %3607 = vmatprep.mubr.bf16.mxu0 %v2489
        %3608 = vmatmul.mubr.bf16.gmra.mxu0 %v2488
        %v3609 = vpop.f32.mrf.mxu0
        %v3610 = vadd.f32 0.0, %v3609
        %v3611 = vpop.f32.mrf.mxu0
        %v3612 = vpop.f32.mrf.mxu0
        %v3613 = vadd.f32 0.0, %v3612
        %v3614 = vpop.f32.mrf.mxu0
        %3615 = vmatprep.mubr.bf16.mxu0 %v2492
        %3616 = vmatmul.mubr.bf16.gmra.mxu0 %v2491
        %v3617 = vpop.f32.mrf.mxu0
        %v3618 = vadd.f32 0.0, %v3617
        %v3619 = vpop.f32.mrf.mxu0
        %v3620 = vpop.f32.mrf.mxu0
        %v3621 = vadd.f32 0.0, %v3620
        %v3622 = vpop.f32.mrf.mxu0
        %3623 = vmatprep.mubr.bf16.mxu0 %v2495
        %3624 = vmatmul.mubr.bf16.gmra.mxu0 %v2494
        %v3625 = vpop.f32.mrf.mxu0
        %v3626 = vadd.f32 0.0, %v3625
        %v3627 = vpop.f32.mrf.mxu0
        %v3628 = vpop.f32.mrf.mxu0
        %v3629 = vadd.f32 0.0, %v3628
        %v3630 = vpop.f32.mrf.mxu0
        %3631 = vmatprep.mubr.bf16.mxu0 %v2498
        %3632 = vmatmul.mubr.bf16.gmra.mxu0 %v2497
        %v3633 = vpop.f32.mrf.mxu0
        %v3634 = vadd.f32 0.0, %v3633
        %v3635 = vpop.f32.mrf.mxu0
        %v3636 = vpop.f32.mrf.mxu0
        %v3637 = vadd.f32 0.0, %v3636
        %v3638 = vpop.f32.mrf.mxu0
        %3639 = vmatprep.mubr.bf16.mxu0 %v2501
        %3640 = vmatmul.mubr.bf16.gmra.mxu0 %v2500
        %v3641 = vpop.f32.mrf.mxu0
        %v3642 = vadd.f32 0.0, %v3641
        %v3643 = vpop.f32.mrf.mxu0
        %v3644 = vpop.f32.mrf.mxu0
        %v3645 = vadd.f32 0.0, %v3644
        %v3646 = vpop.f32.mrf.mxu0
        %3647 = vmatprep.mubr.bf16.mxu0 %v2504
        %3648 = vmatmul.mubr.bf16.gmra.mxu0 %v2503
        %v3649 = vpop.f32.mrf.mxu0
        %v3650 = vadd.f32 0.0, %v3649
        %v3651 = vpop.f32.mrf.mxu0
        %v3652 = vpop.f32.mrf.mxu0
        %v3653 = vadd.f32 0.0, %v3652
        %v3654 = vpop.f32.mrf.mxu0
        %3655 = vmatprep.mubr.bf16.mxu0 %v2507
        %3656 = vmatmul.mubr.bf16.gmra.mxu0 %v2506
        %v3657 = vpop.f32.mrf.mxu0
        %v3658 = vadd.f32 0.0, %v3657
        %v3659 = vpop.f32.mrf.mxu0
        %v3660 = vpop.f32.mrf.mxu0
        %v3661 = vadd.f32 0.0, %v3660
        %v3662 = vpop.f32.mrf.mxu0
        %3663 = vmatprep.mubr.bf16.mxu0 %v2510
        %3664 = vmatmul.mubr.bf16.gmra.mxu0 %v2509
        %v3665 = vpop.f32.mrf.mxu0
        %v3666 = vadd.f32 0.0, %v3665
        %v3667 = vpop.f32.mrf.mxu0
        %v3668 = vpop.f32.mrf.mxu0
        %v3669 = vadd.f32 0.0, %v3668
        %v3670 = vpop.f32.mrf.mxu0
        %3671 = vmatprep.mubr.bf16.mxu0 %v2513
        %3672 = vmatmul.mubr.bf16.gmra.mxu0 %v2512
        %v3673 = vpop.f32.mrf.mxu0
        %v3674 = vadd.f32 0.0, %v3673
        %v3675 = vpop.f32.mrf.mxu0
        %v3676 = vpop.f32.mrf.mxu0
        %v3677 = vadd.f32 0.0, %v3676
        %v3678 = vpop.f32.mrf.mxu0
        %3679 = vmatprep.mubr.bf16.mxu0 %v2516
        %3680 = vmatmul.mubr.bf16.gmra.mxu0 %v2515
        %v3681 = vpop.f32.mrf.mxu0
        %v3682 = vadd.f32 0.0, %v3681
        %v3683 = vpop.f32.mrf.mxu0
        %v3684 = vpop.f32.mrf.mxu0
        %v3685 = vadd.f32 0.0, %v3684
        %v3686 = vpop.f32.mrf.mxu0
        %3687 = vmatprep.mubr.bf16.mxu0 %v2519
        %3688 = vmatmul.mubr.bf16.gmra.mxu0 %v2518
        %v3689 = vpop.f32.mrf.mxu0
        %v3690 = vadd.f32 0.0, %v3689
        %v3691 = vpop.f32.mrf.mxu0
        %v3692 = vpop.f32.mrf.mxu0
        %v3693 = vadd.f32 0.0, %v3692
        %v3694 = vpop.f32.mrf.mxu0
        %3695 = vmatprep.mubr.bf16.mxu0 %v2522
        %3696 = vmatmul.mubr.bf16.gmra.mxu0 %v2521
        %v3697 = vpop.f32.mrf.mxu0
        %v3698 = vadd.f32 0.0, %v3697
        %v3699 = vpop.f32.mrf.mxu0
        %v3700 = vpop.f32.mrf.mxu0
        %v3701 = vadd.f32 0.0, %v3700
        %v3702 = vpop.f32.mrf.mxu0
        %3703 = vmatprep.mubr.bf16.mxu0 %v2525
        %3704 = vmatmul.mubr.bf16.gmra.mxu0 %v2524
        %v3705 = vpop.f32.mrf.mxu0
        %v3706 = vadd.f32 0.0, %v3705
        %v3707 = vpop.f32.mrf.mxu0
        %v3708 = vpop.f32.mrf.mxu0
        %v3709 = vadd.f32 0.0, %v3708
        %v3710 = vpop.f32.mrf.mxu0
        %3711 = vmatprep.mubr.bf16.mxu0 %v2528
        %3712 = vmatmul.mubr.bf16.gmra.mxu0 %v2527
        %v3713 = vpop.f32.mrf.mxu0
        %v3714 = vadd.f32 0.0, %v3713
        %v3715 = vpop.f32.mrf.mxu0
        %v3716 = vpop.f32.mrf.mxu0
        %v3717 = vadd.f32 0.0, %v3716
        %v3718 = vpop.f32.mrf.mxu0
        %3719 = vmatprep.mubr.bf16.mxu0 %v2531
        %3720 = vmatmul.mubr.bf16.gmra.mxu0 %v2530
        %v3721 = vpop.f32.mrf.mxu0
        %v3722 = vadd.f32 0.0, %v3721
        %v3723 = vpop.f32.mrf.mxu0
        %v3724 = vpop.f32.mrf.mxu0
        %v3725 = vadd.f32 0.0, %v3724
        %v3726 = vpop.f32.mrf.mxu0
        %3727 = vmatprep.mubr.bf16.mxu0 %v2534
        %3728 = vmatmul.mubr.bf16.gmra.mxu0 %v2533
        %v3729 = vpop.f32.mrf.mxu0
        %v3730 = vadd.f32 0.0, %v3729
        %v3731 = vpop.f32.mrf.mxu0
        %v3732 = vpop.f32.mrf.mxu0
        %v3733 = vadd.f32 0.0, %v3732
        %v3734 = vpop.f32.mrf.mxu0
        %3735 = vmatprep.mubr.bf16.mxu0 %v2537
        %3736 = vmatmul.mubr.bf16.gmra.mxu0 %v2536
        %v3737 = vpop.f32.mrf.mxu0
        %v3738 = vadd.f32 0.0, %v3737
        %v3739 = vpop.f32.mrf.mxu0
        %v3740 = vpop.f32.mrf.mxu0
        %v3741 = vadd.f32 0.0, %v3740
        %v3742 = vpop.f32.mrf.mxu0
        %3743 = vmatprep.mubr.bf16.mxu0 %v2540
        %3744 = vmatmul.mubr.bf16.gmra.mxu0 %v2539
        %v3745 = vpop.f32.mrf.mxu0
        %v3746 = vadd.f32 0.0, %v3745
        %v3747 = vpop.f32.mrf.mxu0
        %v3748 = vpop.f32.mrf.mxu0
        %v3749 = vadd.f32 0.0, %v3748
        %v3750 = vpop.f32.mrf.mxu0
        %3751 = vmatprep.mubr.bf16.mxu0 %v2543
        %3752 = vmatmul.mubr.bf16.gmra.mxu0 %v2542
        %v3753 = vpop.f32.mrf.mxu0
        %v3754 = vadd.f32 0.0, %v3753
        %v3755 = vpop.f32.mrf.mxu0
        %v3756 = vpop.f32.mrf.mxu0
        %v3757 = vadd.f32 0.0, %v3756
        %v3758 = vpop.f32.mrf.mxu0
        %3759 = vmatprep.mubr.bf16.mxu0 %v2546
        %3760 = vmatmul.mubr.bf16.gmra.mxu0 %v2545
        %v3761 = vpop.f32.mrf.mxu0
        %v3762 = vadd.f32 0.0, %v3761
        %v3763 = vpop.f32.mrf.mxu0
        %v3764 = vpop.f32.mrf.mxu0
        %v3765 = vadd.f32 0.0, %v3764
        %v3766 = vpop.f32.mrf.mxu0
        %3767 = vmatprep.mubr.bf16.mxu0 %v2549
        %3768 = vmatmul.mubr.bf16.gmra.mxu0 %v2548
        %v3769 = vpop.f32.mrf.mxu0
        %v3770 = vadd.f32 0.0, %v3769
        %v3771 = vpop.f32.mrf.mxu0
        %v3772 = vpop.f32.mrf.mxu0
        %v3773 = vadd.f32 0.0, %v3772
        %v3774 = vpop.f32.mrf.mxu0
        %3775 = vmatprep.mubr.bf16.mxu0 %v2552
        %3776 = vmatmul.mubr.bf16.gmra.mxu0 %v2551
        %v3777 = vpop.f32.mrf.mxu0
        %v3778 = vadd.f32 0.0, %v3777
        %v3779 = vpop.f32.mrf.mxu0
        %v3780 = vpop.f32.mrf.mxu0
        %v3781 = vadd.f32 0.0, %v3780
        %v3782 = vpop.f32.mrf.mxu0
        %3783 = vmatprep.mubr.bf16.mxu0 %v2555
        %3784 = vmatmul.mubr.bf16.gmra.mxu0 %v2554
        %v3785 = vpop.f32.mrf.mxu0
        %v3786 = vadd.f32 0.0, %v3785
        %v3787 = vpop.f32.mrf.mxu0
        %v3788 = vpop.f32.mrf.mxu0
        %v3789 = vadd.f32 0.0, %v3788
        %v3790 = vpop.f32.mrf.mxu0
        %3791 = vmatprep.mubr.bf16.mxu0 %v2558
        %3792 = vmatmul.mubr.bf16.gmra.mxu0 %v2557
        %v3793 = vpop.f32.mrf.mxu0
        %v3794 = vadd.f32 0.0, %v3793
        %v3795 = vpop.f32.mrf.mxu0
        %v3796 = vpop.f32.mrf.mxu0
        %v3797 = vadd.f32 0.0, %v3796
        %v3798 = vpop.f32.mrf.mxu0
        %3799 = vmatprep.mubr.bf16.mxu0 %v2561
        %3800 = vmatmul.mubr.bf16.gmra.mxu0 %v2560
        %v3801 = vpop.f32.mrf.mxu0
        %v3802 = vadd.f32 0.0, %v3801
        %v3803 = vpop.f32.mrf.mxu0
        %v3804 = vpop.f32.mrf.mxu0
        %v3805 = vadd.f32 0.0, %v3804
        %v3806 = vpop.f32.mrf.mxu0
        %3807 = vmatprep.mubr.bf16.mxu0 %v2564
        %3808 = vmatmul.mubr.bf16.gmra.mxu0 %v2563
        %v3809 = vpop.f32.mrf.mxu0
        %v3810 = vadd.f32 0.0, %v3809
        %v3811 = vpop.f32.mrf.mxu0
        %v3812 = vpop.f32.mrf.mxu0
        %v3813 = vadd.f32 0.0, %v3812
        %v3814 = vpop.f32.mrf.mxu0
        %3815 = vmatprep.mubr.bf16.mxu0 %v2567
        %3816 = vmatmul.mubr.bf16.gmra.mxu0 %v2566
        %v3817 = vpop.f32.mrf.mxu0
        %v3818 = vadd.f32 0.0, %v3817
        %v3819 = vpop.f32.mrf.mxu0
        %v3820 = vpop.f32.mrf.mxu0
        %v3821 = vadd.f32 0.0, %v3820
        %v3822 = vpop.f32.mrf.mxu0
        %3823 = vmatprep.mubr.bf16.mxu0 %v2570
        %3824 = vmatmul.mubr.bf16.gmra.mxu0 %v2569
        %v3825 = vpop.f32.mrf.mxu0
        %v3826 = vadd.f32 0.0, %v3825
        %v3827 = vpop.f32.mrf.mxu0
        %v3828 = vpop.f32.mrf.mxu0
        %v3829 = vadd.f32 0.0, %v3828
        %v3830 = vpop.f32.mrf.mxu0
        %3831 = vmatprep.mubr.bf16.mxu0 %v2573
        %3832 = vmatmul.mubr.bf16.gmra.mxu0 %v2572
        %v3833 = vpop.f32.mrf.mxu0
        %v3834 = vadd.f32 0.0, %v3833
        %v3835 = vpop.f32.mrf.mxu0
        %v3836 = vpop.f32.mrf.mxu0
        %v3837 = vadd.f32 0.0, %v3836
        %v3838 = vpop.f32.mrf.mxu0
        %3839 = vmatprep.mubr.bf16.mxu0 %v2576
        %3840 = vmatmul.mubr.bf16.gmra.mxu0 %v2575
        %v3841 = vpop.f32.mrf.mxu0
        %v3842 = vadd.f32 0.0, %v3841
        %v3843 = vpop.f32.mrf.mxu0
        %v3844 = vpop.f32.mrf.mxu0
        %v3845 = vadd.f32 0.0, %v3844
        %v3846 = vpop.f32.mrf.mxu0
        %3847 = vmatprep.mubr.bf16.mxu0 %v2579
        %3848 = vmatmul.mubr.bf16.gmra.mxu0 %v2578
        %v3849 = vpop.f32.mrf.mxu0
        %v3850 = vadd.f32 0.0, %v3849
        %v3851 = vpop.f32.mrf.mxu0
        %v3852 = vpop.f32.mrf.mxu0
        %v3853 = vadd.f32 0.0, %v3852
        %v3854 = vpop.f32.mrf.mxu0
        %3855 = vmatprep.mubr.bf16.mxu0 %v2582
        %3856 = vmatmul.mubr.bf16.gmra.mxu0 %v2581
        %v3857 = vpop.f32.mrf.mxu0
        %v3858 = vadd.f32 0.0, %v3857
        %v3859 = vpop.f32.mrf.mxu0
        %v3860 = vpop.f32.mrf.mxu0
        %v3861 = vadd.f32 0.0, %v3860
        %v3862 = vpop.f32.mrf.mxu0
        %3863 = vmatprep.mubr.bf16.mxu0 %v2585
        %3864 = vmatmul.mubr.bf16.gmra.mxu0 %v2584
        %v3865 = vpop.f32.mrf.mxu0
        %v3866 = vadd.f32 0.0, %v3865
        %v3867 = vpop.f32.mrf.mxu0
        %v3868 = vpop.f32.mrf.mxu0
        %v3869 = vadd.f32 0.0, %v3868
        %v3870 = vpop.f32.mrf.mxu0
        %3871 = vmatprep.mubr.bf16.mxu0 %v2588
        %3872 = vmatmul.mubr.bf16.gmra.mxu0 %v2587
        %v3873 = vpop.f32.mrf.mxu0
        %v3874 = vadd.f32 0.0, %v3873
        %v3875 = vpop.f32.mrf.mxu0
        %v3876 = vpop.f32.mrf.mxu0
        %v3877 = vadd.f32 0.0, %v3876
        %v3878 = vpop.f32.mrf.mxu0
        %3879 = vmatprep.mubr.bf16.mxu0 %v2591
        %3880 = vmatmul.mubr.bf16.gmra.mxu0 %v2590
        %v3881 = vpop.f32.mrf.mxu0
        %v3882 = vadd.f32 0.0, %v3881
        %v3883 = vpop.f32.mrf.mxu0
        %v3884 = vpop.f32.mrf.mxu0
        %v3885 = vadd.f32 0.0, %v3884
        %v3886 = vpop.f32.mrf.mxu0
        %3887 = vmatprep.mubr.bf16.mxu0 %v2594
        %3888 = vmatmul.mubr.bf16.gmra.mxu0 %v2593
        %v3889 = vpop.f32.mrf.mxu0
        %v3890 = vadd.f32 0.0, %v3889
        %v3891 = vpop.f32.mrf.mxu0
        %v3892 = vpop.f32.mrf.mxu0
        %v3893 = vadd.f32 0.0, %v3892
        %v3894 = vpop.f32.mrf.mxu0
        %3895 = vmatprep.mubr.bf16.mxu0 %v2597
        %3896 = vmatmul.mubr.bf16.gmra.mxu0 %v2596
        %v3897 = vpop.f32.mrf.mxu0
        %v3898 = vadd.f32 0.0, %v3897
        %v3899 = vpop.f32.mrf.mxu0
        %v3900 = vpop.f32.mrf.mxu0
        %v3901 = vadd.f32 0.0, %v3900
        %v3902 = vpop.f32.mrf.mxu0
        %3903 = vmatprep.mubr.bf16.mxu0 %v2600
        %3904 = vmatmul.mubr.bf16.gmra.mxu0 %v2599
        %v3905 = vpop.f32.mrf.mxu0
        %v3906 = vadd.f32 0.0, %v3905
        %v3907 = vpop.f32.mrf.mxu0
        %v3908 = vpop.f32.mrf.mxu0
        %v3909 = vadd.f32 0.0, %v3908
        %v3910 = vpop.f32.mrf.mxu0
        %3911 = vmatprep.mubr.bf16.mxu0 %v2603
        %3912 = vmatmul.mubr.bf16.gmra.mxu0 %v2602
        %v3913 = vpop.f32.mrf.mxu0
        %v3914 = vadd.f32 0.0, %v3913
        %v3915 = vpop.f32.mrf.mxu0
        %v3916 = vpop.f32.mrf.mxu0
        %v3917 = vadd.f32 0.0, %v3916
        %v3918 = vpop.f32.mrf.mxu0
        %3919 = vmatprep.mubr.bf16.mxu0 %v2606
        %3920 = vmatmul.mubr.bf16.gmra.mxu0 %v2605
        %v3921 = vpop.f32.mrf.mxu0
        %v3922 = vadd.f32 0.0, %v3921
        %v3923 = vpop.f32.mrf.mxu0
        %v3924 = vpop.f32.mrf.mxu0
        %v3925 = vadd.f32 0.0, %v3924
        %v3926 = vpop.f32.mrf.mxu0
        %3927 = vmatprep.mubr.bf16.mxu0 %v2609
        %3928 = vmatmul.mubr.bf16.gmra.mxu0 %v2608
        %v3929 = vpop.f32.mrf.mxu0
        %v3930 = vadd.f32 0.0, %v3929
        %v3931 = vpop.f32.mrf.mxu0
        %v3932 = vpop.f32.mrf.mxu0
        %v3933 = vadd.f32 0.0, %v3932
        %v3934 = vpop.f32.mrf.mxu0
        %3935 = vmatprep.mubr.bf16.mxu0 %v2612
        %3936 = vmatmul.mubr.bf16.gmra.mxu0 %v2611
        %v3937 = vpop.f32.mrf.mxu0
        %v3938 = vadd.f32 0.0, %v3937
        %v3939 = vpop.f32.mrf.mxu0
        %v3940 = vpop.f32.mrf.mxu0
        %v3941 = vadd.f32 0.0, %v3940
        %v3942 = vpop.f32.mrf.mxu0
        %3943 = vmatprep.mubr.bf16.mxu0 %v2615
        %3944 = vmatmul.mubr.bf16.gmra.mxu0 %v2614
        %v3945 = vpop.f32.mrf.mxu0
        %v3946 = vadd.f32 0.0, %v3945
        %v3947 = vpop.f32.mrf.mxu0
        %v3948 = vpop.f32.mrf.mxu0
        %v3949 = vadd.f32 0.0, %v3948
        %v3950 = vpop.f32.mrf.mxu0
        %3951 = vmatprep.mubr.bf16.mxu0 %v2618
        %3952 = vmatmul.mubr.bf16.gmra.mxu0 %v2617
        %v3953 = vpop.f32.mrf.mxu0
        %v3954 = vadd.f32 0.0, %v3953
        %v3955 = vpop.f32.mrf.mxu0
        %v3956 = vpop.f32.mrf.mxu0
        %v3957 = vadd.f32 0.0, %v3956
        %v3958 = vpop.f32.mrf.mxu0
        %3959 = vdwg.mxu0
        %3960 = vmatprep.subr.bf16.mxu0 0
        %3961 = vmatpush1.bf16.msra.mxu0 0
        %3962 = vmatprep.subr.bf16.mxu0 0
        %3963 = vmatpush1.bf16.msra.mxu0 0
        %3964 = vmatprep.subr.bf16.mxu0 0
        %3965 = vmatpush1.bf16.msra.mxu0 0
        %3966 = vmatprep.subr.bf16.mxu0 0
        %3967 = vmatpush1.bf16.msra.mxu0 0
        %3968 = vmatprep.subr.bf16.mxu0 0
        %3969 = vmatpush1.bf16.msra.mxu0 0
        %3970 = vmatprep.subr.bf16.mxu0 0
        %3971 = vmatpush1.bf16.msra.mxu0 %v3125
        %3972 = vmatprep.subr.bf16.mxu0 0
        %3973 = vmatpush1.bf16.msra.mxu0 %v918
        %3974 = vmatprep.subr.bf16.mxu0 0
        %3975 = vmatpush1.bf16.msra.mxu0 %v917
        %3976 = vmatprep.subr.bf16.mxu0 0
        %3977 = vmatpush2.bf16.msra.mxu0 0
        %3978 = vmatprep.subr.bf16.mxu0 0
        %3979 = vmatpush2.bf16.msra.mxu0 0
        %3980 = vmatprep.subr.bf16.mxu0 0
        %3981 = vmatpush2.bf16.msra.mxu0 0
        %3982 = vmatprep.subr.bf16.mxu0 0
        %3983 = vmatpush2.bf16.msra.mxu0 0
        %3984 = vmatprep.subr.bf16.mxu0 0
        %3985 = vmatpush2.bf16.msra.mxu0 0
        %3986 = vmatprep.subr.bf16.mxu0 0
        %3987 = vmatpush2.bf16.msra.mxu0 0
        %3988 = vmatprep.subr.bf16.mxu0 0
        %3989 = vmatpush2.bf16.msra.mxu0 0
        %3990 = vmatprep.subr.bf16.mxu0 0
        %3991 = vmatpush2.bf16.msra.mxu0 0
        %3992 = vmatprep.mubr.bf16.mxu0 0
        %3993 = vmatmul.mubr.bf16.gmra.mxu0 %v2822
        %v3994 = vpop.f32.mrf.mxu0
        %v3995 = vadd.f32 %v3162, %v3994
        %v3996 = vpop.f32.mrf.mxu0
        %v3997 = vpop.f32.mrf.mxu0
        %v3998 = vadd.f32 %v3165, %v3997
        %v3999 = vpop.f32.mrf.mxu0
        %4000 = vmatprep.mubr.bf16.mxu0 0
        %4001 = vmatmul.mubr.bf16.gmra.mxu0 %v2825
        %v4002 = vpop.f32.mrf.mxu0
        %v4003 = vadd.f32 %v3170, %v4002
        %v4004 = vpop.f32.mrf.mxu0
        %v4005 = vpop.f32.mrf.mxu0
        %v4006 = vadd.f32 %v3173, %v4005
        %v4007 = vpop.f32.mrf.mxu0
        %4008 = vmatprep.mubr.bf16.mxu0 0
        %4009 = vmatmul.mubr.bf16.gmra.mxu0 %v2828
        %v4010 = vpop.f32.mrf.mxu0
        %v4011 = vadd.f32 %v3178, %v4010
        %v4012 = vpop.f32.mrf.mxu0
        %v4013 = vpop.f32.mrf.mxu0
        %v4014 = vadd.f32 %v3181, %v4013
        %v4015 = vpop.f32.mrf.mxu0
        %4016 = vmatprep.mubr.bf16.mxu0 0
        %4017 = vmatmul.mubr.bf16.gmra.mxu0 %v2831
        %v4018 = vpop.f32.mrf.mxu0
        %v4019 = vadd.f32 %v3186, %v4018
        %v4020 = vpop.f32.mrf.mxu0
        %v4021 = vpop.f32.mrf.mxu0
        %v4022 = vadd.f32 %v3189, %v4021
        %v4023 = vpop.f32.mrf.mxu0
        %4024 = vmatprep.mubr.bf16.mxu0 0
        %4025 = vmatmul.mubr.bf16.gmra.mxu0 %v2834
        %v4026 = vpop.f32.mrf.mxu0
        %v4027 = vadd.f32 %v3194, %v4026
        %v4028 = vpop.f32.mrf.mxu0
        %v4029 = vpop.f32.mrf.mxu0
        %v4030 = vadd.f32 %v3197, %v4029
        %v4031 = vpop.f32.mrf.mxu0
        %4032 = vmatprep.mubr.bf16.mxu0 0
        %4033 = vmatmul.mubr.bf16.gmra.mxu0 %v2837
        %v4034 = vpop.f32.mrf.mxu0
        %v4035 = vadd.f32 %v3202, %v4034
        %v4036 = vpop.f32.mrf.mxu0
        %v4037 = vpop.f32.mrf.mxu0
        %v4038 = vadd.f32 %v3205, %v4037
        %v4039 = vpop.f32.mrf.mxu0
        %4040 = vmatprep.mubr.bf16.mxu0 0
        %4041 = vmatmul.mubr.bf16.gmra.mxu0 %v2840
        %v4042 = vpop.f32.mrf.mxu0
        %v4043 = vadd.f32 %v3210, %v4042
        %v4044 = vpop.f32.mrf.mxu0
        %v4045 = vpop.f32.mrf.mxu0
        %v4046 = vadd.f32 %v3213, %v4045
        %v4047 = vpop.f32.mrf.mxu0
        %4048 = vmatprep.mubr.bf16.mxu0 0
        %4049 = vmatmul.mubr.bf16.gmra.mxu0 %v2843
        %v4050 = vpop.f32.mrf.mxu0
        %v4051 = vadd.f32 %v3218, %v4050
        %v4052 = vpop.f32.mrf.mxu0
        %v4053 = vpop.f32.mrf.mxu0
        %v4054 = vadd.f32 %v3221, %v4053
        %v4055 = vpop.f32.mrf.mxu0
        %4056 = vmatprep.mubr.bf16.mxu0 0
        %4057 = vmatmul.mubr.bf16.gmra.mxu0 %v2846
        %v4058 = vpop.f32.mrf.mxu0
        %v4059 = vadd.f32 %v3226, %v4058
        %v4060 = vpop.f32.mrf.mxu0
        %v4061 = vpop.f32.mrf.mxu0
        %v4062 = vadd.f32 %v3229, %v4061
        %v4063 = vpop.f32.mrf.mxu0
        %4064 = vmatprep.mubr.bf16.mxu0 0
        %4065 = vmatmul.mubr.bf16.gmra.mxu0 %v2849
        %v4066 = vpop.f32.mrf.mxu0
        %v4067 = vadd.f32 %v3234, %v4066
        %v4068 = vpop.f32.mrf.mxu0
        %v4069 = vpop.f32.mrf.mxu0
        %v4070 = vadd.f32 %v3237, %v4069
        %v4071 = vpop.f32.mrf.mxu0
        %4072 = vmatprep.mubr.bf16.mxu0 0
        %4073 = vmatmul.mubr.bf16.gmra.mxu0 %v2852
        %v4074 = vpop.f32.mrf.mxu0
        %v4075 = vadd.f32 %v3242, %v4074
        %v4076 = vpop.f32.mrf.mxu0
        %v4077 = vpop.f32.mrf.mxu0
        %v4078 = vadd.f32 %v3245, %v4077
        %v4079 = vpop.f32.mrf.mxu0
        %4080 = vmatprep.mubr.bf16.mxu0 0
        %4081 = vmatmul.mubr.bf16.gmra.mxu0 %v2855
        %v4082 = vpop.f32.mrf.mxu0
        %v4083 = vadd.f32 %v3250, %v4082
        %v4084 = vpop.f32.mrf.mxu0
        %v4085 = vpop.f32.mrf.mxu0
        %v4086 = vadd.f32 %v3253, %v4085
        %v4087 = vpop.f32.mrf.mxu0
        %4088 = vmatprep.mubr.bf16.mxu0 0
        %4089 = vmatmul.mubr.bf16.gmra.mxu0 %v2858
        %v4090 = vpop.f32.mrf.mxu0
        %v4091 = vadd.f32 %v3258, %v4090
        %v4092 = vpop.f32.mrf.mxu0
        %v4093 = vpop.f32.mrf.mxu0
        %v4094 = vadd.f32 %v3261, %v4093
        %v4095 = vpop.f32.mrf.mxu0
        %4096 = vmatprep.mubr.bf16.mxu0 0
        %4097 = vmatmul.mubr.bf16.gmra.mxu0 %v2861
        %v4098 = vpop.f32.mrf.mxu0
        %v4099 = vadd.f32 %v3266, %v4098
        %v4100 = vpop.f32.mrf.mxu0
        %v4101 = vpop.f32.mrf.mxu0
        %v4102 = vadd.f32 %v3269, %v4101
        %v4103 = vpop.f32.mrf.mxu0
        %4104 = vmatprep.mubr.bf16.mxu0 0
        %4105 = vmatmul.mubr.bf16.gmra.mxu0 %v2864
        %v4106 = vpop.f32.mrf.mxu0
        %v4107 = vadd.f32 %v3274, %v4106
        %v4108 = vpop.f32.mrf.mxu0
        %v4109 = vpop.f32.mrf.mxu0
        %v4110 = vadd.f32 %v3277, %v4109
        %v4111 = vpop.f32.mrf.mxu0
        %4112 = vmatprep.mubr.bf16.mxu0 0
        %4113 = vmatmul.mubr.bf16.gmra.mxu0 %v2867
        %v4114 = vpop.f32.mrf.mxu0
        %v4115 = vadd.f32 %v3282, %v4114
        %v4116 = vpop.f32.mrf.mxu0
        %v4117 = vpop.f32.mrf.mxu0
        %v4118 = vadd.f32 %v3285, %v4117
        %v4119 = vpop.f32.mrf.mxu0
        %4120 = vmatprep.mubr.bf16.mxu0 0
        %4121 = vmatmul.mubr.bf16.gmra.mxu0 %v2870
        %v4122 = vpop.f32.mrf.mxu0
        %v4123 = vadd.f32 %v3290, %v4122
        %v4124 = vpop.f32.mrf.mxu0
        %v4125 = vpop.f32.mrf.mxu0
        %v4126 = vadd.f32 %v3293, %v4125
        %v4127 = vpop.f32.mrf.mxu0
        %4128 = vmatprep.mubr.bf16.mxu0 0
        %4129 = vmatmul.mubr.bf16.gmra.mxu0 %v2873
        %v4130 = vpop.f32.mrf.mxu0
        %v4131 = vadd.f32 %v3298, %v4130
        %v4132 = vpop.f32.mrf.mxu0
        %v4133 = vpop.f32.mrf.mxu0
        %v4134 = vadd.f32 %v3301, %v4133
        %v4135 = vpop.f32.mrf.mxu0
        %4136 = vmatprep.mubr.bf16.mxu0 0
        %4137 = vmatmul.mubr.bf16.gmra.mxu0 %v2876
        %v4138 = vpop.f32.mrf.mxu0
        %v4139 = vadd.f32 %v3306, %v4138
        %v4140 = vpop.f32.mrf.mxu0
        %v4141 = vpop.f32.mrf.mxu0
        %v4142 = vadd.f32 %v3309, %v4141
        %v4143 = vpop.f32.mrf.mxu0
        %4144 = vmatprep.mubr.bf16.mxu0 0
        %4145 = vmatmul.mubr.bf16.gmra.mxu0 %v2879
        %v4146 = vpop.f32.mrf.mxu0
        %v4147 = vadd.f32 %v3314, %v4146
        %v4148 = vpop.f32.mrf.mxu0
        %v4149 = vpop.f32.mrf.mxu0
        %v4150 = vadd.f32 %v3317, %v4149
        %v4151 = vpop.f32.mrf.mxu0
        %4152 = vmatprep.mubr.bf16.mxu0 0
        %4153 = vmatmul.mubr.bf16.gmra.mxu0 %v2882
        %v4154 = vpop.f32.mrf.mxu0
        %v4155 = vadd.f32 %v3322, %v4154
        %v4156 = vpop.f32.mrf.mxu0
        %v4157 = vpop.f32.mrf.mxu0
        %v4158 = vadd.f32 %v3325, %v4157
        %v4159 = vpop.f32.mrf.mxu0
        %4160 = vmatprep.mubr.bf16.mxu0 0
        %4161 = vmatmul.mubr.bf16.gmra.mxu0 %v2885
        %v4162 = vpop.f32.mrf.mxu0
        %v4163 = vadd.f32 %v3330, %v4162
        %v4164 = vpop.f32.mrf.mxu0
        %v4165 = vpop.f32.mrf.mxu0
        %v4166 = vadd.f32 %v3333, %v4165
        %v4167 = vpop.f32.mrf.mxu0
        %4168 = vmatprep.mubr.bf16.mxu0 0
        %4169 = vmatmul.mubr.bf16.gmra.mxu0 %v2888
        %v4170 = vpop.f32.mrf.mxu0
        %v4171 = vadd.f32 %v3338, %v4170
        %v4172 = vpop.f32.mrf.mxu0
        %v4173 = vpop.f32.mrf.mxu0
        %v4174 = vadd.f32 %v3341, %v4173
        %v4175 = vpop.f32.mrf.mxu0
        %4176 = vmatprep.mubr.bf16.mxu0 0
        %4177 = vmatmul.mubr.bf16.gmra.mxu0 %v2891
        %v4178 = vpop.f32.mrf.mxu0
        %v4179 = vadd.f32 %v3346, %v4178
        %v4180 = vpop.f32.mrf.mxu0
        %v4181 = vpop.f32.mrf.mxu0
        %v4182 = vadd.f32 %v3349, %v4181
        %v4183 = vpop.f32.mrf.mxu0
        %4184 = vmatprep.mubr.bf16.mxu0 0
        %4185 = vmatmul.mubr.bf16.gmra.mxu0 %v2894
        %v4186 = vpop.f32.mrf.mxu0
        %v4187 = vadd.f32 %v3354, %v4186
        %v4188 = vpop.f32.mrf.mxu0
        %v4189 = vpop.f32.mrf.mxu0
        %v4190 = vadd.f32 %v3357, %v4189
        %v4191 = vpop.f32.mrf.mxu0
        %4192 = vmatprep.mubr.bf16.mxu0 0
        %4193 = vmatmul.mubr.bf16.gmra.mxu0 %v2897
        %v4194 = vpop.f32.mrf.mxu0
        %v4195 = vadd.f32 %v3362, %v4194
        %v4196 = vpop.f32.mrf.mxu0
        %v4197 = vpop.f32.mrf.mxu0
        %v4198 = vadd.f32 %v3365, %v4197
        %v4199 = vpop.f32.mrf.mxu0
        %4200 = vmatprep.mubr.bf16.mxu0 0
        %4201 = vmatmul.mubr.bf16.gmra.mxu0 %v2900
        %v4202 = vpop.f32.mrf.mxu0
        %v4203 = vadd.f32 %v3370, %v4202
        %v4204 = vpop.f32.mrf.mxu0
        %v4205 = vpop.f32.mrf.mxu0
        %v4206 = vadd.f32 %v3373, %v4205
        %v4207 = vpop.f32.mrf.mxu0
        %4208 = vmatprep.mubr.bf16.mxu0 0
        %4209 = vmatmul.mubr.bf16.gmra.mxu0 %v2903
        %v4210 = vpop.f32.mrf.mxu0
        %v4211 = vadd.f32 %v3378, %v4210
        %v4212 = vpop.f32.mrf.mxu0
        %v4213 = vpop.f32.mrf.mxu0
        %v4214 = vadd.f32 %v3381, %v4213
        %v4215 = vpop.f32.mrf.mxu0
        %4216 = vmatprep.mubr.bf16.mxu0 0
        %4217 = vmatmul.mubr.bf16.gmra.mxu0 %v2906
        %v4218 = vpop.f32.mrf.mxu0
        %v4219 = vadd.f32 %v3386, %v4218
        %v4220 = vpop.f32.mrf.mxu0
        %v4221 = vpop.f32.mrf.mxu0
        %v4222 = vadd.f32 %v3389, %v4221
        %v4223 = vpop.f32.mrf.mxu0
        %4224 = vmatprep.mubr.bf16.mxu0 0
        %4225 = vmatmul.mubr.bf16.gmra.mxu0 %v2909
        %v4226 = vpop.f32.mrf.mxu0
        %v4227 = vadd.f32 %v3394, %v4226
        %v4228 = vpop.f32.mrf.mxu0
        %v4229 = vpop.f32.mrf.mxu0
        %v4230 = vadd.f32 %v3397, %v4229
        %v4231 = vpop.f32.mrf.mxu0
        %4232 = vmatprep.mubr.bf16.mxu0 0
        %4233 = vmatmul.mubr.bf16.gmra.mxu0 %v2912
        %v4234 = vpop.f32.mrf.mxu0
        %v4235 = vadd.f32 %v3402, %v4234
        %v4236 = vpop.f32.mrf.mxu0
        %v4237 = vpop.f32.mrf.mxu0
        %v4238 = vadd.f32 %v3405, %v4237
        %v4239 = vpop.f32.mrf.mxu0
        %4240 = vmatprep.mubr.bf16.mxu0 0
        %4241 = vmatmul.mubr.bf16.gmra.mxu0 %v2915
        %v4242 = vpop.f32.mrf.mxu0
        %v4243 = vadd.f32 %v3410, %v4242
        %v4244 = vpop.f32.mrf.mxu0
        %v4245 = vpop.f32.mrf.mxu0
        %v4246 = vadd.f32 %v3413, %v4245
        %v4247 = vpop.f32.mrf.mxu0
        %4248 = vmatprep.mubr.bf16.mxu0 0
        %4249 = vmatmul.mubr.bf16.gmra.mxu0 %v2918
        %v4250 = vpop.f32.mrf.mxu0
        %v4251 = vadd.f32 %v3418, %v4250
        %v4252 = vpop.f32.mrf.mxu0
        %v4253 = vpop.f32.mrf.mxu0
        %v4254 = vadd.f32 %v3421, %v4253
        %v4255 = vpop.f32.mrf.mxu0
        %4256 = vmatprep.mubr.bf16.mxu0 0
        %4257 = vmatmul.mubr.bf16.gmra.mxu0 %v2921
        %v4258 = vpop.f32.mrf.mxu0
        %v4259 = vadd.f32 %v3426, %v4258
        %v4260 = vpop.f32.mrf.mxu0
        %v4261 = vpop.f32.mrf.mxu0
        %v4262 = vadd.f32 %v3429, %v4261
        %v4263 = vpop.f32.mrf.mxu0
        %4264 = vmatprep.mubr.bf16.mxu0 0
        %4265 = vmatmul.mubr.bf16.gmra.mxu0 %v2924
        %v4266 = vpop.f32.mrf.mxu0
        %v4267 = vadd.f32 %v3434, %v4266
        %v4268 = vpop.f32.mrf.mxu0
        %v4269 = vpop.f32.mrf.mxu0
        %v4270 = vadd.f32 %v3437, %v4269
        %v4271 = vpop.f32.mrf.mxu0
        %4272 = vmatprep.mubr.bf16.mxu0 0
        %4273 = vmatmul.mubr.bf16.gmra.mxu0 %v2927
        %v4274 = vpop.f32.mrf.mxu0
        %v4275 = vadd.f32 %v3442, %v4274
        %v4276 = vpop.f32.mrf.mxu0
        %v4277 = vpop.f32.mrf.mxu0
        %v4278 = vadd.f32 %v3445, %v4277
        %v4279 = vpop.f32.mrf.mxu0
        %4280 = vmatprep.mubr.bf16.mxu0 0
        %4281 = vmatmul.mubr.bf16.gmra.mxu0 %v2930
        %v4282 = vpop.f32.mrf.mxu0
        %v4283 = vadd.f32 %v3450, %v4282
        %v4284 = vpop.f32.mrf.mxu0
        %v4285 = vpop.f32.mrf.mxu0
        %v4286 = vadd.f32 %v3453, %v4285
        %v4287 = vpop.f32.mrf.mxu0
        %4288 = vmatprep.mubr.bf16.mxu0 0
        %4289 = vmatmul.mubr.bf16.gmra.mxu0 %v2933
        %v4290 = vpop.f32.mrf.mxu0
        %v4291 = vadd.f32 %v3458, %v4290
        %v4292 = vpop.f32.mrf.mxu0
        %v4293 = vpop.f32.mrf.mxu0
        %v4294 = vadd.f32 %v3461, %v4293
        %v4295 = vpop.f32.mrf.mxu0
        %4296 = vmatprep.mubr.bf16.mxu0 0
        %4297 = vmatmul.mubr.bf16.gmra.mxu0 %v2936
        %v4298 = vpop.f32.mrf.mxu0
        %v4299 = vadd.f32 %v3466, %v4298
        %v4300 = vpop.f32.mrf.mxu0
        %v4301 = vpop.f32.mrf.mxu0
        %v4302 = vadd.f32 %v3469, %v4301
        %v4303 = vpop.f32.mrf.mxu0
        %4304 = vmatprep.mubr.bf16.mxu0 0
        %4305 = vmatmul.mubr.bf16.gmra.mxu0 %v2939
        %v4306 = vpop.f32.mrf.mxu0
        %v4307 = vadd.f32 %v3474, %v4306
        %v4308 = vpop.f32.mrf.mxu0
        %v4309 = vpop.f32.mrf.mxu0
        %v4310 = vadd.f32 %v3477, %v4309
        %v4311 = vpop.f32.mrf.mxu0
        %4312 = vmatprep.mubr.bf16.mxu0 0
        %4313 = vmatmul.mubr.bf16.gmra.mxu0 %v2942
        %v4314 = vpop.f32.mrf.mxu0
        %v4315 = vadd.f32 %v3482, %v4314
        %v4316 = vpop.f32.mrf.mxu0
        %v4317 = vpop.f32.mrf.mxu0
        %v4318 = vadd.f32 %v3485, %v4317
        %v4319 = vpop.f32.mrf.mxu0
        %4320 = vmatprep.mubr.bf16.mxu0 0
        %4321 = vmatmul.mubr.bf16.gmra.mxu0 %v2945
        %v4322 = vpop.f32.mrf.mxu0
        %v4323 = vadd.f32 %v3490, %v4322
        %v4324 = vpop.f32.mrf.mxu0
        %v4325 = vpop.f32.mrf.mxu0
        %v4326 = vadd.f32 %v3493, %v4325
        %v4327 = vpop.f32.mrf.mxu0
        %4328 = vmatprep.mubr.bf16.mxu0 0
        %4329 = vmatmul.mubr.bf16.gmra.mxu0 %v2948
        %v4330 = vpop.f32.mrf.mxu0
        %v4331 = vadd.f32 %v3498, %v4330
        %v4332 = vpop.f32.mrf.mxu0
        %v4333 = vpop.f32.mrf.mxu0
        %v4334 = vadd.f32 %v3501, %v4333
        %v4335 = vpop.f32.mrf.mxu0
        %4336 = vmatprep.mubr.bf16.mxu0 0
        %4337 = vmatmul.mubr.bf16.gmra.mxu0 %v2951
        %v4338 = vpop.f32.mrf.mxu0
        %v4339 = vadd.f32 %v3506, %v4338
        %v4340 = vpop.f32.mrf.mxu0
        %v4341 = vpop.f32.mrf.mxu0
        %v4342 = vadd.f32 %v3509, %v4341
        %v4343 = vpop.f32.mrf.mxu0
        %4344 = vmatprep.mubr.bf16.mxu0 0
        %4345 = vmatmul.mubr.bf16.gmra.mxu0 %v2954
        %v4346 = vpop.f32.mrf.mxu0
        %v4347 = vadd.f32 %v3514, %v4346
        %v4348 = vpop.f32.mrf.mxu0
        %v4349 = vpop.f32.mrf.mxu0
        %v4350 = vadd.f32 %v3517, %v4349
        %v4351 = vpop.f32.mrf.mxu0
        %4352 = vmatprep.mubr.bf16.mxu0 0
        %4353 = vmatmul.mubr.bf16.gmra.mxu0 %v2957
        %v4354 = vpop.f32.mrf.mxu0
        %v4355 = vadd.f32 %v3522, %v4354
        %v4356 = vpop.f32.mrf.mxu0
        %v4357 = vpop.f32.mrf.mxu0
        %v4358 = vadd.f32 %v3525, %v4357
        %v4359 = vpop.f32.mrf.mxu0
        %4360 = vmatprep.mubr.bf16.mxu0 0
        %4361 = vmatmul.mubr.bf16.gmra.mxu0 %v2960
        %v4362 = vpop.f32.mrf.mxu0
        %v4363 = vadd.f32 %v3530, %v4362
        %v4364 = vpop.f32.mrf.mxu0
        %v4365 = vpop.f32.mrf.mxu0
        %v4366 = vadd.f32 %v3533, %v4365
        %v4367 = vpop.f32.mrf.mxu0
        %4368 = vmatprep.mubr.bf16.mxu0 0
        %4369 = vmatmul.mubr.bf16.gmra.mxu0 %v2963
        %v4370 = vpop.f32.mrf.mxu0
        %v4371 = vadd.f32 %v3538, %v4370
        %v4372 = vpop.f32.mrf.mxu0
        %v4373 = vpop.f32.mrf.mxu0
        %v4374 = vadd.f32 %v3541, %v4373
        %v4375 = vpop.f32.mrf.mxu0
        %4376 = vmatprep.mubr.bf16.mxu0 0
        %4377 = vmatmul.mubr.bf16.gmra.mxu0 %v2966
        %v4378 = vpop.f32.mrf.mxu0
        %v4379 = vadd.f32 %v3546, %v4378
        %v4380 = vpop.f32.mrf.mxu0
        %v4381 = vpop.f32.mrf.mxu0
        %v4382 = vadd.f32 %v3549, %v4381
        %v4383 = vpop.f32.mrf.mxu0
        %4384 = vmatprep.mubr.bf16.mxu0 0
        %4385 = vmatmul.mubr.bf16.gmra.mxu0 %v2969
        %v4386 = vpop.f32.mrf.mxu0
        %v4387 = vadd.f32 %v3554, %v4386
        %v4388 = vpop.f32.mrf.mxu0
        %v4389 = vpop.f32.mrf.mxu0
        %v4390 = vadd.f32 %v3557, %v4389
        %v4391 = vpop.f32.mrf.mxu0
        %4392 = vmatprep.mubr.bf16.mxu0 0
        %4393 = vmatmul.mubr.bf16.gmra.mxu0 %v2972
        %v4394 = vpop.f32.mrf.mxu0
        %v4395 = vadd.f32 %v3562, %v4394
        %v4396 = vpop.f32.mrf.mxu0
        %v4397 = vpop.f32.mrf.mxu0
        %v4398 = vadd.f32 %v3565, %v4397
        %v4399 = vpop.f32.mrf.mxu0
        %4400 = vmatprep.mubr.bf16.mxu0 0
        %4401 = vmatmul.mubr.bf16.gmra.mxu0 %v2975
        %v4402 = vpop.f32.mrf.mxu0
        %v4403 = vadd.f32 %v3570, %v4402
        %v4404 = vpop.f32.mrf.mxu0
        %v4405 = vpop.f32.mrf.mxu0
        %v4406 = vadd.f32 %v3573, %v4405
        %v4407 = vpop.f32.mrf.mxu0
        %4408 = vmatprep.mubr.bf16.mxu0 0
        %4409 = vmatmul.mubr.bf16.gmra.mxu0 %v2978
        %v4410 = vpop.f32.mrf.mxu0
        %v4411 = vadd.f32 %v3578, %v4410
        %v4412 = vpop.f32.mrf.mxu0
        %v4413 = vpop.f32.mrf.mxu0
        %v4414 = vadd.f32 %v3581, %v4413
        %v4415 = vpop.f32.mrf.mxu0
        %4416 = vmatprep.mubr.bf16.mxu0 0
        %4417 = vmatmul.mubr.bf16.gmra.mxu0 %v2981
        %v4418 = vpop.f32.mrf.mxu0
        %v4419 = vadd.f32 %v3586, %v4418
        %v4420 = vpop.f32.mrf.mxu0
        %v4421 = vpop.f32.mrf.mxu0
        %v4422 = vadd.f32 %v3589, %v4421
        %v4423 = vpop.f32.mrf.mxu0
        %4424 = vmatprep.mubr.bf16.mxu0 0
        %4425 = vmatmul.mubr.bf16.gmra.mxu0 %v2984
        %v4426 = vpop.f32.mrf.mxu0
        %v4427 = vadd.f32 %v3594, %v4426
        %v4428 = vpop.f32.mrf.mxu0
        %v4429 = vpop.f32.mrf.mxu0
        %v4430 = vadd.f32 %v3597, %v4429
        %v4431 = vpop.f32.mrf.mxu0
        %4432 = vmatprep.mubr.bf16.mxu0 0
        %4433 = vmatmul.mubr.bf16.gmra.mxu0 %v2987
        %v4434 = vpop.f32.mrf.mxu0
        %v4435 = vadd.f32 %v3602, %v4434
        %v4436 = vpop.f32.mrf.mxu0
        %v4437 = vpop.f32.mrf.mxu0
        %v4438 = vadd.f32 %v3605, %v4437
        %v4439 = vpop.f32.mrf.mxu0
        %4440 = vmatprep.mubr.bf16.mxu0 0
        %4441 = vmatmul.mubr.bf16.gmra.mxu0 %v2990
        %v4442 = vpop.f32.mrf.mxu0
        %v4443 = vadd.f32 %v3610, %v4442
        %v4444 = vpop.f32.mrf.mxu0
        %v4445 = vpop.f32.mrf.mxu0
        %v4446 = vadd.f32 %v3613, %v4445
        %v4447 = vpop.f32.mrf.mxu0
        %4448 = vmatprep.mubr.bf16.mxu0 0
        %4449 = vmatmul.mubr.bf16.gmra.mxu0 %v2993
        %v4450 = vpop.f32.mrf.mxu0
        %v4451 = vadd.f32 %v3618, %v4450
        %v4452 = vpop.f32.mrf.mxu0
        %v4453 = vpop.f32.mrf.mxu0
        %v4454 = vadd.f32 %v3621, %v4453
        %v4455 = vpop.f32.mrf.mxu0
        %4456 = vmatprep.mubr.bf16.mxu0 0
        %4457 = vmatmul.mubr.bf16.gmra.mxu0 %v2996
        %v4458 = vpop.f32.mrf.mxu0
        %v4459 = vadd.f32 %v3626, %v4458
        %v4460 = vpop.f32.mrf.mxu0
        %v4461 = vpop.f32.mrf.mxu0
        %v4462 = vadd.f32 %v3629, %v4461
        %v4463 = vpop.f32.mrf.mxu0
        %4464 = vmatprep.mubr.bf16.mxu0 0
        %4465 = vmatmul.mubr.bf16.gmra.mxu0 %v2999
        %v4466 = vpop.f32.mrf.mxu0
        %v4467 = vadd.f32 %v3634, %v4466
        %v4468 = vpop.f32.mrf.mxu0
        %v4469 = vpop.f32.mrf.mxu0
        %v4470 = vadd.f32 %v3637, %v4469
        %v4471 = vpop.f32.mrf.mxu0
        %4472 = vmatprep.mubr.bf16.mxu0 0
        %4473 = vmatmul.mubr.bf16.gmra.mxu0 %v3002
        %v4474 = vpop.f32.mrf.mxu0
        %v4475 = vadd.f32 %v3642, %v4474
        %v4476 = vpop.f32.mrf.mxu0
        %v4477 = vpop.f32.mrf.mxu0
        %v4478 = vadd.f32 %v3645, %v4477
        %v4479 = vpop.f32.mrf.mxu0
        %4480 = vmatprep.mubr.bf16.mxu0 0
        %4481 = vmatmul.mubr.bf16.gmra.mxu0 %v3005
        %v4482 = vpop.f32.mrf.mxu0
        %v4483 = vadd.f32 %v3650, %v4482
        %v4484 = vpop.f32.mrf.mxu0
        %v4485 = vpop.f32.mrf.mxu0
        %v4486 = vadd.f32 %v3653, %v4485
        %v4487 = vpop.f32.mrf.mxu0
        %4488 = vmatprep.mubr.bf16.mxu0 0
        %4489 = vmatmul.mubr.bf16.gmra.mxu0 %v3008
        %v4490 = vpop.f32.mrf.mxu0
        %v4491 = vadd.f32 %v3658, %v4490
        %v4492 = vpop.f32.mrf.mxu0
        %v4493 = vpop.f32.mrf.mxu0
        %v4494 = vadd.f32 %v3661, %v4493
        %v4495 = vpop.f32.mrf.mxu0
        %4496 = vmatprep.mubr.bf16.mxu0 0
        %4497 = vmatmul.mubr.bf16.gmra.mxu0 %v3011
        %v4498 = vpop.f32.mrf.mxu0
        %v4499 = vadd.f32 %v3666, %v4498
        %v4500 = vpop.f32.mrf.mxu0
        %v4501 = vpop.f32.mrf.mxu0
        %v4502 = vadd.f32 %v3669, %v4501
        %v4503 = vpop.f32.mrf.mxu0
        %4504 = vmatprep.mubr.bf16.mxu0 0
        %4505 = vmatmul.mubr.bf16.gmra.mxu0 %v3014
        %v4506 = vpop.f32.mrf.mxu0
        %v4507 = vadd.f32 %v3674, %v4506
        %v4508 = vpop.f32.mrf.mxu0
        %v4509 = vpop.f32.mrf.mxu0
        %v4510 = vadd.f32 %v3677, %v4509
        %v4511 = vpop.f32.mrf.mxu0
        %4512 = vmatprep.mubr.bf16.mxu0 0
        %4513 = vmatmul.mubr.bf16.gmra.mxu0 %v3017
        %v4514 = vpop.f32.mrf.mxu0
        %v4515 = vadd.f32 %v3682, %v4514
        %v4516 = vpop.f32.mrf.mxu0
        %v4517 = vpop.f32.mrf.mxu0
        %v4518 = vadd.f32 %v3685, %v4517
        %v4519 = vpop.f32.mrf.mxu0
        %4520 = vmatprep.mubr.bf16.mxu0 0
        %4521 = vmatmul.mubr.bf16.gmra.mxu0 %v3020
        %v4522 = vpop.f32.mrf.mxu0
        %v4523 = vadd.f32 %v3690, %v4522
        %v4524 = vpop.f32.mrf.mxu0
        %v4525 = vpop.f32.mrf.mxu0
        %v4526 = vadd.f32 %v3693, %v4525
        %v4527 = vpop.f32.mrf.mxu0
        %4528 = vmatprep.mubr.bf16.mxu0 0
        %4529 = vmatmul.mubr.bf16.gmra.mxu0 %v3023
        %v4530 = vpop.f32.mrf.mxu0
        %v4531 = vadd.f32 %v3698, %v4530
        %v4532 = vpop.f32.mrf.mxu0
        %v4533 = vpop.f32.mrf.mxu0
        %v4534 = vadd.f32 %v3701, %v4533
        %v4535 = vpop.f32.mrf.mxu0
        %4536 = vmatprep.mubr.bf16.mxu0 0
        %4537 = vmatmul.mubr.bf16.gmra.mxu0 %v3026
        %v4538 = vpop.f32.mrf.mxu0
        %v4539 = vadd.f32 %v3706, %v4538
        %v4540 = vpop.f32.mrf.mxu0
        %v4541 = vpop.f32.mrf.mxu0
        %v4542 = vadd.f32 %v3709, %v4541
        %v4543 = vpop.f32.mrf.mxu0
        %4544 = vmatprep.mubr.bf16.mxu0 0
        %4545 = vmatmul.mubr.bf16.gmra.mxu0 %v3029
        %v4546 = vpop.f32.mrf.mxu0
        %v4547 = vadd.f32 %v3714, %v4546
        %v4548 = vpop.f32.mrf.mxu0
        %v4549 = vpop.f32.mrf.mxu0
        %v4550 = vadd.f32 %v3717, %v4549
        %v4551 = vpop.f32.mrf.mxu0
        %4552 = vmatprep.mubr.bf16.mxu0 0
        %4553 = vmatmul.mubr.bf16.gmra.mxu0 %v3032
        %v4554 = vpop.f32.mrf.mxu0
        %v4555 = vadd.f32 %v3722, %v4554
        %v4556 = vpop.f32.mrf.mxu0
        %v4557 = vpop.f32.mrf.mxu0
        %v4558 = vadd.f32 %v3725, %v4557
        %v4559 = vpop.f32.mrf.mxu0
        %4560 = vmatprep.mubr.bf16.mxu0 0
        %4561 = vmatmul.mubr.bf16.gmra.mxu0 %v3035
        %v4562 = vpop.f32.mrf.mxu0
        %v4563 = vadd.f32 %v3730, %v4562
        %v4564 = vpop.f32.mrf.mxu0
        %v4565 = vpop.f32.mrf.mxu0
        %v4566 = vadd.f32 %v3733, %v4565
        %v4567 = vpop.f32.mrf.mxu0
        %4568 = vmatprep.mubr.bf16.mxu0 0
        %4569 = vmatmul.mubr.bf16.gmra.mxu0 %v3038
        %v4570 = vpop.f32.mrf.mxu0
        %v4571 = vadd.f32 %v3738, %v4570
        %v4572 = vpop.f32.mrf.mxu0
        %v4573 = vpop.f32.mrf.mxu0
        %v4574 = vadd.f32 %v3741, %v4573
        %v4575 = vpop.f32.mrf.mxu0
        %4576 = vmatprep.mubr.bf16.mxu0 0
        %4577 = vmatmul.mubr.bf16.gmra.mxu0 %v3041
        %v4578 = vpop.f32.mrf.mxu0
        %v4579 = vadd.f32 %v3746, %v4578
        %v4580 = vpop.f32.mrf.mxu0
        %v4581 = vpop.f32.mrf.mxu0
        %v4582 = vadd.f32 %v3749, %v4581
        %v4583 = vpop.f32.mrf.mxu0
        %4584 = vmatprep.mubr.bf16.mxu0 0
        %4585 = vmatmul.mubr.bf16.gmra.mxu0 %v3044
        %v4586 = vpop.f32.mrf.mxu0
        %v4587 = vadd.f32 %v3754, %v4586
        %v4588 = vpop.f32.mrf.mxu0
        %v4589 = vpop.f32.mrf.mxu0
        %v4590 = vadd.f32 %v3757, %v4589
        %v4591 = vpop.f32.mrf.mxu0
        %4592 = vmatprep.mubr.bf16.mxu0 0
        %4593 = vmatmul.mubr.bf16.gmra.mxu0 %v3047
        %v4594 = vpop.f32.mrf.mxu0
        %v4595 = vadd.f32 %v3762, %v4594
        %v4596 = vpop.f32.mrf.mxu0
        %v4597 = vpop.f32.mrf.mxu0
        %v4598 = vadd.f32 %v3765, %v4597
        %v4599 = vpop.f32.mrf.mxu0
        %4600 = vmatprep.mubr.bf16.mxu0 0
        %4601 = vmatmul.mubr.bf16.gmra.mxu0 %v3050
        %v4602 = vpop.f32.mrf.mxu0
        %v4603 = vadd.f32 %v3770, %v4602
        %v4604 = vpop.f32.mrf.mxu0
        %v4605 = vpop.f32.mrf.mxu0
        %v4606 = vadd.f32 %v3773, %v4605
        %v4607 = vpop.f32.mrf.mxu0
        %4608 = vmatprep.mubr.bf16.mxu0 0
        %4609 = vmatmul.mubr.bf16.gmra.mxu0 %v3053
        %v4610 = vpop.f32.mrf.mxu0
        %v4611 = vadd.f32 %v3778, %v4610
        %v4612 = vpop.f32.mrf.mxu0
        %v4613 = vpop.f32.mrf.mxu0
        %v4614 = vadd.f32 %v3781, %v4613
        %v4615 = vpop.f32.mrf.mxu0
        %4616 = vmatprep.mubr.bf16.mxu0 0
        %4617 = vmatmul.mubr.bf16.gmra.mxu0 %v3056
        %v4618 = vpop.f32.mrf.mxu0
        %v4619 = vadd.f32 %v3786, %v4618
        %v4620 = vpop.f32.mrf.mxu0
        %v4621 = vpop.f32.mrf.mxu0
        %v4622 = vadd.f32 %v3789, %v4621
        %v4623 = vpop.f32.mrf.mxu0
        %4624 = vmatprep.mubr.bf16.mxu0 0
        %4625 = vmatmul.mubr.bf16.gmra.mxu0 %v3059
        %v4626 = vpop.f32.mrf.mxu0
        %v4627 = vadd.f32 %v3794, %v4626
        %v4628 = vpop.f32.mrf.mxu0
        %v4629 = vpop.f32.mrf.mxu0
        %v4630 = vadd.f32 %v3797, %v4629
        %v4631 = vpop.f32.mrf.mxu0
        %4632 = vmatprep.mubr.bf16.mxu0 0
        %4633 = vmatmul.mubr.bf16.gmra.mxu0 %v3062
        %v4634 = vpop.f32.mrf.mxu0
        %v4635 = vadd.f32 %v3802, %v4634
        %v4636 = vpop.f32.mrf.mxu0
        %v4637 = vpop.f32.mrf.mxu0
        %v4638 = vadd.f32 %v3805, %v4637
        %v4639 = vpop.f32.mrf.mxu0
        %4640 = vmatprep.mubr.bf16.mxu0 0
        %4641 = vmatmul.mubr.bf16.gmra.mxu0 %v3065
        %v4642 = vpop.f32.mrf.mxu0
        %v4643 = vadd.f32 %v3810, %v4642
        %v4644 = vpop.f32.mrf.mxu0
        %v4645 = vpop.f32.mrf.mxu0
        %v4646 = vadd.f32 %v3813, %v4645
        %v4647 = vpop.f32.mrf.mxu0
        %4648 = vmatprep.mubr.bf16.mxu0 0
        %4649 = vmatmul.mubr.bf16.gmra.mxu0 %v3068
        %v4650 = vpop.f32.mrf.mxu0
        %v4651 = vadd.f32 %v3818, %v4650
        %v4652 = vpop.f32.mrf.mxu0
        %v4653 = vpop.f32.mrf.mxu0
        %v4654 = vadd.f32 %v3821, %v4653
        %v4655 = vpop.f32.mrf.mxu0
        %4656 = vmatprep.mubr.bf16.mxu0 0
        %4657 = vmatmul.mubr.bf16.gmra.mxu0 %v3071
        %v4658 = vpop.f32.mrf.mxu0
        %v4659 = vadd.f32 %v3826, %v4658
        %v4660 = vpop.f32.mrf.mxu0
        %v4661 = vpop.f32.mrf.mxu0
        %v4662 = vadd.f32 %v3829, %v4661
        %v4663 = vpop.f32.mrf.mxu0
        %4664 = vmatprep.mubr.bf16.mxu0 0
        %4665 = vmatmul.mubr.bf16.gmra.mxu0 %v3074
        %v4666 = vpop.f32.mrf.mxu0
        %v4667 = vadd.f32 %v3834, %v4666
        %v4668 = vpop.f32.mrf.mxu0
        %v4669 = vpop.f32.mrf.mxu0
        %v4670 = vadd.f32 %v3837, %v4669
        %v4671 = vpop.f32.mrf.mxu0
        %4672 = vmatprep.mubr.bf16.mxu0 0
        %4673 = vmatmul.mubr.bf16.gmra.mxu0 %v3077
        %v4674 = vpop.f32.mrf.mxu0
        %v4675 = vadd.f32 %v3842, %v4674
        %v4676 = vpop.f32.mrf.mxu0
        %v4677 = vpop.f32.mrf.mxu0
        %v4678 = vadd.f32 %v3845, %v4677
        %v4679 = vpop.f32.mrf.mxu0
        %4680 = vmatprep.mubr.bf16.mxu0 0
        %4681 = vmatmul.mubr.bf16.gmra.mxu0 %v3080
        %v4682 = vpop.f32.mrf.mxu0
        %v4683 = vadd.f32 %v3850, %v4682
        %v4684 = vpop.f32.mrf.mxu0
        %v4685 = vpop.f32.mrf.mxu0
        %v4686 = vadd.f32 %v3853, %v4685
        %v4687 = vpop.f32.mrf.mxu0
        %4688 = vmatprep.mubr.bf16.mxu0 0
        %4689 = vmatmul.mubr.bf16.gmra.mxu0 %v3083
        %v4690 = vpop.f32.mrf.mxu0
        %v4691 = vadd.f32 %v3858, %v4690
        %v4692 = vpop.f32.mrf.mxu0
        %v4693 = vpop.f32.mrf.mxu0
        %v4694 = vadd.f32 %v3861, %v4693
        %v4695 = vpop.f32.mrf.mxu0
        %4696 = vmatprep.mubr.bf16.mxu0 0
        %4697 = vmatmul.mubr.bf16.gmra.mxu0 %v3086
        %v4698 = vpop.f32.mrf.mxu0
        %v4699 = vadd.f32 %v3866, %v4698
        %v4700 = vpop.f32.mrf.mxu0
        %v4701 = vpop.f32.mrf.mxu0
        %v4702 = vadd.f32 %v3869, %v4701
        %v4703 = vpop.f32.mrf.mxu0
        %4704 = vmatprep.mubr.bf16.mxu0 0
        %4705 = vmatmul.mubr.bf16.gmra.mxu0 %v3089
        %v4706 = vpop.f32.mrf.mxu0
        %v4707 = vadd.f32 %v3874, %v4706
        %v4708 = vpop.f32.mrf.mxu0
        %v4709 = vpop.f32.mrf.mxu0
        %v4710 = vadd.f32 %v3877, %v4709
        %v4711 = vpop.f32.mrf.mxu0
        %4712 = vmatprep.mubr.bf16.mxu0 0
        %4713 = vmatmul.mubr.bf16.gmra.mxu0 %v3092
        %v4714 = vpop.f32.mrf.mxu0
        %v4715 = vadd.f32 %v3882, %v4714
        %v4716 = vpop.f32.mrf.mxu0
        %v4717 = vpop.f32.mrf.mxu0
        %v4718 = vadd.f32 %v3885, %v4717
        %v4719 = vpop.f32.mrf.mxu0
        %4720 = vmatprep.mubr.bf16.mxu0 0
        %4721 = vmatmul.mubr.bf16.gmra.mxu0 %v3095
        %v4722 = vpop.f32.mrf.mxu0
        %v4723 = vadd.f32 %v3890, %v4722
        %v4724 = vpop.f32.mrf.mxu0
        %v4725 = vpop.f32.mrf.mxu0
        %v4726 = vadd.f32 %v3893, %v4725
        %v4727 = vpop.f32.mrf.mxu0
        %4728 = vmatprep.mubr.bf16.mxu0 0
        %4729 = vmatmul.mubr.bf16.gmra.mxu0 %v3098
        %v4730 = vpop.f32.mrf.mxu0
        %v4731 = vadd.f32 %v3898, %v4730
        %v4732 = vpop.f32.mrf.mxu0
        %v4733 = vpop.f32.mrf.mxu0
        %v4734 = vadd.f32 %v3901, %v4733
        %v4735 = vpop.f32.mrf.mxu0
        %4736 = vmatprep.mubr.bf16.mxu0 0
        %4737 = vmatmul.mubr.bf16.gmra.mxu0 %v3101
        %v4738 = vpop.f32.mrf.mxu0
        %v4739 = vadd.f32 %v3906, %v4738
        %v4740 = vpop.f32.mrf.mxu0
        %v4741 = vpop.f32.mrf.mxu0
        %v4742 = vadd.f32 %v3909, %v4741
        %v4743 = vpop.f32.mrf.mxu0
        %4744 = vmatprep.mubr.bf16.mxu0 0
        %4745 = vmatmul.mubr.bf16.gmra.mxu0 %v3104
        %v4746 = vpop.f32.mrf.mxu0
        %v4747 = vadd.f32 %v3914, %v4746
        %v4748 = vpop.f32.mrf.mxu0
        %v4749 = vpop.f32.mrf.mxu0
        %v4750 = vadd.f32 %v3917, %v4749
        %v4751 = vpop.f32.mrf.mxu0
        %4752 = vmatprep.mubr.bf16.mxu0 0
        %4753 = vmatmul.mubr.bf16.gmra.mxu0 %v3107
        %v4754 = vpop.f32.mrf.mxu0
        %v4755 = vadd.f32 %v3922, %v4754
        %v4756 = vpop.f32.mrf.mxu0
        %v4757 = vpop.f32.mrf.mxu0
        %v4758 = vadd.f32 %v3925, %v4757
        %v4759 = vpop.f32.mrf.mxu0
        %4760 = vmatprep.mubr.bf16.mxu0 0
        %4761 = vmatmul.mubr.bf16.gmra.mxu0 %v3110
        %v4762 = vpop.f32.mrf.mxu0
        %v4763 = vadd.f32 %v3930, %v4762
        %v4764 = vpop.f32.mrf.mxu0
        %v4765 = vpop.f32.mrf.mxu0
        %v4766 = vadd.f32 %v3933, %v4765
        %v4767 = vpop.f32.mrf.mxu0
        %4768 = vmatprep.mubr.bf16.mxu0 0
        %4769 = vmatmul.mubr.bf16.gmra.mxu0 %v3113
        %v4770 = vpop.f32.mrf.mxu0
        %v4771 = vadd.f32 %v3938, %v4770
        %v4772 = vpop.f32.mrf.mxu0
        %v4773 = vpop.f32.mrf.mxu0
        %v4774 = vadd.f32 %v3941, %v4773
        %v4775 = vpop.f32.mrf.mxu0
        %4776 = vmatprep.mubr.bf16.mxu0 0
        %4777 = vmatmul.mubr.bf16.gmra.mxu0 %v3116
        %v4778 = vpop.f32.mrf.mxu0
        %v4779 = vadd.f32 %v3946, %v4778
        %v4780 = vpop.f32.mrf.mxu0
        %v4781 = vpop.f32.mrf.mxu0
        %v4782 = vadd.f32 %v3949, %v4781
        %v4783 = vpop.f32.mrf.mxu0
        %4784 = vmatprep.mubr.bf16.mxu0 0
        %4785 = vmatmul.mubr.bf16.gmra.mxu0 %v3119
        %v4786 = vpop.f32.mrf.mxu0
        %v4787 = vadd.f32 %v3954, %v4786
        %v4788 = vpop.f32.mrf.mxu0
        %v4789 = vpop.f32.mrf.mxu0
        %v4790 = vadd.f32 %v3957, %v4789
        %v4791 = vpop.f32.mrf.mxu0
        %4792 = vdwg.mxu0
        %v4793 = vpack.c.bf16 %v3998, %v3995
        %v4794 = vpack.c.bf16 %v4006, %v4003
        %v4795 = vpack.c.bf16 %v4014, %v4011
        %v4796 = vpack.c.bf16 %v4022, %v4019
        %v4797 = vpack.c.bf16 %v4030, %v4027
        %v4798 = vpack.c.bf16 %v4038, %v4035
        %v4799 = vpack.c.bf16 %v4046, %v4043
        %v4800 = vpack.c.bf16 %v4054, %v4051
        %v4801 = vpack.c.bf16 %v4062, %v4059
        %v4802 = vpack.c.bf16 %v4070, %v4067
        %v4803 = vpack.c.bf16 %v4078, %v4075
        %v4804 = vpack.c.bf16 %v4086, %v4083
        %v4805 = vpack.c.bf16 %v4094, %v4091
        %v4806 = vpack.c.bf16 %v4102, %v4099
        %v4807 = vpack.c.bf16 %v4110, %v4107
        %v4808 = vpack.c.bf16 %v4118, %v4115
        %v4809 = vpack.c.bf16 %v4126, %v4123
        %v4810 = vpack.c.bf16 %v4134, %v4131
        %v4811 = vpack.c.bf16 %v4142, %v4139
        %v4812 = vpack.c.bf16 %v4150, %v4147
        %v4813 = vpack.c.bf16 %v4158, %v4155
        %v4814 = vpack.c.bf16 %v4166, %v4163
        %v4815 = vpack.c.bf16 %v4174, %v4171
        %v4816 = vpack.c.bf16 %v4182, %v4179
        %v4817 = vpack.c.bf16 %v4190, %v4187
        %v4818 = vpack.c.bf16 %v4198, %v4195
        %v4819 = vpack.c.bf16 %v4206, %v4203
        %v4820 = vpack.c.bf16 %v4214, %v4211
        %v4821 = vpack.c.bf16 %v4222, %v4219
        %v4822 = vpack.c.bf16 %v4230, %v4227
        %v4823 = vpack.c.bf16 %v4238, %v4235
        %v4824 = vpack.c.bf16 %v4246, %v4243
        %v4825 = vpack.c.bf16 %v4254, %v4251
        %v4826 = vpack.c.bf16 %v4262, %v4259
        %v4827 = vpack.c.bf16 %v4270, %v4267
        %v4828 = vpack.c.bf16 %v4278, %v4275
        %v4829 = vpack.c.bf16 %v4286, %v4283
        %v4830 = vpack.c.bf16 %v4294, %v4291
        %v4831 = vpack.c.bf16 %v4302, %v4299
        %v4832 = vpack.c.bf16 %v4310, %v4307
        %v4833 = vpack.c.bf16 %v4318, %v4315
        %v4834 = vpack.c.bf16 %v4326, %v4323
        %v4835 = vpack.c.bf16 %v4334, %v4331
        %v4836 = vpack.c.bf16 %v4342, %v4339
        %v4837 = vpack.c.bf16 %v4350, %v4347
        %v4838 = vpack.c.bf16 %v4358, %v4355
        %v4839 = vpack.c.bf16 %v4366, %v4363
        %v4840 = vpack.c.bf16 %v4374, %v4371
        %v4841 = vpack.c.bf16 %v4382, %v4379
        %v4842 = vpack.c.bf16 %v4390, %v4387
        %v4843 = vpack.c.bf16 %v4398, %v4395
        %v4844 = vpack.c.bf16 %v4406, %v4403
        %v4845 = vpack.c.bf16 %v4414, %v4411
        %v4846 = vpack.c.bf16 %v4422, %v4419
        %v4847 = vpack.c.bf16 %v4430, %v4427
        %v4848 = vpack.c.bf16 %v4438, %v4435
        %v4849 = vpack.c.bf16 %v4446, %v4443
        %v4850 = vpack.c.bf16 %v4454, %v4451
        %v4851 = vpack.c.bf16 %v4462, %v4459
        %v4852 = vpack.c.bf16 %v4470, %v4467
        %v4853 = vpack.c.bf16 %v4478, %v4475
        %v4854 = vpack.c.bf16 %v4486, %v4483
        %v4855 = vpack.c.bf16 %v4494, %v4491
        %v4856 = vpack.c.bf16 %v4502, %v4499
        %v4857 = vpack.c.bf16 %v4510, %v4507
        %v4858 = vpack.c.bf16 %v4518, %v4515
        %v4859 = vpack.c.bf16 %v4526, %v4523
        %v4860 = vpack.c.bf16 %v4534, %v4531
        %v4861 = vpack.c.bf16 %v4542, %v4539
        %v4862 = vpack.c.bf16 %v4550, %v4547
        %v4863 = vpack.c.bf16 %v4558, %v4555
        %v4864 = vpack.c.bf16 %v4566, %v4563
        %v4865 = vpack.c.bf16 %v4574, %v4571
        %v4866 = vpack.c.bf16 %v4582, %v4579
        %v4867 = vpack.c.bf16 %v4590, %v4587
        %v4868 = vpack.c.bf16 %v4598, %v4595
        %v4869 = vpack.c.bf16 %v4606, %v4603
        %v4870 = vpack.c.bf16 %v4614, %v4611
        %v4871 = vpack.c.bf16 %v4622, %v4619
        %v4872 = vpack.c.bf16 %v4630, %v4627
        %v4873 = vpack.c.bf16 %v4638, %v4635
        %v4874 = vpack.c.bf16 %v4646, %v4643
        %v4875 = vpack.c.bf16 %v4654, %v4651
        %v4876 = vpack.c.bf16 %v4662, %v4659
        %v4877 = vpack.c.bf16 %v4670, %v4667
        %v4878 = vpack.c.bf16 %v4678, %v4675
        %v4879 = vpack.c.bf16 %v4686, %v4683
        %v4880 = vpack.c.bf16 %v4694, %v4691
        %v4881 = vpack.c.bf16 %v4702, %v4699
        %v4882 = vpack.c.bf16 %v4710, %v4707
        %v4883 = vpack.c.bf16 %v4718, %v4715
        %v4884 = vpack.c.bf16 %v4726, %v4723
        %v4885 = vpack.c.bf16 %v4734, %v4731
        %v4886 = vpack.c.bf16 %v4742, %v4739
        %v4887 = vpack.c.bf16 %v4750, %v4747
        %v4888 = vpack.c.bf16 %v4758, %v4755
        %v4889 = vpack.c.bf16 %v4766, %v4763
        %v4890 = vpack.c.bf16 %v4774, %v4771
        %v4891 = vpack.c.bf16 %v4782, %v4779
        %v4892 = vpack.c.bf16 %v4790, %v4787
        %v4893 = vld [vmem:[%s4] sm:$0xf]
        %v4894 = vld [vmem:[%s4 + $0x4] sm:$0xf]
        %s4895 = scalar_lea.vmem %s4, 8
        %v4896 = vld [vmem:[%s4895] sm:$0xf]
        %v4897 = vld [vmem:[%s4895 + $0x4] sm:$0xf]
        %v4900 = vunpack.c.l.b16 %v4896
        %v4901 = vunpack.c.l.b16 %v4897
        %v4902 = vpack.c.b16 %v4901, %v4900
        %vm4904 = vcmask 130048
        %v4906 = vsel %vm4904, %v4797, 0
        %v4909 = vsel %vm4904, %v4798, 0
        %v4912 = vsel %vm4904, %v4799, 0
        %v4915 = vsel %vm4904, %v4800, 0
        %4917 = vmatprep.subr.bf16.mxu0 0
        %4918 = vmatpush1.bf16.msra.mxu0 0
        %4919 = vmatprep.subr.bf16.mxu0 0
        %4920 = vmatpush1.bf16.msra.mxu0 0
        %4921 = vmatprep.subr.bf16.mxu0 0
        %4922 = vmatpush1.bf16.msra.mxu0 0
        %4923 = vmatprep.subr.bf16.mxu0 0
        %4924 = vmatpush1.bf16.msra.mxu0 0
        %4925 = vmatprep.subr.bf16.mxu0 0
        %4926 = vmatpush1.bf16.msra.mxu0 0
        %4927 = vmatprep.subr.bf16.mxu0 0
        %4928 = vmatpush1.bf16.msra.mxu0 0
        %4929 = vmatprep.subr.bf16.mxu0 0
        %4930 = vmatpush1.bf16.msra.mxu0 0
        %4931 = vmatprep.subr.bf16.mxu0 0
        %4932 = vmatpush1.bf16.msra.mxu0 %v4902
        %4933 = vmatprep.subr.bf16.mxu0 0
        %4934 = vmatpush2.bf16.msra.mxu0 0
        %4935 = vmatprep.subr.bf16.mxu0 0
        %4936 = vmatpush2.bf16.msra.mxu0 0
        %4937 = vmatprep.subr.bf16.mxu0 0
        %4938 = vmatpush2.bf16.msra.mxu0 0
        %4939 = vmatprep.subr.bf16.mxu0 0
        %4940 = vmatpush2.bf16.msra.mxu0 0
        %4941 = vmatprep.subr.bf16.mxu0 0
        %4942 = vmatpush2.bf16.msra.mxu0 0
        %4943 = vmatprep.subr.bf16.mxu0 0
        %4944 = vmatpush2.bf16.msra.mxu0 0
        %4945 = vmatprep.subr.bf16.mxu0 0
        %4946 = vmatpush2.bf16.msra.mxu0 0
        %4947 = vmatprep.subr.bf16.mxu0 0
        %4948 = vmatpush2.bf16.msra.mxu0 0
        %4949 = vmatprep.mubr.bf16.mxu0 0
        %4950 = vmatmul.mubr.bf16.gmra.mxu0 %v4906
        %v4951 = vpop.f32.mrf.mxu0
        %v4952 = vadd.f32 0.0, %v4951
        %v4953 = vpop.f32.mrf.mxu0
        %v4954 = vpop.f32.mrf.mxu0
        %v4955 = vadd.f32 0.0, %v4954
        %v4956 = vpop.f32.mrf.mxu0
        %4957 = vmatprep.mubr.bf16.mxu0 0
        %4958 = vmatmul.mubr.bf16.gmra.mxu0 %v4909
        %v4959 = vpop.f32.mrf.mxu0
        %v4960 = vadd.f32 0.0, %v4959
        %v4961 = vpop.f32.mrf.mxu0
        %v4962 = vpop.f32.mrf.mxu0
        %v4963 = vadd.f32 0.0, %v4962
        %v4964 = vpop.f32.mrf.mxu0
        %4965 = vmatprep.mubr.bf16.mxu0 0
        %4966 = vmatmul.mubr.bf16.gmra.mxu0 %v4912
        %v4967 = vpop.f32.mrf.mxu0
        %v4968 = vadd.f32 0.0, %v4967
        %v4969 = vpop.f32.mrf.mxu0
        %v4970 = vpop.f32.mrf.mxu0
        %v4971 = vadd.f32 0.0, %v4970
        %v4972 = vpop.f32.mrf.mxu0
        %4973 = vmatprep.mubr.bf16.mxu0 0
        %4974 = vmatmul.mubr.bf16.gmra.mxu0 %v4915
        %v4975 = vpop.f32.mrf.mxu0
        %v4976 = vadd.f32 0.0, %v4975
        %v4977 = vpop.f32.mrf.mxu0
        %v4978 = vpop.f32.mrf.mxu0
        %v4979 = vadd.f32 0.0, %v4978
        %v4980 = vpop.f32.mrf.mxu0
        %4981 = vdwg.mxu0
        %v4984 = vunpack.c.l.b16 %v4893
        %v4985 = vunpack.c.l.b16 %v4894
        %v4986 = vpack.c.b16 %v4985, %v4984
        %v4989 = vsel %vm4904, %v4793, 0
        %v4992 = vsel %vm4904, %v4794, 0
        %v4995 = vsel %vm4904, %v4795, 0
        %v4998 = vsel %vm4904, %v4796, 0
        %5000 = vmatprep.subr.bf16.mxu0 0
        %5001 = vmatpush1.bf16.msra.mxu0 0
        %5002 = vmatprep.subr.bf16.mxu0 0
        %5003 = vmatpush1.bf16.msra.mxu0 0
        %5004 = vmatprep.subr.bf16.mxu0 0
        %5005 = vmatpush1.bf16.msra.mxu0 0
        %5006 = vmatprep.subr.bf16.mxu0 0
        %5007 = vmatpush1.bf16.msra.mxu0 0
        %5008 = vmatprep.subr.bf16.mxu0 0
        %5009 = vmatpush1.bf16.msra.mxu0 0
        %5010 = vmatprep.subr.bf16.mxu0 0
        %5011 = vmatpush1.bf16.msra.mxu0 0
        %5012 = vmatprep.subr.bf16.mxu0 0
        %5013 = vmatpush1.bf16.msra.mxu0 0
        %5014 = vmatprep.subr.bf16.mxu0 0
        %5015 = vmatpush1.bf16.msra.mxu0 %v4986
        %5016 = vmatprep.subr.bf16.mxu0 0
        %5017 = vmatpush2.bf16.msra.mxu0 0
        %5018 = vmatprep.subr.bf16.mxu0 0
        %5019 = vmatpush2.bf16.msra.mxu0 0
        %5020 = vmatprep.subr.bf16.mxu0 0
        %5021 = vmatpush2.bf16.msra.mxu0 0
        %5022 = vmatprep.subr.bf16.mxu0 0
        %5023 = vmatpush2.bf16.msra.mxu0 0
        %5024 = vmatprep.subr.bf16.mxu0 0
        %5025 = vmatpush2.bf16.msra.mxu0 0
        %5026 = vmatprep.subr.bf16.mxu0 0
        %5027 = vmatpush2.bf16.msra.mxu0 0
        %5028 = vmatprep.subr.bf16.mxu0 0
        %5029 = vmatpush2.bf16.msra.mxu0 0
        %5030 = vmatprep.subr.bf16.mxu0 0
        %5031 = vmatpush2.bf16.msra.mxu0 0
        %5032 = vmatprep.mubr.bf16.mxu0 0
        %5033 = vmatmul.mubr.bf16.gmra.mxu0 %v4989
        %v5034 = vpop.f32.mrf.mxu0
        %v5035 = vadd.f32 %v4952, %v5034
        %v5036 = vpop.f32.mrf.mxu0
        %v5037 = vpop.f32.mrf.mxu0
        %v5038 = vadd.f32 %v4955, %v5037
        %v5039 = vpop.f32.mrf.mxu0
        %5040 = vmatprep.mubr.bf16.mxu0 0
        %5041 = vmatmul.mubr.bf16.gmra.mxu0 %v4992
        %v5042 = vpop.f32.mrf.mxu0
        %v5043 = vadd.f32 %v4960, %v5042
        %v5044 = vpop.f32.mrf.mxu0
        %v5045 = vpop.f32.mrf.mxu0
        %v5046 = vadd.f32 %v4963, %v5045
        %v5047 = vpop.f32.mrf.mxu0
        %5048 = vmatprep.mubr.bf16.mxu0 0
        %5049 = vmatmul.mubr.bf16.gmra.mxu0 %v4995
        %v5050 = vpop.f32.mrf.mxu0
        %v5051 = vadd.f32 %v4968, %v5050
        %v5052 = vpop.f32.mrf.mxu0
        %v5053 = vpop.f32.mrf.mxu0
        %v5054 = vadd.f32 %v4971, %v5053
        %v5055 = vpop.f32.mrf.mxu0
        %5056 = vmatprep.mubr.bf16.mxu0 0
        %5057 = vmatmul.mubr.bf16.gmra.mxu0 %v4998
        %v5058 = vpop.f32.mrf.mxu0
        %v5059 = vadd.f32 %v4976, %v5058
        %v5060 = vpop.f32.mrf.mxu0
        %v5061 = vpop.f32.mrf.mxu0
        %v5062 = vadd.f32 %v4979, %v5061
        %v5063 = vpop.f32.mrf.mxu0
        %5064 = vdwg.mxu0
        %s5065 = scalar_lea.vmem %s4, 16
        %v5066 = vld [vmem:[%s5065] sm:$0xf]
        %v5067 = vld [vmem:[%s5065 + $0x4] sm:$0xf]
        %v5070 = vunpack.c.l.b16 %v5066
        %v5071 = vunpack.c.l.b16 %v5067
        %v5072 = vpack.c.b16 %v5071, %v5070
        %v5075 = vsel %vm4904, %v4801, 0
        %v5078 = vsel %vm4904, %v4802, 0
        %v5081 = vsel %vm4904, %v4803, 0
        %v5084 = vsel %vm4904, %v4804, 0
        %5086 = vmatprep.subr.bf16.mxu0 0
        %5087 = vmatpush1.bf16.msra.mxu0 0
        %5088 = vmatprep.subr.bf16.mxu0 0
        %5089 = vmatpush1.bf16.msra.mxu0 0
        %5090 = vmatprep.subr.bf16.mxu0 0
        %5091 = vmatpush1.bf16.msra.mxu0 0
        %5092 = vmatprep.subr.bf16.mxu0 0
        %5093 = vmatpush1.bf16.msra.mxu0 0
        %5094 = vmatprep.subr.bf16.mxu0 0
        %5095 = vmatpush1.bf16.msra.mxu0 0
        %5096 = vmatprep.subr.bf16.mxu0 0
        %5097 = vmatpush1.bf16.msra.mxu0 0
        %5098 = vmatprep.subr.bf16.mxu0 0
        %5099 = vmatpush1.bf16.msra.mxu0 0
        %5100 = vmatprep.subr.bf16.mxu0 0
        %5101 = vmatpush1.bf16.msra.mxu0 %v5072
        %5102 = vmatprep.subr.bf16.mxu0 0
        %5103 = vmatpush2.bf16.msra.mxu0 0
        %5104 = vmatprep.subr.bf16.mxu0 0
        %5105 = vmatpush2.bf16.msra.mxu0 0
        %5106 = vmatprep.subr.bf16.mxu0 0
        %5107 = vmatpush2.bf16.msra.mxu0 0
        %5108 = vmatprep.subr.bf16.mxu0 0
        %5109 = vmatpush2.bf16.msra.mxu0 0
        %5110 = vmatprep.subr.bf16.mxu0 0
        %5111 = vmatpush2.bf16.msra.mxu0 0
        %5112 = vmatprep.subr.bf16.mxu0 0
        %5113 = vmatpush2.bf16.msra.mxu0 0
        %5114 = vmatprep.subr.bf16.mxu0 0
        %5115 = vmatpush2.bf16.msra.mxu0 0
        %5116 = vmatprep.subr.bf16.mxu0 0
        %5117 = vmatpush2.bf16.msra.mxu0 0
        %5118 = vmatprep.mubr.bf16.mxu0 0
        %5119 = vmatmul.mubr.bf16.gmra.mxu0 %v5075
        %v5120 = vpop.f32.mrf.mxu0
        %v5121 = vadd.f32 0.0, %v5120
        %v5122 = vpop.f32.mrf.mxu0
        %v5123 = vpop.f32.mrf.mxu0
        %v5124 = vadd.f32 0.0, %v5123
        %v5125 = vpop.f32.mrf.mxu0
        %5126 = vmatprep.mubr.bf16.mxu0 0
        %5127 = vmatmul.mubr.bf16.gmra.mxu0 %v5078
        %v5128 = vpop.f32.mrf.mxu0
        %v5129 = vadd.f32 0.0, %v5128
        %v5130 = vpop.f32.mrf.mxu0
        %v5131 = vpop.f32.mrf.mxu0
        %v5132 = vadd.f32 0.0, %v5131
        %v5133 = vpop.f32.mrf.mxu0
        %5134 = vmatprep.mubr.bf16.mxu0 0
        %5135 = vmatmul.mubr.bf16.gmra.mxu0 %v5081
        %v5136 = vpop.f32.mrf.mxu0
        %v5137 = vadd.f32 0.0, %v5136
        %v5138 = vpop.f32.mrf.mxu0
        %v5139 = vpop.f32.mrf.mxu0
        %v5140 = vadd.f32 0.0, %v5139
        %v5141 = vpop.f32.mrf.mxu0
        %5142 = vmatprep.mubr.bf16.mxu0 0
        %5143 = vmatmul.mubr.bf16.gmra.mxu0 %v5084
        %v5144 = vpop.f32.mrf.mxu0
        %v5145 = vadd.f32 0.0, %v5144
        %v5146 = vpop.f32.mrf.mxu0
        %v5147 = vpop.f32.mrf.mxu0
        %v5148 = vadd.f32 0.0, %v5147
        %v5149 = vpop.f32.mrf.mxu0
        %5150 = vdwg.mxu0
        %v5151 = vadd.f32 %v5035, %v5121
        %v5152 = vadd.f32 %v5038, %v5124
        %v5153 = vadd.f32 %v5043, %v5129
        %v5154 = vadd.f32 %v5046, %v5132
        %v5155 = vadd.f32 %v5051, %v5137
        %v5156 = vadd.f32 %v5054, %v5140
        %v5157 = vadd.f32 %v5059, %v5145
        %v5158 = vadd.f32 %v5062, %v5148
        %s5159 = scalar_lea.vmem %s4, 24
        %v5160 = vld [vmem:[%s5159] sm:$0xf]
        %v5161 = vld [vmem:[%s5159 + $0x4] sm:$0xf]
        %v5164 = vunpack.c.l.b16 %v5160
        %v5165 = vunpack.c.l.b16 %v5161
        %v5166 = vpack.c.b16 %v5165, %v5164
        %v5169 = vsel %vm4904, %v4805, 0
        %v5172 = vsel %vm4904, %v4806, 0
        %v5175 = vsel %vm4904, %v4807, 0
        %v5178 = vsel %vm4904, %v4808, 0
        %5180 = vmatprep.subr.bf16.mxu0 0
        %5181 = vmatpush1.bf16.msra.mxu0 0
        %5182 = vmatprep.subr.bf16.mxu0 0
        %5183 = vmatpush1.bf16.msra.mxu0 0
        %5184 = vmatprep.subr.bf16.mxu0 0
        %5185 = vmatpush1.bf16.msra.mxu0 0
        %5186 = vmatprep.subr.bf16.mxu0 0
        %5187 = vmatpush1.bf16.msra.mxu0 0
        %5188 = vmatprep.subr.bf16.mxu0 0
        %5189 = vmatpush1.bf16.msra.mxu0 0
        %5190 = vmatprep.subr.bf16.mxu0 0
        %5191 = vmatpush1.bf16.msra.mxu0 0
        %5192 = vmatprep.subr.bf16.mxu0 0
        %5193 = vmatpush1.bf16.msra.mxu0 0
        %5194 = vmatprep.subr.bf16.mxu0 0
        %5195 = vmatpush1.bf16.msra.mxu0 %v5166
        %5196 = vmatprep.subr.bf16.mxu0 0
        %5197 = vmatpush2.bf16.msra.mxu0 0
        %5198 = vmatprep.subr.bf16.mxu0 0
        %5199 = vmatpush2.bf16.msra.mxu0 0
        %5200 = vmatprep.subr.bf16.mxu0 0
        %5201 = vmatpush2.bf16.msra.mxu0 0
        %5202 = vmatprep.subr.bf16.mxu0 0
        %5203 = vmatpush2.bf16.msra.mxu0 0
        %5204 = vmatprep.subr.bf16.mxu0 0
        %5205 = vmatpush2.bf16.msra.mxu0 0
        %5206 = vmatprep.subr.bf16.mxu0 0
        %5207 = vmatpush2.bf16.msra.mxu0 0
        %5208 = vmatprep.subr.bf16.mxu0 0
        %5209 = vmatpush2.bf16.msra.mxu0 0
        %5210 = vmatprep.subr.bf16.mxu0 0
        %5211 = vmatpush2.bf16.msra.mxu0 0
        %5212 = vmatprep.mubr.bf16.mxu0 0
        %5213 = vmatmul.mubr.bf16.gmra.mxu0 %v5169
        %v5214 = vpop.f32.mrf.mxu0
        %v5215 = vadd.f32 0.0, %v5214
        %v5216 = vpop.f32.mrf.mxu0
        %v5217 = vpop.f32.mrf.mxu0
        %v5218 = vadd.f32 0.0, %v5217
        %v5219 = vpop.f32.mrf.mxu0
        %5220 = vmatprep.mubr.bf16.mxu0 0
        %5221 = vmatmul.mubr.bf16.gmra.mxu0 %v5172
        %v5222 = vpop.f32.mrf.mxu0
        %v5223 = vadd.f32 0.0, %v5222
        %v5224 = vpop.f32.mrf.mxu0
        %v5225 = vpop.f32.mrf.mxu0
        %v5226 = vadd.f32 0.0, %v5225
        %v5227 = vpop.f32.mrf.mxu0
        %5228 = vmatprep.mubr.bf16.mxu0 0
        %5229 = vmatmul.mubr.bf16.gmra.mxu0 %v5175
        %v5230 = vpop.f32.mrf.mxu0
        %v5231 = vadd.f32 0.0, %v5230
        %v5232 = vpop.f32.mrf.mxu0
        %v5233 = vpop.f32.mrf.mxu0
        %v5234 = vadd.f32 0.0, %v5233
        %v5235 = vpop.f32.mrf.mxu0
        %5236 = vmatprep.mubr.bf16.mxu0 0
        %5237 = vmatmul.mubr.bf16.gmra.mxu0 %v5178
        %v5238 = vpop.f32.mrf.mxu0
        %v5239 = vadd.f32 0.0, %v5238
        %v5240 = vpop.f32.mrf.mxu0
        %v5241 = vpop.f32.mrf.mxu0
        %v5242 = vadd.f32 0.0, %v5241
        %v5243 = vpop.f32.mrf.mxu0
        %5244 = vdwg.mxu0
        %v5245 = vadd.f32 %v5151, %v5215
        %v5246 = vadd.f32 %v5152, %v5218
        %v5247 = vadd.f32 %v5153, %v5223
        %v5248 = vadd.f32 %v5154, %v5226
        %v5249 = vadd.f32 %v5155, %v5231
        %v5250 = vadd.f32 %v5156, %v5234
        %v5251 = vadd.f32 %v5157, %v5239
        %v5252 = vadd.f32 %v5158, %v5242
        %s5253 = scalar_lea.vmem %s4, 32
        %v5254 = vld [vmem:[%s5253] sm:$0xf]
        %v5255 = vld [vmem:[%s5253 + $0x4] sm:$0xf]
        %v5258 = vunpack.c.l.b16 %v5254
        %v5259 = vunpack.c.l.b16 %v5255
        %v5260 = vpack.c.b16 %v5259, %v5258
        %v5263 = vsel %vm4904, %v4809, 0
        %v5266 = vsel %vm4904, %v4810, 0
        %v5269 = vsel %vm4904, %v4811, 0
        %v5272 = vsel %vm4904, %v4812, 0
        %5274 = vmatprep.subr.bf16.mxu0 0
        %5275 = vmatpush1.bf16.msra.mxu0 0
        %5276 = vmatprep.subr.bf16.mxu0 0
        %5277 = vmatpush1.bf16.msra.mxu0 0
        %5278 = vmatprep.subr.bf16.mxu0 0
        %5279 = vmatpush1.bf16.msra.mxu0 0
        %5280 = vmatprep.subr.bf16.mxu0 0
        %5281 = vmatpush1.bf16.msra.mxu0 0
        %5282 = vmatprep.subr.bf16.mxu0 0
        %5283 = vmatpush1.bf16.msra.mxu0 0
        %5284 = vmatprep.subr.bf16.mxu0 0
        %5285 = vmatpush1.bf16.msra.mxu0 0
        %5286 = vmatprep.subr.bf16.mxu0 0
        %5287 = vmatpush1.bf16.msra.mxu0 0
        %5288 = vmatprep.subr.bf16.mxu0 0
        %5289 = vmatpush1.bf16.msra.mxu0 %v5260
        %5290 = vmatprep.subr.bf16.mxu0 0
        %5291 = vmatpush2.bf16.msra.mxu0 0
        %5292 = vmatprep.subr.bf16.mxu0 0
        %5293 = vmatpush2.bf16.msra.mxu0 0
        %5294 = vmatprep.subr.bf16.mxu0 0
        %5295 = vmatpush2.bf16.msra.mxu0 0
        %5296 = vmatprep.subr.bf16.mxu0 0
        %5297 = vmatpush2.bf16.msra.mxu0 0
        %5298 = vmatprep.subr.bf16.mxu0 0
        %5299 = vmatpush2.bf16.msra.mxu0 0
        %5300 = vmatprep.subr.bf16.mxu0 0
        %5301 = vmatpush2.bf16.msra.mxu0 0
        %5302 = vmatprep.subr.bf16.mxu0 0
        %5303 = vmatpush2.bf16.msra.mxu0 0
        %5304 = vmatprep.subr.bf16.mxu0 0
        %5305 = vmatpush2.bf16.msra.mxu0 0
        %5306 = vmatprep.mubr.bf16.mxu0 0
        %5307 = vmatmul.mubr.bf16.gmra.mxu0 %v5263
        %v5308 = vpop.f32.mrf.mxu0
        %v5309 = vadd.f32 0.0, %v5308
        %v5310 = vpop.f32.mrf.mxu0
        %v5311 = vpop.f32.mrf.mxu0
        %v5312 = vadd.f32 0.0, %v5311
        %v5313 = vpop.f32.mrf.mxu0
        %5314 = vmatprep.mubr.bf16.mxu0 0
        %5315 = vmatmul.mubr.bf16.gmra.mxu0 %v5266
        %v5316 = vpop.f32.mrf.mxu0
        %v5317 = vadd.f32 0.0, %v5316
        %v5318 = vpop.f32.mrf.mxu0
        %v5319 = vpop.f32.mrf.mxu0
        %v5320 = vadd.f32 0.0, %v5319
        %v5321 = vpop.f32.mrf.mxu0
        %5322 = vmatprep.mubr.bf16.mxu0 0
        %5323 = vmatmul.mubr.bf16.gmra.mxu0 %v5269
        %v5324 = vpop.f32.mrf.mxu0
        %v5325 = vadd.f32 0.0, %v5324
        %v5326 = vpop.f32.mrf.mxu0
        %v5327 = vpop.f32.mrf.mxu0
        %v5328 = vadd.f32 0.0, %v5327
        %v5329 = vpop.f32.mrf.mxu0
        %5330 = vmatprep.mubr.bf16.mxu0 0
        %5331 = vmatmul.mubr.bf16.gmra.mxu0 %v5272
        %v5332 = vpop.f32.mrf.mxu0
        %v5333 = vadd.f32 0.0, %v5332
        %v5334 = vpop.f32.mrf.mxu0
        %v5335 = vpop.f32.mrf.mxu0
        %v5336 = vadd.f32 0.0, %v5335
        %v5337 = vpop.f32.mrf.mxu0
        %5338 = vdwg.mxu0
        %v5339 = vadd.f32 %v5245, %v5309
        %v5340 = vadd.f32 %v5246, %v5312
        %v5341 = vadd.f32 %v5247, %v5317
        %v5342 = vadd.f32 %v5248, %v5320
        %v5343 = vadd.f32 %v5249, %v5325
        %v5344 = vadd.f32 %v5250, %v5328
        %v5345 = vadd.f32 %v5251, %v5333
        %v5346 = vadd.f32 %v5252, %v5336
        %s5347 = scalar_lea.vmem %s4, 40
        %v5348 = vld [vmem:[%s5347] sm:$0xf]
        %v5349 = vld [vmem:[%s5347 + $0x4] sm:$0xf]
        %v5352 = vunpack.c.l.b16 %v5348
        %v5353 = vunpack.c.l.b16 %v5349
        %v5354 = vpack.c.b16 %v5353, %v5352
        %v5357 = vsel %vm4904, %v4813, 0
        %v5360 = vsel %vm4904, %v4814, 0
        %v5363 = vsel %vm4904, %v4815, 0
        %v5366 = vsel %vm4904, %v4816, 0
        %5368 = vmatprep.subr.bf16.mxu0 0
        %5369 = vmatpush1.bf16.msra.mxu0 0
        %5370 = vmatprep.subr.bf16.mxu0 0
        %5371 = vmatpush1.bf16.msra.mxu0 0
        %5372 = vmatprep.subr.bf16.mxu0 0
        %5373 = vmatpush1.bf16.msra.mxu0 0
        %5374 = vmatprep.subr.bf16.mxu0 0
        %5375 = vmatpush1.bf16.msra.mxu0 0
        %5376 = vmatprep.subr.bf16.mxu0 0
        %5377 = vmatpush1.bf16.msra.mxu0 0
        %5378 = vmatprep.subr.bf16.mxu0 0
        %5379 = vmatpush1.bf16.msra.mxu0 0
        %5380 = vmatprep.subr.bf16.mxu0 0
        %5381 = vmatpush1.bf16.msra.mxu0 0
        %5382 = vmatprep.subr.bf16.mxu0 0
        %5383 = vmatpush1.bf16.msra.mxu0 %v5354
        %5384 = vmatprep.subr.bf16.mxu0 0
        %5385 = vmatpush2.bf16.msra.mxu0 0
        %5386 = vmatprep.subr.bf16.mxu0 0
        %5387 = vmatpush2.bf16.msra.mxu0 0
        %5388 = vmatprep.subr.bf16.mxu0 0
        %5389 = vmatpush2.bf16.msra.mxu0 0
        %5390 = vmatprep.subr.bf16.mxu0 0
        %5391 = vmatpush2.bf16.msra.mxu0 0
        %5392 = vmatprep.subr.bf16.mxu0 0
        %5393 = vmatpush2.bf16.msra.mxu0 0
        %5394 = vmatprep.subr.bf16.mxu0 0
        %5395 = vmatpush2.bf16.msra.mxu0 0
        %5396 = vmatprep.subr.bf16.mxu0 0
        %5397 = vmatpush2.bf16.msra.mxu0 0
        %5398 = vmatprep.subr.bf16.mxu0 0
        %5399 = vmatpush2.bf16.msra.mxu0 0
        %5400 = vmatprep.mubr.bf16.mxu0 0
        %5401 = vmatmul.mubr.bf16.gmra.mxu0 %v5357
        %v5402 = vpop.f32.mrf.mxu0
        %v5403 = vadd.f32 0.0, %v5402
        %v5404 = vpop.f32.mrf.mxu0
        %v5405 = vpop.f32.mrf.mxu0
        %v5406 = vadd.f32 0.0, %v5405
        %v5407 = vpop.f32.mrf.mxu0
        %5408 = vmatprep.mubr.bf16.mxu0 0
        %5409 = vmatmul.mubr.bf16.gmra.mxu0 %v5360
        %v5410 = vpop.f32.mrf.mxu0
        %v5411 = vadd.f32 0.0, %v5410
        %v5412 = vpop.f32.mrf.mxu0
        %v5413 = vpop.f32.mrf.mxu0
        %v5414 = vadd.f32 0.0, %v5413
        %v5415 = vpop.f32.mrf.mxu0
        %5416 = vmatprep.mubr.bf16.mxu0 0
        %5417 = vmatmul.mubr.bf16.gmra.mxu0 %v5363
        %v5418 = vpop.f32.mrf.mxu0
        %v5419 = vadd.f32 0.0, %v5418
        %v5420 = vpop.f32.mrf.mxu0
        %v5421 = vpop.f32.mrf.mxu0
        %v5422 = vadd.f32 0.0, %v5421
        %v5423 = vpop.f32.mrf.mxu0
        %5424 = vmatprep.mubr.bf16.mxu0 0
        %5425 = vmatmul.mubr.bf16.gmra.mxu0 %v5366
        %v5426 = vpop.f32.mrf.mxu0
        %v5427 = vadd.f32 0.0, %v5426
        %v5428 = vpop.f32.mrf.mxu0
        %v5429 = vpop.f32.mrf.mxu0
        %v5430 = vadd.f32 0.0, %v5429
        %v5431 = vpop.f32.mrf.mxu0
        %5432 = vdwg.mxu0
        %v5433 = vadd.f32 %v5339, %v5403
        %v5434 = vadd.f32 %v5340, %v5406
        %v5435 = vadd.f32 %v5341, %v5411
        %v5436 = vadd.f32 %v5342, %v5414
        %v5437 = vadd.f32 %v5343, %v5419
        %v5438 = vadd.f32 %v5344, %v5422
        %v5439 = vadd.f32 %v5345, %v5427
        %v5440 = vadd.f32 %v5346, %v5430
        %s5441 = scalar_lea.vmem %s4, 48
        %v5442 = vld [vmem:[%s5441] sm:$0xf]
        %v5443 = vld [vmem:[%s5441 + $0x4] sm:$0xf]
        %v5446 = vunpack.c.l.b16 %v5442
        %v5447 = vunpack.c.l.b16 %v5443
        %v5448 = vpack.c.b16 %v5447, %v5446
        %v5451 = vsel %vm4904, %v4817, 0
        %v5454 = vsel %vm4904, %v4818, 0
        %v5457 = vsel %vm4904, %v4819, 0
        %v5460 = vsel %vm4904, %v4820, 0
        %5462 = vmatprep.subr.bf16.mxu0 0
        %5463 = vmatpush1.bf16.msra.mxu0 0
        %5464 = vmatprep.subr.bf16.mxu0 0
        %5465 = vmatpush1.bf16.msra.mxu0 0
        %5466 = vmatprep.subr.bf16.mxu0 0
        %5467 = vmatpush1.bf16.msra.mxu0 0
        %5468 = vmatprep.subr.bf16.mxu0 0
        %5469 = vmatpush1.bf16.msra.mxu0 0
        %5470 = vmatprep.subr.bf16.mxu0 0
        %5471 = vmatpush1.bf16.msra.mxu0 0
        %5472 = vmatprep.subr.bf16.mxu0 0
        %5473 = vmatpush1.bf16.msra.mxu0 0
        %5474 = vmatprep.subr.bf16.mxu0 0
        %5475 = vmatpush1.bf16.msra.mxu0 0
        %5476 = vmatprep.subr.bf16.mxu0 0
        %5477 = vmatpush1.bf16.msra.mxu0 %v5448
        %5478 = vmatprep.subr.bf16.mxu0 0
        %5479 = vmatpush2.bf16.msra.mxu0 0
        %5480 = vmatprep.subr.bf16.mxu0 0
        %5481 = vmatpush2.bf16.msra.mxu0 0
        %5482 = vmatprep.subr.bf16.mxu0 0
        %5483 = vmatpush2.bf16.msra.mxu0 0
        %5484 = vmatprep.subr.bf16.mxu0 0
        %5485 = vmatpush2.bf16.msra.mxu0 0
        %5486 = vmatprep.subr.bf16.mxu0 0
        %5487 = vmatpush2.bf16.msra.mxu0 0
        %5488 = vmatprep.subr.bf16.mxu0 0
        %5489 = vmatpush2.bf16.msra.mxu0 0
        %5490 = vmatprep.subr.bf16.mxu0 0
        %5491 = vmatpush2.bf16.msra.mxu0 0
        %5492 = vmatprep.subr.bf16.mxu0 0
        %5493 = vmatpush2.bf16.msra.mxu0 0
        %5494 = vmatprep.mubr.bf16.mxu0 0
        %5495 = vmatmul.mubr.bf16.gmra.mxu0 %v5451
        %v5496 = vpop.f32.mrf.mxu0
        %v5497 = vadd.f32 0.0, %v5496
        %v5498 = vpop.f32.mrf.mxu0
        %v5499 = vpop.f32.mrf.mxu0
        %v5500 = vadd.f32 0.0, %v5499
        %v5501 = vpop.f32.mrf.mxu0
        %5502 = vmatprep.mubr.bf16.mxu0 0
        %5503 = vmatmul.mubr.bf16.gmra.mxu0 %v5454
        %v5504 = vpop.f32.mrf.mxu0
        %v5505 = vadd.f32 0.0, %v5504
        %v5506 = vpop.f32.mrf.mxu0
        %v5507 = vpop.f32.mrf.mxu0
        %v5508 = vadd.f32 0.0, %v5507
        %v5509 = vpop.f32.mrf.mxu0
        %5510 = vmatprep.mubr.bf16.mxu0 0
        %5511 = vmatmul.mubr.bf16.gmra.mxu0 %v5457
        %v5512 = vpop.f32.mrf.mxu0
        %v5513 = vadd.f32 0.0, %v5512
        %v5514 = vpop.f32.mrf.mxu0
        %v5515 = vpop.f32.mrf.mxu0
        %v5516 = vadd.f32 0.0, %v5515
        %v5517 = vpop.f32.mrf.mxu0
        %5518 = vmatprep.mubr.bf16.mxu0 0
        %5519 = vmatmul.mubr.bf16.gmra.mxu0 %v5460
        %v5520 = vpop.f32.mrf.mxu0
        %v5521 = vadd.f32 0.0, %v5520
        %v5522 = vpop.f32.mrf.mxu0
        %v5523 = vpop.f32.mrf.mxu0
        %v5524 = vadd.f32 0.0, %v5523
        %v5525 = vpop.f32.mrf.mxu0
        %5526 = vdwg.mxu0
        %v5527 = vadd.f32 %v5433, %v5497
        %v5528 = vadd.f32 %v5434, %v5500
        %v5529 = vadd.f32 %v5435, %v5505
        %v5530 = vadd.f32 %v5436, %v5508
        %v5531 = vadd.f32 %v5437, %v5513
        %v5532 = vadd.f32 %v5438, %v5516
        %v5533 = vadd.f32 %v5439, %v5521
        %v5534 = vadd.f32 %v5440, %v5524
        %s5535 = scalar_lea.vmem %s4, 56
        %v5536 = vld [vmem:[%s5535] sm:$0xf]
        %v5537 = vld [vmem:[%s5535 + $0x4] sm:$0xf]
        %v5540 = vunpack.c.l.b16 %v5536
        %v5541 = vunpack.c.l.b16 %v5537
        %v5542 = vpack.c.b16 %v5541, %v5540
        %v5545 = vsel %vm4904, %v4821, 0
        %v5548 = vsel %vm4904, %v4822, 0
        %v5551 = vsel %vm4904, %v4823, 0
        %v5554 = vsel %vm4904, %v4824, 0
        %5556 = vmatprep.subr.bf16.mxu0 0
        %5557 = vmatpush1.bf16.msra.mxu0 0
        %5558 = vmatprep.subr.bf16.mxu0 0
        %5559 = vmatpush1.bf16.msra.mxu0 0
        %5560 = vmatprep.subr.bf16.mxu0 0
        %5561 = vmatpush1.bf16.msra.mxu0 0
        %5562 = vmatprep.subr.bf16.mxu0 0
        %5563 = vmatpush1.bf16.msra.mxu0 0
        %5564 = vmatprep.subr.bf16.mxu0 0
        %5565 = vmatpush1.bf16.msra.mxu0 0
        %5566 = vmatprep.subr.bf16.mxu0 0
        %5567 = vmatpush1.bf16.msra.mxu0 0
        %5568 = vmatprep.subr.bf16.mxu0 0
        %5569 = vmatpush1.bf16.msra.mxu0 0
        %5570 = vmatprep.subr.bf16.mxu0 0
        %5571 = vmatpush1.bf16.msra.mxu0 %v5542
        %5572 = vmatprep.subr.bf16.mxu0 0
        %5573 = vmatpush2.bf16.msra.mxu0 0
        %5574 = vmatprep.subr.bf16.mxu0 0
        %5575 = vmatpush2.bf16.msra.mxu0 0
        %5576 = vmatprep.subr.bf16.mxu0 0
        %5577 = vmatpush2.bf16.msra.mxu0 0
        %5578 = vmatprep.subr.bf16.mxu0 0
        %5579 = vmatpush2.bf16.msra.mxu0 0
        %5580 = vmatprep.subr.bf16.mxu0 0
        %5581 = vmatpush2.bf16.msra.mxu0 0
        %5582 = vmatprep.subr.bf16.mxu0 0
        %5583 = vmatpush2.bf16.msra.mxu0 0
        %5584 = vmatprep.subr.bf16.mxu0 0
        %5585 = vmatpush2.bf16.msra.mxu0 0
        %5586 = vmatprep.subr.bf16.mxu0 0
        %5587 = vmatpush2.bf16.msra.mxu0 0
        %5588 = vmatprep.mubr.bf16.mxu0 0
        %5589 = vmatmul.mubr.bf16.gmra.mxu0 %v5545
        %v5590 = vpop.f32.mrf.mxu0
        %v5591 = vadd.f32 0.0, %v5590
        %v5592 = vpop.f32.mrf.mxu0
        %v5593 = vpop.f32.mrf.mxu0
        %v5594 = vadd.f32 0.0, %v5593
        %v5595 = vpop.f32.mrf.mxu0
        %5596 = vmatprep.mubr.bf16.mxu0 0
        %5597 = vmatmul.mubr.bf16.gmra.mxu0 %v5548
        %v5598 = vpop.f32.mrf.mxu0
        %v5599 = vadd.f32 0.0, %v5598
        %v5600 = vpop.f32.mrf.mxu0
        %v5601 = vpop.f32.mrf.mxu0
        %v5602 = vadd.f32 0.0, %v5601
        %v5603 = vpop.f32.mrf.mxu0
        %5604 = vmatprep.mubr.bf16.mxu0 0
        %5605 = vmatmul.mubr.bf16.gmra.mxu0 %v5551
        %v5606 = vpop.f32.mrf.mxu0
        %v5607 = vadd.f32 0.0, %v5606
        %v5608 = vpop.f32.mrf.mxu0
        %v5609 = vpop.f32.mrf.mxu0
        %v5610 = vadd.f32 0.0, %v5609
        %v5611 = vpop.f32.mrf.mxu0
        %5612 = vmatprep.mubr.bf16.mxu0 0
        %5613 = vmatmul.mubr.bf16.gmra.mxu0 %v5554
        %v5614 = vpop.f32.mrf.mxu0
        %v5615 = vadd.f32 0.0, %v5614
        %v5616 = vpop.f32.mrf.mxu0
        %v5617 = vpop.f32.mrf.mxu0
        %v5618 = vadd.f32 0.0, %v5617
        %v5619 = vpop.f32.mrf.mxu0
        %5620 = vdwg.mxu0
        %v5621 = vadd.f32 %v5527, %v5591
        %v5622 = vadd.f32 %v5528, %v5594
        %v5623 = vadd.f32 %v5529, %v5599
        %v5624 = vadd.f32 %v5530, %v5602
        %v5625 = vadd.f32 %v5531, %v5607
        %v5626 = vadd.f32 %v5532, %v5610
        %v5627 = vadd.f32 %v5533, %v5615
        %v5628 = vadd.f32 %v5534, %v5618
        %s5629 = scalar_lea.vmem %s4, 64
        %v5630 = vld [vmem:[%s5629] sm:$0xf]
        %v5631 = vld [vmem:[%s5629 + $0x4] sm:$0xf]
        %v5634 = vunpack.c.l.b16 %v5630
        %v5635 = vunpack.c.l.b16 %v5631
        %v5636 = vpack.c.b16 %v5635, %v5634
        %v5639 = vsel %vm4904, %v4825, 0
        %v5642 = vsel %vm4904, %v4826, 0
        %v5645 = vsel %vm4904, %v4827, 0
        %v5648 = vsel %vm4904, %v4828, 0
        %5650 = vmatprep.subr.bf16.mxu0 0
        %5651 = vmatpush1.bf16.msra.mxu0 0
        %5652 = vmatprep.subr.bf16.mxu0 0
        %5653 = vmatpush1.bf16.msra.mxu0 0
        %5654 = vmatprep.subr.bf16.mxu0 0
        %5655 = vmatpush1.bf16.msra.mxu0 0
        %5656 = vmatprep.subr.bf16.mxu0 0
        %5657 = vmatpush1.bf16.msra.mxu0 0
        %5658 = vmatprep.subr.bf16.mxu0 0
        %5659 = vmatpush1.bf16.msra.mxu0 0
        %5660 = vmatprep.subr.bf16.mxu0 0
        %5661 = vmatpush1.bf16.msra.mxu0 0
        %5662 = vmatprep.subr.bf16.mxu0 0
        %5663 = vmatpush1.bf16.msra.mxu0 0
        %5664 = vmatprep.subr.bf16.mxu0 0
        %5665 = vmatpush1.bf16.msra.mxu0 %v5636
        %5666 = vmatprep.subr.bf16.mxu0 0
        %5667 = vmatpush2.bf16.msra.mxu0 0
        %5668 = vmatprep.subr.bf16.mxu0 0
        %5669 = vmatpush2.bf16.msra.mxu0 0
        %5670 = vmatprep.subr.bf16.mxu0 0
        %5671 = vmatpush2.bf16.msra.mxu0 0
        %5672 = vmatprep.subr.bf16.mxu0 0
        %5673 = vmatpush2.bf16.msra.mxu0 0
        %5674 = vmatprep.subr.bf16.mxu0 0
        %5675 = vmatpush2.bf16.msra.mxu0 0
        %5676 = vmatprep.subr.bf16.mxu0 0
        %5677 = vmatpush2.bf16.msra.mxu0 0
        %5678 = vmatprep.subr.bf16.mxu0 0
        %5679 = vmatpush2.bf16.msra.mxu0 0
        %5680 = vmatprep.subr.bf16.mxu0 0
        %5681 = vmatpush2.bf16.msra.mxu0 0
        %5682 = vmatprep.mubr.bf16.mxu0 0
        %5683 = vmatmul.mubr.bf16.gmra.mxu0 %v5639
        %v5684 = vpop.f32.mrf.mxu0
        %v5685 = vadd.f32 0.0, %v5684
        %v5686 = vpop.f32.mrf.mxu0
        %v5687 = vpop.f32.mrf.mxu0
        %v5688 = vadd.f32 0.0, %v5687
        %v5689 = vpop.f32.mrf.mxu0
        %5690 = vmatprep.mubr.bf16.mxu0 0
        %5691 = vmatmul.mubr.bf16.gmra.mxu0 %v5642
        %v5692 = vpop.f32.mrf.mxu0
        %v5693 = vadd.f32 0.0, %v5692
        %v5694 = vpop.f32.mrf.mxu0
        %v5695 = vpop.f32.mrf.mxu0
        %v5696 = vadd.f32 0.0, %v5695
        %v5697 = vpop.f32.mrf.mxu0
        %5698 = vmatprep.mubr.bf16.mxu0 0
        %5699 = vmatmul.mubr.bf16.gmra.mxu0 %v5645
        %v5700 = vpop.f32.mrf.mxu0
        %v5701 = vadd.f32 0.0, %v5700
        %v5702 = vpop.f32.mrf.mxu0
        %v5703 = vpop.f32.mrf.mxu0
        %v5704 = vadd.f32 0.0, %v5703
        %v5705 = vpop.f32.mrf.mxu0
        %5706 = vmatprep.mubr.bf16.mxu0 0
        %5707 = vmatmul.mubr.bf16.gmra.mxu0 %v5648
        %v5708 = vpop.f32.mrf.mxu0
        %v5709 = vadd.f32 0.0, %v5708
        %v5710 = vpop.f32.mrf.mxu0
        %v5711 = vpop.f32.mrf.mxu0
        %v5712 = vadd.f32 0.0, %v5711
        %v5713 = vpop.f32.mrf.mxu0
        %5714 = vdwg.mxu0
        %v5715 = vadd.f32 %v5621, %v5685
        %v5716 = vadd.f32 %v5622, %v5688
        %v5717 = vadd.f32 %v5623, %v5693
        %v5718 = vadd.f32 %v5624, %v5696
        %v5719 = vadd.f32 %v5625, %v5701
        %v5720 = vadd.f32 %v5626, %v5704
        %v5721 = vadd.f32 %v5627, %v5709
        %v5722 = vadd.f32 %v5628, %v5712
        %s5723 = scalar_lea.vmem %s4, 72
        %v5724 = vld [vmem:[%s5723] sm:$0xf]
        %v5725 = vld [vmem:[%s5723 + $0x4] sm:$0xf]
        %v5728 = vunpack.c.l.b16 %v5724
        %v5729 = vunpack.c.l.b16 %v5725
        %v5730 = vpack.c.b16 %v5729, %v5728
        %v5733 = vsel %vm4904, %v4829, 0
        %v5736 = vsel %vm4904, %v4830, 0
        %v5739 = vsel %vm4904, %v4831, 0
        %v5742 = vsel %vm4904, %v4832, 0
        %5744 = vmatprep.subr.bf16.mxu0 0
        %5745 = vmatpush1.bf16.msra.mxu0 0
        %5746 = vmatprep.subr.bf16.mxu0 0
        %5747 = vmatpush1.bf16.msra.mxu0 0
        %5748 = vmatprep.subr.bf16.mxu0 0
        %5749 = vmatpush1.bf16.msra.mxu0 0
        %5750 = vmatprep.subr.bf16.mxu0 0
        %5751 = vmatpush1.bf16.msra.mxu0 0
        %5752 = vmatprep.subr.bf16.mxu0 0
        %5753 = vmatpush1.bf16.msra.mxu0 0
        %5754 = vmatprep.subr.bf16.mxu0 0
        %5755 = vmatpush1.bf16.msra.mxu0 0
        %5756 = vmatprep.subr.bf16.mxu0 0
        %5757 = vmatpush1.bf16.msra.mxu0 0
        %5758 = vmatprep.subr.bf16.mxu0 0
        %5759 = vmatpush1.bf16.msra.mxu0 %v5730
        %5760 = vmatprep.subr.bf16.mxu0 0
        %5761 = vmatpush2.bf16.msra.mxu0 0
        %5762 = vmatprep.subr.bf16.mxu0 0
        %5763 = vmatpush2.bf16.msra.mxu0 0
        %5764 = vmatprep.subr.bf16.mxu0 0
        %5765 = vmatpush2.bf16.msra.mxu0 0
        %5766 = vmatprep.subr.bf16.mxu0 0
        %5767 = vmatpush2.bf16.msra.mxu0 0
        %5768 = vmatprep.subr.bf16.mxu0 0
        %5769 = vmatpush2.bf16.msra.mxu0 0
        %5770 = vmatprep.subr.bf16.mxu0 0
        %5771 = vmatpush2.bf16.msra.mxu0 0
        %5772 = vmatprep.subr.bf16.mxu0 0
        %5773 = vmatpush2.bf16.msra.mxu0 0
        %5774 = vmatprep.subr.bf16.mxu0 0
        %5775 = vmatpush2.bf16.msra.mxu0 0
        %5776 = vmatprep.mubr.bf16.mxu0 0
        %5777 = vmatmul.mubr.bf16.gmra.mxu0 %v5733
        %v5778 = vpop.f32.mrf.mxu0
        %v5779 = vadd.f32 0.0, %v5778
        %v5780 = vpop.f32.mrf.mxu0
        %v5781 = vpop.f32.mrf.mxu0
        %v5782 = vadd.f32 0.0, %v5781
        %v5783 = vpop.f32.mrf.mxu0
        %5784 = vmatprep.mubr.bf16.mxu0 0
        %5785 = vmatmul.mubr.bf16.gmra.mxu0 %v5736
        %v5786 = vpop.f32.mrf.mxu0
        %v5787 = vadd.f32 0.0, %v5786
        %v5788 = vpop.f32.mrf.mxu0
        %v5789 = vpop.f32.mrf.mxu0
        %v5790 = vadd.f32 0.0, %v5789
        %v5791 = vpop.f32.mrf.mxu0
        %5792 = vmatprep.mubr.bf16.mxu0 0
        %5793 = vmatmul.mubr.bf16.gmra.mxu0 %v5739
        %v5794 = vpop.f32.mrf.mxu0
        %v5795 = vadd.f32 0.0, %v5794
        %v5796 = vpop.f32.mrf.mxu0
        %v5797 = vpop.f32.mrf.mxu0
        %v5798 = vadd.f32 0.0, %v5797
        %v5799 = vpop.f32.mrf.mxu0
        %5800 = vmatprep.mubr.bf16.mxu0 0
        %5801 = vmatmul.mubr.bf16.gmra.mxu0 %v5742
        %v5802 = vpop.f32.mrf.mxu0
        %v5803 = vadd.f32 0.0, %v5802
        %v5804 = vpop.f32.mrf.mxu0
        %v5805 = vpop.f32.mrf.mxu0
        %v5806 = vadd.f32 0.0, %v5805
        %v5807 = vpop.f32.mrf.mxu0
        %5808 = vdwg.mxu0
        %v5809 = vadd.f32 %v5715, %v5779
        %v5810 = vadd.f32 %v5716, %v5782
        %v5811 = vadd.f32 %v5717, %v5787
        %v5812 = vadd.f32 %v5718, %v5790
        %v5813 = vadd.f32 %v5719, %v5795
        %v5814 = vadd.f32 %v5720, %v5798
        %v5815 = vadd.f32 %v5721, %v5803
        %v5816 = vadd.f32 %v5722, %v5806
        %s5817 = scalar_lea.vmem %s4, 80
        %v5818 = vld [vmem:[%s5817] sm:$0xf]
        %v5819 = vld [vmem:[%s5817 + $0x4] sm:$0xf]
        %v5822 = vunpack.c.l.b16 %v5818
        %v5823 = vunpack.c.l.b16 %v5819
        %v5824 = vpack.c.b16 %v5823, %v5822
        %v5827 = vsel %vm4904, %v4833, 0
        %v5830 = vsel %vm4904, %v4834, 0
        %v5833 = vsel %vm4904, %v4835, 0
        %v5836 = vsel %vm4904, %v4836, 0
        %5838 = vmatprep.subr.bf16.mxu0 0
        %5839 = vmatpush1.bf16.msra.mxu0 0
        %5840 = vmatprep.subr.bf16.mxu0 0
        %5841 = vmatpush1.bf16.msra.mxu0 0
        %5842 = vmatprep.subr.bf16.mxu0 0
        %5843 = vmatpush1.bf16.msra.mxu0 0
        %5844 = vmatprep.subr.bf16.mxu0 0
        %5845 = vmatpush1.bf16.msra.mxu0 0
        %5846 = vmatprep.subr.bf16.mxu0 0
        %5847 = vmatpush1.bf16.msra.mxu0 0
        %5848 = vmatprep.subr.bf16.mxu0 0
        %5849 = vmatpush1.bf16.msra.mxu0 0
        %5850 = vmatprep.subr.bf16.mxu0 0
        %5851 = vmatpush1.bf16.msra.mxu0 0
        %5852 = vmatprep.subr.bf16.mxu0 0
        %5853 = vmatpush1.bf16.msra.mxu0 %v5824
        %5854 = vmatprep.subr.bf16.mxu0 0
        %5855 = vmatpush2.bf16.msra.mxu0 0
        %5856 = vmatprep.subr.bf16.mxu0 0
        %5857 = vmatpush2.bf16.msra.mxu0 0
        %5858 = vmatprep.subr.bf16.mxu0 0
        %5859 = vmatpush2.bf16.msra.mxu0 0
        %5860 = vmatprep.subr.bf16.mxu0 0
        %5861 = vmatpush2.bf16.msra.mxu0 0
        %5862 = vmatprep.subr.bf16.mxu0 0
        %5863 = vmatpush2.bf16.msra.mxu0 0
        %5864 = vmatprep.subr.bf16.mxu0 0
        %5865 = vmatpush2.bf16.msra.mxu0 0
        %5866 = vmatprep.subr.bf16.mxu0 0
        %5867 = vmatpush2.bf16.msra.mxu0 0
        %5868 = vmatprep.subr.bf16.mxu0 0
        %5869 = vmatpush2.bf16.msra.mxu0 0
        %5870 = vmatprep.mubr.bf16.mxu0 0
        %5871 = vmatmul.mubr.bf16.gmra.mxu0 %v5827
        %v5872 = vpop.f32.mrf.mxu0
        %v5873 = vadd.f32 0.0, %v5872
        %v5874 = vpop.f32.mrf.mxu0
        %v5875 = vpop.f32.mrf.mxu0
        %v5876 = vadd.f32 0.0, %v5875
        %v5877 = vpop.f32.mrf.mxu0
        %5878 = vmatprep.mubr.bf16.mxu0 0
        %5879 = vmatmul.mubr.bf16.gmra.mxu0 %v5830
        %v5880 = vpop.f32.mrf.mxu0
        %v5881 = vadd.f32 0.0, %v5880
        %v5882 = vpop.f32.mrf.mxu0
        %v5883 = vpop.f32.mrf.mxu0
        %v5884 = vadd.f32 0.0, %v5883
        %v5885 = vpop.f32.mrf.mxu0
        %5886 = vmatprep.mubr.bf16.mxu0 0
        %5887 = vmatmul.mubr.bf16.gmra.mxu0 %v5833
        %v5888 = vpop.f32.mrf.mxu0
        %v5889 = vadd.f32 0.0, %v5888
        %v5890 = vpop.f32.mrf.mxu0
        %v5891 = vpop.f32.mrf.mxu0
        %v5892 = vadd.f32 0.0, %v5891
        %v5893 = vpop.f32.mrf.mxu0
        %5894 = vmatprep.mubr.bf16.mxu0 0
        %5895 = vmatmul.mubr.bf16.gmra.mxu0 %v5836
        %v5896 = vpop.f32.mrf.mxu0
        %v5897 = vadd.f32 0.0, %v5896
        %v5898 = vpop.f32.mrf.mxu0
        %v5899 = vpop.f32.mrf.mxu0
        %v5900 = vadd.f32 0.0, %v5899
        %v5901 = vpop.f32.mrf.mxu0
        %5902 = vdwg.mxu0
        %v5903 = vadd.f32 %v5809, %v5873
        %v5904 = vadd.f32 %v5810, %v5876
        %v5905 = vadd.f32 %v5811, %v5881
        %v5906 = vadd.f32 %v5812, %v5884
        %v5907 = vadd.f32 %v5813, %v5889
        %v5908 = vadd.f32 %v5814, %v5892
        %v5909 = vadd.f32 %v5815, %v5897
        %v5910 = vadd.f32 %v5816, %v5900
        %s5911 = scalar_lea.vmem %s4, 88
        %v5912 = vld [vmem:[%s5911] sm:$0xf]
        %v5913 = vld [vmem:[%s5911 + $0x4] sm:$0xf]
        %v5916 = vunpack.c.l.b16 %v5912
        %v5917 = vunpack.c.l.b16 %v5913
        %v5918 = vpack.c.b16 %v5917, %v5916
        %v5921 = vsel %vm4904, %v4837, 0
        %v5924 = vsel %vm4904, %v4838, 0
        %v5927 = vsel %vm4904, %v4839, 0
        %v5930 = vsel %vm4904, %v4840, 0
        %5932 = vmatprep.subr.bf16.mxu0 0
        %5933 = vmatpush1.bf16.msra.mxu0 0
        %5934 = vmatprep.subr.bf16.mxu0 0
        %5935 = vmatpush1.bf16.msra.mxu0 0
        %5936 = vmatprep.subr.bf16.mxu0 0
        %5937 = vmatpush1.bf16.msra.mxu0 0
        %5938 = vmatprep.subr.bf16.mxu0 0
        %5939 = vmatpush1.bf16.msra.mxu0 0
        %5940 = vmatprep.subr.bf16.mxu0 0
        %5941 = vmatpush1.bf16.msra.mxu0 0
        %5942 = vmatprep.subr.bf16.mxu0 0
        %5943 = vmatpush1.bf16.msra.mxu0 0
        %5944 = vmatprep.subr.bf16.mxu0 0
        %5945 = vmatpush1.bf16.msra.mxu0 0
        %5946 = vmatprep.subr.bf16.mxu0 0
        %5947 = vmatpush1.bf16.msra.mxu0 %v5918
        %5948 = vmatprep.subr.bf16.mxu0 0
        %5949 = vmatpush2.bf16.msra.mxu0 0
        %5950 = vmatprep.subr.bf16.mxu0 0
        %5951 = vmatpush2.bf16.msra.mxu0 0
        %5952 = vmatprep.subr.bf16.mxu0 0
        %5953 = vmatpush2.bf16.msra.mxu0 0
        %5954 = vmatprep.subr.bf16.mxu0 0
        %5955 = vmatpush2.bf16.msra.mxu0 0
        %5956 = vmatprep.subr.bf16.mxu0 0
        %5957 = vmatpush2.bf16.msra.mxu0 0
        %5958 = vmatprep.subr.bf16.mxu0 0
        %5959 = vmatpush2.bf16.msra.mxu0 0
        %5960 = vmatprep.subr.bf16.mxu0 0
        %5961 = vmatpush2.bf16.msra.mxu0 0
        %5962 = vmatprep.subr.bf16.mxu0 0
        %5963 = vmatpush2.bf16.msra.mxu0 0
        %5964 = vmatprep.mubr.bf16.mxu0 0
        %5965 = vmatmul.mubr.bf16.gmra.mxu0 %v5921
        %v5966 = vpop.f32.mrf.mxu0
        %v5967 = vadd.f32 0.0, %v5966
        %v5968 = vpop.f32.mrf.mxu0
        %v5969 = vpop.f32.mrf.mxu0
        %v5970 = vadd.f32 0.0, %v5969
        %v5971 = vpop.f32.mrf.mxu0
        %5972 = vmatprep.mubr.bf16.mxu0 0
        %5973 = vmatmul.mubr.bf16.gmra.mxu0 %v5924
        %v5974 = vpop.f32.mrf.mxu0
        %v5975 = vadd.f32 0.0, %v5974
        %v5976 = vpop.f32.mrf.mxu0
        %v5977 = vpop.f32.mrf.mxu0
        %v5978 = vadd.f32 0.0, %v5977
        %v5979 = vpop.f32.mrf.mxu0
        %5980 = vmatprep.mubr.bf16.mxu0 0
        %5981 = vmatmul.mubr.bf16.gmra.mxu0 %v5927
        %v5982 = vpop.f32.mrf.mxu0
        %v5983 = vadd.f32 0.0, %v5982
        %v5984 = vpop.f32.mrf.mxu0
        %v5985 = vpop.f32.mrf.mxu0
        %v5986 = vadd.f32 0.0, %v5985
        %v5987 = vpop.f32.mrf.mxu0
        %5988 = vmatprep.mubr.bf16.mxu0 0
        %5989 = vmatmul.mubr.bf16.gmra.mxu0 %v5930
        %v5990 = vpop.f32.mrf.mxu0
        %v5991 = vadd.f32 0.0, %v5990
        %v5992 = vpop.f32.mrf.mxu0
        %v5993 = vpop.f32.mrf.mxu0
        %v5994 = vadd.f32 0.0, %v5993
        %v5995 = vpop.f32.mrf.mxu0
        %5996 = vdwg.mxu0
        %v5997 = vadd.f32 %v5903, %v5967
        %v5998 = vadd.f32 %v5904, %v5970
        %v5999 = vadd.f32 %v5905, %v5975
        %v6000 = vadd.f32 %v5906, %v5978
        %v6001 = vadd.f32 %v5907, %v5983
        %v6002 = vadd.f32 %v5908, %v5986
        %v6003 = vadd.f32 %v5909, %v5991
        %v6004 = vadd.f32 %v5910, %v5994
        %s6005 = scalar_lea.vmem %s4, 96
        %v6006 = vld [vmem:[%s6005] sm:$0xf]
        %v6007 = vld [vmem:[%s6005 + $0x4] sm:$0xf]
        %v6010 = vunpack.c.l.b16 %v6006
        %v6011 = vunpack.c.l.b16 %v6007
        %v6012 = vpack.c.b16 %v6011, %v6010
        %v6015 = vsel %vm4904, %v4841, 0
        %v6018 = vsel %vm4904, %v4842, 0
        %v6021 = vsel %vm4904, %v4843, 0
        %v6024 = vsel %vm4904, %v4844, 0
        %6026 = vmatprep.subr.bf16.mxu0 0
        %6027 = vmatpush1.bf16.msra.mxu0 0
        %6028 = vmatprep.subr.bf16.mxu0 0
        %6029 = vmatpush1.bf16.msra.mxu0 0
        %6030 = vmatprep.subr.bf16.mxu0 0
        %6031 = vmatpush1.bf16.msra.mxu0 0
        %6032 = vmatprep.subr.bf16.mxu0 0
        %6033 = vmatpush1.bf16.msra.mxu0 0
        %6034 = vmatprep.subr.bf16.mxu0 0
        %6035 = vmatpush1.bf16.msra.mxu0 0
        %6036 = vmatprep.subr.bf16.mxu0 0
        %6037 = vmatpush1.bf16.msra.mxu0 0
        %6038 = vmatprep.subr.bf16.mxu0 0
        %6039 = vmatpush1.bf16.msra.mxu0 0
        %6040 = vmatprep.subr.bf16.mxu0 0
        %6041 = vmatpush1.bf16.msra.mxu0 %v6012
        %6042 = vmatprep.subr.bf16.mxu0 0
        %6043 = vmatpush2.bf16.msra.mxu0 0
        %6044 = vmatprep.subr.bf16.mxu0 0
        %6045 = vmatpush2.bf16.msra.mxu0 0
        %6046 = vmatprep.subr.bf16.mxu0 0
        %6047 = vmatpush2.bf16.msra.mxu0 0
        %6048 = vmatprep.subr.bf16.mxu0 0
        %6049 = vmatpush2.bf16.msra.mxu0 0
        %6050 = vmatprep.subr.bf16.mxu0 0
        %6051 = vmatpush2.bf16.msra.mxu0 0
        %6052 = vmatprep.subr.bf16.mxu0 0
        %6053 = vmatpush2.bf16.msra.mxu0 0
        %6054 = vmatprep.subr.bf16.mxu0 0
        %6055 = vmatpush2.bf16.msra.mxu0 0
        %6056 = vmatprep.subr.bf16.mxu0 0
        %6057 = vmatpush2.bf16.msra.mxu0 0
        %6058 = vmatprep.mubr.bf16.mxu0 0
        %6059 = vmatmul.mubr.bf16.gmra.mxu0 %v6015
        %v6060 = vpop.f32.mrf.mxu0
        %v6061 = vadd.f32 0.0, %v6060
        %v6062 = vpop.f32.mrf.mxu0
        %v6063 = vpop.f32.mrf.mxu0
        %v6064 = vadd.f32 0.0, %v6063
        %v6065 = vpop.f32.mrf.mxu0
        %6066 = vmatprep.mubr.bf16.mxu0 0
        %6067 = vmatmul.mubr.bf16.gmra.mxu0 %v6018
        %v6068 = vpop.f32.mrf.mxu0
        %v6069 = vadd.f32 0.0, %v6068
        %v6070 = vpop.f32.mrf.mxu0
        %v6071 = vpop.f32.mrf.mxu0
        %v6072 = vadd.f32 0.0, %v6071
        %v6073 = vpop.f32.mrf.mxu0
        %6074 = vmatprep.mubr.bf16.mxu0 0
        %6075 = vmatmul.mubr.bf16.gmra.mxu0 %v6021
        %v6076 = vpop.f32.mrf.mxu0
        %v6077 = vadd.f32 0.0, %v6076
        %v6078 = vpop.f32.mrf.mxu0
        %v6079 = vpop.f32.mrf.mxu0
        %v6080 = vadd.f32 0.0, %v6079
        %v6081 = vpop.f32.mrf.mxu0
        %6082 = vmatprep.mubr.bf16.mxu0 0
        %6083 = vmatmul.mubr.bf16.gmra.mxu0 %v6024
        %v6084 = vpop.f32.mrf.mxu0
        %v6085 = vadd.f32 0.0, %v6084
        %v6086 = vpop.f32.mrf.mxu0
        %v6087 = vpop.f32.mrf.mxu0
        %v6088 = vadd.f32 0.0, %v6087
        %v6089 = vpop.f32.mrf.mxu0
        %6090 = vdwg.mxu0
        %v6091 = vadd.f32 %v5997, %v6061
        %v6092 = vadd.f32 %v5998, %v6064
        %v6093 = vadd.f32 %v5999, %v6069
        %v6094 = vadd.f32 %v6000, %v6072
        %v6095 = vadd.f32 %v6001, %v6077
        %v6096 = vadd.f32 %v6002, %v6080
        %v6097 = vadd.f32 %v6003, %v6085
        %v6098 = vadd.f32 %v6004, %v6088
        %s6099 = scalar_lea.vmem %s4, 104
        %v6100 = vld [vmem:[%s6099] sm:$0xf]
        %v6101 = vld [vmem:[%s6099 + $0x4] sm:$0xf]
        %v6104 = vunpack.c.l.b16 %v6100
        %v6105 = vunpack.c.l.b16 %v6101
        %v6106 = vpack.c.b16 %v6105, %v6104
        %v6109 = vsel %vm4904, %v4845, 0
        %v6112 = vsel %vm4904, %v4846, 0
        %v6115 = vsel %vm4904, %v4847, 0
        %v6118 = vsel %vm4904, %v4848, 0
        %6120 = vmatprep.subr.bf16.mxu0 0
        %6121 = vmatpush1.bf16.msra.mxu0 0
        %6122 = vmatprep.subr.bf16.mxu0 0
        %6123 = vmatpush1.bf16.msra.mxu0 0
        %6124 = vmatprep.subr.bf16.mxu0 0
        %6125 = vmatpush1.bf16.msra.mxu0 0
        %6126 = vmatprep.subr.bf16.mxu0 0
        %6127 = vmatpush1.bf16.msra.mxu0 0
        %6128 = vmatprep.subr.bf16.mxu0 0
        %6129 = vmatpush1.bf16.msra.mxu0 0
        %6130 = vmatprep.subr.bf16.mxu0 0
        %6131 = vmatpush1.bf16.msra.mxu0 0
        %6132 = vmatprep.subr.bf16.mxu0 0
        %6133 = vmatpush1.bf16.msra.mxu0 0
        %6134 = vmatprep.subr.bf16.mxu0 0
        %6135 = vmatpush1.bf16.msra.mxu0 %v6106
        %6136 = vmatprep.subr.bf16.mxu0 0
        %6137 = vmatpush2.bf16.msra.mxu0 0
        %6138 = vmatprep.subr.bf16.mxu0 0
        %6139 = vmatpush2.bf16.msra.mxu0 0
        %6140 = vmatprep.subr.bf16.mxu0 0
        %6141 = vmatpush2.bf16.msra.mxu0 0
        %6142 = vmatprep.subr.bf16.mxu0 0
        %6143 = vmatpush2.bf16.msra.mxu0 0
        %6144 = vmatprep.subr.bf16.mxu0 0
        %6145 = vmatpush2.bf16.msra.mxu0 0
        %6146 = vmatprep.subr.bf16.mxu0 0
        %6147 = vmatpush2.bf16.msra.mxu0 0
        %6148 = vmatprep.subr.bf16.mxu0 0
        %6149 = vmatpush2.bf16.msra.mxu0 0
        %6150 = vmatprep.subr.bf16.mxu0 0
        %6151 = vmatpush2.bf16.msra.mxu0 0
        %6152 = vmatprep.mubr.bf16.mxu0 0
        %6153 = vmatmul.mubr.bf16.gmra.mxu0 %v6109
        %v6154 = vpop.f32.mrf.mxu0
        %v6155 = vadd.f32 0.0, %v6154
        %v6156 = vpop.f32.mrf.mxu0
        %v6157 = vpop.f32.mrf.mxu0
        %v6158 = vadd.f32 0.0, %v6157
        %v6159 = vpop.f32.mrf.mxu0
        %6160 = vmatprep.mubr.bf16.mxu0 0
        %6161 = vmatmul.mubr.bf16.gmra.mxu0 %v6112
        %v6162 = vpop.f32.mrf.mxu0
        %v6163 = vadd.f32 0.0, %v6162
        %v6164 = vpop.f32.mrf.mxu0
        %v6165 = vpop.f32.mrf.mxu0
        %v6166 = vadd.f32 0.0, %v6165
        %v6167 = vpop.f32.mrf.mxu0
        %6168 = vmatprep.mubr.bf16.mxu0 0
        %6169 = vmatmul.mubr.bf16.gmra.mxu0 %v6115
        %v6170 = vpop.f32.mrf.mxu0
        %v6171 = vadd.f32 0.0, %v6170
        %v6172 = vpop.f32.mrf.mxu0
        %v6173 = vpop.f32.mrf.mxu0
        %v6174 = vadd.f32 0.0, %v6173
        %v6175 = vpop.f32.mrf.mxu0
        %6176 = vmatprep.mubr.bf16.mxu0 0
        %6177 = vmatmul.mubr.bf16.gmra.mxu0 %v6118
        %v6178 = vpop.f32.mrf.mxu0
        %v6179 = vadd.f32 0.0, %v6178
        %v6180 = vpop.f32.mrf.mxu0
        %v6181 = vpop.f32.mrf.mxu0
        %v6182 = vadd.f32 0.0, %v6181
        %v6183 = vpop.f32.mrf.mxu0
        %6184 = vdwg.mxu0
        %v6185 = vadd.f32 %v6091, %v6155
        %v6186 = vadd.f32 %v6092, %v6158
        %v6187 = vadd.f32 %v6093, %v6163
        %v6188 = vadd.f32 %v6094, %v6166
        %v6189 = vadd.f32 %v6095, %v6171
        %v6190 = vadd.f32 %v6096, %v6174
        %v6191 = vadd.f32 %v6097, %v6179
        %v6192 = vadd.f32 %v6098, %v6182
        %s6193 = scalar_lea.vmem %s4, 112
        %v6194 = vld [vmem:[%s6193] sm:$0xf]
        %v6195 = vld [vmem:[%s6193 + $0x4] sm:$0xf]
        %v6198 = vunpack.c.l.b16 %v6194
        %v6199 = vunpack.c.l.b16 %v6195
        %v6200 = vpack.c.b16 %v6199, %v6198
        %v6203 = vsel %vm4904, %v4849, 0
        %v6206 = vsel %vm4904, %v4850, 0
        %v6209 = vsel %vm4904, %v4851, 0
        %v6212 = vsel %vm4904, %v4852, 0
        %6214 = vmatprep.subr.bf16.mxu0 0
        %6215 = vmatpush1.bf16.msra.mxu0 0
        %6216 = vmatprep.subr.bf16.mxu0 0
        %6217 = vmatpush1.bf16.msra.mxu0 0
        %6218 = vmatprep.subr.bf16.mxu0 0
        %6219 = vmatpush1.bf16.msra.mxu0 0
        %6220 = vmatprep.subr.bf16.mxu0 0
        %6221 = vmatpush1.bf16.msra.mxu0 0
        %6222 = vmatprep.subr.bf16.mxu0 0
        %6223 = vmatpush1.bf16.msra.mxu0 0
        %6224 = vmatprep.subr.bf16.mxu0 0
        %6225 = vmatpush1.bf16.msra.mxu0 0
        %6226 = vmatprep.subr.bf16.mxu0 0
        %6227 = vmatpush1.bf16.msra.mxu0 0
        %6228 = vmatprep.subr.bf16.mxu0 0
        %6229 = vmatpush1.bf16.msra.mxu0 %v6200
        %6230 = vmatprep.subr.bf16.mxu0 0
        %6231 = vmatpush2.bf16.msra.mxu0 0
        %6232 = vmatprep.subr.bf16.mxu0 0
        %6233 = vmatpush2.bf16.msra.mxu0 0
        %6234 = vmatprep.subr.bf16.mxu0 0
        %6235 = vmatpush2.bf16.msra.mxu0 0
        %6236 = vmatprep.subr.bf16.mxu0 0
        %6237 = vmatpush2.bf16.msra.mxu0 0
        %6238 = vmatprep.subr.bf16.mxu0 0
        %6239 = vmatpush2.bf16.msra.mxu0 0
        %6240 = vmatprep.subr.bf16.mxu0 0
        %6241 = vmatpush2.bf16.msra.mxu0 0
        %6242 = vmatprep.subr.bf16.mxu0 0
        %6243 = vmatpush2.bf16.msra.mxu0 0
        %6244 = vmatprep.subr.bf16.mxu0 0
        %6245 = vmatpush2.bf16.msra.mxu0 0
        %6246 = vmatprep.mubr.bf16.mxu0 0
        %6247 = vmatmul.mubr.bf16.gmra.mxu0 %v6203
        %v6248 = vpop.f32.mrf.mxu0
        %v6249 = vadd.f32 0.0, %v6248
        %v6250 = vpop.f32.mrf.mxu0
        %v6251 = vpop.f32.mrf.mxu0
        %v6252 = vadd.f32 0.0, %v6251
        %v6253 = vpop.f32.mrf.mxu0
        %6254 = vmatprep.mubr.bf16.mxu0 0
        %6255 = vmatmul.mubr.bf16.gmra.mxu0 %v6206
        %v6256 = vpop.f32.mrf.mxu0
        %v6257 = vadd.f32 0.0, %v6256
        %v6258 = vpop.f32.mrf.mxu0
        %v6259 = vpop.f32.mrf.mxu0
        %v6260 = vadd.f32 0.0, %v6259
        %v6261 = vpop.f32.mrf.mxu0
        %6262 = vmatprep.mubr.bf16.mxu0 0
        %6263 = vmatmul.mubr.bf16.gmra.mxu0 %v6209
        %v6264 = vpop.f32.mrf.mxu0
        %v6265 = vadd.f32 0.0, %v6264
        %v6266 = vpop.f32.mrf.mxu0
        %v6267 = vpop.f32.mrf.mxu0
        %v6268 = vadd.f32 0.0, %v6267
        %v6269 = vpop.f32.mrf.mxu0
        %6270 = vmatprep.mubr.bf16.mxu0 0
        %6271 = vmatmul.mubr.bf16.gmra.mxu0 %v6212
        %v6272 = vpop.f32.mrf.mxu0
        %v6273 = vadd.f32 0.0, %v6272
        %v6274 = vpop.f32.mrf.mxu0
        %v6275 = vpop.f32.mrf.mxu0
        %v6276 = vadd.f32 0.0, %v6275
        %v6277 = vpop.f32.mrf.mxu0
        %6278 = vdwg.mxu0
        %v6279 = vadd.f32 %v6185, %v6249
        %v6280 = vadd.f32 %v6186, %v6252
        %v6281 = vadd.f32 %v6187, %v6257
        %v6282 = vadd.f32 %v6188, %v6260
        %v6283 = vadd.f32 %v6189, %v6265
        %v6284 = vadd.f32 %v6190, %v6268
        %v6285 = vadd.f32 %v6191, %v6273
        %v6286 = vadd.f32 %v6192, %v6276
        %s6287 = scalar_lea.vmem %s4, 120
        %v6288 = vld [vmem:[%s6287] sm:$0xf]
        %v6289 = vld [vmem:[%s6287 + $0x4] sm:$0xf]
        %v6292 = vunpack.c.l.b16 %v6288
        %v6293 = vunpack.c.l.b16 %v6289
        %v6294 = vpack.c.b16 %v6293, %v6292
        %v6297 = vsel %vm4904, %v4853, 0
        %v6300 = vsel %vm4904, %v4854, 0
        %v6303 = vsel %vm4904, %v4855, 0
        %v6306 = vsel %vm4904, %v4856, 0
        %6308 = vmatprep.subr.bf16.mxu0 0
        %6309 = vmatpush1.bf16.msra.mxu0 0
        %6310 = vmatprep.subr.bf16.mxu0 0
        %6311 = vmatpush1.bf16.msra.mxu0 0
        %6312 = vmatprep.subr.bf16.mxu0 0
        %6313 = vmatpush1.bf16.msra.mxu0 0
        %6314 = vmatprep.subr.bf16.mxu0 0
        %6315 = vmatpush1.bf16.msra.mxu0 0
        %6316 = vmatprep.subr.bf16.mxu0 0
        %6317 = vmatpush1.bf16.msra.mxu0 0
        %6318 = vmatprep.subr.bf16.mxu0 0
        %6319 = vmatpush1.bf16.msra.mxu0 0
        %6320 = vmatprep.subr.bf16.mxu0 0
        %6321 = vmatpush1.bf16.msra.mxu0 0
        %6322 = vmatprep.subr.bf16.mxu0 0
        %6323 = vmatpush1.bf16.msra.mxu0 %v6294
        %6324 = vmatprep.subr.bf16.mxu0 0
        %6325 = vmatpush2.bf16.msra.mxu0 0
        %6326 = vmatprep.subr.bf16.mxu0 0
        %6327 = vmatpush2.bf16.msra.mxu0 0
        %6328 = vmatprep.subr.bf16.mxu0 0
        %6329 = vmatpush2.bf16.msra.mxu0 0
        %6330 = vmatprep.subr.bf16.mxu0 0
        %6331 = vmatpush2.bf16.msra.mxu0 0
        %6332 = vmatprep.subr.bf16.mxu0 0
        %6333 = vmatpush2.bf16.msra.mxu0 0
        %6334 = vmatprep.subr.bf16.mxu0 0
        %6335 = vmatpush2.bf16.msra.mxu0 0
        %6336 = vmatprep.subr.bf16.mxu0 0
        %6337 = vmatpush2.bf16.msra.mxu0 0
        %6338 = vmatprep.subr.bf16.mxu0 0
        %6339 = vmatpush2.bf16.msra.mxu0 0
        %6340 = vmatprep.mubr.bf16.mxu0 0
        %6341 = vmatmul.mubr.bf16.gmra.mxu0 %v6297
        %v6342 = vpop.f32.mrf.mxu0
        %v6343 = vadd.f32 0.0, %v6342
        %v6344 = vpop.f32.mrf.mxu0
        %v6345 = vpop.f32.mrf.mxu0
        %v6346 = vadd.f32 0.0, %v6345
        %v6347 = vpop.f32.mrf.mxu0
        %6348 = vmatprep.mubr.bf16.mxu0 0
        %6349 = vmatmul.mubr.bf16.gmra.mxu0 %v6300
        %v6350 = vpop.f32.mrf.mxu0
        %v6351 = vadd.f32 0.0, %v6350
        %v6352 = vpop.f32.mrf.mxu0
        %v6353 = vpop.f32.mrf.mxu0
        %v6354 = vadd.f32 0.0, %v6353
        %v6355 = vpop.f32.mrf.mxu0
        %6356 = vmatprep.mubr.bf16.mxu0 0
        %6357 = vmatmul.mubr.bf16.gmra.mxu0 %v6303
        %v6358 = vpop.f32.mrf.mxu0
        %v6359 = vadd.f32 0.0, %v6358
        %v6360 = vpop.f32.mrf.mxu0
        %v6361 = vpop.f32.mrf.mxu0
        %v6362 = vadd.f32 0.0, %v6361
        %v6363 = vpop.f32.mrf.mxu0
        %6364 = vmatprep.mubr.bf16.mxu0 0
        %6365 = vmatmul.mubr.bf16.gmra.mxu0 %v6306
        %v6366 = vpop.f32.mrf.mxu0
        %v6367 = vadd.f32 0.0, %v6366
        %v6368 = vpop.f32.mrf.mxu0
        %v6369 = vpop.f32.mrf.mxu0
        %v6370 = vadd.f32 0.0, %v6369
        %v6371 = vpop.f32.mrf.mxu0
        %6372 = vdwg.mxu0
        %v6373 = vadd.f32 %v6279, %v6343
        %v6374 = vadd.f32 %v6280, %v6346
        %v6375 = vadd.f32 %v6281, %v6351
        %v6376 = vadd.f32 %v6282, %v6354
        %v6377 = vadd.f32 %v6283, %v6359
        %v6378 = vadd.f32 %v6284, %v6362
        %v6379 = vadd.f32 %v6285, %v6367
        %v6380 = vadd.f32 %v6286, %v6370
        %s6381 = scalar_lea.vmem %s4, 128
        %v6382 = vld [vmem:[%s6381] sm:$0xf]
        %v6383 = vld [vmem:[%s6381 + $0x4] sm:$0xf]
        %v6386 = vunpack.c.l.b16 %v6382
        %v6387 = vunpack.c.l.b16 %v6383
        %v6388 = vpack.c.b16 %v6387, %v6386
        %v6391 = vsel %vm4904, %v4857, 0
        %v6394 = vsel %vm4904, %v4858, 0
        %v6397 = vsel %vm4904, %v4859, 0
        %v6400 = vsel %vm4904, %v4860, 0
        %6402 = vmatprep.subr.bf16.mxu0 0
        %6403 = vmatpush1.bf16.msra.mxu0 0
        %6404 = vmatprep.subr.bf16.mxu0 0
        %6405 = vmatpush1.bf16.msra.mxu0 0
        %6406 = vmatprep.subr.bf16.mxu0 0
        %6407 = vmatpush1.bf16.msra.mxu0 0
        %6408 = vmatprep.subr.bf16.mxu0 0
        %6409 = vmatpush1.bf16.msra.mxu0 0
        %6410 = vmatprep.subr.bf16.mxu0 0
        %6411 = vmatpush1.bf16.msra.mxu0 0
        %6412 = vmatprep.subr.bf16.mxu0 0
        %6413 = vmatpush1.bf16.msra.mxu0 0
        %6414 = vmatprep.subr.bf16.mxu0 0
        %6415 = vmatpush1.bf16.msra.mxu0 0
        %6416 = vmatprep.subr.bf16.mxu0 0
        %6417 = vmatpush1.bf16.msra.mxu0 %v6388
        %6418 = vmatprep.subr.bf16.mxu0 0
        %6419 = vmatpush2.bf16.msra.mxu0 0
        %6420 = vmatprep.subr.bf16.mxu0 0
        %6421 = vmatpush2.bf16.msra.mxu0 0
        %6422 = vmatprep.subr.bf16.mxu0 0
        %6423 = vmatpush2.bf16.msra.mxu0 0
        %6424 = vmatprep.subr.bf16.mxu0 0
        %6425 = vmatpush2.bf16.msra.mxu0 0
        %6426 = vmatprep.subr.bf16.mxu0 0
        %6427 = vmatpush2.bf16.msra.mxu0 0
        %6428 = vmatprep.subr.bf16.mxu0 0
        %6429 = vmatpush2.bf16.msra.mxu0 0
        %6430 = vmatprep.subr.bf16.mxu0 0
        %6431 = vmatpush2.bf16.msra.mxu0 0
        %6432 = vmatprep.subr.bf16.mxu0 0
        %6433 = vmatpush2.bf16.msra.mxu0 0
        %6434 = vmatprep.mubr.bf16.mxu0 0
        %6435 = vmatmul.mubr.bf16.gmra.mxu0 %v6391
        %v6436 = vpop.f32.mrf.mxu0
        %v6437 = vadd.f32 0.0, %v6436
        %v6438 = vpop.f32.mrf.mxu0
        %v6439 = vpop.f32.mrf.mxu0
        %v6440 = vadd.f32 0.0, %v6439
        %v6441 = vpop.f32.mrf.mxu0
        %6442 = vmatprep.mubr.bf16.mxu0 0
        %6443 = vmatmul.mubr.bf16.gmra.mxu0 %v6394
        %v6444 = vpop.f32.mrf.mxu0
        %v6445 = vadd.f32 0.0, %v6444
        %v6446 = vpop.f32.mrf.mxu0
        %v6447 = vpop.f32.mrf.mxu0
        %v6448 = vadd.f32 0.0, %v6447
        %v6449 = vpop.f32.mrf.mxu0
        %6450 = vmatprep.mubr.bf16.mxu0 0
        %6451 = vmatmul.mubr.bf16.gmra.mxu0 %v6397
        %v6452 = vpop.f32.mrf.mxu0
        %v6453 = vadd.f32 0.0, %v6452
        %v6454 = vpop.f32.mrf.mxu0
        %v6455 = vpop.f32.mrf.mxu0
        %v6456 = vadd.f32 0.0, %v6455
        %v6457 = vpop.f32.mrf.mxu0
        %6458 = vmatprep.mubr.bf16.mxu0 0
        %6459 = vmatmul.mubr.bf16.gmra.mxu0 %v6400
        %v6460 = vpop.f32.mrf.mxu0
        %v6461 = vadd.f32 0.0, %v6460
        %v6462 = vpop.f32.mrf.mxu0
        %v6463 = vpop.f32.mrf.mxu0
        %v6464 = vadd.f32 0.0, %v6463
        %v6465 = vpop.f32.mrf.mxu0
        %6466 = vdwg.mxu0
        %v6467 = vadd.f32 %v6373, %v6437
        %v6468 = vadd.f32 %v6374, %v6440
        %v6469 = vadd.f32 %v6375, %v6445
        %v6470 = vadd.f32 %v6376, %v6448
        %v6471 = vadd.f32 %v6377, %v6453
        %v6472 = vadd.f32 %v6378, %v6456
        %v6473 = vadd.f32 %v6379, %v6461
        %v6474 = vadd.f32 %v6380, %v6464
        %s6475 = scalar_lea.vmem %s4, 136
        %v6476 = vld [vmem:[%s6475] sm:$0xf]
        %v6477 = vld [vmem:[%s6475 + $0x4] sm:$0xf]
        %v6480 = vunpack.c.l.b16 %v6476
        %v6481 = vunpack.c.l.b16 %v6477
        %v6482 = vpack.c.b16 %v6481, %v6480
        %v6485 = vsel %vm4904, %v4861, 0
        %v6488 = vsel %vm4904, %v4862, 0
        %v6491 = vsel %vm4904, %v4863, 0
        %v6494 = vsel %vm4904, %v4864, 0
        %6496 = vmatprep.subr.bf16.mxu0 0
        %6497 = vmatpush1.bf16.msra.mxu0 0
        %6498 = vmatprep.subr.bf16.mxu0 0
        %6499 = vmatpush1.bf16.msra.mxu0 0
        %6500 = vmatprep.subr.bf16.mxu0 0
        %6501 = vmatpush1.bf16.msra.mxu0 0
        %6502 = vmatprep.subr.bf16.mxu0 0
        %6503 = vmatpush1.bf16.msra.mxu0 0
        %6504 = vmatprep.subr.bf16.mxu0 0
        %6505 = vmatpush1.bf16.msra.mxu0 0
        %6506 = vmatprep.subr.bf16.mxu0 0
        %6507 = vmatpush1.bf16.msra.mxu0 0
        %6508 = vmatprep.subr.bf16.mxu0 0
        %6509 = vmatpush1.bf16.msra.mxu0 0
        %6510 = vmatprep.subr.bf16.mxu0 0
        %6511 = vmatpush1.bf16.msra.mxu0 %v6482
        %6512 = vmatprep.subr.bf16.mxu0 0
        %6513 = vmatpush2.bf16.msra.mxu0 0
        %6514 = vmatprep.subr.bf16.mxu0 0
        %6515 = vmatpush2.bf16.msra.mxu0 0
        %6516 = vmatprep.subr.bf16.mxu0 0
        %6517 = vmatpush2.bf16.msra.mxu0 0
        %6518 = vmatprep.subr.bf16.mxu0 0
        %6519 = vmatpush2.bf16.msra.mxu0 0
        %6520 = vmatprep.subr.bf16.mxu0 0
        %6521 = vmatpush2.bf16.msra.mxu0 0
        %6522 = vmatprep.subr.bf16.mxu0 0
        %6523 = vmatpush2.bf16.msra.mxu0 0
        %6524 = vmatprep.subr.bf16.mxu0 0
        %6525 = vmatpush2.bf16.msra.mxu0 0
        %6526 = vmatprep.subr.bf16.mxu0 0
        %6527 = vmatpush2.bf16.msra.mxu0 0
        %6528 = vmatprep.mubr.bf16.mxu0 0
        %6529 = vmatmul.mubr.bf16.gmra.mxu0 %v6485
        %v6530 = vpop.f32.mrf.mxu0
        %v6531 = vadd.f32 0.0, %v6530
        %v6532 = vpop.f32.mrf.mxu0
        %v6533 = vpop.f32.mrf.mxu0
        %v6534 = vadd.f32 0.0, %v6533
        %v6535 = vpop.f32.mrf.mxu0
        %6536 = vmatprep.mubr.bf16.mxu0 0
        %6537 = vmatmul.mubr.bf16.gmra.mxu0 %v6488
        %v6538 = vpop.f32.mrf.mxu0
        %v6539 = vadd.f32 0.0, %v6538
        %v6540 = vpop.f32.mrf.mxu0
        %v6541 = vpop.f32.mrf.mxu0
        %v6542 = vadd.f32 0.0, %v6541
        %v6543 = vpop.f32.mrf.mxu0
        %6544 = vmatprep.mubr.bf16.mxu0 0
        %6545 = vmatmul.mubr.bf16.gmra.mxu0 %v6491
        %v6546 = vpop.f32.mrf.mxu0
        %v6547 = vadd.f32 0.0, %v6546
        %v6548 = vpop.f32.mrf.mxu0
        %v6549 = vpop.f32.mrf.mxu0
        %v6550 = vadd.f32 0.0, %v6549
        %v6551 = vpop.f32.mrf.mxu0
        %6552 = vmatprep.mubr.bf16.mxu0 0
        %6553 = vmatmul.mubr.bf16.gmra.mxu0 %v6494
        %v6554 = vpop.f32.mrf.mxu0
        %v6555 = vadd.f32 0.0, %v6554
        %v6556 = vpop.f32.mrf.mxu0
        %v6557 = vpop.f32.mrf.mxu0
        %v6558 = vadd.f32 0.0, %v6557
        %v6559 = vpop.f32.mrf.mxu0
        %6560 = vdwg.mxu0
        %v6561 = vadd.f32 %v6467, %v6531
        %v6562 = vadd.f32 %v6468, %v6534
        %v6563 = vadd.f32 %v6469, %v6539
        %v6564 = vadd.f32 %v6470, %v6542
        %v6565 = vadd.f32 %v6471, %v6547
        %v6566 = vadd.f32 %v6472, %v6550
        %v6567 = vadd.f32 %v6473, %v6555
        %v6568 = vadd.f32 %v6474, %v6558
        %s6569 = scalar_lea.vmem %s4, 144
        %v6570 = vld [vmem:[%s6569] sm:$0xf]
        %v6571 = vld [vmem:[%s6569 + $0x4] sm:$0xf]
        %v6574 = vunpack.c.l.b16 %v6570
        %v6575 = vunpack.c.l.b16 %v6571
        %v6576 = vpack.c.b16 %v6575, %v6574
        %v6579 = vsel %vm4904, %v4865, 0
        %v6582 = vsel %vm4904, %v4866, 0
        %v6585 = vsel %vm4904, %v4867, 0
        %v6588 = vsel %vm4904, %v4868, 0
        %6590 = vmatprep.subr.bf16.mxu0 0
        %6591 = vmatpush1.bf16.msra.mxu0 0
        %6592 = vmatprep.subr.bf16.mxu0 0
        %6593 = vmatpush1.bf16.msra.mxu0 0
        %6594 = vmatprep.subr.bf16.mxu0 0
        %6595 = vmatpush1.bf16.msra.mxu0 0
        %6596 = vmatprep.subr.bf16.mxu0 0
        %6597 = vmatpush1.bf16.msra.mxu0 0
        %6598 = vmatprep.subr.bf16.mxu0 0
        %6599 = vmatpush1.bf16.msra.mxu0 0
        %6600 = vmatprep.subr.bf16.mxu0 0
        %6601 = vmatpush1.bf16.msra.mxu0 0
        %6602 = vmatprep.subr.bf16.mxu0 0
        %6603 = vmatpush1.bf16.msra.mxu0 0
        %6604 = vmatprep.subr.bf16.mxu0 0
        %6605 = vmatpush1.bf16.msra.mxu0 %v6576
        %6606 = vmatprep.subr.bf16.mxu0 0
        %6607 = vmatpush2.bf16.msra.mxu0 0
        %6608 = vmatprep.subr.bf16.mxu0 0
        %6609 = vmatpush2.bf16.msra.mxu0 0
        %6610 = vmatprep.subr.bf16.mxu0 0
        %6611 = vmatpush2.bf16.msra.mxu0 0
        %6612 = vmatprep.subr.bf16.mxu0 0
        %6613 = vmatpush2.bf16.msra.mxu0 0
        %6614 = vmatprep.subr.bf16.mxu0 0
        %6615 = vmatpush2.bf16.msra.mxu0 0
        %6616 = vmatprep.subr.bf16.mxu0 0
        %6617 = vmatpush2.bf16.msra.mxu0 0
        %6618 = vmatprep.subr.bf16.mxu0 0
        %6619 = vmatpush2.bf16.msra.mxu0 0
        %6620 = vmatprep.subr.bf16.mxu0 0
        %6621 = vmatpush2.bf16.msra.mxu0 0
        %6622 = vmatprep.mubr.bf16.mxu0 0
        %6623 = vmatmul.mubr.bf16.gmra.mxu0 %v6579
        %v6624 = vpop.f32.mrf.mxu0
        %v6625 = vadd.f32 0.0, %v6624
        %v6626 = vpop.f32.mrf.mxu0
        %v6627 = vpop.f32.mrf.mxu0
        %v6628 = vadd.f32 0.0, %v6627
        %v6629 = vpop.f32.mrf.mxu0
        %6630 = vmatprep.mubr.bf16.mxu0 0
        %6631 = vmatmul.mubr.bf16.gmra.mxu0 %v6582
        %v6632 = vpop.f32.mrf.mxu0
        %v6633 = vadd.f32 0.0, %v6632
        %v6634 = vpop.f32.mrf.mxu0
        %v6635 = vpop.f32.mrf.mxu0
        %v6636 = vadd.f32 0.0, %v6635
        %v6637 = vpop.f32.mrf.mxu0
        %6638 = vmatprep.mubr.bf16.mxu0 0
        %6639 = vmatmul.mubr.bf16.gmra.mxu0 %v6585
        %v6640 = vpop.f32.mrf.mxu0
        %v6641 = vadd.f32 0.0, %v6640
        %v6642 = vpop.f32.mrf.mxu0
        %v6643 = vpop.f32.mrf.mxu0
        %v6644 = vadd.f32 0.0, %v6643
        %v6645 = vpop.f32.mrf.mxu0
        %6646 = vmatprep.mubr.bf16.mxu0 0
        %6647 = vmatmul.mubr.bf16.gmra.mxu0 %v6588
        %v6648 = vpop.f32.mrf.mxu0
        %v6649 = vadd.f32 0.0, %v6648
        %v6650 = vpop.f32.mrf.mxu0
        %v6651 = vpop.f32.mrf.mxu0
        %v6652 = vadd.f32 0.0, %v6651
        %v6653 = vpop.f32.mrf.mxu0
        %6654 = vdwg.mxu0
        %v6655 = vadd.f32 %v6561, %v6625
        %v6656 = vadd.f32 %v6562, %v6628
        %v6657 = vadd.f32 %v6563, %v6633
        %v6658 = vadd.f32 %v6564, %v6636
        %v6659 = vadd.f32 %v6565, %v6641
        %v6660 = vadd.f32 %v6566, %v6644
        %v6661 = vadd.f32 %v6567, %v6649
        %v6662 = vadd.f32 %v6568, %v6652
        %s6663 = scalar_lea.vmem %s4, 152
        %v6664 = vld [vmem:[%s6663] sm:$0xf]
        %v6665 = vld [vmem:[%s6663 + $0x4] sm:$0xf]
        %v6668 = vunpack.c.l.b16 %v6664
        %v6669 = vunpack.c.l.b16 %v6665
        %v6670 = vpack.c.b16 %v6669, %v6668
        %v6673 = vsel %vm4904, %v4869, 0
        %v6676 = vsel %vm4904, %v4870, 0
        %v6679 = vsel %vm4904, %v4871, 0
        %v6682 = vsel %vm4904, %v4872, 0
        %6684 = vmatprep.subr.bf16.mxu0 0
        %6685 = vmatpush1.bf16.msra.mxu0 0
        %6686 = vmatprep.subr.bf16.mxu0 0
        %6687 = vmatpush1.bf16.msra.mxu0 0
        %6688 = vmatprep.subr.bf16.mxu0 0
        %6689 = vmatpush1.bf16.msra.mxu0 0
        %6690 = vmatprep.subr.bf16.mxu0 0
        %6691 = vmatpush1.bf16.msra.mxu0 0
        %6692 = vmatprep.subr.bf16.mxu0 0
        %6693 = vmatpush1.bf16.msra.mxu0 0
        %6694 = vmatprep.subr.bf16.mxu0 0
        %6695 = vmatpush1.bf16.msra.mxu0 0
        %6696 = vmatprep.subr.bf16.mxu0 0
        %6697 = vmatpush1.bf16.msra.mxu0 0
        %6698 = vmatprep.subr.bf16.mxu0 0
        %6699 = vmatpush1.bf16.msra.mxu0 %v6670
        %6700 = vmatprep.subr.bf16.mxu0 0
        %6701 = vmatpush2.bf16.msra.mxu0 0
        %6702 = vmatprep.subr.bf16.mxu0 0
        %6703 = vmatpush2.bf16.msra.mxu0 0
        %6704 = vmatprep.subr.bf16.mxu0 0
        %6705 = vmatpush2.bf16.msra.mxu0 0
        %6706 = vmatprep.subr.bf16.mxu0 0
        %6707 = vmatpush2.bf16.msra.mxu0 0
        %6708 = vmatprep.subr.bf16.mxu0 0
        %6709 = vmatpush2.bf16.msra.mxu0 0
        %6710 = vmatprep.subr.bf16.mxu0 0
        %6711 = vmatpush2.bf16.msra.mxu0 0
        %6712 = vmatprep.subr.bf16.mxu0 0
        %6713 = vmatpush2.bf16.msra.mxu0 0
        %6714 = vmatprep.subr.bf16.mxu0 0
        %6715 = vmatpush2.bf16.msra.mxu0 0
        %6716 = vmatprep.mubr.bf16.mxu0 0
        %6717 = vmatmul.mubr.bf16.gmra.mxu0 %v6673
        %v6718 = vpop.f32.mrf.mxu0
        %v6719 = vadd.f32 0.0, %v6718
        %v6720 = vpop.f32.mrf.mxu0
        %v6721 = vpop.f32.mrf.mxu0
        %v6722 = vadd.f32 0.0, %v6721
        %v6723 = vpop.f32.mrf.mxu0
        %6724 = vmatprep.mubr.bf16.mxu0 0
        %6725 = vmatmul.mubr.bf16.gmra.mxu0 %v6676
        %v6726 = vpop.f32.mrf.mxu0
        %v6727 = vadd.f32 0.0, %v6726
        %v6728 = vpop.f32.mrf.mxu0
        %v6729 = vpop.f32.mrf.mxu0
        %v6730 = vadd.f32 0.0, %v6729
        %v6731 = vpop.f32.mrf.mxu0
        %6732 = vmatprep.mubr.bf16.mxu0 0
        %6733 = vmatmul.mubr.bf16.gmra.mxu0 %v6679
        %v6734 = vpop.f32.mrf.mxu0
        %v6735 = vadd.f32 0.0, %v6734
        %v6736 = vpop.f32.mrf.mxu0
        %v6737 = vpop.f32.mrf.mxu0
        %v6738 = vadd.f32 0.0, %v6737
        %v6739 = vpop.f32.mrf.mxu0
        %6740 = vmatprep.mubr.bf16.mxu0 0
        %6741 = vmatmul.mubr.bf16.gmra.mxu0 %v6682
        %v6742 = vpop.f32.mrf.mxu0
        %v6743 = vadd.f32 0.0, %v6742
        %v6744 = vpop.f32.mrf.mxu0
        %v6745 = vpop.f32.mrf.mxu0
        %v6746 = vadd.f32 0.0, %v6745
        %v6747 = vpop.f32.mrf.mxu0
        %6748 = vdwg.mxu0
        %v6749 = vadd.f32 %v6655, %v6719
        %v6750 = vadd.f32 %v6656, %v6722
        %v6751 = vadd.f32 %v6657, %v6727
        %v6752 = vadd.f32 %v6658, %v6730
        %v6753 = vadd.f32 %v6659, %v6735
        %v6754 = vadd.f32 %v6660, %v6738
        %v6755 = vadd.f32 %v6661, %v6743
        %v6756 = vadd.f32 %v6662, %v6746
        %s6757 = scalar_lea.vmem %s4, 160
        %v6758 = vld [vmem:[%s6757] sm:$0xf]
        %v6759 = vld [vmem:[%s6757 + $0x4] sm:$0xf]
        %v6762 = vunpack.c.l.b16 %v6758
        %v6763 = vunpack.c.l.b16 %v6759
        %v6764 = vpack.c.b16 %v6763, %v6762
        %v6767 = vsel %vm4904, %v4873, 0
        %v6770 = vsel %vm4904, %v4874, 0
        %v6773 = vsel %vm4904, %v4875, 0
        %v6776 = vsel %vm4904, %v4876, 0
        %6778 = vmatprep.subr.bf16.mxu0 0
        %6779 = vmatpush1.bf16.msra.mxu0 0
        %6780 = vmatprep.subr.bf16.mxu0 0
        %6781 = vmatpush1.bf16.msra.mxu0 0
        %6782 = vmatprep.subr.bf16.mxu0 0
        %6783 = vmatpush1.bf16.msra.mxu0 0
        %6784 = vmatprep.subr.bf16.mxu0 0
        %6785 = vmatpush1.bf16.msra.mxu0 0
        %6786 = vmatprep.subr.bf16.mxu0 0
        %6787 = vmatpush1.bf16.msra.mxu0 0
        %6788 = vmatprep.subr.bf16.mxu0 0
        %6789 = vmatpush1.bf16.msra.mxu0 0
        %6790 = vmatprep.subr.bf16.mxu0 0
        %6791 = vmatpush1.bf16.msra.mxu0 0
        %6792 = vmatprep.subr.bf16.mxu0 0
        %6793 = vmatpush1.bf16.msra.mxu0 %v6764
        %6794 = vmatprep.subr.bf16.mxu0 0
        %6795 = vmatpush2.bf16.msra.mxu0 0
        %6796 = vmatprep.subr.bf16.mxu0 0
        %6797 = vmatpush2.bf16.msra.mxu0 0
        %6798 = vmatprep.subr.bf16.mxu0 0
        %6799 = vmatpush2.bf16.msra.mxu0 0
        %6800 = vmatprep.subr.bf16.mxu0 0
        %6801 = vmatpush2.bf16.msra.mxu0 0
        %6802 = vmatprep.subr.bf16.mxu0 0
        %6803 = vmatpush2.bf16.msra.mxu0 0
        %6804 = vmatprep.subr.bf16.mxu0 0
        %6805 = vmatpush2.bf16.msra.mxu0 0
        %6806 = vmatprep.subr.bf16.mxu0 0
        %6807 = vmatpush2.bf16.msra.mxu0 0
        %6808 = vmatprep.subr.bf16.mxu0 0
        %6809 = vmatpush2.bf16.msra.mxu0 0
        %6810 = vmatprep.mubr.bf16.mxu0 0
        %6811 = vmatmul.mubr.bf16.gmra.mxu0 %v6767
        %v6812 = vpop.f32.mrf.mxu0
        %v6813 = vadd.f32 0.0, %v6812
        %v6814 = vpop.f32.mrf.mxu0
        %v6815 = vpop.f32.mrf.mxu0
        %v6816 = vadd.f32 0.0, %v6815
        %v6817 = vpop.f32.mrf.mxu0
        %6818 = vmatprep.mubr.bf16.mxu0 0
        %6819 = vmatmul.mubr.bf16.gmra.mxu0 %v6770
        %v6820 = vpop.f32.mrf.mxu0
        %v6821 = vadd.f32 0.0, %v6820
        %v6822 = vpop.f32.mrf.mxu0
        %v6823 = vpop.f32.mrf.mxu0
        %v6824 = vadd.f32 0.0, %v6823
        %v6825 = vpop.f32.mrf.mxu0
        %6826 = vmatprep.mubr.bf16.mxu0 0
        %6827 = vmatmul.mubr.bf16.gmra.mxu0 %v6773
        %v6828 = vpop.f32.mrf.mxu0
        %v6829 = vadd.f32 0.0, %v6828
        %v6830 = vpop.f32.mrf.mxu0
        %v6831 = vpop.f32.mrf.mxu0
        %v6832 = vadd.f32 0.0, %v6831
        %v6833 = vpop.f32.mrf.mxu0
        %6834 = vmatprep.mubr.bf16.mxu0 0
        %6835 = vmatmul.mubr.bf16.gmra.mxu0 %v6776
        %v6836 = vpop.f32.mrf.mxu0
        %v6837 = vadd.f32 0.0, %v6836
        %v6838 = vpop.f32.mrf.mxu0
        %v6839 = vpop.f32.mrf.mxu0
        %v6840 = vadd.f32 0.0, %v6839
        %v6841 = vpop.f32.mrf.mxu0
        %6842 = vdwg.mxu0
        %v6843 = vadd.f32 %v6749, %v6813
        %v6844 = vadd.f32 %v6750, %v6816
        %v6845 = vadd.f32 %v6751, %v6821
        %v6846 = vadd.f32 %v6752, %v6824
        %v6847 = vadd.f32 %v6753, %v6829
        %v6848 = vadd.f32 %v6754, %v6832
        %v6849 = vadd.f32 %v6755, %v6837
        %v6850 = vadd.f32 %v6756, %v6840
        %s6851 = scalar_lea.vmem %s4, 168
        %v6852 = vld [vmem:[%s6851] sm:$0xf]
        %v6853 = vld [vmem:[%s6851 + $0x4] sm:$0xf]
        %v6856 = vunpack.c.l.b16 %v6852
        %v6857 = vunpack.c.l.b16 %v6853
        %v6858 = vpack.c.b16 %v6857, %v6856
        %v6861 = vsel %vm4904, %v4877, 0
        %v6864 = vsel %vm4904, %v4878, 0
        %v6867 = vsel %vm4904, %v4879, 0
        %v6870 = vsel %vm4904, %v4880, 0
        %6872 = vmatprep.subr.bf16.mxu0 0
        %6873 = vmatpush1.bf16.msra.mxu0 0
        %6874 = vmatprep.subr.bf16.mxu0 0
        %6875 = vmatpush1.bf16.msra.mxu0 0
        %6876 = vmatprep.subr.bf16.mxu0 0
        %6877 = vmatpush1.bf16.msra.mxu0 0
        %6878 = vmatprep.subr.bf16.mxu0 0
        %6879 = vmatpush1.bf16.msra.mxu0 0
        %6880 = vmatprep.subr.bf16.mxu0 0
        %6881 = vmatpush1.bf16.msra.mxu0 0
        %6882 = vmatprep.subr.bf16.mxu0 0
        %6883 = vmatpush1.bf16.msra.mxu0 0
        %6884 = vmatprep.subr.bf16.mxu0 0
        %6885 = vmatpush1.bf16.msra.mxu0 0
        %6886 = vmatprep.subr.bf16.mxu0 0
        %6887 = vmatpush1.bf16.msra.mxu0 %v6858
        %6888 = vmatprep.subr.bf16.mxu0 0
        %6889 = vmatpush2.bf16.msra.mxu0 0
        %6890 = vmatprep.subr.bf16.mxu0 0
        %6891 = vmatpush2.bf16.msra.mxu0 0
        %6892 = vmatprep.subr.bf16.mxu0 0
        %6893 = vmatpush2.bf16.msra.mxu0 0
        %6894 = vmatprep.subr.bf16.mxu0 0
        %6895 = vmatpush2.bf16.msra.mxu0 0
        %6896 = vmatprep.subr.bf16.mxu0 0
        %6897 = vmatpush2.bf16.msra.mxu0 0
        %6898 = vmatprep.subr.bf16.mxu0 0
        %6899 = vmatpush2.bf16.msra.mxu0 0
        %6900 = vmatprep.subr.bf16.mxu0 0
        %6901 = vmatpush2.bf16.msra.mxu0 0
        %6902 = vmatprep.subr.bf16.mxu0 0
        %6903 = vmatpush2.bf16.msra.mxu0 0
        %6904 = vmatprep.mubr.bf16.mxu0 0
        %6905 = vmatmul.mubr.bf16.gmra.mxu0 %v6861
        %v6906 = vpop.f32.mrf.mxu0
        %v6907 = vadd.f32 0.0, %v6906
        %v6908 = vpop.f32.mrf.mxu0
        %v6909 = vpop.f32.mrf.mxu0
        %v6910 = vadd.f32 0.0, %v6909
        %v6911 = vpop.f32.mrf.mxu0
        %6912 = vmatprep.mubr.bf16.mxu0 0
        %6913 = vmatmul.mubr.bf16.gmra.mxu0 %v6864
        %v6914 = vpop.f32.mrf.mxu0
        %v6915 = vadd.f32 0.0, %v6914
        %v6916 = vpop.f32.mrf.mxu0
        %v6917 = vpop.f32.mrf.mxu0
        %v6918 = vadd.f32 0.0, %v6917
        %v6919 = vpop.f32.mrf.mxu0
        %6920 = vmatprep.mubr.bf16.mxu0 0
        %6921 = vmatmul.mubr.bf16.gmra.mxu0 %v6867
        %v6922 = vpop.f32.mrf.mxu0
        %v6923 = vadd.f32 0.0, %v6922
        %v6924 = vpop.f32.mrf.mxu0
        %v6925 = vpop.f32.mrf.mxu0
        %v6926 = vadd.f32 0.0, %v6925
        %v6927 = vpop.f32.mrf.mxu0
        %6928 = vmatprep.mubr.bf16.mxu0 0
        %6929 = vmatmul.mubr.bf16.gmra.mxu0 %v6870
        %v6930 = vpop.f32.mrf.mxu0
        %v6931 = vadd.f32 0.0, %v6930
        %v6932 = vpop.f32.mrf.mxu0
        %v6933 = vpop.f32.mrf.mxu0
        %v6934 = vadd.f32 0.0, %v6933
        %v6935 = vpop.f32.mrf.mxu0
        %6936 = vdwg.mxu0
        %v6937 = vadd.f32 %v6843, %v6907
        %v6938 = vadd.f32 %v6844, %v6910
        %v6939 = vadd.f32 %v6845, %v6915
        %v6940 = vadd.f32 %v6846, %v6918
        %v6941 = vadd.f32 %v6847, %v6923
        %v6942 = vadd.f32 %v6848, %v6926
        %v6943 = vadd.f32 %v6849, %v6931
        %v6944 = vadd.f32 %v6850, %v6934
        %s6945 = scalar_lea.vmem %s4, 176
        %v6946 = vld [vmem:[%s6945] sm:$0xf]
        %v6947 = vld [vmem:[%s6945 + $0x4] sm:$0xf]
        %v6950 = vunpack.c.l.b16 %v6946
        %v6951 = vunpack.c.l.b16 %v6947
        %v6952 = vpack.c.b16 %v6951, %v6950
        %v6955 = vsel %vm4904, %v4881, 0
        %v6958 = vsel %vm4904, %v4882, 0
        %v6961 = vsel %vm4904, %v4883, 0
        %v6964 = vsel %vm4904, %v4884, 0
        %6966 = vmatprep.subr.bf16.mxu0 0
        %6967 = vmatpush1.bf16.msra.mxu0 0
        %6968 = vmatprep.subr.bf16.mxu0 0
        %6969 = vmatpush1.bf16.msra.mxu0 0
        %6970 = vmatprep.subr.bf16.mxu0 0
        %6971 = vmatpush1.bf16.msra.mxu0 0
        %6972 = vmatprep.subr.bf16.mxu0 0
        %6973 = vmatpush1.bf16.msra.mxu0 0
        %6974 = vmatprep.subr.bf16.mxu0 0
        %6975 = vmatpush1.bf16.msra.mxu0 0
        %6976 = vmatprep.subr.bf16.mxu0 0
        %6977 = vmatpush1.bf16.msra.mxu0 0
        %6978 = vmatprep.subr.bf16.mxu0 0
        %6979 = vmatpush1.bf16.msra.mxu0 0
        %6980 = vmatprep.subr.bf16.mxu0 0
        %6981 = vmatpush1.bf16.msra.mxu0 %v6952
        %6982 = vmatprep.subr.bf16.mxu0 0
        %6983 = vmatpush2.bf16.msra.mxu0 0
        %6984 = vmatprep.subr.bf16.mxu0 0
        %6985 = vmatpush2.bf16.msra.mxu0 0
        %6986 = vmatprep.subr.bf16.mxu0 0
        %6987 = vmatpush2.bf16.msra.mxu0 0
        %6988 = vmatprep.subr.bf16.mxu0 0
        %6989 = vmatpush2.bf16.msra.mxu0 0
        %6990 = vmatprep.subr.bf16.mxu0 0
        %6991 = vmatpush2.bf16.msra.mxu0 0
        %6992 = vmatprep.subr.bf16.mxu0 0
        %6993 = vmatpush2.bf16.msra.mxu0 0
        %6994 = vmatprep.subr.bf16.mxu0 0
        %6995 = vmatpush2.bf16.msra.mxu0 0
        %6996 = vmatprep.subr.bf16.mxu0 0
        %6997 = vmatpush2.bf16.msra.mxu0 0
        %6998 = vmatprep.mubr.bf16.mxu0 0
        %6999 = vmatmul.mubr.bf16.gmra.mxu0 %v6955
        %v7000 = vpop.f32.mrf.mxu0
        %v7001 = vadd.f32 0.0, %v7000
        %v7002 = vpop.f32.mrf.mxu0
        %v7003 = vpop.f32.mrf.mxu0
        %v7004 = vadd.f32 0.0, %v7003
        %v7005 = vpop.f32.mrf.mxu0
        %7006 = vmatprep.mubr.bf16.mxu0 0
        %7007 = vmatmul.mubr.bf16.gmra.mxu0 %v6958
        %v7008 = vpop.f32.mrf.mxu0
        %v7009 = vadd.f32 0.0, %v7008
        %v7010 = vpop.f32.mrf.mxu0
        %v7011 = vpop.f32.mrf.mxu0
        %v7012 = vadd.f32 0.0, %v7011
        %v7013 = vpop.f32.mrf.mxu0
        %7014 = vmatprep.mubr.bf16.mxu0 0
        %7015 = vmatmul.mubr.bf16.gmra.mxu0 %v6961
        %v7016 = vpop.f32.mrf.mxu0
        %v7017 = vadd.f32 0.0, %v7016
        %v7018 = vpop.f32.mrf.mxu0
        %v7019 = vpop.f32.mrf.mxu0
        %v7020 = vadd.f32 0.0, %v7019
        %v7021 = vpop.f32.mrf.mxu0
        %7022 = vmatprep.mubr.bf16.mxu0 0
        %7023 = vmatmul.mubr.bf16.gmra.mxu0 %v6964
        %v7024 = vpop.f32.mrf.mxu0
        %v7025 = vadd.f32 0.0, %v7024
        %v7026 = vpop.f32.mrf.mxu0
        %v7027 = vpop.f32.mrf.mxu0
        %v7028 = vadd.f32 0.0, %v7027
        %v7029 = vpop.f32.mrf.mxu0
        %7030 = vdwg.mxu0
        %v7031 = vadd.f32 %v6937, %v7001
        %v7032 = vadd.f32 %v6938, %v7004
        %v7033 = vadd.f32 %v6939, %v7009
        %v7034 = vadd.f32 %v6940, %v7012
        %v7035 = vadd.f32 %v6941, %v7017
        %v7036 = vadd.f32 %v6942, %v7020
        %v7037 = vadd.f32 %v6943, %v7025
        %v7038 = vadd.f32 %v6944, %v7028
        %s7039 = scalar_lea.vmem %s4, 184
        %v7040 = vld [vmem:[%s7039] sm:$0xf]
        %v7041 = vld [vmem:[%s7039 + $0x4] sm:$0xf]
        %v7044 = vunpack.c.l.b16 %v7040
        %v7045 = vunpack.c.l.b16 %v7041
        %v7046 = vpack.c.b16 %v7045, %v7044
        %v7049 = vsel %vm4904, %v4885, 0
        %v7052 = vsel %vm4904, %v4886, 0
        %v7055 = vsel %vm4904, %v4887, 0
        %v7058 = vsel %vm4904, %v4888, 0
        %7060 = vmatprep.subr.bf16.mxu0 0
        %7061 = vmatpush1.bf16.msra.mxu0 0
        %7062 = vmatprep.subr.bf16.mxu0 0
        %7063 = vmatpush1.bf16.msra.mxu0 0
        %7064 = vmatprep.subr.bf16.mxu0 0
        %7065 = vmatpush1.bf16.msra.mxu0 0
        %7066 = vmatprep.subr.bf16.mxu0 0
        %7067 = vmatpush1.bf16.msra.mxu0 0
        %7068 = vmatprep.subr.bf16.mxu0 0
        %7069 = vmatpush1.bf16.msra.mxu0 0
        %7070 = vmatprep.subr.bf16.mxu0 0
        %7071 = vmatpush1.bf16.msra.mxu0 0
        %7072 = vmatprep.subr.bf16.mxu0 0
        %7073 = vmatpush1.bf16.msra.mxu0 0
        %7074 = vmatprep.subr.bf16.mxu0 0
        %7075 = vmatpush1.bf16.msra.mxu0 %v7046
        %7076 = vmatprep.subr.bf16.mxu0 0
        %7077 = vmatpush2.bf16.msra.mxu0 0
        %7078 = vmatprep.subr.bf16.mxu0 0
        %7079 = vmatpush2.bf16.msra.mxu0 0
        %7080 = vmatprep.subr.bf16.mxu0 0
        %7081 = vmatpush2.bf16.msra.mxu0 0
        %7082 = vmatprep.subr.bf16.mxu0 0
        %7083 = vmatpush2.bf16.msra.mxu0 0
        %7084 = vmatprep.subr.bf16.mxu0 0
        %7085 = vmatpush2.bf16.msra.mxu0 0
        %7086 = vmatprep.subr.bf16.mxu0 0
        %7087 = vmatpush2.bf16.msra.mxu0 0
        %7088 = vmatprep.subr.bf16.mxu0 0
        %7089 = vmatpush2.bf16.msra.mxu0 0
        %7090 = vmatprep.subr.bf16.mxu0 0
        %7091 = vmatpush2.bf16.msra.mxu0 0
        %7092 = vmatprep.mubr.bf16.mxu0 0
        %7093 = vmatmul.mubr.bf16.gmra.mxu0 %v7049
        %v7094 = vpop.f32.mrf.mxu0
        %v7095 = vadd.f32 0.0, %v7094
        %v7096 = vpop.f32.mrf.mxu0
        %v7097 = vpop.f32.mrf.mxu0
        %v7098 = vadd.f32 0.0, %v7097
        %v7099 = vpop.f32.mrf.mxu0
        %7100 = vmatprep.mubr.bf16.mxu0 0
        %7101 = vmatmul.mubr.bf16.gmra.mxu0 %v7052
        %v7102 = vpop.f32.mrf.mxu0
        %v7103 = vadd.f32 0.0, %v7102
        %v7104 = vpop.f32.mrf.mxu0
        %v7105 = vpop.f32.mrf.mxu0
        %v7106 = vadd.f32 0.0, %v7105
        %v7107 = vpop.f32.mrf.mxu0
        %7108 = vmatprep.mubr.bf16.mxu0 0
        %7109 = vmatmul.mubr.bf16.gmra.mxu0 %v7055
        %v7110 = vpop.f32.mrf.mxu0
        %v7111 = vadd.f32 0.0, %v7110
        %v7112 = vpop.f32.mrf.mxu0
        %v7113 = vpop.f32.mrf.mxu0
        %v7114 = vadd.f32 0.0, %v7113
        %v7115 = vpop.f32.mrf.mxu0
        %7116 = vmatprep.mubr.bf16.mxu0 0
        %7117 = vmatmul.mubr.bf16.gmra.mxu0 %v7058
        %v7118 = vpop.f32.mrf.mxu0
        %v7119 = vadd.f32 0.0, %v7118
        %v7120 = vpop.f32.mrf.mxu0
        %v7121 = vpop.f32.mrf.mxu0
        %v7122 = vadd.f32 0.0, %v7121
        %v7123 = vpop.f32.mrf.mxu0
        %7124 = vdwg.mxu0
        %v7125 = vadd.f32 %v7031, %v7095
        %v7126 = vadd.f32 %v7032, %v7098
        %v7127 = vadd.f32 %v7033, %v7103
        %v7128 = vadd.f32 %v7034, %v7106
        %v7129 = vadd.f32 %v7035, %v7111
        %v7130 = vadd.f32 %v7036, %v7114
        %v7131 = vadd.f32 %v7037, %v7119
        %v7132 = vadd.f32 %v7038, %v7122
        %s7133 = scalar_lea.vmem %s4, 192
        %v7134 = vld [vmem:[%s7133] sm:$0xf]
        %v7135 = vld [vmem:[%s7133 + $0x4] sm:$0xf]
        %v7138 = vunpack.c.l.b16 %v7134
        %v7139 = vunpack.c.l.b16 %v7135
        %v7140 = vpack.c.b16 %v7139, %v7138
        %v7143 = vsel %vm4904, %v4889, 0
        %v7146 = vsel %vm4904, %v4890, 0
        %v7149 = vsel %vm4904, %v4891, 0
        %v7152 = vsel %vm4904, %v4892, 0
        %7154 = vmatprep.subr.bf16.mxu0 0
        %7155 = vmatpush1.bf16.msra.mxu0 0
        %7156 = vmatprep.subr.bf16.mxu0 0
        %7157 = vmatpush1.bf16.msra.mxu0 0
        %7158 = vmatprep.subr.bf16.mxu0 0
        %7159 = vmatpush1.bf16.msra.mxu0 0
        %7160 = vmatprep.subr.bf16.mxu0 0
        %7161 = vmatpush1.bf16.msra.mxu0 0
        %7162 = vmatprep.subr.bf16.mxu0 0
        %7163 = vmatpush1.bf16.msra.mxu0 0
        %7164 = vmatprep.subr.bf16.mxu0 0
        %7165 = vmatpush1.bf16.msra.mxu0 0
        %7166 = vmatprep.subr.bf16.mxu0 0
        %7167 = vmatpush1.bf16.msra.mxu0 0
        %7168 = vmatprep.subr.bf16.mxu0 0
        %7169 = vmatpush1.bf16.msra.mxu0 %v7140
        %7170 = vmatprep.subr.bf16.mxu0 0
        %7171 = vmatpush2.bf16.msra.mxu0 0
        %7172 = vmatprep.subr.bf16.mxu0 0
        %7173 = vmatpush2.bf16.msra.mxu0 0
        %7174 = vmatprep.subr.bf16.mxu0 0
        %7175 = vmatpush2.bf16.msra.mxu0 0
        %7176 = vmatprep.subr.bf16.mxu0 0
        %7177 = vmatpush2.bf16.msra.mxu0 0
        %7178 = vmatprep.subr.bf16.mxu0 0
        %7179 = vmatpush2.bf16.msra.mxu0 0
        %7180 = vmatprep.subr.bf16.mxu0 0
        %7181 = vmatpush2.bf16.msra.mxu0 0
        %7182 = vmatprep.subr.bf16.mxu0 0
        %7183 = vmatpush2.bf16.msra.mxu0 0
        %7184 = vmatprep.subr.bf16.mxu0 0
        %7185 = vmatpush2.bf16.msra.mxu0 0
        %7186 = vmatprep.mubr.bf16.mxu0 0
        %7187 = vmatmul.mubr.bf16.gmra.mxu0 %v7143
        %v7188 = vpop.f32.mrf.mxu0
        %v7189 = vadd.f32 0.0, %v7188
        %v7190 = vpop.f32.mrf.mxu0
        %v7191 = vpop.f32.mrf.mxu0
        %v7192 = vadd.f32 0.0, %v7191
        %v7193 = vpop.f32.mrf.mxu0
        %7194 = vmatprep.mubr.bf16.mxu0 0
        %7195 = vmatmul.mubr.bf16.gmra.mxu0 %v7146
        %v7196 = vpop.f32.mrf.mxu0
        %v7197 = vadd.f32 0.0, %v7196
        %v7198 = vpop.f32.mrf.mxu0
        %v7199 = vpop.f32.mrf.mxu0
        %v7200 = vadd.f32 0.0, %v7199
        %v7201 = vpop.f32.mrf.mxu0
        %7202 = vmatprep.mubr.bf16.mxu0 0
        %7203 = vmatmul.mubr.bf16.gmra.mxu0 %v7149
        %v7204 = vpop.f32.mrf.mxu0
        %v7205 = vadd.f32 0.0, %v7204
        %v7206 = vpop.f32.mrf.mxu0
        %v7207 = vpop.f32.mrf.mxu0
        %v7208 = vadd.f32 0.0, %v7207
        %v7209 = vpop.f32.mrf.mxu0
        %7210 = vmatprep.mubr.bf16.mxu0 0
        %7211 = vmatmul.mubr.bf16.gmra.mxu0 %v7152
        %v7212 = vpop.f32.mrf.mxu0
        %v7213 = vadd.f32 0.0, %v7212
        %v7214 = vpop.f32.mrf.mxu0
        %v7215 = vpop.f32.mrf.mxu0
        %v7216 = vadd.f32 0.0, %v7215
        %v7217 = vpop.f32.mrf.mxu0
        %7218 = vdwg.mxu0
        %v7219 = vadd.f32 %v7125, %v7189
        %v7220 = vadd.f32 %v7126, %v7192
        %v7221 = vadd.f32 %v7127, %v7197
        %v7222 = vadd.f32 %v7128, %v7200
        %v7223 = vadd.f32 %v7129, %v7205
        %v7224 = vadd.f32 %v7130, %v7208
        %v7225 = vadd.f32 %v7131, %v7213
        %v7226 = vadd.f32 %v7132, %v7216
        %v7227 = vld [vmem:[%s5] sm:$0x1]
        %v7229 = vlaneseq
        %v7230 = vshrl.u32 %v7229, 7
        %v7231 = vsub.s32 0, %v7230
        %v7232 = vrot.slane %v7227, %v7231
        %v7234 = vadd.f32 %v7219, %v7232
        %v7235 = vadd.f32 %v7220, %v7232
        %v7236 = vadd.f32 %v7221, %v7232
        %v7237 = vadd.f32 %v7222, %v7232
        %v7238 = vadd.f32 %v7223, %v7232
        %v7239 = vadd.f32 %v7224, %v7232
        %v7240 = vadd.f32 %v7225, %v7232
        %v7241 = vadd.f32 %v7226, %v7232
        %v7242 = vmax.f32 %v7234, 0.0
        %v7243 = vmax.f32 %v7235, 0.0
        %v7244 = vmax.f32 %v7236, 0.0
        %v7245 = vmax.f32 %v7237, 0.0
        %v7246 = vmax.f32 %v7238, 0.0
        %v7247 = vmax.f32 %v7239, 0.0
        %v7248 = vmax.f32 %v7240, 0.0
        %v7249 = vmax.f32 %v7241, 0.0
        %v7250 = vpack.c.bf16 %v7243, %v7242
        %v7251 = vpack.c.bf16 %v7245, %v7244
        %v7252 = vpack.c.bf16 %v7247, %v7246
        %v7253 = vpack.c.bf16 %v7249, %v7248
        %v7254 = vld [vmem:[%s6] sm:$0xf]
        %v7255 = vld [vmem:[%s6 + $0x4] sm:$0xf]
        %v7256 = vld [vmem:[%s6 + $0x8] sm:$0xf]
        %v7257 = vld [vmem:[%s6 + $0xc] sm:$0xf]
        %v7258 = vld [vmem:[%s6 + $0x10] sm:$0xf]
        %v7259 = vld [vmem:[%s6 + $0x14] sm:$0xf]
        %v7260 = vld [vmem:[%s6 + $0x18] sm:$0xf]
        %v7261 = vld [vmem:[%s6 + $0x1c] sm:$0xf]
        %v7262 = vld [vmem:[%s6 + $0x20] sm:$0xf]
        %v7263 = vld [vmem:[%s6 + $0x24] sm:$0xf]
        %v7264 = vld [vmem:[%s6 + $0x28] sm:$0xf]
        %v7265 = vld [vmem:[%s6 + $0x2c] sm:$0xf]
        %v7266 = vld [vmem:[%s6 + $0x30] sm:$0xf]
        %v7267 = vld [vmem:[%s6 + $0x34] sm:$0xf]
        %v7268 = vld [vmem:[%s6 + $0x38] sm:$0xf]
        %v7269 = vld [vmem:[%s6 + $0x3c] sm:$0xf]
        %v7270 = vld [vmem:[%s6 + $0x40] sm:$0xf]
        %v7271 = vld [vmem:[%s6 + $0x44] sm:$0xf]
        %v7272 = vld [vmem:[%s6 + $0x48] sm:$0xf]
        %v7273 = vld [vmem:[%s6 + $0x4c] sm:$0xf]
        %v7274 = vld [vmem:[%s6 + $0x50] sm:$0xf]
        %v7275 = vld [vmem:[%s6 + $0x54] sm:$0xf]
        %v7276 = vld [vmem:[%s6 + $0x58] sm:$0xf]
        %v7277 = vld [vmem:[%s6 + $0x5c] sm:$0xf]
        %v7278 = vld [vmem:[%s6 + $0x60] sm:$0xf]
        %v7279 = vld [vmem:[%s6 + $0x64] sm:$0xf]
        %v7280 = vld [vmem:[%s6 + $0x68] sm:$0xf]
        %v7281 = vld [vmem:[%s6 + $0x6c] sm:$0xf]
        %v7282 = vld [vmem:[%s6 + $0x70] sm:$0xf]
        %v7283 = vld [vmem:[%s6 + $0x74] sm:$0xf]
        %v7284 = vld [vmem:[%s6 + $0x78] sm:$0xf]
        %v7285 = vld [vmem:[%s6 + $0x7c] sm:$0xf]
        %v7286 = vld [vmem:[%s6 + $0x80] sm:$0xf]
        %v7287 = vld [vmem:[%s6 + $0x84] sm:$0xf]
        %v7288 = vld [vmem:[%s6 + $0x88] sm:$0xf]
        %v7289 = vld [vmem:[%s6 + $0x8c] sm:$0xf]
        %v7290 = vld [vmem:[%s6 + $0x90] sm:$0xf]
        %v7291 = vld [vmem:[%s6 + $0x94] sm:$0xf]
        %v7292 = vld [vmem:[%s6 + $0x98] sm:$0xf]
        %v7293 = vld [vmem:[%s6 + $0x9c] sm:$0xf]
        %v7294 = vld [vmem:[%s6 + $0xa0] sm:$0xf]
        %v7295 = vld [vmem:[%s6 + $0xa4] sm:$0xf]
        %v7296 = vld [vmem:[%s6 + $0xa8] sm:$0xf]
        %v7297 = vld [vmem:[%s6 + $0xac] sm:$0xf]
        %v7298 = vld [vmem:[%s6 + $0xb0] sm:$0xf]
        %v7299 = vld [vmem:[%s6 + $0xb4] sm:$0xf]
        %v7300 = vld [vmem:[%s6 + $0xb8] sm:$0xf]
        %v7301 = vld [vmem:[%s6 + $0xbc] sm:$0xf]
        %v7302 = vld [vmem:[%s6 + $0xc0] sm:$0xf]
        %v7303 = vld [vmem:[%s6 + $0xc4] sm:$0xf]
        %v7354 = vunpack.c.l.b16 %v7254
        %v7355 = vunpack.c.l.b16 %v7255
        %v7356 = vunpack.c.l.b16 %v7256
        %v7357 = vunpack.c.l.b16 %v7257
        %v7358 = vunpack.c.l.b16 %v7258
        %v7359 = vunpack.c.l.b16 %v7259
        %v7360 = vunpack.c.l.b16 %v7260
        %v7361 = vunpack.c.l.b16 %v7261
        %v7362 = vunpack.c.l.b16 %v7262
        %v7363 = vunpack.c.l.b16 %v7263
        %v7364 = vunpack.c.l.b16 %v7264
        %v7365 = vunpack.c.l.b16 %v7265
        %v7366 = vunpack.c.l.b16 %v7266
        %v7367 = vunpack.c.l.b16 %v7267
        %v7368 = vunpack.c.l.b16 %v7268
        %v7369 = vunpack.c.l.b16 %v7269
        %v7370 = vunpack.c.l.b16 %v7270
        %v7371 = vunpack.c.l.b16 %v7271
        %v7372 = vunpack.c.l.b16 %v7272
        %v7373 = vunpack.c.l.b16 %v7273
        %v7374 = vunpack.c.l.b16 %v7274
        %v7375 = vunpack.c.l.b16 %v7275
        %v7376 = vunpack.c.l.b16 %v7276
        %v7377 = vunpack.c.l.b16 %v7277
        %v7378 = vunpack.c.l.b16 %v7278
        %v7379 = vunpack.c.l.b16 %v7279
        %v7380 = vunpack.c.l.b16 %v7280
        %v7381 = vunpack.c.l.b16 %v7281
        %v7382 = vunpack.c.l.b16 %v7282
        %v7383 = vunpack.c.l.b16 %v7283
        %v7384 = vunpack.c.l.b16 %v7284
        %v7385 = vunpack.c.l.b16 %v7285
        %v7386 = vunpack.c.l.b16 %v7286
        %v7387 = vunpack.c.l.b16 %v7287
        %v7388 = vunpack.c.l.b16 %v7288
        %v7389 = vunpack.c.l.b16 %v7289
        %v7390 = vunpack.c.l.b16 %v7290
        %v7391 = vunpack.c.l.b16 %v7291
        %v7392 = vunpack.c.l.b16 %v7292
        %v7393 = vunpack.c.l.b16 %v7293
        %v7394 = vunpack.c.l.b16 %v7294
        %v7395 = vunpack.c.l.b16 %v7295
        %v7396 = vunpack.c.l.b16 %v7296
        %v7397 = vunpack.c.l.b16 %v7297
        %v7398 = vunpack.c.l.b16 %v7298
        %v7399 = vunpack.c.l.b16 %v7299
        %v7400 = vunpack.c.l.b16 %v7300
        %v7401 = vunpack.c.l.b16 %v7301
        %v7402 = vunpack.c.l.b16 %v7302
        %v7403 = vunpack.c.l.b16 %v7303
        %v7404 = vpack.c.b16 %v7355, %v7354
        %v7405 = vpack.c.b16 %v7357, %v7356
        %v7406 = vpack.c.b16 %v7359, %v7358
        %v7407 = vpack.c.b16 %v7361, %v7360
        %v7408 = vpack.c.b16 %v7363, %v7362
        %v7409 = vpack.c.b16 %v7365, %v7364
        %v7410 = vpack.c.b16 %v7367, %v7366
        %v7411 = vpack.c.b16 %v7369, %v7368
        %v7412 = vpack.c.b16 %v7371, %v7370
        %v7413 = vpack.c.b16 %v7373, %v7372
        %v7414 = vpack.c.b16 %v7375, %v7374
        %v7415 = vpack.c.b16 %v7377, %v7376
        %v7416 = vpack.c.b16 %v7379, %v7378
        %v7417 = vpack.c.b16 %v7381, %v7380
        %v7418 = vpack.c.b16 %v7383, %v7382
        %v7419 = vpack.c.b16 %v7385, %v7384
        %v7420 = vpack.c.b16 %v7387, %v7386
        %v7421 = vpack.c.b16 %v7389, %v7388
        %v7422 = vpack.c.b16 %v7391, %v7390
        %v7423 = vpack.c.b16 %v7393, %v7392
        %v7424 = vpack.c.b16 %v7395, %v7394
        %v7425 = vpack.c.b16 %v7397, %v7396
        %v7426 = vpack.c.b16 %v7399, %v7398
        %v7427 = vpack.c.b16 %v7401, %v7400
        %v7428 = vpack.c.b16 %v7403, %v7402
        %vm7429 = vcmask 523264
        %v7431 = vsel %vm7429, %v7404, 0
        %v7434 = vsel %vm7429, %v7405, 0
        %v7437 = vsel %vm7429, %v7406, 0
        %v7440 = vsel %vm7429, %v7407, 0
        %v7443 = vsel %vm7429, %v7408, 0
        %v7446 = vsel %vm7429, %v7409, 0
        %v7449 = vsel %vm7429, %v7410, 0
        %v7452 = vsel %vm7429, %v7411, 0
        %v7455 = vsel %vm7429, %v7412, 0
        %v7458 = vsel %vm7429, %v7413, 0
        %v7461 = vsel %vm7429, %v7414, 0
        %v7464 = vsel %vm7429, %v7415, 0
        %v7467 = vsel %vm7429, %v7416, 0
        %v7470 = vsel %vm7429, %v7417, 0
        %v7473 = vsel %vm7429, %v7418, 0
        %v7476 = vsel %vm7429, %v7419, 0
        %v7479 = vsel %vm7429, %v7420, 0
        %v7482 = vsel %vm7429, %v7421, 0
        %v7485 = vsel %vm7429, %v7422, 0
        %v7488 = vsel %vm7429, %v7423, 0
        %v7491 = vsel %vm7429, %v7424, 0
        %v7494 = vsel %vm7429, %v7425, 0
        %v7497 = vsel %vm7429, %v7426, 0
        %v7500 = vsel %vm7429, %v7427, 0
        %v7503 = vsel %vm7429, %v7428, 0
        %7505 = vmatprep.subr.bf16.mxu0 0
        %7506 = vmatpush1.bf16.msra.mxu0 0
        %7507 = vmatprep.subr.bf16.mxu0 0
        %7508 = vmatpush1.bf16.msra.mxu0 0
        %7509 = vmatprep.subr.bf16.mxu0 0
        %7510 = vmatpush1.bf16.msra.mxu0 0
        %7511 = vmatprep.subr.bf16.mxu0 0
        %7512 = vmatpush1.bf16.msra.mxu0 0
        %7513 = vmatprep.subr.bf16.mxu0 0
        %7514 = vmatpush1.bf16.msra.mxu0 %v7253
        %7515 = vmatprep.subr.bf16.mxu0 0
        %7516 = vmatpush1.bf16.msra.mxu0 %v7252
        %7517 = vmatprep.subr.bf16.mxu0 0
        %7518 = vmatpush1.bf16.msra.mxu0 %v7251
        %7519 = vmatprep.subr.bf16.mxu0 0
        %7520 = vmatpush1.bf16.msra.mxu0 %v7250
        %7521 = vmatprep.subr.bf16.mxu0 0
        %7522 = vmatpush2.bf16.msra.mxu0 0
        %7523 = vmatprep.subr.bf16.mxu0 0
        %7524 = vmatpush2.bf16.msra.mxu0 0
        %7525 = vmatprep.subr.bf16.mxu0 0
        %7526 = vmatpush2.bf16.msra.mxu0 0
        %7527 = vmatprep.subr.bf16.mxu0 0
        %7528 = vmatpush2.bf16.msra.mxu0 0
        %7529 = vmatprep.subr.bf16.mxu0 0
        %7530 = vmatpush2.bf16.msra.mxu0 0
        %7531 = vmatprep.subr.bf16.mxu0 0
        %7532 = vmatpush2.bf16.msra.mxu0 0
        %7533 = vmatprep.subr.bf16.mxu0 0
        %7534 = vmatpush2.bf16.msra.mxu0 0
        %7535 = vmatprep.subr.bf16.mxu0 0
        %7536 = vmatpush2.bf16.msra.mxu0 0
        %7537 = vmatprep.mubr.bf16.mxu0 0
        %7538 = vmatmul.mubr.bf16.gmra.mxu0 %v7431
        %v7539 = vpop.f32.mrf.mxu0
        %v7540 = vadd.f32 0.0, %v7539
        %v7541 = vpop.f32.mrf.mxu0
        %v7542 = vpop.f32.mrf.mxu0
        %v7543 = vadd.f32 0.0, %v7542
        %v7544 = vpop.f32.mrf.mxu0
        %7545 = vmatprep.mubr.bf16.mxu0 0
        %7546 = vmatmul.mubr.bf16.gmra.mxu0 %v7434
        %v7547 = vpop.f32.mrf.mxu0
        %v7548 = vadd.f32 0.0, %v7547
        %v7549 = vpop.f32.mrf.mxu0
        %v7550 = vpop.f32.mrf.mxu0
        %v7551 = vadd.f32 0.0, %v7550
        %v7552 = vpop.f32.mrf.mxu0
        %7553 = vmatprep.mubr.bf16.mxu0 0
        %7554 = vmatmul.mubr.bf16.gmra.mxu0 %v7437
        %v7555 = vpop.f32.mrf.mxu0
        %v7556 = vadd.f32 0.0, %v7555
        %v7557 = vpop.f32.mrf.mxu0
        %v7558 = vpop.f32.mrf.mxu0
        %v7559 = vadd.f32 0.0, %v7558
        %v7560 = vpop.f32.mrf.mxu0
        %7561 = vmatprep.mubr.bf16.mxu0 0
        %7562 = vmatmul.mubr.bf16.gmra.mxu0 %v7440
        %v7563 = vpop.f32.mrf.mxu0
        %v7564 = vadd.f32 0.0, %v7563
        %v7565 = vpop.f32.mrf.mxu0
        %v7566 = vpop.f32.mrf.mxu0
        %v7567 = vadd.f32 0.0, %v7566
        %v7568 = vpop.f32.mrf.mxu0
        %7569 = vmatprep.mubr.bf16.mxu0 0
        %7570 = vmatmul.mubr.bf16.gmra.mxu0 %v7443
        %v7571 = vpop.f32.mrf.mxu0
        %v7572 = vadd.f32 0.0, %v7571
        %v7573 = vpop.f32.mrf.mxu0
        %v7574 = vpop.f32.mrf.mxu0
        %v7575 = vadd.f32 0.0, %v7574
        %v7576 = vpop.f32.mrf.mxu0
        %7577 = vmatprep.mubr.bf16.mxu0 0
        %7578 = vmatmul.mubr.bf16.gmra.mxu0 %v7446
        %v7579 = vpop.f32.mrf.mxu0
        %v7580 = vadd.f32 0.0, %v7579
        %v7581 = vpop.f32.mrf.mxu0
        %v7582 = vpop.f32.mrf.mxu0
        %v7583 = vadd.f32 0.0, %v7582
        %v7584 = vpop.f32.mrf.mxu0
        %7585 = vmatprep.mubr.bf16.mxu0 0
        %7586 = vmatmul.mubr.bf16.gmra.mxu0 %v7449
        %v7587 = vpop.f32.mrf.mxu0
        %v7588 = vadd.f32 0.0, %v7587
        %v7589 = vpop.f32.mrf.mxu0
        %v7590 = vpop.f32.mrf.mxu0
        %v7591 = vadd.f32 0.0, %v7590
        %v7592 = vpop.f32.mrf.mxu0
        %7593 = vmatprep.mubr.bf16.mxu0 0
        %7594 = vmatmul.mubr.bf16.gmra.mxu0 %v7452
        %v7595 = vpop.f32.mrf.mxu0
        %v7596 = vadd.f32 0.0, %v7595
        %v7597 = vpop.f32.mrf.mxu0
        %v7598 = vpop.f32.mrf.mxu0
        %v7599 = vadd.f32 0.0, %v7598
        %v7600 = vpop.f32.mrf.mxu0
        %7601 = vmatprep.mubr.bf16.mxu0 0
        %7602 = vmatmul.mubr.bf16.gmra.mxu0 %v7455
        %v7603 = vpop.f32.mrf.mxu0
        %v7604 = vadd.f32 0.0, %v7603
        %v7605 = vpop.f32.mrf.mxu0
        %v7606 = vpop.f32.mrf.mxu0
        %v7607 = vadd.f32 0.0, %v7606
        %v7608 = vpop.f32.mrf.mxu0
        %7609 = vmatprep.mubr.bf16.mxu0 0
        %7610 = vmatmul.mubr.bf16.gmra.mxu0 %v7458
        %v7611 = vpop.f32.mrf.mxu0
        %v7612 = vadd.f32 0.0, %v7611
        %v7613 = vpop.f32.mrf.mxu0
        %v7614 = vpop.f32.mrf.mxu0
        %v7615 = vadd.f32 0.0, %v7614
        %v7616 = vpop.f32.mrf.mxu0
        %7617 = vmatprep.mubr.bf16.mxu0 0
        %7618 = vmatmul.mubr.bf16.gmra.mxu0 %v7461
        %v7619 = vpop.f32.mrf.mxu0
        %v7620 = vadd.f32 0.0, %v7619
        %v7621 = vpop.f32.mrf.mxu0
        %v7622 = vpop.f32.mrf.mxu0
        %v7623 = vadd.f32 0.0, %v7622
        %v7624 = vpop.f32.mrf.mxu0
        %7625 = vmatprep.mubr.bf16.mxu0 0
        %7626 = vmatmul.mubr.bf16.gmra.mxu0 %v7464
        %v7627 = vpop.f32.mrf.mxu0
        %v7628 = vadd.f32 0.0, %v7627
        %v7629 = vpop.f32.mrf.mxu0
        %v7630 = vpop.f32.mrf.mxu0
        %v7631 = vadd.f32 0.0, %v7630
        %v7632 = vpop.f32.mrf.mxu0
        %7633 = vmatprep.mubr.bf16.mxu0 0
        %7634 = vmatmul.mubr.bf16.gmra.mxu0 %v7467
        %v7635 = vpop.f32.mrf.mxu0
        %v7636 = vadd.f32 0.0, %v7635
        %v7637 = vpop.f32.mrf.mxu0
        %v7638 = vpop.f32.mrf.mxu0
        %v7639 = vadd.f32 0.0, %v7638
        %v7640 = vpop.f32.mrf.mxu0
        %7641 = vmatprep.mubr.bf16.mxu0 0
        %7642 = vmatmul.mubr.bf16.gmra.mxu0 %v7470
        %v7643 = vpop.f32.mrf.mxu0
        %v7644 = vadd.f32 0.0, %v7643
        %v7645 = vpop.f32.mrf.mxu0
        %v7646 = vpop.f32.mrf.mxu0
        %v7647 = vadd.f32 0.0, %v7646
        %v7648 = vpop.f32.mrf.mxu0
        %7649 = vmatprep.mubr.bf16.mxu0 0
        %7650 = vmatmul.mubr.bf16.gmra.mxu0 %v7473
        %v7651 = vpop.f32.mrf.mxu0
        %v7652 = vadd.f32 0.0, %v7651
        %v7653 = vpop.f32.mrf.mxu0
        %v7654 = vpop.f32.mrf.mxu0
        %v7655 = vadd.f32 0.0, %v7654
        %v7656 = vpop.f32.mrf.mxu0
        %7657 = vmatprep.mubr.bf16.mxu0 0
        %7658 = vmatmul.mubr.bf16.gmra.mxu0 %v7476
        %v7659 = vpop.f32.mrf.mxu0
        %v7660 = vadd.f32 0.0, %v7659
        %v7661 = vpop.f32.mrf.mxu0
        %v7662 = vpop.f32.mrf.mxu0
        %v7663 = vadd.f32 0.0, %v7662
        %v7664 = vpop.f32.mrf.mxu0
        %7665 = vmatprep.mubr.bf16.mxu0 0
        %7666 = vmatmul.mubr.bf16.gmra.mxu0 %v7479
        %v7667 = vpop.f32.mrf.mxu0
        %v7668 = vadd.f32 0.0, %v7667
        %v7669 = vpop.f32.mrf.mxu0
        %v7670 = vpop.f32.mrf.mxu0
        %v7671 = vadd.f32 0.0, %v7670
        %v7672 = vpop.f32.mrf.mxu0
        %7673 = vmatprep.mubr.bf16.mxu0 0
        %7674 = vmatmul.mubr.bf16.gmra.mxu0 %v7482
        %v7675 = vpop.f32.mrf.mxu0
        %v7676 = vadd.f32 0.0, %v7675
        %v7677 = vpop.f32.mrf.mxu0
        %v7678 = vpop.f32.mrf.mxu0
        %v7679 = vadd.f32 0.0, %v7678
        %v7680 = vpop.f32.mrf.mxu0
        %7681 = vmatprep.mubr.bf16.mxu0 0
        %7682 = vmatmul.mubr.bf16.gmra.mxu0 %v7485
        %v7683 = vpop.f32.mrf.mxu0
        %v7684 = vadd.f32 0.0, %v7683
        %v7685 = vpop.f32.mrf.mxu0
        %v7686 = vpop.f32.mrf.mxu0
        %v7687 = vadd.f32 0.0, %v7686
        %v7688 = vpop.f32.mrf.mxu0
        %7689 = vmatprep.mubr.bf16.mxu0 0
        %7690 = vmatmul.mubr.bf16.gmra.mxu0 %v7488
        %v7691 = vpop.f32.mrf.mxu0
        %v7692 = vadd.f32 0.0, %v7691
        %v7693 = vpop.f32.mrf.mxu0
        %v7694 = vpop.f32.mrf.mxu0
        %v7695 = vadd.f32 0.0, %v7694
        %v7696 = vpop.f32.mrf.mxu0
        %7697 = vmatprep.mubr.bf16.mxu0 0
        %7698 = vmatmul.mubr.bf16.gmra.mxu0 %v7491
        %v7699 = vpop.f32.mrf.mxu0
        %v7700 = vadd.f32 0.0, %v7699
        %v7701 = vpop.f32.mrf.mxu0
        %v7702 = vpop.f32.mrf.mxu0
        %v7703 = vadd.f32 0.0, %v7702
        %v7704 = vpop.f32.mrf.mxu0
        %7705 = vmatprep.mubr.bf16.mxu0 0
        %7706 = vmatmul.mubr.bf16.gmra.mxu0 %v7494
        %v7707 = vpop.f32.mrf.mxu0
        %v7708 = vadd.f32 0.0, %v7707
        %v7709 = vpop.f32.mrf.mxu0
        %v7710 = vpop.f32.mrf.mxu0
        %v7711 = vadd.f32 0.0, %v7710
        %v7712 = vpop.f32.mrf.mxu0
        %7713 = vmatprep.mubr.bf16.mxu0 0
        %7714 = vmatmul.mubr.bf16.gmra.mxu0 %v7497
        %v7715 = vpop.f32.mrf.mxu0
        %v7716 = vadd.f32 0.0, %v7715
        %v7717 = vpop.f32.mrf.mxu0
        %v7718 = vpop.f32.mrf.mxu0
        %v7719 = vadd.f32 0.0, %v7718
        %v7720 = vpop.f32.mrf.mxu0
        %7721 = vmatprep.mubr.bf16.mxu0 0
        %7722 = vmatmul.mubr.bf16.gmra.mxu0 %v7500
        %v7723 = vpop.f32.mrf.mxu0
        %v7724 = vadd.f32 0.0, %v7723
        %v7725 = vpop.f32.mrf.mxu0
        %v7726 = vpop.f32.mrf.mxu0
        %v7727 = vadd.f32 0.0, %v7726
        %v7728 = vpop.f32.mrf.mxu0
        %7729 = vmatprep.mubr.bf16.mxu0 0
        %7730 = vmatmul.mubr.bf16.gmra.mxu0 %v7503
        %v7731 = vpop.f32.mrf.mxu0
        %v7732 = vadd.f32 0.0, %v7731
        %v7733 = vpop.f32.mrf.mxu0
        %v7734 = vpop.f32.mrf.mxu0
        %v7735 = vadd.f32 0.0, %v7734
        %v7736 = vpop.f32.mrf.mxu0
        %7737 = vdwg.mxu0
        %v7738 = vpack.c.bf16 %v7543, %v7540
        %v7739 = vpack.c.bf16 %v7551, %v7548
        %v7740 = vpack.c.bf16 %v7559, %v7556
        %v7741 = vpack.c.bf16 %v7567, %v7564
        %v7742 = vpack.c.bf16 %v7575, %v7572
        %v7743 = vpack.c.bf16 %v7583, %v7580
        %v7744 = vpack.c.bf16 %v7591, %v7588
        %v7745 = vpack.c.bf16 %v7599, %v7596
        %v7746 = vpack.c.bf16 %v7607, %v7604
        %v7747 = vpack.c.bf16 %v7615, %v7612
        %v7748 = vpack.c.bf16 %v7623, %v7620
        %v7749 = vpack.c.bf16 %v7631, %v7628
        %v7750 = vpack.c.bf16 %v7639, %v7636
        %v7751 = vpack.c.bf16 %v7647, %v7644
        %v7752 = vpack.c.bf16 %v7655, %v7652
        %v7753 = vpack.c.bf16 %v7663, %v7660
        %v7754 = vpack.c.bf16 %v7671, %v7668
        %v7755 = vpack.c.bf16 %v7679, %v7676
        %v7756 = vpack.c.bf16 %v7687, %v7684
        %v7757 = vpack.c.bf16 %v7695, %v7692
        %v7758 = vpack.c.bf16 %v7703, %v7700
        %v7759 = vpack.c.bf16 %v7711, %v7708
        %v7760 = vpack.c.bf16 %v7719, %v7716
        %v7761 = vpack.c.bf16 %v7727, %v7724
        %v7762 = vpack.c.bf16 %v7735, %v7732
        %v7763 = vld [vmem:[%s7] sm:$0xf]
        %v7764 = vld [vmem:[%s7 + $0x4] sm:$0xf]
        %v7765 = vld [vmem:[%s7 + $0x8] sm:$0xf]
        %v7766 = vld [vmem:[%s7 + $0xc] sm:$0xf]
        %s7767 = scalar_lea.vmem %s7, 16
        %v7768 = vld [vmem:[%s7767] sm:$0xf]
        %v7769 = vld [vmem:[%s7767 + $0x4] sm:$0xf]
        %v7770 = vld [vmem:[%s7767 + $0x8] sm:$0xf]
        %v7771 = vld [vmem:[%s7767 + $0xc] sm:$0xf]
        %v7776 = vunpack.c.l.b16 %v7768
        %v7777 = vunpack.c.l.b16 %v7769
        %v7778 = vunpack.c.l.b16 %v7770
        %v7779 = vunpack.c.l.b16 %v7771
        %v7780 = vpack.c.b16 %v7777, %v7776
        %v7781 = vpack.c.b16 %v7779, %v7778
        %vm7784 = vcmask 261120
        %v7786 = vsel %vm7784, %v7739, 0
        %7788 = vmatprep.subr.bf16.mxu0 0
        %7789 = vmatpush1.bf16.msra.mxu0 0
        %7790 = vmatprep.subr.bf16.mxu0 0
        %7791 = vmatpush1.bf16.msra.mxu0 0
        %7792 = vmatprep.subr.bf16.mxu0 0
        %7793 = vmatpush1.bf16.msra.mxu0 0
        %7794 = vmatprep.subr.bf16.mxu0 0
        %7795 = vmatpush1.bf16.msra.mxu0 0
        %7796 = vmatprep.subr.bf16.mxu0 0
        %7797 = vmatpush1.bf16.msra.mxu0 0
        %7798 = vmatprep.subr.bf16.mxu0 0
        %7799 = vmatpush1.bf16.msra.mxu0 0
        %7800 = vmatprep.subr.bf16.mxu0 0
        %7801 = vmatpush1.bf16.msra.mxu0 %v7781
        %7802 = vmatprep.subr.bf16.mxu0 0
        %7803 = vmatpush1.bf16.msra.mxu0 %v7780
        %7804 = vmatprep.subr.bf16.mxu0 0
        %7805 = vmatpush2.bf16.msra.mxu0 0
        %7806 = vmatprep.subr.bf16.mxu0 0
        %7807 = vmatpush2.bf16.msra.mxu0 0
        %7808 = vmatprep.subr.bf16.mxu0 0
        %7809 = vmatpush2.bf16.msra.mxu0 0
        %7810 = vmatprep.subr.bf16.mxu0 0
        %7811 = vmatpush2.bf16.msra.mxu0 0
        %7812 = vmatprep.subr.bf16.mxu0 0
        %7813 = vmatpush2.bf16.msra.mxu0 0
        %7814 = vmatprep.subr.bf16.mxu0 0
        %7815 = vmatpush2.bf16.msra.mxu0 0
        %7816 = vmatprep.subr.bf16.mxu0 0
        %7817 = vmatpush2.bf16.msra.mxu0 0
        %7818 = vmatprep.subr.bf16.mxu0 0
        %7819 = vmatpush2.bf16.msra.mxu0 0
        %7820 = vmatprep.mubr.bf16.mxu0 0
        %7821 = vmatmul.mubr.bf16.gmra.mxu0 %v7786
        %v7822 = vpop.f32.mrf.mxu0
        %v7823 = vadd.f32 0.0, %v7822
        %v7824 = vpop.f32.mrf.mxu0
        %v7825 = vpop.f32.mrf.mxu0
        %v7826 = vadd.f32 0.0, %v7825
        %v7827 = vpop.f32.mrf.mxu0
        %7828 = vdwg.mxu0
        %v7833 = vunpack.c.l.b16 %v7763
        %v7834 = vunpack.c.l.b16 %v7764
        %v7835 = vunpack.c.l.b16 %v7765
        %v7836 = vunpack.c.l.b16 %v7766
        %v7837 = vpack.c.b16 %v7834, %v7833
        %v7838 = vpack.c.b16 %v7836, %v7835
        %v7842 = vsel %vm7784, %v7738, 0
        %7844 = vmatprep.subr.bf16.mxu0 0
        %7845 = vmatpush1.bf16.msra.mxu0 0
        %7846 = vmatprep.subr.bf16.mxu0 0
        %7847 = vmatpush1.bf16.msra.mxu0 0
        %7848 = vmatprep.subr.bf16.mxu0 0
        %7849 = vmatpush1.bf16.msra.mxu0 0
        %7850 = vmatprep.subr.bf16.mxu0 0
        %7851 = vmatpush1.bf16.msra.mxu0 0
        %7852 = vmatprep.subr.bf16.mxu0 0
        %7853 = vmatpush1.bf16.msra.mxu0 0
        %7854 = vmatprep.subr.bf16.mxu0 0
        %7855 = vmatpush1.bf16.msra.mxu0 0
        %7856 = vmatprep.subr.bf16.mxu0 0
        %7857 = vmatpush1.bf16.msra.mxu0 %v7838
        %7858 = vmatprep.subr.bf16.mxu0 0
        %7859 = vmatpush1.bf16.msra.mxu0 %v7837
        %7860 = vmatprep.subr.bf16.mxu0 0
        %7861 = vmatpush2.bf16.msra.mxu0 0
        %7862 = vmatprep.subr.bf16.mxu0 0
        %7863 = vmatpush2.bf16.msra.mxu0 0
        %7864 = vmatprep.subr.bf16.mxu0 0
        %7865 = vmatpush2.bf16.msra.mxu0 0
        %7866 = vmatprep.subr.bf16.mxu0 0
        %7867 = vmatpush2.bf16.msra.mxu0 0
        %7868 = vmatprep.subr.bf16.mxu0 0
        %7869 = vmatpush2.bf16.msra.mxu0 0
        %7870 = vmatprep.subr.bf16.mxu0 0
        %7871 = vmatpush2.bf16.msra.mxu0 0
        %7872 = vmatprep.subr.bf16.mxu0 0
        %7873 = vmatpush2.bf16.msra.mxu0 0
        %7874 = vmatprep.subr.bf16.mxu0 0
        %7875 = vmatpush2.bf16.msra.mxu0 0
        %7876 = vmatprep.mubr.bf16.mxu0 0
        %7877 = vmatmul.mubr.bf16.gmra.mxu0 %v7842
        %v7878 = vpop.f32.mrf.mxu0
        %v7879 = vadd.f32 %v7823, %v7878
        %v7880 = vpop.f32.mrf.mxu0
        %v7881 = vpop.f32.mrf.mxu0
        %v7882 = vadd.f32 %v7826, %v7881
        %v7883 = vpop.f32.mrf.mxu0
        %7884 = vdwg.mxu0
        %s7885 = scalar_lea.vmem %s7, 32
        %v7886 = vld [vmem:[%s7885] sm:$0xf]
        %v7887 = vld [vmem:[%s7885 + $0x4] sm:$0xf]
        %v7888 = vld [vmem:[%s7885 + $0x8] sm:$0xf]
        %v7889 = vld [vmem:[%s7885 + $0xc] sm:$0xf]
        %v7894 = vunpack.c.l.b16 %v7886
        %v7895 = vunpack.c.l.b16 %v7887
        %v7896 = vunpack.c.l.b16 %v7888
        %v7897 = vunpack.c.l.b16 %v7889
        %v7898 = vpack.c.b16 %v7895, %v7894
        %v7899 = vpack.c.b16 %v7897, %v7896
        %v7903 = vsel %vm7784, %v7740, 0
        %7905 = vmatprep.subr.bf16.mxu0 0
        %7906 = vmatpush1.bf16.msra.mxu0 0
        %7907 = vmatprep.subr.bf16.mxu0 0
        %7908 = vmatpush1.bf16.msra.mxu0 0
        %7909 = vmatprep.subr.bf16.mxu0 0
        %7910 = vmatpush1.bf16.msra.mxu0 0
        %7911 = vmatprep.subr.bf16.mxu0 0
        %7912 = vmatpush1.bf16.msra.mxu0 0
        %7913 = vmatprep.subr.bf16.mxu0 0
        %7914 = vmatpush1.bf16.msra.mxu0 0
        %7915 = vmatprep.subr.bf16.mxu0 0
        %7916 = vmatpush1.bf16.msra.mxu0 0
        %7917 = vmatprep.subr.bf16.mxu0 0
        %7918 = vmatpush1.bf16.msra.mxu0 %v7899
        %7919 = vmatprep.subr.bf16.mxu0 0
        %7920 = vmatpush1.bf16.msra.mxu0 %v7898
        %7921 = vmatprep.subr.bf16.mxu0 0
        %7922 = vmatpush2.bf16.msra.mxu0 0
        %7923 = vmatprep.subr.bf16.mxu0 0
        %7924 = vmatpush2.bf16.msra.mxu0 0
        %7925 = vmatprep.subr.bf16.mxu0 0
        %7926 = vmatpush2.bf16.msra.mxu0 0
        %7927 = vmatprep.subr.bf16.mxu0 0
        %7928 = vmatpush2.bf16.msra.mxu0 0
        %7929 = vmatprep.subr.bf16.mxu0 0
        %7930 = vmatpush2.bf16.msra.mxu0 0
        %7931 = vmatprep.subr.bf16.mxu0 0
        %7932 = vmatpush2.bf16.msra.mxu0 0
        %7933 = vmatprep.subr.bf16.mxu0 0
        %7934 = vmatpush2.bf16.msra.mxu0 0
        %7935 = vmatprep.subr.bf16.mxu0 0
        %7936 = vmatpush2.bf16.msra.mxu0 0
        %7937 = vmatprep.mubr.bf16.mxu0 0
        %7938 = vmatmul.mubr.bf16.gmra.mxu0 %v7903
        %v7939 = vpop.f32.mrf.mxu0
        %v7940 = vadd.f32 0.0, %v7939
        %v7941 = vpop.f32.mrf.mxu0
        %v7942 = vpop.f32.mrf.mxu0
        %v7943 = vadd.f32 0.0, %v7942
        %v7944 = vpop.f32.mrf.mxu0
        %7945 = vdwg.mxu0
        %v7946 = vadd.f32 %v7879, %v7940
        %v7947 = vadd.f32 %v7882, %v7943
        %s7948 = scalar_lea.vmem %s7, 48
        %v7949 = vld [vmem:[%s7948] sm:$0xf]
        %v7950 = vld [vmem:[%s7948 + $0x4] sm:$0xf]
        %v7951 = vld [vmem:[%s7948 + $0x8] sm:$0xf]
        %v7952 = vld [vmem:[%s7948 + $0xc] sm:$0xf]
        %v7957 = vunpack.c.l.b16 %v7949
        %v7958 = vunpack.c.l.b16 %v7950
        %v7959 = vunpack.c.l.b16 %v7951
        %v7960 = vunpack.c.l.b16 %v7952
        %v7961 = vpack.c.b16 %v7958, %v7957
        %v7962 = vpack.c.b16 %v7960, %v7959
        %v7966 = vsel %vm7784, %v7741, 0
        %7968 = vmatprep.subr.bf16.mxu0 0
        %7969 = vmatpush1.bf16.msra.mxu0 0
        %7970 = vmatprep.subr.bf16.mxu0 0
        %7971 = vmatpush1.bf16.msra.mxu0 0
        %7972 = vmatprep.subr.bf16.mxu0 0
        %7973 = vmatpush1.bf16.msra.mxu0 0
        %7974 = vmatprep.subr.bf16.mxu0 0
        %7975 = vmatpush1.bf16.msra.mxu0 0
        %7976 = vmatprep.subr.bf16.mxu0 0
        %7977 = vmatpush1.bf16.msra.mxu0 0
        %7978 = vmatprep.subr.bf16.mxu0 0
        %7979 = vmatpush1.bf16.msra.mxu0 0
        %7980 = vmatprep.subr.bf16.mxu0 0
        %7981 = vmatpush1.bf16.msra.mxu0 %v7962
        %7982 = vmatprep.subr.bf16.mxu0 0
        %7983 = vmatpush1.bf16.msra.mxu0 %v7961
        %7984 = vmatprep.subr.bf16.mxu0 0
        %7985 = vmatpush2.bf16.msra.mxu0 0
        %7986 = vmatprep.subr.bf16.mxu0 0
        %7987 = vmatpush2.bf16.msra.mxu0 0
        %7988 = vmatprep.subr.bf16.mxu0 0
        %7989 = vmatpush2.bf16.msra.mxu0 0
        %7990 = vmatprep.subr.bf16.mxu0 0
        %7991 = vmatpush2.bf16.msra.mxu0 0
        %7992 = vmatprep.subr.bf16.mxu0 0
        %7993 = vmatpush2.bf16.msra.mxu0 0
        %7994 = vmatprep.subr.bf16.mxu0 0
        %7995 = vmatpush2.bf16.msra.mxu0 0
        %7996 = vmatprep.subr.bf16.mxu0 0
        %7997 = vmatpush2.bf16.msra.mxu0 0
        %7998 = vmatprep.subr.bf16.mxu0 0
        %7999 = vmatpush2.bf16.msra.mxu0 0
        %8000 = vmatprep.mubr.bf16.mxu0 0
        %8001 = vmatmul.mubr.bf16.gmra.mxu0 %v7966
        %v8002 = vpop.f32.mrf.mxu0
        %v8003 = vadd.f32 0.0, %v8002
        %v8004 = vpop.f32.mrf.mxu0
        %v8005 = vpop.f32.mrf.mxu0
        %v8006 = vadd.f32 0.0, %v8005
        %v8007 = vpop.f32.mrf.mxu0
        %8008 = vdwg.mxu0
        %v8009 = vadd.f32 %v7946, %v8003
        %v8010 = vadd.f32 %v7947, %v8006
        %s8011 = scalar_lea.vmem %s7, 64
        %v8012 = vld [vmem:[%s8011] sm:$0xf]
        %v8013 = vld [vmem:[%s8011 + $0x4] sm:$0xf]
        %v8014 = vld [vmem:[%s8011 + $0x8] sm:$0xf]
        %v8015 = vld [vmem:[%s8011 + $0xc] sm:$0xf]
        %v8020 = vunpack.c.l.b16 %v8012
        %v8021 = vunpack.c.l.b16 %v8013
        %v8022 = vunpack.c.l.b16 %v8014
        %v8023 = vunpack.c.l.b16 %v8015
        %v8024 = vpack.c.b16 %v8021, %v8020
        %v8025 = vpack.c.b16 %v8023, %v8022
        %v8029 = vsel %vm7784, %v7742, 0
        %8031 = vmatprep.subr.bf16.mxu0 0
        %8032 = vmatpush1.bf16.msra.mxu0 0
        %8033 = vmatprep.subr.bf16.mxu0 0
        %8034 = vmatpush1.bf16.msra.mxu0 0
        %8035 = vmatprep.subr.bf16.mxu0 0
        %8036 = vmatpush1.bf16.msra.mxu0 0
        %8037 = vmatprep.subr.bf16.mxu0 0
        %8038 = vmatpush1.bf16.msra.mxu0 0
        %8039 = vmatprep.subr.bf16.mxu0 0
        %8040 = vmatpush1.bf16.msra.mxu0 0
        %8041 = vmatprep.subr.bf16.mxu0 0
        %8042 = vmatpush1.bf16.msra.mxu0 0
        %8043 = vmatprep.subr.bf16.mxu0 0
        %8044 = vmatpush1.bf16.msra.mxu0 %v8025
        %8045 = vmatprep.subr.bf16.mxu0 0
        %8046 = vmatpush1.bf16.msra.mxu0 %v8024
        %8047 = vmatprep.subr.bf16.mxu0 0
        %8048 = vmatpush2.bf16.msra.mxu0 0
        %8049 = vmatprep.subr.bf16.mxu0 0
        %8050 = vmatpush2.bf16.msra.mxu0 0
        %8051 = vmatprep.subr.bf16.mxu0 0
        %8052 = vmatpush2.bf16.msra.mxu0 0
        %8053 = vmatprep.subr.bf16.mxu0 0
        %8054 = vmatpush2.bf16.msra.mxu0 0
        %8055 = vmatprep.subr.bf16.mxu0 0
        %8056 = vmatpush2.bf16.msra.mxu0 0
        %8057 = vmatprep.subr.bf16.mxu0 0
        %8058 = vmatpush2.bf16.msra.mxu0 0
        %8059 = vmatprep.subr.bf16.mxu0 0
        %8060 = vmatpush2.bf16.msra.mxu0 0
        %8061 = vmatprep.subr.bf16.mxu0 0
        %8062 = vmatpush2.bf16.msra.mxu0 0
        %8063 = vmatprep.mubr.bf16.mxu0 0
        %8064 = vmatmul.mubr.bf16.gmra.mxu0 %v8029
        %v8065 = vpop.f32.mrf.mxu0
        %v8066 = vadd.f32 0.0, %v8065
        %v8067 = vpop.f32.mrf.mxu0
        %v8068 = vpop.f32.mrf.mxu0
        %v8069 = vadd.f32 0.0, %v8068
        %v8070 = vpop.f32.mrf.mxu0
        %8071 = vdwg.mxu0
        %v8072 = vadd.f32 %v8009, %v8066
        %v8073 = vadd.f32 %v8010, %v8069
        %s8074 = scalar_lea.vmem %s7, 80
        %v8075 = vld [vmem:[%s8074] sm:$0xf]
        %v8076 = vld [vmem:[%s8074 + $0x4] sm:$0xf]
        %v8077 = vld [vmem:[%s8074 + $0x8] sm:$0xf]
        %v8078 = vld [vmem:[%s8074 + $0xc] sm:$0xf]
        %v8083 = vunpack.c.l.b16 %v8075
        %v8084 = vunpack.c.l.b16 %v8076
        %v8085 = vunpack.c.l.b16 %v8077
        %v8086 = vunpack.c.l.b16 %v8078
        %v8087 = vpack.c.b16 %v8084, %v8083
        %v8088 = vpack.c.b16 %v8086, %v8085
        %v8092 = vsel %vm7784, %v7743, 0
        %8094 = vmatprep.subr.bf16.mxu0 0
        %8095 = vmatpush1.bf16.msra.mxu0 0
        %8096 = vmatprep.subr.bf16.mxu0 0
        %8097 = vmatpush1.bf16.msra.mxu0 0
        %8098 = vmatprep.subr.bf16.mxu0 0
        %8099 = vmatpush1.bf16.msra.mxu0 0
        %8100 = vmatprep.subr.bf16.mxu0 0
        %8101 = vmatpush1.bf16.msra.mxu0 0
        %8102 = vmatprep.subr.bf16.mxu0 0
        %8103 = vmatpush1.bf16.msra.mxu0 0
        %8104 = vmatprep.subr.bf16.mxu0 0
        %8105 = vmatpush1.bf16.msra.mxu0 0
        %8106 = vmatprep.subr.bf16.mxu0 0
        %8107 = vmatpush1.bf16.msra.mxu0 %v8088
        %8108 = vmatprep.subr.bf16.mxu0 0
        %8109 = vmatpush1.bf16.msra.mxu0 %v8087
        %8110 = vmatprep.subr.bf16.mxu0 0
        %8111 = vmatpush2.bf16.msra.mxu0 0
        %8112 = vmatprep.subr.bf16.mxu0 0
        %8113 = vmatpush2.bf16.msra.mxu0 0
        %8114 = vmatprep.subr.bf16.mxu0 0
        %8115 = vmatpush2.bf16.msra.mxu0 0
        %8116 = vmatprep.subr.bf16.mxu0 0
        %8117 = vmatpush2.bf16.msra.mxu0 0
        %8118 = vmatprep.subr.bf16.mxu0 0
        %8119 = vmatpush2.bf16.msra.mxu0 0
        %8120 = vmatprep.subr.bf16.mxu0 0
        %8121 = vmatpush2.bf16.msra.mxu0 0
        %8122 = vmatprep.subr.bf16.mxu0 0
        %8123 = vmatpush2.bf16.msra.mxu0 0
        %8124 = vmatprep.subr.bf16.mxu0 0
        %8125 = vmatpush2.bf16.msra.mxu0 0
        %8126 = vmatprep.mubr.bf16.mxu0 0
        %8127 = vmatmul.mubr.bf16.gmra.mxu0 %v8092
        %v8128 = vpop.f32.mrf.mxu0
        %v8129 = vadd.f32 0.0, %v8128
        %v8130 = vpop.f32.mrf.mxu0
        %v8131 = vpop.f32.mrf.mxu0
        %v8132 = vadd.f32 0.0, %v8131
        %v8133 = vpop.f32.mrf.mxu0
        %8134 = vdwg.mxu0
        %v8135 = vadd.f32 %v8072, %v8129
        %v8136 = vadd.f32 %v8073, %v8132
        %s8137 = scalar_lea.vmem %s7, 96
        %v8138 = vld [vmem:[%s8137] sm:$0xf]
        %v8139 = vld [vmem:[%s8137 + $0x4] sm:$0xf]
        %v8140 = vld [vmem:[%s8137 + $0x8] sm:$0xf]
        %v8141 = vld [vmem:[%s8137 + $0xc] sm:$0xf]
        %v8146 = vunpack.c.l.b16 %v8138
        %v8147 = vunpack.c.l.b16 %v8139
        %v8148 = vunpack.c.l.b16 %v8140
        %v8149 = vunpack.c.l.b16 %v8141
        %v8150 = vpack.c.b16 %v8147, %v8146
        %v8151 = vpack.c.b16 %v8149, %v8148
        %v8155 = vsel %vm7784, %v7744, 0
        %8157 = vmatprep.subr.bf16.mxu0 0
        %8158 = vmatpush1.bf16.msra.mxu0 0
        %8159 = vmatprep.subr.bf16.mxu0 0
        %8160 = vmatpush1.bf16.msra.mxu0 0
        %8161 = vmatprep.subr.bf16.mxu0 0
        %8162 = vmatpush1.bf16.msra.mxu0 0
        %8163 = vmatprep.subr.bf16.mxu0 0
        %8164 = vmatpush1.bf16.msra.mxu0 0
        %8165 = vmatprep.subr.bf16.mxu0 0
        %8166 = vmatpush1.bf16.msra.mxu0 0
        %8167 = vmatprep.subr.bf16.mxu0 0
        %8168 = vmatpush1.bf16.msra.mxu0 0
        %8169 = vmatprep.subr.bf16.mxu0 0
        %8170 = vmatpush1.bf16.msra.mxu0 %v8151
        %8171 = vmatprep.subr.bf16.mxu0 0
        %8172 = vmatpush1.bf16.msra.mxu0 %v8150
        %8173 = vmatprep.subr.bf16.mxu0 0
        %8174 = vmatpush2.bf16.msra.mxu0 0
        %8175 = vmatprep.subr.bf16.mxu0 0
        %8176 = vmatpush2.bf16.msra.mxu0 0
        %8177 = vmatprep.subr.bf16.mxu0 0
        %8178 = vmatpush2.bf16.msra.mxu0 0
        %8179 = vmatprep.subr.bf16.mxu0 0
        %8180 = vmatpush2.bf16.msra.mxu0 0
        %8181 = vmatprep.subr.bf16.mxu0 0
        %8182 = vmatpush2.bf16.msra.mxu0 0
        %8183 = vmatprep.subr.bf16.mxu0 0
        %8184 = vmatpush2.bf16.msra.mxu0 0
        %8185 = vmatprep.subr.bf16.mxu0 0
        %8186 = vmatpush2.bf16.msra.mxu0 0
        %8187 = vmatprep.subr.bf16.mxu0 0
        %8188 = vmatpush2.bf16.msra.mxu0 0
        %8189 = vmatprep.mubr.bf16.mxu0 0
        %8190 = vmatmul.mubr.bf16.gmra.mxu0 %v8155
        %v8191 = vpop.f32.mrf.mxu0
        %v8192 = vadd.f32 0.0, %v8191
        %v8193 = vpop.f32.mrf.mxu0
        %v8194 = vpop.f32.mrf.mxu0
        %v8195 = vadd.f32 0.0, %v8194
        %v8196 = vpop.f32.mrf.mxu0
        %8197 = vdwg.mxu0
        %v8198 = vadd.f32 %v8135, %v8192
        %v8199 = vadd.f32 %v8136, %v8195
        %s8200 = scalar_lea.vmem %s7, 112
        %v8201 = vld [vmem:[%s8200] sm:$0xf]
        %v8202 = vld [vmem:[%s8200 + $0x4] sm:$0xf]
        %v8203 = vld [vmem:[%s8200 + $0x8] sm:$0xf]
        %v8204 = vld [vmem:[%s8200 + $0xc] sm:$0xf]
        %v8209 = vunpack.c.l.b16 %v8201
        %v8210 = vunpack.c.l.b16 %v8202
        %v8211 = vunpack.c.l.b16 %v8203
        %v8212 = vunpack.c.l.b16 %v8204
        %v8213 = vpack.c.b16 %v8210, %v8209
        %v8214 = vpack.c.b16 %v8212, %v8211
        %v8218 = vsel %vm7784, %v7745, 0
        %8220 = vmatprep.subr.bf16.mxu0 0
        %8221 = vmatpush1.bf16.msra.mxu0 0
        %8222 = vmatprep.subr.bf16.mxu0 0
        %8223 = vmatpush1.bf16.msra.mxu0 0
        %8224 = vmatprep.subr.bf16.mxu0 0
        %8225 = vmatpush1.bf16.msra.mxu0 0
        %8226 = vmatprep.subr.bf16.mxu0 0
        %8227 = vmatpush1.bf16.msra.mxu0 0
        %8228 = vmatprep.subr.bf16.mxu0 0
        %8229 = vmatpush1.bf16.msra.mxu0 0
        %8230 = vmatprep.subr.bf16.mxu0 0
        %8231 = vmatpush1.bf16.msra.mxu0 0
        %8232 = vmatprep.subr.bf16.mxu0 0
        %8233 = vmatpush1.bf16.msra.mxu0 %v8214
        %8234 = vmatprep.subr.bf16.mxu0 0
        %8235 = vmatpush1.bf16.msra.mxu0 %v8213
        %8236 = vmatprep.subr.bf16.mxu0 0
        %8237 = vmatpush2.bf16.msra.mxu0 0
        %8238 = vmatprep.subr.bf16.mxu0 0
        %8239 = vmatpush2.bf16.msra.mxu0 0
        %8240 = vmatprep.subr.bf16.mxu0 0
        %8241 = vmatpush2.bf16.msra.mxu0 0
        %8242 = vmatprep.subr.bf16.mxu0 0
        %8243 = vmatpush2.bf16.msra.mxu0 0
        %8244 = vmatprep.subr.bf16.mxu0 0
        %8245 = vmatpush2.bf16.msra.mxu0 0
        %8246 = vmatprep.subr.bf16.mxu0 0
        %8247 = vmatpush2.bf16.msra.mxu0 0
        %8248 = vmatprep.subr.bf16.mxu0 0
        %8249 = vmatpush2.bf16.msra.mxu0 0
        %8250 = vmatprep.subr.bf16.mxu0 0
        %8251 = vmatpush2.bf16.msra.mxu0 0
        %8252 = vmatprep.mubr.bf16.mxu0 0
        %8253 = vmatmul.mubr.bf16.gmra.mxu0 %v8218
        %v8254 = vpop.f32.mrf.mxu0
        %v8255 = vadd.f32 0.0, %v8254
        %v8256 = vpop.f32.mrf.mxu0
        %v8257 = vpop.f32.mrf.mxu0
        %v8258 = vadd.f32 0.0, %v8257
        %v8259 = vpop.f32.mrf.mxu0
        %8260 = vdwg.mxu0
        %v8261 = vadd.f32 %v8198, %v8255
        %v8262 = vadd.f32 %v8199, %v8258
        %s8263 = scalar_lea.vmem %s7, 128
        %v8264 = vld [vmem:[%s8263] sm:$0xf]
        %v8265 = vld [vmem:[%s8263 + $0x4] sm:$0xf]
        %v8266 = vld [vmem:[%s8263 + $0x8] sm:$0xf]
        %v8267 = vld [vmem:[%s8263 + $0xc] sm:$0xf]
        %v8272 = vunpack.c.l.b16 %v8264
        %v8273 = vunpack.c.l.b16 %v8265
        %v8274 = vunpack.c.l.b16 %v8266
        %v8275 = vunpack.c.l.b16 %v8267
        %v8276 = vpack.c.b16 %v8273, %v8272
        %v8277 = vpack.c.b16 %v8275, %v8274
        %v8281 = vsel %vm7784, %v7746, 0
        %8283 = vmatprep.subr.bf16.mxu0 0
        %8284 = vmatpush1.bf16.msra.mxu0 0
        %8285 = vmatprep.subr.bf16.mxu0 0
        %8286 = vmatpush1.bf16.msra.mxu0 0
        %8287 = vmatprep.subr.bf16.mxu0 0
        %8288 = vmatpush1.bf16.msra.mxu0 0
        %8289 = vmatprep.subr.bf16.mxu0 0
        %8290 = vmatpush1.bf16.msra.mxu0 0
        %8291 = vmatprep.subr.bf16.mxu0 0
        %8292 = vmatpush1.bf16.msra.mxu0 0
        %8293 = vmatprep.subr.bf16.mxu0 0
        %8294 = vmatpush1.bf16.msra.mxu0 0
        %8295 = vmatprep.subr.bf16.mxu0 0
        %8296 = vmatpush1.bf16.msra.mxu0 %v8277
        %8297 = vmatprep.subr.bf16.mxu0 0
        %8298 = vmatpush1.bf16.msra.mxu0 %v8276
        %8299 = vmatprep.subr.bf16.mxu0 0
        %8300 = vmatpush2.bf16.msra.mxu0 0
        %8301 = vmatprep.subr.bf16.mxu0 0
        %8302 = vmatpush2.bf16.msra.mxu0 0
        %8303 = vmatprep.subr.bf16.mxu0 0
        %8304 = vmatpush2.bf16.msra.mxu0 0
        %8305 = vmatprep.subr.bf16.mxu0 0
        %8306 = vmatpush2.bf16.msra.mxu0 0
        %8307 = vmatprep.subr.bf16.mxu0 0
        %8308 = vmatpush2.bf16.msra.mxu0 0
        %8309 = vmatprep.subr.bf16.mxu0 0
        %8310 = vmatpush2.bf16.msra.mxu0 0
        %8311 = vmatprep.subr.bf16.mxu0 0
        %8312 = vmatpush2.bf16.msra.mxu0 0
        %8313 = vmatprep.subr.bf16.mxu0 0
        %8314 = vmatpush2.bf16.msra.mxu0 0
        %8315 = vmatprep.mubr.bf16.mxu0 0
        %8316 = vmatmul.mubr.bf16.gmra.mxu0 %v8281
        %v8317 = vpop.f32.mrf.mxu0
        %v8318 = vadd.f32 0.0, %v8317
        %v8319 = vpop.f32.mrf.mxu0
        %v8320 = vpop.f32.mrf.mxu0
        %v8321 = vadd.f32 0.0, %v8320
        %v8322 = vpop.f32.mrf.mxu0
        %8323 = vdwg.mxu0
        %v8324 = vadd.f32 %v8261, %v8318
        %v8325 = vadd.f32 %v8262, %v8321
        %s8326 = scalar_lea.vmem %s7, 144
        %v8327 = vld [vmem:[%s8326] sm:$0xf]
        %v8328 = vld [vmem:[%s8326 + $0x4] sm:$0xf]
        %v8329 = vld [vmem:[%s8326 + $0x8] sm:$0xf]
        %v8330 = vld [vmem:[%s8326 + $0xc] sm:$0xf]
        %v8335 = vunpack.c.l.b16 %v8327
        %v8336 = vunpack.c.l.b16 %v8328
        %v8337 = vunpack.c.l.b16 %v8329
        %v8338 = vunpack.c.l.b16 %v8330
        %v8339 = vpack.c.b16 %v8336, %v8335
        %v8340 = vpack.c.b16 %v8338, %v8337
        %v8344 = vsel %vm7784, %v7747, 0
        %8346 = vmatprep.subr.bf16.mxu0 0
        %8347 = vmatpush1.bf16.msra.mxu0 0
        %8348 = vmatprep.subr.bf16.mxu0 0
        %8349 = vmatpush1.bf16.msra.mxu0 0
        %8350 = vmatprep.subr.bf16.mxu0 0
        %8351 = vmatpush1.bf16.msra.mxu0 0
        %8352 = vmatprep.subr.bf16.mxu0 0
        %8353 = vmatpush1.bf16.msra.mxu0 0
        %8354 = vmatprep.subr.bf16.mxu0 0
        %8355 = vmatpush1.bf16.msra.mxu0 0
        %8356 = vmatprep.subr.bf16.mxu0 0
        %8357 = vmatpush1.bf16.msra.mxu0 0
        %8358 = vmatprep.subr.bf16.mxu0 0
        %8359 = vmatpush1.bf16.msra.mxu0 %v8340
        %8360 = vmatprep.subr.bf16.mxu0 0
        %8361 = vmatpush1.bf16.msra.mxu0 %v8339
        %8362 = vmatprep.subr.bf16.mxu0 0
        %8363 = vmatpush2.bf16.msra.mxu0 0
        %8364 = vmatprep.subr.bf16.mxu0 0
        %8365 = vmatpush2.bf16.msra.mxu0 0
        %8366 = vmatprep.subr.bf16.mxu0 0
        %8367 = vmatpush2.bf16.msra.mxu0 0
        %8368 = vmatprep.subr.bf16.mxu0 0
        %8369 = vmatpush2.bf16.msra.mxu0 0
        %8370 = vmatprep.subr.bf16.mxu0 0
        %8371 = vmatpush2.bf16.msra.mxu0 0
        %8372 = vmatprep.subr.bf16.mxu0 0
        %8373 = vmatpush2.bf16.msra.mxu0 0
        %8374 = vmatprep.subr.bf16.mxu0 0
        %8375 = vmatpush2.bf16.msra.mxu0 0
        %8376 = vmatprep.subr.bf16.mxu0 0
        %8377 = vmatpush2.bf16.msra.mxu0 0
        %8378 = vmatprep.mubr.bf16.mxu0 0
        %8379 = vmatmul.mubr.bf16.gmra.mxu0 %v8344
        %v8380 = vpop.f32.mrf.mxu0
        %v8381 = vadd.f32 0.0, %v8380
        %v8382 = vpop.f32.mrf.mxu0
        %v8383 = vpop.f32.mrf.mxu0
        %v8384 = vadd.f32 0.0, %v8383
        %v8385 = vpop.f32.mrf.mxu0
        %8386 = vdwg.mxu0
        %v8387 = vadd.f32 %v8324, %v8381
        %v8388 = vadd.f32 %v8325, %v8384
        %s8389 = scalar_lea.vmem %s7, 160
        %v8390 = vld [vmem:[%s8389] sm:$0xf]
        %v8391 = vld [vmem:[%s8389 + $0x4] sm:$0xf]
        %v8392 = vld [vmem:[%s8389 + $0x8] sm:$0xf]
        %v8393 = vld [vmem:[%s8389 + $0xc] sm:$0xf]
        %v8398 = vunpack.c.l.b16 %v8390
        %v8399 = vunpack.c.l.b16 %v8391
        %v8400 = vunpack.c.l.b16 %v8392
        %v8401 = vunpack.c.l.b16 %v8393
        %v8402 = vpack.c.b16 %v8399, %v8398
        %v8403 = vpack.c.b16 %v8401, %v8400
        %v8407 = vsel %vm7784, %v7748, 0
        %8409 = vmatprep.subr.bf16.mxu0 0
        %8410 = vmatpush1.bf16.msra.mxu0 0
        %8411 = vmatprep.subr.bf16.mxu0 0
        %8412 = vmatpush1.bf16.msra.mxu0 0
        %8413 = vmatprep.subr.bf16.mxu0 0
        %8414 = vmatpush1.bf16.msra.mxu0 0
        %8415 = vmatprep.subr.bf16.mxu0 0
        %8416 = vmatpush1.bf16.msra.mxu0 0
        %8417 = vmatprep.subr.bf16.mxu0 0
        %8418 = vmatpush1.bf16.msra.mxu0 0
        %8419 = vmatprep.subr.bf16.mxu0 0
        %8420 = vmatpush1.bf16.msra.mxu0 0
        %8421 = vmatprep.subr.bf16.mxu0 0
        %8422 = vmatpush1.bf16.msra.mxu0 %v8403
        %8423 = vmatprep.subr.bf16.mxu0 0
        %8424 = vmatpush1.bf16.msra.mxu0 %v8402
        %8425 = vmatprep.subr.bf16.mxu0 0
        %8426 = vmatpush2.bf16.msra.mxu0 0
        %8427 = vmatprep.subr.bf16.mxu0 0
        %8428 = vmatpush2.bf16.msra.mxu0 0
        %8429 = vmatprep.subr.bf16.mxu0 0
        %8430 = vmatpush2.bf16.msra.mxu0 0
        %8431 = vmatprep.subr.bf16.mxu0 0
        %8432 = vmatpush2.bf16.msra.mxu0 0
        %8433 = vmatprep.subr.bf16.mxu0 0
        %8434 = vmatpush2.bf16.msra.mxu0 0
        %8435 = vmatprep.subr.bf16.mxu0 0
        %8436 = vmatpush2.bf16.msra.mxu0 0
        %8437 = vmatprep.subr.bf16.mxu0 0
        %8438 = vmatpush2.bf16.msra.mxu0 0
        %8439 = vmatprep.subr.bf16.mxu0 0
        %8440 = vmatpush2.bf16.msra.mxu0 0
        %8441 = vmatprep.mubr.bf16.mxu0 0
        %8442 = vmatmul.mubr.bf16.gmra.mxu0 %v8407
        %v8443 = vpop.f32.mrf.mxu0
        %v8444 = vadd.f32 0.0, %v8443
        %v8445 = vpop.f32.mrf.mxu0
        %v8446 = vpop.f32.mrf.mxu0
        %v8447 = vadd.f32 0.0, %v8446
        %v8448 = vpop.f32.mrf.mxu0
        %8449 = vdwg.mxu0
        %v8450 = vadd.f32 %v8387, %v8444
        %v8451 = vadd.f32 %v8388, %v8447
        %s8452 = scalar_lea.vmem %s7, 176
        %v8453 = vld [vmem:[%s8452] sm:$0xf]
        %v8454 = vld [vmem:[%s8452 + $0x4] sm:$0xf]
        %v8455 = vld [vmem:[%s8452 + $0x8] sm:$0xf]
        %v8456 = vld [vmem:[%s8452 + $0xc] sm:$0xf]
        %v8461 = vunpack.c.l.b16 %v8453
        %v8462 = vunpack.c.l.b16 %v8454
        %v8463 = vunpack.c.l.b16 %v8455
        %v8464 = vunpack.c.l.b16 %v8456
        %v8465 = vpack.c.b16 %v8462, %v8461
        %v8466 = vpack.c.b16 %v8464, %v8463
        %v8470 = vsel %vm7784, %v7749, 0
        %8472 = vmatprep.subr.bf16.mxu0 0
        %8473 = vmatpush1.bf16.msra.mxu0 0
        %8474 = vmatprep.subr.bf16.mxu0 0
        %8475 = vmatpush1.bf16.msra.mxu0 0
        %8476 = vmatprep.subr.bf16.mxu0 0
        %8477 = vmatpush1.bf16.msra.mxu0 0
        %8478 = vmatprep.subr.bf16.mxu0 0
        %8479 = vmatpush1.bf16.msra.mxu0 0
        %8480 = vmatprep.subr.bf16.mxu0 0
        %8481 = vmatpush1.bf16.msra.mxu0 0
        %8482 = vmatprep.subr.bf16.mxu0 0
        %8483 = vmatpush1.bf16.msra.mxu0 0
        %8484 = vmatprep.subr.bf16.mxu0 0
        %8485 = vmatpush1.bf16.msra.mxu0 %v8466
        %8486 = vmatprep.subr.bf16.mxu0 0
        %8487 = vmatpush1.bf16.msra.mxu0 %v8465
        %8488 = vmatprep.subr.bf16.mxu0 0
        %8489 = vmatpush2.bf16.msra.mxu0 0
        %8490 = vmatprep.subr.bf16.mxu0 0
        %8491 = vmatpush2.bf16.msra.mxu0 0
        %8492 = vmatprep.subr.bf16.mxu0 0
        %8493 = vmatpush2.bf16.msra.mxu0 0
        %8494 = vmatprep.subr.bf16.mxu0 0
        %8495 = vmatpush2.bf16.msra.mxu0 0
        %8496 = vmatprep.subr.bf16.mxu0 0
        %8497 = vmatpush2.bf16.msra.mxu0 0
        %8498 = vmatprep.subr.bf16.mxu0 0
        %8499 = vmatpush2.bf16.msra.mxu0 0
        %8500 = vmatprep.subr.bf16.mxu0 0
        %8501 = vmatpush2.bf16.msra.mxu0 0
        %8502 = vmatprep.subr.bf16.mxu0 0
        %8503 = vmatpush2.bf16.msra.mxu0 0
        %8504 = vmatprep.mubr.bf16.mxu0 0
        %8505 = vmatmul.mubr.bf16.gmra.mxu0 %v8470
        %v8506 = vpop.f32.mrf.mxu0
        %v8507 = vadd.f32 0.0, %v8506
        %v8508 = vpop.f32.mrf.mxu0
        %v8509 = vpop.f32.mrf.mxu0
        %v8510 = vadd.f32 0.0, %v8509
        %v8511 = vpop.f32.mrf.mxu0
        %8512 = vdwg.mxu0
        %v8513 = vadd.f32 %v8450, %v8507
        %v8514 = vadd.f32 %v8451, %v8510
        %s8515 = scalar_lea.vmem %s7, 192
        %v8516 = vld [vmem:[%s8515] sm:$0xf]
        %v8517 = vld [vmem:[%s8515 + $0x4] sm:$0xf]
        %v8518 = vld [vmem:[%s8515 + $0x8] sm:$0xf]
        %v8519 = vld [vmem:[%s8515 + $0xc] sm:$0xf]
        %v8524 = vunpack.c.l.b16 %v8516
        %v8525 = vunpack.c.l.b16 %v8517
        %v8526 = vunpack.c.l.b16 %v8518
        %v8527 = vunpack.c.l.b16 %v8519
        %v8528 = vpack.c.b16 %v8525, %v8524
        %v8529 = vpack.c.b16 %v8527, %v8526
        %v8533 = vsel %vm7784, %v7750, 0
        %8535 = vmatprep.subr.bf16.mxu0 0
        %8536 = vmatpush1.bf16.msra.mxu0 0
        %8537 = vmatprep.subr.bf16.mxu0 0
        %8538 = vmatpush1.bf16.msra.mxu0 0
        %8539 = vmatprep.subr.bf16.mxu0 0
        %8540 = vmatpush1.bf16.msra.mxu0 0
        %8541 = vmatprep.subr.bf16.mxu0 0
        %8542 = vmatpush1.bf16.msra.mxu0 0
        %8543 = vmatprep.subr.bf16.mxu0 0
        %8544 = vmatpush1.bf16.msra.mxu0 0
        %8545 = vmatprep.subr.bf16.mxu0 0
        %8546 = vmatpush1.bf16.msra.mxu0 0
        %8547 = vmatprep.subr.bf16.mxu0 0
        %8548 = vmatpush1.bf16.msra.mxu0 %v8529
        %8549 = vmatprep.subr.bf16.mxu0 0
        %8550 = vmatpush1.bf16.msra.mxu0 %v8528
        %8551 = vmatprep.subr.bf16.mxu0 0
        %8552 = vmatpush2.bf16.msra.mxu0 0
        %8553 = vmatprep.subr.bf16.mxu0 0
        %8554 = vmatpush2.bf16.msra.mxu0 0
        %8555 = vmatprep.subr.bf16.mxu0 0
        %8556 = vmatpush2.bf16.msra.mxu0 0
        %8557 = vmatprep.subr.bf16.mxu0 0
        %8558 = vmatpush2.bf16.msra.mxu0 0
        %8559 = vmatprep.subr.bf16.mxu0 0
        %8560 = vmatpush2.bf16.msra.mxu0 0
        %8561 = vmatprep.subr.bf16.mxu0 0
        %8562 = vmatpush2.bf16.msra.mxu0 0
        %8563 = vmatprep.subr.bf16.mxu0 0
        %8564 = vmatpush2.bf16.msra.mxu0 0
        %8565 = vmatprep.subr.bf16.mxu0 0
        %8566 = vmatpush2.bf16.msra.mxu0 0
        %8567 = vmatprep.mubr.bf16.mxu0 0
        %8568 = vmatmul.mubr.bf16.gmra.mxu0 %v8533
        %v8569 = vpop.f32.mrf.mxu0
        %v8570 = vadd.f32 0.0, %v8569
        %v8571 = vpop.f32.mrf.mxu0
        %v8572 = vpop.f32.mrf.mxu0
        %v8573 = vadd.f32 0.0, %v8572
        %v8574 = vpop.f32.mrf.mxu0
        %8575 = vdwg.mxu0
        %v8576 = vadd.f32 %v8513, %v8570
        %v8577 = vadd.f32 %v8514, %v8573
        %s8578 = scalar_lea.vmem %s7, 208
        %v8579 = vld [vmem:[%s8578] sm:$0xf]
        %v8580 = vld [vmem:[%s8578 + $0x4] sm:$0xf]
        %v8581 = vld [vmem:[%s8578 + $0x8] sm:$0xf]
        %v8582 = vld [vmem:[%s8578 + $0xc] sm:$0xf]
        %v8587 = vunpack.c.l.b16 %v8579
        %v8588 = vunpack.c.l.b16 %v8580
        %v8589 = vunpack.c.l.b16 %v8581
        %v8590 = vunpack.c.l.b16 %v8582
        %v8591 = vpack.c.b16 %v8588, %v8587
        %v8592 = vpack.c.b16 %v8590, %v8589
        %v8596 = vsel %vm7784, %v7751, 0
        %8598 = vmatprep.subr.bf16.mxu0 0
        %8599 = vmatpush1.bf16.msra.mxu0 0
        %8600 = vmatprep.subr.bf16.mxu0 0
        %8601 = vmatpush1.bf16.msra.mxu0 0
        %8602 = vmatprep.subr.bf16.mxu0 0
        %8603 = vmatpush1.bf16.msra.mxu0 0
        %8604 = vmatprep.subr.bf16.mxu0 0
        %8605 = vmatpush1.bf16.msra.mxu0 0
        %8606 = vmatprep.subr.bf16.mxu0 0
        %8607 = vmatpush1.bf16.msra.mxu0 0
        %8608 = vmatprep.subr.bf16.mxu0 0
        %8609 = vmatpush1.bf16.msra.mxu0 0
        %8610 = vmatprep.subr.bf16.mxu0 0
        %8611 = vmatpush1.bf16.msra.mxu0 %v8592
        %8612 = vmatprep.subr.bf16.mxu0 0
        %8613 = vmatpush1.bf16.msra.mxu0 %v8591
        %8614 = vmatprep.subr.bf16.mxu0 0
        %8615 = vmatpush2.bf16.msra.mxu0 0
        %8616 = vmatprep.subr.bf16.mxu0 0
        %8617 = vmatpush2.bf16.msra.mxu0 0
        %8618 = vmatprep.subr.bf16.mxu0 0
        %8619 = vmatpush2.bf16.msra.mxu0 0
        %8620 = vmatprep.subr.bf16.mxu0 0
        %8621 = vmatpush2.bf16.msra.mxu0 0
        %8622 = vmatprep.subr.bf16.mxu0 0
        %8623 = vmatpush2.bf16.msra.mxu0 0
        %8624 = vmatprep.subr.bf16.mxu0 0
        %8625 = vmatpush2.bf16.msra.mxu0 0
        %8626 = vmatprep.subr.bf16.mxu0 0
        %8627 = vmatpush2.bf16.msra.mxu0 0
        %8628 = vmatprep.subr.bf16.mxu0 0
        %8629 = vmatpush2.bf16.msra.mxu0 0
        %8630 = vmatprep.mubr.bf16.mxu0 0
        %8631 = vmatmul.mubr.bf16.gmra.mxu0 %v8596
        %v8632 = vpop.f32.mrf.mxu0
        %v8633 = vadd.f32 0.0, %v8632
        %v8634 = vpop.f32.mrf.mxu0
        %v8635 = vpop.f32.mrf.mxu0
        %v8636 = vadd.f32 0.0, %v8635
        %v8637 = vpop.f32.mrf.mxu0
        %8638 = vdwg.mxu0
        %v8639 = vadd.f32 %v8576, %v8633
        %v8640 = vadd.f32 %v8577, %v8636
        %s8641 = scalar_lea.vmem %s7, 224
        %v8642 = vld [vmem:[%s8641] sm:$0xf]
        %v8643 = vld [vmem:[%s8641 + $0x4] sm:$0xf]
        %v8644 = vld [vmem:[%s8641 + $0x8] sm:$0xf]
        %v8645 = vld [vmem:[%s8641 + $0xc] sm:$0xf]
        %v8650 = vunpack.c.l.b16 %v8642
        %v8651 = vunpack.c.l.b16 %v8643
        %v8652 = vunpack.c.l.b16 %v8644
        %v8653 = vunpack.c.l.b16 %v8645
        %v8654 = vpack.c.b16 %v8651, %v8650
        %v8655 = vpack.c.b16 %v8653, %v8652
        %v8659 = vsel %vm7784, %v7752, 0
        %8661 = vmatprep.subr.bf16.mxu0 0
        %8662 = vmatpush1.bf16.msra.mxu0 0
        %8663 = vmatprep.subr.bf16.mxu0 0
        %8664 = vmatpush1.bf16.msra.mxu0 0
        %8665 = vmatprep.subr.bf16.mxu0 0
        %8666 = vmatpush1.bf16.msra.mxu0 0
        %8667 = vmatprep.subr.bf16.mxu0 0
        %8668 = vmatpush1.bf16.msra.mxu0 0
        %8669 = vmatprep.subr.bf16.mxu0 0
        %8670 = vmatpush1.bf16.msra.mxu0 0
        %8671 = vmatprep.subr.bf16.mxu0 0
        %8672 = vmatpush1.bf16.msra.mxu0 0
        %8673 = vmatprep.subr.bf16.mxu0 0
        %8674 = vmatpush1.bf16.msra.mxu0 %v8655
        %8675 = vmatprep.subr.bf16.mxu0 0
        %8676 = vmatpush1.bf16.msra.mxu0 %v8654
        %8677 = vmatprep.subr.bf16.mxu0 0
        %8678 = vmatpush2.bf16.msra.mxu0 0
        %8679 = vmatprep.subr.bf16.mxu0 0
        %8680 = vmatpush2.bf16.msra.mxu0 0
        %8681 = vmatprep.subr.bf16.mxu0 0
        %8682 = vmatpush2.bf16.msra.mxu0 0
        %8683 = vmatprep.subr.bf16.mxu0 0
        %8684 = vmatpush2.bf16.msra.mxu0 0
        %8685 = vmatprep.subr.bf16.mxu0 0
        %8686 = vmatpush2.bf16.msra.mxu0 0
        %8687 = vmatprep.subr.bf16.mxu0 0
        %8688 = vmatpush2.bf16.msra.mxu0 0
        %8689 = vmatprep.subr.bf16.mxu0 0
        %8690 = vmatpush2.bf16.msra.mxu0 0
        %8691 = vmatprep.subr.bf16.mxu0 0
        %8692 = vmatpush2.bf16.msra.mxu0 0
        %8693 = vmatprep.mubr.bf16.mxu0 0
        %8694 = vmatmul.mubr.bf16.gmra.mxu0 %v8659
        %v8695 = vpop.f32.mrf.mxu0
        %v8696 = vadd.f32 0.0, %v8695
        %v8697 = vpop.f32.mrf.mxu0
        %v8698 = vpop.f32.mrf.mxu0
        %v8699 = vadd.f32 0.0, %v8698
        %v8700 = vpop.f32.mrf.mxu0
        %8701 = vdwg.mxu0
        %v8702 = vadd.f32 %v8639, %v8696
        %v8703 = vadd.f32 %v8640, %v8699
        %s8704 = scalar_lea.vmem %s7, 240
        %v8705 = vld [vmem:[%s8704] sm:$0xf]
        %v8706 = vld [vmem:[%s8704 + $0x4] sm:$0xf]
        %v8707 = vld [vmem:[%s8704 + $0x8] sm:$0xf]
        %v8708 = vld [vmem:[%s8704 + $0xc] sm:$0xf]
        %v8713 = vunpack.c.l.b16 %v8705
        %v8714 = vunpack.c.l.b16 %v8706
        %v8715 = vunpack.c.l.b16 %v8707
        %v8716 = vunpack.c.l.b16 %v8708
        %v8717 = vpack.c.b16 %v8714, %v8713
        %v8718 = vpack.c.b16 %v8716, %v8715
        %v8722 = vsel %vm7784, %v7753, 0
        %8724 = vmatprep.subr.bf16.mxu0 0
        %8725 = vmatpush1.bf16.msra.mxu0 0
        %8726 = vmatprep.subr.bf16.mxu0 0
        %8727 = vmatpush1.bf16.msra.mxu0 0
        %8728 = vmatprep.subr.bf16.mxu0 0
        %8729 = vmatpush1.bf16.msra.mxu0 0
        %8730 = vmatprep.subr.bf16.mxu0 0
        %8731 = vmatpush1.bf16.msra.mxu0 0
        %8732 = vmatprep.subr.bf16.mxu0 0
        %8733 = vmatpush1.bf16.msra.mxu0 0
        %8734 = vmatprep.subr.bf16.mxu0 0
        %8735 = vmatpush1.bf16.msra.mxu0 0
        %8736 = vmatprep.subr.bf16.mxu0 0
        %8737 = vmatpush1.bf16.msra.mxu0 %v8718
        %8738 = vmatprep.subr.bf16.mxu0 0
        %8739 = vmatpush1.bf16.msra.mxu0 %v8717
        %8740 = vmatprep.subr.bf16.mxu0 0
        %8741 = vmatpush2.bf16.msra.mxu0 0
        %8742 = vmatprep.subr.bf16.mxu0 0
        %8743 = vmatpush2.bf16.msra.mxu0 0
        %8744 = vmatprep.subr.bf16.mxu0 0
        %8745 = vmatpush2.bf16.msra.mxu0 0
        %8746 = vmatprep.subr.bf16.mxu0 0
        %8747 = vmatpush2.bf16.msra.mxu0 0
        %8748 = vmatprep.subr.bf16.mxu0 0
        %8749 = vmatpush2.bf16.msra.mxu0 0
        %8750 = vmatprep.subr.bf16.mxu0 0
        %8751 = vmatpush2.bf16.msra.mxu0 0
        %8752 = vmatprep.subr.bf16.mxu0 0
        %8753 = vmatpush2.bf16.msra.mxu0 0
        %8754 = vmatprep.subr.bf16.mxu0 0
        %8755 = vmatpush2.bf16.msra.mxu0 0
        %8756 = vmatprep.mubr.bf16.mxu0 0
        %8757 = vmatmul.mubr.bf16.gmra.mxu0 %v8722
        %v8758 = vpop.f32.mrf.mxu0
        %v8759 = vadd.f32 0.0, %v8758
        %v8760 = vpop.f32.mrf.mxu0
        %v8761 = vpop.f32.mrf.mxu0
        %v8762 = vadd.f32 0.0, %v8761
        %v8763 = vpop.f32.mrf.mxu0
        %8764 = vdwg.mxu0
        %v8765 = vadd.f32 %v8702, %v8759
        %v8766 = vadd.f32 %v8703, %v8762
        %s8767 = scalar_lea.vmem %s7, 256
        %v8768 = vld [vmem:[%s8767] sm:$0xf]
        %v8769 = vld [vmem:[%s8767 + $0x4] sm:$0xf]
        %v8770 = vld [vmem:[%s8767 + $0x8] sm:$0xf]
        %v8771 = vld [vmem:[%s8767 + $0xc] sm:$0xf]
        %v8776 = vunpack.c.l.b16 %v8768
        %v8777 = vunpack.c.l.b16 %v8769
        %v8778 = vunpack.c.l.b16 %v8770
        %v8779 = vunpack.c.l.b16 %v8771
        %v8780 = vpack.c.b16 %v8777, %v8776
        %v8781 = vpack.c.b16 %v8779, %v8778
        %v8785 = vsel %vm7784, %v7754, 0
        %8787 = vmatprep.subr.bf16.mxu0 0
        %8788 = vmatpush1.bf16.msra.mxu0 0
        %8789 = vmatprep.subr.bf16.mxu0 0
        %8790 = vmatpush1.bf16.msra.mxu0 0
        %8791 = vmatprep.subr.bf16.mxu0 0
        %8792 = vmatpush1.bf16.msra.mxu0 0
        %8793 = vmatprep.subr.bf16.mxu0 0
        %8794 = vmatpush1.bf16.msra.mxu0 0
        %8795 = vmatprep.subr.bf16.mxu0 0
        %8796 = vmatpush1.bf16.msra.mxu0 0
        %8797 = vmatprep.subr.bf16.mxu0 0
        %8798 = vmatpush1.bf16.msra.mxu0 0
        %8799 = vmatprep.subr.bf16.mxu0 0
        %8800 = vmatpush1.bf16.msra.mxu0 %v8781
        %8801 = vmatprep.subr.bf16.mxu0 0
        %8802 = vmatpush1.bf16.msra.mxu0 %v8780
        %8803 = vmatprep.subr.bf16.mxu0 0
        %8804 = vmatpush2.bf16.msra.mxu0 0
        %8805 = vmatprep.subr.bf16.mxu0 0
        %8806 = vmatpush2.bf16.msra.mxu0 0
        %8807 = vmatprep.subr.bf16.mxu0 0
        %8808 = vmatpush2.bf16.msra.mxu0 0
        %8809 = vmatprep.subr.bf16.mxu0 0
        %8810 = vmatpush2.bf16.msra.mxu0 0
        %8811 = vmatprep.subr.bf16.mxu0 0
        %8812 = vmatpush2.bf16.msra.mxu0 0
        %8813 = vmatprep.subr.bf16.mxu0 0
        %8814 = vmatpush2.bf16.msra.mxu0 0
        %8815 = vmatprep.subr.bf16.mxu0 0
        %8816 = vmatpush2.bf16.msra.mxu0 0
        %8817 = vmatprep.subr.bf16.mxu0 0
        %8818 = vmatpush2.bf16.msra.mxu0 0
        %8819 = vmatprep.mubr.bf16.mxu0 0
        %8820 = vmatmul.mubr.bf16.gmra.mxu0 %v8785
        %v8821 = vpop.f32.mrf.mxu0
        %v8822 = vadd.f32 0.0, %v8821
        %v8823 = vpop.f32.mrf.mxu0
        %v8824 = vpop.f32.mrf.mxu0
        %v8825 = vadd.f32 0.0, %v8824
        %v8826 = vpop.f32.mrf.mxu0
        %8827 = vdwg.mxu0
        %v8828 = vadd.f32 %v8765, %v8822
        %v8829 = vadd.f32 %v8766, %v8825
        %s8830 = scalar_lea.vmem %s7, 272
        %v8831 = vld [vmem:[%s8830] sm:$0xf]
        %v8832 = vld [vmem:[%s8830 + $0x4] sm:$0xf]
        %v8833 = vld [vmem:[%s8830 + $0x8] sm:$0xf]
        %v8834 = vld [vmem:[%s8830 + $0xc] sm:$0xf]
        %v8839 = vunpack.c.l.b16 %v8831
        %v8840 = vunpack.c.l.b16 %v8832
        %v8841 = vunpack.c.l.b16 %v8833
        %v8842 = vunpack.c.l.b16 %v8834
        %v8843 = vpack.c.b16 %v8840, %v8839
        %v8844 = vpack.c.b16 %v8842, %v8841
        %v8848 = vsel %vm7784, %v7755, 0
        %8850 = vmatprep.subr.bf16.mxu0 0
        %8851 = vmatpush1.bf16.msra.mxu0 0
        %8852 = vmatprep.subr.bf16.mxu0 0
        %8853 = vmatpush1.bf16.msra.mxu0 0
        %8854 = vmatprep.subr.bf16.mxu0 0
        %8855 = vmatpush1.bf16.msra.mxu0 0
        %8856 = vmatprep.subr.bf16.mxu0 0
        %8857 = vmatpush1.bf16.msra.mxu0 0
        %8858 = vmatprep.subr.bf16.mxu0 0
        %8859 = vmatpush1.bf16.msra.mxu0 0
        %8860 = vmatprep.subr.bf16.mxu0 0
        %8861 = vmatpush1.bf16.msra.mxu0 0
        %8862 = vmatprep.subr.bf16.mxu0 0
        %8863 = vmatpush1.bf16.msra.mxu0 %v8844
        %8864 = vmatprep.subr.bf16.mxu0 0
        %8865 = vmatpush1.bf16.msra.mxu0 %v8843
        %8866 = vmatprep.subr.bf16.mxu0 0
        %8867 = vmatpush2.bf16.msra.mxu0 0
        %8868 = vmatprep.subr.bf16.mxu0 0
        %8869 = vmatpush2.bf16.msra.mxu0 0
        %8870 = vmatprep.subr.bf16.mxu0 0
        %8871 = vmatpush2.bf16.msra.mxu0 0
        %8872 = vmatprep.subr.bf16.mxu0 0
        %8873 = vmatpush2.bf16.msra.mxu0 0
        %8874 = vmatprep.subr.bf16.mxu0 0
        %8875 = vmatpush2.bf16.msra.mxu0 0
        %8876 = vmatprep.subr.bf16.mxu0 0
        %8877 = vmatpush2.bf16.msra.mxu0 0
        %8878 = vmatprep.subr.bf16.mxu0 0
        %8879 = vmatpush2.bf16.msra.mxu0 0
        %8880 = vmatprep.subr.bf16.mxu0 0
        %8881 = vmatpush2.bf16.msra.mxu0 0
        %8882 = vmatprep.mubr.bf16.mxu0 0
        %8883 = vmatmul.mubr.bf16.gmra.mxu0 %v8848
        %v8884 = vpop.f32.mrf.mxu0
        %v8885 = vadd.f32 0.0, %v8884
        %v8886 = vpop.f32.mrf.mxu0
        %v8887 = vpop.f32.mrf.mxu0
        %v8888 = vadd.f32 0.0, %v8887
        %v8889 = vpop.f32.mrf.mxu0
        %8890 = vdwg.mxu0
        %v8891 = vadd.f32 %v8828, %v8885
        %v8892 = vadd.f32 %v8829, %v8888
        %s8893 = scalar_lea.vmem %s7, 288
        %v8894 = vld [vmem:[%s8893] sm:$0xf]
        %v8895 = vld [vmem:[%s8893 + $0x4] sm:$0xf]
        %v8896 = vld [vmem:[%s8893 + $0x8] sm:$0xf]
        %v8897 = vld [vmem:[%s8893 + $0xc] sm:$0xf]
        %v8902 = vunpack.c.l.b16 %v8894
        %v8903 = vunpack.c.l.b16 %v8895
        %v8904 = vunpack.c.l.b16 %v8896
        %v8905 = vunpack.c.l.b16 %v8897
        %v8906 = vpack.c.b16 %v8903, %v8902
        %v8907 = vpack.c.b16 %v8905, %v8904
        %v8911 = vsel %vm7784, %v7756, 0
        %8913 = vmatprep.subr.bf16.mxu0 0
        %8914 = vmatpush1.bf16.msra.mxu0 0
        %8915 = vmatprep.subr.bf16.mxu0 0
        %8916 = vmatpush1.bf16.msra.mxu0 0
        %8917 = vmatprep.subr.bf16.mxu0 0
        %8918 = vmatpush1.bf16.msra.mxu0 0
        %8919 = vmatprep.subr.bf16.mxu0 0
        %8920 = vmatpush1.bf16.msra.mxu0 0
        %8921 = vmatprep.subr.bf16.mxu0 0
        %8922 = vmatpush1.bf16.msra.mxu0 0
        %8923 = vmatprep.subr.bf16.mxu0 0
        %8924 = vmatpush1.bf16.msra.mxu0 0
        %8925 = vmatprep.subr.bf16.mxu0 0
        %8926 = vmatpush1.bf16.msra.mxu0 %v8907
        %8927 = vmatprep.subr.bf16.mxu0 0
        %8928 = vmatpush1.bf16.msra.mxu0 %v8906
        %8929 = vmatprep.subr.bf16.mxu0 0
        %8930 = vmatpush2.bf16.msra.mxu0 0
        %8931 = vmatprep.subr.bf16.mxu0 0
        %8932 = vmatpush2.bf16.msra.mxu0 0
        %8933 = vmatprep.subr.bf16.mxu0 0
        %8934 = vmatpush2.bf16.msra.mxu0 0
        %8935 = vmatprep.subr.bf16.mxu0 0
        %8936 = vmatpush2.bf16.msra.mxu0 0
        %8937 = vmatprep.subr.bf16.mxu0 0
        %8938 = vmatpush2.bf16.msra.mxu0 0
        %8939 = vmatprep.subr.bf16.mxu0 0
        %8940 = vmatpush2.bf16.msra.mxu0 0
        %8941 = vmatprep.subr.bf16.mxu0 0
        %8942 = vmatpush2.bf16.msra.mxu0 0
        %8943 = vmatprep.subr.bf16.mxu0 0
        %8944 = vmatpush2.bf16.msra.mxu0 0
        %8945 = vmatprep.mubr.bf16.mxu0 0
        %8946 = vmatmul.mubr.bf16.gmra.mxu0 %v8911
        %v8947 = vpop.f32.mrf.mxu0
        %v8948 = vadd.f32 0.0, %v8947
        %v8949 = vpop.f32.mrf.mxu0
        %v8950 = vpop.f32.mrf.mxu0
        %v8951 = vadd.f32 0.0, %v8950
        %v8952 = vpop.f32.mrf.mxu0
        %8953 = vdwg.mxu0
        %v8954 = vadd.f32 %v8891, %v8948
        %v8955 = vadd.f32 %v8892, %v8951
        %s8956 = scalar_lea.vmem %s7, 304
        %v8957 = vld [vmem:[%s8956] sm:$0xf]
        %v8958 = vld [vmem:[%s8956 + $0x4] sm:$0xf]
        %v8959 = vld [vmem:[%s8956 + $0x8] sm:$0xf]
        %v8960 = vld [vmem:[%s8956 + $0xc] sm:$0xf]
        %v8965 = vunpack.c.l.b16 %v8957
        %v8966 = vunpack.c.l.b16 %v8958
        %v8967 = vunpack.c.l.b16 %v8959
        %v8968 = vunpack.c.l.b16 %v8960
        %v8969 = vpack.c.b16 %v8966, %v8965
        %v8970 = vpack.c.b16 %v8968, %v8967
        %v8974 = vsel %vm7784, %v7757, 0
        %8976 = vmatprep.subr.bf16.mxu0 0
        %8977 = vmatpush1.bf16.msra.mxu0 0
        %8978 = vmatprep.subr.bf16.mxu0 0
        %8979 = vmatpush1.bf16.msra.mxu0 0
        %8980 = vmatprep.subr.bf16.mxu0 0
        %8981 = vmatpush1.bf16.msra.mxu0 0
        %8982 = vmatprep.subr.bf16.mxu0 0
        %8983 = vmatpush1.bf16.msra.mxu0 0
        %8984 = vmatprep.subr.bf16.mxu0 0
        %8985 = vmatpush1.bf16.msra.mxu0 0
        %8986 = vmatprep.subr.bf16.mxu0 0
        %8987 = vmatpush1.bf16.msra.mxu0 0
        %8988 = vmatprep.subr.bf16.mxu0 0
        %8989 = vmatpush1.bf16.msra.mxu0 %v8970
        %8990 = vmatprep.subr.bf16.mxu0 0
        %8991 = vmatpush1.bf16.msra.mxu0 %v8969
        %8992 = vmatprep.subr.bf16.mxu0 0
        %8993 = vmatpush2.bf16.msra.mxu0 0
        %8994 = vmatprep.subr.bf16.mxu0 0
        %8995 = vmatpush2.bf16.msra.mxu0 0
        %8996 = vmatprep.subr.bf16.mxu0 0
        %8997 = vmatpush2.bf16.msra.mxu0 0
        %8998 = vmatprep.subr.bf16.mxu0 0
        %8999 = vmatpush2.bf16.msra.mxu0 0
        %9000 = vmatprep.subr.bf16.mxu0 0
        %9001 = vmatpush2.bf16.msra.mxu0 0
        %9002 = vmatprep.subr.bf16.mxu0 0
        %9003 = vmatpush2.bf16.msra.mxu0 0
        %9004 = vmatprep.subr.bf16.mxu0 0
        %9005 = vmatpush2.bf16.msra.mxu0 0
        %9006 = vmatprep.subr.bf16.mxu0 0
        %9007 = vmatpush2.bf16.msra.mxu0 0
        %9008 = vmatprep.mubr.bf16.mxu0 0
        %9009 = vmatmul.mubr.bf16.gmra.mxu0 %v8974
        %v9010 = vpop.f32.mrf.mxu0
        %v9011 = vadd.f32 0.0, %v9010
        %v9012 = vpop.f32.mrf.mxu0
        %v9013 = vpop.f32.mrf.mxu0
        %v9014 = vadd.f32 0.0, %v9013
        %v9015 = vpop.f32.mrf.mxu0
        %9016 = vdwg.mxu0
        %v9017 = vadd.f32 %v8954, %v9011
        %v9018 = vadd.f32 %v8955, %v9014
        %s9019 = scalar_lea.vmem %s7, 320
        %v9020 = vld [vmem:[%s9019] sm:$0xf]
        %v9021 = vld [vmem:[%s9019 + $0x4] sm:$0xf]
        %v9022 = vld [vmem:[%s9019 + $0x8] sm:$0xf]
        %v9023 = vld [vmem:[%s9019 + $0xc] sm:$0xf]
        %v9028 = vunpack.c.l.b16 %v9020
        %v9029 = vunpack.c.l.b16 %v9021
        %v9030 = vunpack.c.l.b16 %v9022
        %v9031 = vunpack.c.l.b16 %v9023
        %v9032 = vpack.c.b16 %v9029, %v9028
        %v9033 = vpack.c.b16 %v9031, %v9030
        %v9037 = vsel %vm7784, %v7758, 0
        %9039 = vmatprep.subr.bf16.mxu0 0
        %9040 = vmatpush1.bf16.msra.mxu0 0
        %9041 = vmatprep.subr.bf16.mxu0 0
        %9042 = vmatpush1.bf16.msra.mxu0 0
        %9043 = vmatprep.subr.bf16.mxu0 0
        %9044 = vmatpush1.bf16.msra.mxu0 0
        %9045 = vmatprep.subr.bf16.mxu0 0
        %9046 = vmatpush1.bf16.msra.mxu0 0
        %9047 = vmatprep.subr.bf16.mxu0 0
        %9048 = vmatpush1.bf16.msra.mxu0 0
        %9049 = vmatprep.subr.bf16.mxu0 0
        %9050 = vmatpush1.bf16.msra.mxu0 0
        %9051 = vmatprep.subr.bf16.mxu0 0
        %9052 = vmatpush1.bf16.msra.mxu0 %v9033
        %9053 = vmatprep.subr.bf16.mxu0 0
        %9054 = vmatpush1.bf16.msra.mxu0 %v9032
        %9055 = vmatprep.subr.bf16.mxu0 0
        %9056 = vmatpush2.bf16.msra.mxu0 0
        %9057 = vmatprep.subr.bf16.mxu0 0
        %9058 = vmatpush2.bf16.msra.mxu0 0
        %9059 = vmatprep.subr.bf16.mxu0 0
        %9060 = vmatpush2.bf16.msra.mxu0 0
        %9061 = vmatprep.subr.bf16.mxu0 0
        %9062 = vmatpush2.bf16.msra.mxu0 0
        %9063 = vmatprep.subr.bf16.mxu0 0
        %9064 = vmatpush2.bf16.msra.mxu0 0
        %9065 = vmatprep.subr.bf16.mxu0 0
        %9066 = vmatpush2.bf16.msra.mxu0 0
        %9067 = vmatprep.subr.bf16.mxu0 0
        %9068 = vmatpush2.bf16.msra.mxu0 0
        %9069 = vmatprep.subr.bf16.mxu0 0
        %9070 = vmatpush2.bf16.msra.mxu0 0
        %9071 = vmatprep.mubr.bf16.mxu0 0
        %9072 = vmatmul.mubr.bf16.gmra.mxu0 %v9037
        %v9073 = vpop.f32.mrf.mxu0
        %v9074 = vadd.f32 0.0, %v9073
        %v9075 = vpop.f32.mrf.mxu0
        %v9076 = vpop.f32.mrf.mxu0
        %v9077 = vadd.f32 0.0, %v9076
        %v9078 = vpop.f32.mrf.mxu0
        %9079 = vdwg.mxu0
        %v9080 = vadd.f32 %v9017, %v9074
        %v9081 = vadd.f32 %v9018, %v9077
        %s9082 = scalar_lea.vmem %s7, 336
        %v9083 = vld [vmem:[%s9082] sm:$0xf]
        %v9084 = vld [vmem:[%s9082 + $0x4] sm:$0xf]
        %v9085 = vld [vmem:[%s9082 + $0x8] sm:$0xf]
        %v9086 = vld [vmem:[%s9082 + $0xc] sm:$0xf]
        %v9091 = vunpack.c.l.b16 %v9083
        %v9092 = vunpack.c.l.b16 %v9084
        %v9093 = vunpack.c.l.b16 %v9085
        %v9094 = vunpack.c.l.b16 %v9086
        %v9095 = vpack.c.b16 %v9092, %v9091
        %v9096 = vpack.c.b16 %v9094, %v9093
        %v9100 = vsel %vm7784, %v7759, 0
        %9102 = vmatprep.subr.bf16.mxu0 0
        %9103 = vmatpush1.bf16.msra.mxu0 0
        %9104 = vmatprep.subr.bf16.mxu0 0
        %9105 = vmatpush1.bf16.msra.mxu0 0
        %9106 = vmatprep.subr.bf16.mxu0 0
        %9107 = vmatpush1.bf16.msra.mxu0 0
        %9108 = vmatprep.subr.bf16.mxu0 0
        %9109 = vmatpush1.bf16.msra.mxu0 0
        %9110 = vmatprep.subr.bf16.mxu0 0
        %9111 = vmatpush1.bf16.msra.mxu0 0
        %9112 = vmatprep.subr.bf16.mxu0 0
        %9113 = vmatpush1.bf16.msra.mxu0 0
        %9114 = vmatprep.subr.bf16.mxu0 0
        %9115 = vmatpush1.bf16.msra.mxu0 %v9096
        %9116 = vmatprep.subr.bf16.mxu0 0
        %9117 = vmatpush1.bf16.msra.mxu0 %v9095
        %9118 = vmatprep.subr.bf16.mxu0 0
        %9119 = vmatpush2.bf16.msra.mxu0 0
        %9120 = vmatprep.subr.bf16.mxu0 0
        %9121 = vmatpush2.bf16.msra.mxu0 0
        %9122 = vmatprep.subr.bf16.mxu0 0
        %9123 = vmatpush2.bf16.msra.mxu0 0
        %9124 = vmatprep.subr.bf16.mxu0 0
        %9125 = vmatpush2.bf16.msra.mxu0 0
        %9126 = vmatprep.subr.bf16.mxu0 0
        %9127 = vmatpush2.bf16.msra.mxu0 0
        %9128 = vmatprep.subr.bf16.mxu0 0
        %9129 = vmatpush2.bf16.msra.mxu0 0
        %9130 = vmatprep.subr.bf16.mxu0 0
        %9131 = vmatpush2.bf16.msra.mxu0 0
        %9132 = vmatprep.subr.bf16.mxu0 0
        %9133 = vmatpush2.bf16.msra.mxu0 0
        %9134 = vmatprep.mubr.bf16.mxu0 0
        %9135 = vmatmul.mubr.bf16.gmra.mxu0 %v9100
        %v9136 = vpop.f32.mrf.mxu0
        %v9137 = vadd.f32 0.0, %v9136
        %v9138 = vpop.f32.mrf.mxu0
        %v9139 = vpop.f32.mrf.mxu0
        %v9140 = vadd.f32 0.0, %v9139
        %v9141 = vpop.f32.mrf.mxu0
        %9142 = vdwg.mxu0
        %v9143 = vadd.f32 %v9080, %v9137
        %v9144 = vadd.f32 %v9081, %v9140
        %s9145 = scalar_lea.vmem %s7, 352
        %v9146 = vld [vmem:[%s9145] sm:$0xf]
        %v9147 = vld [vmem:[%s9145 + $0x4] sm:$0xf]
        %v9148 = vld [vmem:[%s9145 + $0x8] sm:$0xf]
        %v9149 = vld [vmem:[%s9145 + $0xc] sm:$0xf]
        %v9154 = vunpack.c.l.b16 %v9146
        %v9155 = vunpack.c.l.b16 %v9147
        %v9156 = vunpack.c.l.b16 %v9148
        %v9157 = vunpack.c.l.b16 %v9149
        %v9158 = vpack.c.b16 %v9155, %v9154
        %v9159 = vpack.c.b16 %v9157, %v9156
        %v9163 = vsel %vm7784, %v7760, 0
        %9165 = vmatprep.subr.bf16.mxu0 0
        %9166 = vmatpush1.bf16.msra.mxu0 0
        %9167 = vmatprep.subr.bf16.mxu0 0
        %9168 = vmatpush1.bf16.msra.mxu0 0
        %9169 = vmatprep.subr.bf16.mxu0 0
        %9170 = vmatpush1.bf16.msra.mxu0 0
        %9171 = vmatprep.subr.bf16.mxu0 0
        %9172 = vmatpush1.bf16.msra.mxu0 0
        %9173 = vmatprep.subr.bf16.mxu0 0
        %9174 = vmatpush1.bf16.msra.mxu0 0
        %9175 = vmatprep.subr.bf16.mxu0 0
        %9176 = vmatpush1.bf16.msra.mxu0 0
        %9177 = vmatprep.subr.bf16.mxu0 0
        %9178 = vmatpush1.bf16.msra.mxu0 %v9159
        %9179 = vmatprep.subr.bf16.mxu0 0
        %9180 = vmatpush1.bf16.msra.mxu0 %v9158
        %9181 = vmatprep.subr.bf16.mxu0 0
        %9182 = vmatpush2.bf16.msra.mxu0 0
        %9183 = vmatprep.subr.bf16.mxu0 0
        %9184 = vmatpush2.bf16.msra.mxu0 0
        %9185 = vmatprep.subr.bf16.mxu0 0
        %9186 = vmatpush2.bf16.msra.mxu0 0
        %9187 = vmatprep.subr.bf16.mxu0 0
        %9188 = vmatpush2.bf16.msra.mxu0 0
        %9189 = vmatprep.subr.bf16.mxu0 0
        %9190 = vmatpush2.bf16.msra.mxu0 0
        %9191 = vmatprep.subr.bf16.mxu0 0
        %9192 = vmatpush2.bf16.msra.mxu0 0
        %9193 = vmatprep.subr.bf16.mxu0 0
        %9194 = vmatpush2.bf16.msra.mxu0 0
        %9195 = vmatprep.subr.bf16.mxu0 0
        %9196 = vmatpush2.bf16.msra.mxu0 0
        %9197 = vmatprep.mubr.bf16.mxu0 0
        %9198 = vmatmul.mubr.bf16.gmra.mxu0 %v9163
        %v9199 = vpop.f32.mrf.mxu0
        %v9200 = vadd.f32 0.0, %v9199
        %v9201 = vpop.f32.mrf.mxu0
        %v9202 = vpop.f32.mrf.mxu0
        %v9203 = vadd.f32 0.0, %v9202
        %v9204 = vpop.f32.mrf.mxu0
        %9205 = vdwg.mxu0
        %v9206 = vadd.f32 %v9143, %v9200
        %v9207 = vadd.f32 %v9144, %v9203
        %s9208 = scalar_lea.vmem %s7, 368
        %v9209 = vld [vmem:[%s9208] sm:$0xf]
        %v9210 = vld [vmem:[%s9208 + $0x4] sm:$0xf]
        %v9211 = vld [vmem:[%s9208 + $0x8] sm:$0xf]
        %v9212 = vld [vmem:[%s9208 + $0xc] sm:$0xf]
        %v9217 = vunpack.c.l.b16 %v9209
        %v9218 = vunpack.c.l.b16 %v9210
        %v9219 = vunpack.c.l.b16 %v9211
        %v9220 = vunpack.c.l.b16 %v9212
        %v9221 = vpack.c.b16 %v9218, %v9217
        %v9222 = vpack.c.b16 %v9220, %v9219
        %v9226 = vsel %vm7784, %v7761, 0
        %9228 = vmatprep.subr.bf16.mxu0 0
        %9229 = vmatpush1.bf16.msra.mxu0 0
        %9230 = vmatprep.subr.bf16.mxu0 0
        %9231 = vmatpush1.bf16.msra.mxu0 0
        %9232 = vmatprep.subr.bf16.mxu0 0
        %9233 = vmatpush1.bf16.msra.mxu0 0
        %9234 = vmatprep.subr.bf16.mxu0 0
        %9235 = vmatpush1.bf16.msra.mxu0 0
        %9236 = vmatprep.subr.bf16.mxu0 0
        %9237 = vmatpush1.bf16.msra.mxu0 0
        %9238 = vmatprep.subr.bf16.mxu0 0
        %9239 = vmatpush1.bf16.msra.mxu0 0
        %9240 = vmatprep.subr.bf16.mxu0 0
        %9241 = vmatpush1.bf16.msra.mxu0 %v9222
        %9242 = vmatprep.subr.bf16.mxu0 0
        %9243 = vmatpush1.bf16.msra.mxu0 %v9221
        %9244 = vmatprep.subr.bf16.mxu0 0
        %9245 = vmatpush2.bf16.msra.mxu0 0
        %9246 = vmatprep.subr.bf16.mxu0 0
        %9247 = vmatpush2.bf16.msra.mxu0 0
        %9248 = vmatprep.subr.bf16.mxu0 0
        %9249 = vmatpush2.bf16.msra.mxu0 0
        %9250 = vmatprep.subr.bf16.mxu0 0
        %9251 = vmatpush2.bf16.msra.mxu0 0
        %9252 = vmatprep.subr.bf16.mxu0 0
        %9253 = vmatpush2.bf16.msra.mxu0 0
        %9254 = vmatprep.subr.bf16.mxu0 0
        %9255 = vmatpush2.bf16.msra.mxu0 0
        %9256 = vmatprep.subr.bf16.mxu0 0
        %9257 = vmatpush2.bf16.msra.mxu0 0
        %9258 = vmatprep.subr.bf16.mxu0 0
        %9259 = vmatpush2.bf16.msra.mxu0 0
        %9260 = vmatprep.mubr.bf16.mxu0 0
        %9261 = vmatmul.mubr.bf16.gmra.mxu0 %v9226
        %v9262 = vpop.f32.mrf.mxu0
        %v9263 = vadd.f32 0.0, %v9262
        %v9264 = vpop.f32.mrf.mxu0
        %v9265 = vpop.f32.mrf.mxu0
        %v9266 = vadd.f32 0.0, %v9265
        %v9267 = vpop.f32.mrf.mxu0
        %9268 = vdwg.mxu0
        %v9269 = vadd.f32 %v9206, %v9263
        %v9270 = vadd.f32 %v9207, %v9266
        %s9271 = scalar_lea.vmem %s7, 384
        %v9272 = vld [vmem:[%s9271] sm:$0xf]
        %v9273 = vld [vmem:[%s9271 + $0x4] sm:$0xf]
        %v9274 = vld [vmem:[%s9271 + $0x8] sm:$0xf]
        %v9275 = vld [vmem:[%s9271 + $0xc] sm:$0xf]
        %v9280 = vunpack.c.l.b16 %v9272
        %v9281 = vunpack.c.l.b16 %v9273
        %v9282 = vunpack.c.l.b16 %v9274
        %v9283 = vunpack.c.l.b16 %v9275
        %v9284 = vpack.c.b16 %v9281, %v9280
        %v9285 = vpack.c.b16 %v9283, %v9282
        %v9289 = vsel %vm7784, %v7762, 0
        %9291 = vmatprep.subr.bf16.mxu0 0
        %9292 = vmatpush1.bf16.msra.mxu0 0
        %9293 = vmatprep.subr.bf16.mxu0 0
        %9294 = vmatpush1.bf16.msra.mxu0 0
        %9295 = vmatprep.subr.bf16.mxu0 0
        %9296 = vmatpush1.bf16.msra.mxu0 0
        %9297 = vmatprep.subr.bf16.mxu0 0
        %9298 = vmatpush1.bf16.msra.mxu0 0
        %9299 = vmatprep.subr.bf16.mxu0 0
        %9300 = vmatpush1.bf16.msra.mxu0 0
        %9301 = vmatprep.subr.bf16.mxu0 0
        %9302 = vmatpush1.bf16.msra.mxu0 0
        %9303 = vmatprep.subr.bf16.mxu0 0
        %9304 = vmatpush1.bf16.msra.mxu0 %v9285
        %9305 = vmatprep.subr.bf16.mxu0 0
        %9306 = vmatpush1.bf16.msra.mxu0 %v9284
        %9307 = vmatprep.subr.bf16.mxu0 0
        %9308 = vmatpush2.bf16.msra.mxu0 0
        %9309 = vmatprep.subr.bf16.mxu0 0
        %9310 = vmatpush2.bf16.msra.mxu0 0
        %9311 = vmatprep.subr.bf16.mxu0 0
        %9312 = vmatpush2.bf16.msra.mxu0 0
        %9313 = vmatprep.subr.bf16.mxu0 0
        %9314 = vmatpush2.bf16.msra.mxu0 0
        %9315 = vmatprep.subr.bf16.mxu0 0
        %9316 = vmatpush2.bf16.msra.mxu0 0
        %9317 = vmatprep.subr.bf16.mxu0 0
        %9318 = vmatpush2.bf16.msra.mxu0 0
        %9319 = vmatprep.subr.bf16.mxu0 0
        %9320 = vmatpush2.bf16.msra.mxu0 0
        %9321 = vmatprep.subr.bf16.mxu0 0
        %9322 = vmatpush2.bf16.msra.mxu0 0
        %9323 = vmatprep.mubr.bf16.mxu0 0
        %9324 = vmatmul.mubr.bf16.gmra.mxu0 %v9289
        %v9325 = vpop.f32.mrf.mxu0
        %v9326 = vadd.f32 0.0, %v9325
        %v9327 = vpop.f32.mrf.mxu0
        %v9328 = vpop.f32.mrf.mxu0
        %v9329 = vadd.f32 0.0, %v9328
        %v9330 = vpop.f32.mrf.mxu0
        %9331 = vdwg.mxu0
        %v9332 = vadd.f32 %v9269, %v9326
        %v9333 = vadd.f32 %v9270, %v9329
        %v9334 = vld [vmem:[%s8] sm:$0x1]
        %v9336 = vlaneseq
        %v9337 = vshrl.u32 %v9336, 7
        %v9338 = vsub.s32 0, %v9337
        %v9339 = vrot.slane %v9334, %v9338
        %v9341 = vadd.f32 %v9332, %v9339
        %v9342 = vadd.f32 %v9333, %v9339
        %v9343 = vmax.f32 %v9341, 0.0
        %v9344 = vmax.f32 %v9342, 0.0
        %v9345 = vpack.c.bf16 %v9344, %v9343
        %v9346 = vld [vmem:[%s10] sm:$0x1]
        %v9347 = vld [vmem:[%s9] sm:$0xf]
        %v9348 = vld [vmem:[%s9 + $0x4] sm:$0xf]
        %v9349 = vld [vmem:[%s9 + $0x8] sm:$0xf]
        %v9350 = vld [vmem:[%s9 + $0xc] sm:$0xf]
        %v9355 = vunpack.c.l.b16 %v9347
        %v9356 = vunpack.c.l.b16 %v9348
        %v9357 = vunpack.c.l.b16 %v9349
        %v9358 = vunpack.c.l.b16 %v9350
        %v9359 = vpack.c.b16 %v9356, %v9355
        %v9360 = vpack.c.b16 %v9358, %v9357
        %v9364 = vsel %vm7784, %v9345, 0
        %9366 = vmatprep.subr.bf16.mxu0 0
        %9367 = vmatpush1.bf16.msra.mxu0 0
        %9368 = vmatprep.subr.bf16.mxu0 0
        %9369 = vmatpush1.bf16.msra.mxu0 0
        %9370 = vmatprep.subr.bf16.mxu0 0
        %9371 = vmatpush1.bf16.msra.mxu0 0
        %9372 = vmatprep.subr.bf16.mxu0 0
        %9373 = vmatpush1.bf16.msra.mxu0 0
        %9374 = vmatprep.subr.bf16.mxu0 0
        %9375 = vmatpush1.bf16.msra.mxu0 0
        %9376 = vmatprep.subr.bf16.mxu0 0
        %9377 = vmatpush1.bf16.msra.mxu0 0
        %9378 = vmatprep.subr.bf16.mxu0 0
        %9379 = vmatpush1.bf16.msra.mxu0 %v9360
        %9380 = vmatprep.subr.bf16.mxu0 0
        %9381 = vmatpush1.bf16.msra.mxu0 %v9359
        %9382 = vmatprep.subr.bf16.mxu0 0
        %9383 = vmatpush2.bf16.msra.mxu0 0
        %9384 = vmatprep.subr.bf16.mxu0 0
        %9385 = vmatpush2.bf16.msra.mxu0 0
        %9386 = vmatprep.subr.bf16.mxu0 0
        %9387 = vmatpush2.bf16.msra.mxu0 0
        %9388 = vmatprep.subr.bf16.mxu0 0
        %9389 = vmatpush2.bf16.msra.mxu0 0
        %9390 = vmatprep.subr.bf16.mxu0 0
        %9391 = vmatpush2.bf16.msra.mxu0 0
        %9392 = vmatprep.subr.bf16.mxu0 0
        %9393 = vmatpush2.bf16.msra.mxu0 0
        %9394 = vmatprep.subr.bf16.mxu0 0
        %9395 = vmatpush2.bf16.msra.mxu0 0
        %9396 = vmatprep.subr.bf16.mxu0 0
        %9397 = vmatpush2.bf16.msra.mxu0 0
        %9398 = vmatprep.mubr.bf16.mxu0 0
        %9399 = vmatmul.mubr.bf16.gmra.mxu0 %v9364
        %v9400 = vpop.f32.mrf.mxu0
        %v9401 = vadd.f32 0.0, %v9400
        %v9402 = vpop.f32.mrf.mxu0
        %v9403 = vpop.f32.mrf.mxu0
        %v9404 = vpop.f32.mrf.mxu0
        %9405 = vdwg.mxu0
        %v9406 = vadd.f32 %v9346, %v9401
        %s9407 = scalar_lea.vmem %s9, 16
        %v9408 = vld [vmem:[%s9407] sm:$0xf]
        %v9409 = vld [vmem:[%s9407 + $0x4] sm:$0xf]
        %v9410 = vld [vmem:[%s9407 + $0x8] sm:$0xf]
        %v9411 = vld [vmem:[%s9407 + $0xc] sm:$0xf]
        %v9412 = vshrl.u32 %v9345, 16
        %v9418 = vunpack.c.l.b16 %v9408
        %v9419 = vunpack.c.l.b16 %v9409
        %v9420 = vunpack.c.l.b16 %v9410
        %v9421 = vunpack.c.l.b16 %v9411
        %v9422 = vpack.c.b16 %v9419, %v9418
        %v9423 = vpack.c.b16 %v9421, %v9420
        %v9427 = vsel %vm7784, %v9412, 0
        %9429 = vmatprep.subr.bf16.mxu0 0
        %9430 = vmatpush1.bf16.msra.mxu0 0
        %9431 = vmatprep.subr.bf16.mxu0 0
        %9432 = vmatpush1.bf16.msra.mxu0 0
        %9433 = vmatprep.subr.bf16.mxu0 0
        %9434 = vmatpush1.bf16.msra.mxu0 0
        %9435 = vmatprep.subr.bf16.mxu0 0
        %9436 = vmatpush1.bf16.msra.mxu0 0
        %9437 = vmatprep.subr.bf16.mxu0 0
        %9438 = vmatpush1.bf16.msra.mxu0 0
        %9439 = vmatprep.subr.bf16.mxu0 0
        %9440 = vmatpush1.bf16.msra.mxu0 0
        %9441 = vmatprep.subr.bf16.mxu0 0
        %9442 = vmatpush1.bf16.msra.mxu0 %v9423
        %9443 = vmatprep.subr.bf16.mxu0 0
        %9444 = vmatpush1.bf16.msra.mxu0 %v9422
        %9445 = vmatprep.subr.bf16.mxu0 0
        %9446 = vmatpush2.bf16.msra.mxu0 0
        %9447 = vmatprep.subr.bf16.mxu0 0
        %9448 = vmatpush2.bf16.msra.mxu0 0
        %9449 = vmatprep.subr.bf16.mxu0 0
        %9450 = vmatpush2.bf16.msra.mxu0 0
        %9451 = vmatprep.subr.bf16.mxu0 0
        %9452 = vmatpush2.bf16.msra.mxu0 0
        %9453 = vmatprep.subr.bf16.mxu0 0
        %9454 = vmatpush2.bf16.msra.mxu0 0
        %9455 = vmatprep.subr.bf16.mxu0 0
        %9456 = vmatpush2.bf16.msra.mxu0 0
        %9457 = vmatprep.subr.bf16.mxu0 0
        %9458 = vmatpush2.bf16.msra.mxu0 0
        %9459 = vmatprep.subr.bf16.mxu0 0
        %9460 = vmatpush2.bf16.msra.mxu0 0
        %9461 = vmatprep.mubr.bf16.mxu0 0
        %9462 = vmatmul.mubr.bf16.gmra.mxu0 %v9427
        %v9463 = vpop.f32.mrf.mxu0
        %v9464 = vadd.f32 0.0, %v9463
        %v9465 = vpop.f32.mrf.mxu0
        %v9466 = vpop.f32.mrf.mxu0
        %v9467 = vpop.f32.mrf.mxu0
        %9468 = vdwg.mxu0
        %v9469 = vadd.f32 %v9406, %v9464
        %s9470 = scalar_lea.vmem %s9, 32
        %v9471 = vld [vmem:[%s9470] sm:$0xf]
        %v9472 = vld [vmem:[%s9470 + $0x4] sm:$0xf]
        %v9473 = vld [vmem:[%s9470 + $0x8] sm:$0xf]
        %v9474 = vld [vmem:[%s9470 + $0xc] sm:$0xf]
        %v9476 = vrot.slane %v9345, 1
        %v9481 = vunpack.c.l.b16 %v9471
        %v9482 = vunpack.c.l.b16 %v9472
        %v9483 = vunpack.c.l.b16 %v9473
        %v9484 = vunpack.c.l.b16 %v9474
        %v9485 = vpack.c.b16 %v9482, %v9481
        %v9486 = vpack.c.b16 %v9484, %v9483
        %v9490 = vsel %vm7784, %v9476, 0
        %9492 = vmatprep.subr.bf16.mxu0 0
        %9493 = vmatpush1.bf16.msra.mxu0 0
        %9494 = vmatprep.subr.bf16.mxu0 0
        %9495 = vmatpush1.bf16.msra.mxu0 0
        %9496 = vmatprep.subr.bf16.mxu0 0
        %9497 = vmatpush1.bf16.msra.mxu0 0
        %9498 = vmatprep.subr.bf16.mxu0 0
        %9499 = vmatpush1.bf16.msra.mxu0 0
        %9500 = vmatprep.subr.bf16.mxu0 0
        %9501 = vmatpush1.bf16.msra.mxu0 0
        %9502 = vmatprep.subr.bf16.mxu0 0
        %9503 = vmatpush1.bf16.msra.mxu0 0
        %9504 = vmatprep.subr.bf16.mxu0 0
        %9505 = vmatpush1.bf16.msra.mxu0 %v9486
        %9506 = vmatprep.subr.bf16.mxu0 0
        %9507 = vmatpush1.bf16.msra.mxu0 %v9485
        %9508 = vmatprep.subr.bf16.mxu0 0
        %9509 = vmatpush2.bf16.msra.mxu0 0
        %9510 = vmatprep.subr.bf16.mxu0 0
        %9511 = vmatpush2.bf16.msra.mxu0 0
        %9512 = vmatprep.subr.bf16.mxu0 0
        %9513 = vmatpush2.bf16.msra.mxu0 0
        %9514 = vmatprep.subr.bf16.mxu0 0
        %9515 = vmatpush2.bf16.msra.mxu0 0
        %9516 = vmatprep.subr.bf16.mxu0 0
        %9517 = vmatpush2.bf16.msra.mxu0 0
        %9518 = vmatprep.subr.bf16.mxu0 0
        %9519 = vmatpush2.bf16.msra.mxu0 0
        %9520 = vmatprep.subr.bf16.mxu0 0
        %9521 = vmatpush2.bf16.msra.mxu0 0
        %9522 = vmatprep.subr.bf16.mxu0 0
        %9523 = vmatpush2.bf16.msra.mxu0 0
        %9524 = vmatprep.mubr.bf16.mxu0 0
        %9525 = vmatmul.mubr.bf16.gmra.mxu0 %v9490
        %v9526 = vpop.f32.mrf.mxu0
        %v9527 = vadd.f32 0.0, %v9526
        %v9528 = vpop.f32.mrf.mxu0
        %v9529 = vpop.f32.mrf.mxu0
        %v9530 = vpop.f32.mrf.mxu0
        %9531 = vdwg.mxu0
        %v9532 = vadd.f32 %v9469, %v9527
        %s9533 = scalar_lea.vmem %s9, 48
        %v9534 = vld [vmem:[%s9533] sm:$0xf]
        %v9535 = vld [vmem:[%s9533 + $0x4] sm:$0xf]
        %v9536 = vld [vmem:[%s9533 + $0x8] sm:$0xf]
        %v9537 = vld [vmem:[%s9533 + $0xc] sm:$0xf]
        %v9538 = vrot.slane %v9412, 1
        %v9543 = vunpack.c.l.b16 %v9534
        %v9544 = vunpack.c.l.b16 %v9535
        %v9545 = vunpack.c.l.b16 %v9536
        %v9546 = vunpack.c.l.b16 %v9537
        %v9547 = vpack.c.b16 %v9544, %v9543
        %v9548 = vpack.c.b16 %v9546, %v9545
        %v9552 = vsel %vm7784, %v9538, 0
        %9554 = vmatprep.subr.bf16.mxu0 0
        %9555 = vmatpush1.bf16.msra.mxu0 0
        %9556 = vmatprep.subr.bf16.mxu0 0
        %9557 = vmatpush1.bf16.msra.mxu0 0
        %9558 = vmatprep.subr.bf16.mxu0 0
        %9559 = vmatpush1.bf16.msra.mxu0 0
        %9560 = vmatprep.subr.bf16.mxu0 0
        %9561 = vmatpush1.bf16.msra.mxu0 0
        %9562 = vmatprep.subr.bf16.mxu0 0
        %9563 = vmatpush1.bf16.msra.mxu0 0
        %9564 = vmatprep.subr.bf16.mxu0 0
        %9565 = vmatpush1.bf16.msra.mxu0 0
        %9566 = vmatprep.subr.bf16.mxu0 0
        %9567 = vmatpush1.bf16.msra.mxu0 %v9548
        %9568 = vmatprep.subr.bf16.mxu0 0
        %9569 = vmatpush1.bf16.msra.mxu0 %v9547
        %9570 = vmatprep.subr.bf16.mxu0 0
        %9571 = vmatpush2.bf16.msra.mxu0 0
        %9572 = vmatprep.subr.bf16.mxu0 0
        %9573 = vmatpush2.bf16.msra.mxu0 0
        %9574 = vmatprep.subr.bf16.mxu0 0
        %9575 = vmatpush2.bf16.msra.mxu0 0
        %9576 = vmatprep.subr.bf16.mxu0 0
        %9577 = vmatpush2.bf16.msra.mxu0 0
        %9578 = vmatprep.subr.bf16.mxu0 0
        %9579 = vmatpush2.bf16.msra.mxu0 0
        %9580 = vmatprep.subr.bf16.mxu0 0
        %9581 = vmatpush2.bf16.msra.mxu0 0
        %9582 = vmatprep.subr.bf16.mxu0 0
        %9583 = vmatpush2.bf16.msra.mxu0 0
        %9584 = vmatprep.subr.bf16.mxu0 0
        %9585 = vmatpush2.bf16.msra.mxu0 0
        %9586 = vmatprep.mubr.bf16.mxu0 0
        %9587 = vmatmul.mubr.bf16.gmra.mxu0 %v9552
        %v9588 = vpop.f32.mrf.mxu0
        %v9589 = vadd.f32 0.0, %v9588
        %v9590 = vpop.f32.mrf.mxu0
        %v9591 = vpop.f32.mrf.mxu0
        %v9592 = vpop.f32.mrf.mxu0
        %9593 = vdwg.mxu0
        %v9594 = vadd.f32 %v9532, %v9589
        %v9595 = vmax.f32 %v9594, 0.0
        %v9596 = vpack.c.bf16 %v9595, %v9595
        %v9597 = vld [vmem:[%s11] sm:$0xf]
        %v9598 = vld [vmem:[%s11 + $0x4] sm:$0xf]
        %v9599 = vld [vmem:[%s11 + $0x8] sm:$0xf]
        %v9600 = vld [vmem:[%s11 + $0xc] sm:$0xf]
        %v9601 = vld [vmem:[%s12] sm:$0x1]
        %v9606 = vunpack.c.l.b16 %v9597
        %v9607 = vunpack.c.l.b16 %v9598
        %v9608 = vunpack.c.l.b16 %v9599
        %v9609 = vunpack.c.l.b16 %v9600
        %v9610 = vpack.c.b16 %v9607, %v9606
        %v9611 = vpack.c.b16 %v9609, %v9608
        %v9615 = vsel %vm7784, %v9596, 0
        %9617 = vmatprep.subr.bf16.mxu0 0
        %9618 = vmatpush1.bf16.msra.mxu0 0
        %9619 = vmatprep.subr.bf16.mxu0 0
        %9620 = vmatpush1.bf16.msra.mxu0 0
        %9621 = vmatprep.subr.bf16.mxu0 0
        %9622 = vmatpush1.bf16.msra.mxu0 0
        %9623 = vmatprep.subr.bf16.mxu0 0
        %9624 = vmatpush1.bf16.msra.mxu0 0
        %9625 = vmatprep.subr.bf16.mxu0 0
        %9626 = vmatpush1.bf16.msra.mxu0 0
        %9627 = vmatprep.subr.bf16.mxu0 0
        %9628 = vmatpush1.bf16.msra.mxu0 0
        %9629 = vmatprep.subr.bf16.mxu0 0
        %9630 = vmatpush1.bf16.msra.mxu0 %v9611
        %9631 = vmatprep.subr.bf16.mxu0 0
        %9632 = vmatpush1.bf16.msra.mxu0 %v9610
        %9633 = vmatprep.subr.bf16.mxu0 0
        %9634 = vmatpush2.bf16.msra.mxu0 0
        %9635 = vmatprep.subr.bf16.mxu0 0
        %9636 = vmatpush2.bf16.msra.mxu0 0
        %9637 = vmatprep.subr.bf16.mxu0 0
        %9638 = vmatpush2.bf16.msra.mxu0 0
        %9639 = vmatprep.subr.bf16.mxu0 0
        %9640 = vmatpush2.bf16.msra.mxu0 0
        %9641 = vmatprep.subr.bf16.mxu0 0
        %9642 = vmatpush2.bf16.msra.mxu0 0
        %9643 = vmatprep.subr.bf16.mxu0 0
        %9644 = vmatpush2.bf16.msra.mxu0 0
        %9645 = vmatprep.subr.bf16.mxu0 0
        %9646 = vmatpush2.bf16.msra.mxu0 0
        %9647 = vmatprep.subr.bf16.mxu0 0
        %9648 = vmatpush2.bf16.msra.mxu0 0
        %9649 = vmatprep.mubr.bf16.mxu0 0
        %9650 = vmatmul.mubr.bf16.gmra.mxu0 %v9615
        %v9651 = vpop.f32.mrf.mxu0
        %v9652 = vadd.f32 %v9601, %v9651
        %v9653 = vpop.f32.mrf.mxu0
        %v9654 = vpop.f32.mrf.mxu0
        %v9655 = vpop.f32.mrf.mxu0
        %9656 = vdwg.mxu0
        %vm9657 = vcmask 24576
        %9658 = vst.msk [vmem:[%s432] sm:$0x1] %vm9657, %v9652
        %s9659 = sand.u32 %s313, 1
        %s9660 = scalar_lea.sflag [#allocation3], %s9659
        %s9661 = sand.u32 %s313, 1
        %s9662 = scalar_lea.vmem [#allocation2], %s9661
        // Predicated region
        $region73: #{object_dqn_forward.1} parent=71 // pred_check
          %p9663 = pneg %p323
        $region74: #{object_dqn_forward.1} parent=71 // pred_check_branch
          %9665 = sbr.rel (%p9663) target = $region76
        $region75: #{object_dqn_forward.1} parent=71 // pred_region
          %s9667 = ssub.s32 16, 16
          %9668 = vsyncadd %s9660, %s9667
          %s9669 = smul.addr %s27, 16
          %s9670 = scalar_lea.hbm %s13, %s9669
          %s9672 = sshll.u32 %s9662, 4
          %s9673 = int_to_ptr.vmem [resolvable:$true] %s9672
          %9675 = dma.vmem_to_hbm [thread:$0]  %s9673, 16, %s9670, %s9660
        $region76: #{object_dqn_forward.1} parent=71 // pred_fallthru
          _
      $region72: #{object_dqn_forward.1} parent=5 // pred_fallthru
        _
      %p9676 = scmp.le.s32.totalorder 2, %s22
      // Predicated region
      $region77: #{object_dqn_forward.1} parent=5 // pred_check
        %p9677 = pneg %p9676
      $region78: #{object_dqn_forward.1} parent=5 // pred_check_branch
        %9679 = sbr.rel (%p9677) target = $region80
      $region79: #{object_dqn_forward.1} parent=5 // pred_region
        %s9680 = ssub.s32 %s22, 2
        // Predicated region
        $region81: #{object_dqn_forward.1} parent=79 // pred_check
          %p9681 = pneg %p329
        $region82: #{object_dqn_forward.1} parent=79 // pred_check_branch
          %9683 = sbr.rel (%p9681) target = $region84
        $region83: #{object_dqn_forward.1} parent=79 // pred_region
          %s9684 = sand.u32 %s314, 1
          %s9685 = scalar_lea.sflag [#allocation3], %s9684
          %s9686 = sand.u32 %s314, 1
          %s9687 = scalar_lea.vmem [#allocation2], %s9686
          %9688 = dma.done %s9685, 16
        $region84: #{object_dqn_forward.1} parent=79 // pred_fallthru
          _
      $region80: #{object_dqn_forward.1} parent=5 // pred_fallthru
        _
    $region6: #{object_dqn_forward.1} parent=1 // loop_footer
      %s26 = sadd.s32 1, %s22
    $region7: #{object_dqn_forward.1} parent=1 // loop_footer_branch
      %21 = sbr.rel target = $region3
    $region8: #{object_dqn_forward.1} parent=1 // loop_exit
      _
    %9689 = vsyncpa [#allocation3], 1
    %s9690 = scalar_lea.sflag [#allocation3], 1
    %9691 = vsyncpa %s9690, 1

</llo_original>
